<compile_context>
chip_gen: v7x
topology: tpu7x:2x2x1
jax: 0.10.0
libtpu: 0.0.40
codegen_flags: <defaults>
</compile_context>

<pallas_src>
import functools
import math

import jax
import jax.numpy as jnp
from jax.experimental import pallas as pl
from jax.experimental.pallas import tpu as pltpu

TM_MAX = 512                       # M tile cap (sized for v7x's 64 MiB VMEM; raise on v6e)
VMEM_LIMIT = 32 * 1024 * 1024      # explicit scoped-VMEM budget (safe on v5e/v6e/v7x)


def _rup(x, m):
    return ((x + m - 1) // m) * m


def _pick_tm(m):
    """M tile: >=2 grid steps when M allows it (both v7x cores busy), capped at TM_MAX."""
    if m <= 32:
        return max(8, m)                       # single (full-dim) block for tiny layers
    half = (m + 1) // 2
    return min(TM_MAX, _rup(half, 16))         # bf16 sublane packing = 16


def _apply_act(y, act):
    if act == "relu":
        return jnp.maximum(y, 0.0)
    if act == "hardswish":
        return y * jnp.clip(y + 3.0, 0.0, 6.0) * (1.0 / 6.0)
    if act == "sigmoid":
        return jax.nn.sigmoid(y)
    return y


# ---------------------------------------------------------------------------
# Pallas kernels
# ---------------------------------------------------------------------------
def _mm_kernel(x_ref, w_ref, b_ref, o_ref, *, act):
    """Single-K matmul + bias + activation.

    x_ref: (TM, K) bf16 with the TRUE K (no HBM padding); zero-extended here so the
    MXU sees a 128-aligned contraction.  w_ref/b_ref are padded to (Kp, Np)/(1, Np)
    (tiny).  Output is stored at the true N width (full-dim block), bf16 or f32.
    """
    x = x_ref[...]
    kp = w_ref.shape[0]
    if x.shape[1] != kp:
        x = jnp.concatenate(
            [x, jnp.zeros((x.shape[0], kp - x.shape[1]), x.dtype)], axis=1)
    y = jnp.dot(x, w_ref[...], preferred_element_type=jnp.float32)
    y = _apply_act(y + b_ref[...], act)
    o_ref[...] = y[:, :o_ref.shape[1]].astype(o_ref.dtype)


def _dw_kernel(x_ref, w_ref, b_ref, o_ref, *, act):
    """Depthwise 3x3: x_ref (9, TM, C) shifted taps (bf16, true C), w_ref (9, C) f32."""
    acc = jnp.zeros(o_ref.shape, jnp.float32)
    for k in range(9):
        acc = acc + x_ref[k].astype(jnp.float32) * w_ref[pl.ds(k, 1), :]
    o_ref[...] = _apply_act(acc + b_ref[...], act).astype(o_ref.dtype)


def _head_kernel(x_ref, w_ref, b_ref, o_ref):
    """Merged head deconv2 + sigmoid + fused DB step.

    x rows are deconv1 output pixels (cols = [bin feats | thr feats]); the matmul yields
    per-pixel [shrink d00..d11 | thresh d00..d11] logits; output is one contiguous 12-wide
    block: [shrink(4) | thresh(4) | binary(4)] with binary = sigmoid(50*(P - T))."""
    x = x_ref[...]
    kp = w_ref.shape[0]
    if x.shape[1] != kp:
        x = jnp.concatenate(
            [x, jnp.zeros((x.shape[0], kp - x.shape[1]), x.dtype)], axis=1)
    y = jnp.dot(x, w_ref[...], preferred_element_type=jnp.float32)
    y = jax.nn.sigmoid(y + b_ref[...])
    prob = y[:, 0:4]
    thr = y[:, 4:8]
    binr = jax.nn.sigmoid(50.0 * (prob - thr))
    o_ref[...] = jnp.concatenate([prob, thr, binr], axis=1)


# ---------------------------------------------------------------------------
# Wrappers (glue: im2col / taps / reshapes; no HBM pad/slice of activations)
# ---------------------------------------------------------------------------
def matmul_bias_act(x, w, b, act="none", out_dtype=jnp.bfloat16):
    """x (M, K) @ w (K, N) + b (N,), fused activation, via the Pallas MXU kernel."""
    M, K = x.shape
    N = w.shape[1]
    Kp, Np = _rup(K, 128), _rup(N, 128)
    wp = jnp.pad(w.astype(jnp.bfloat16), ((0, Kp - K), (0, Np - N)))
    bp = jnp.pad(b.astype(jnp.float32), (0, Np - N)).reshape(1, Np)
    xi = x.astype(jnp.bfloat16)
    Mi = M
    if M < 8:                                   # tiny-M guard (one full sublane tile)
        Mi = 8
        xi = jnp.pad(xi, ((0, Mi - M), (0, 0)))
    TMb = _pick_tm(Mi)
    out = pl.pallas_call(
        functools.partial(_mm_kernel, act=act),
        out_shape=jax.ShapeDtypeStruct((Mi, N), out_dtype),
        grid_spec=pltpu.PrefetchScalarGridSpec(
            num_scalar_prefetch=0,
            grid=(pl.cdiv(Mi, TMb),),
            in_specs=[
                pl.BlockSpec((TMb, K), lambda i: (i, 0)),
                pl.BlockSpec((Kp, Np), lambda i: (0, 0)),
                pl.BlockSpec((1, Np), lambda i: (0, 0)),
            ],
            out_specs=pl.BlockSpec((TMb, N), lambda i: (i, 0)),
        ),
        compiler_params=pltpu.CompilerParams(
            dimension_semantics=("parallel",),
            vmem_limit_bytes=VMEM_LIMIT),
    )(xi, wp, bp)
    return out if Mi == M else out[:M]


def conv2d(x, w, b, stride=1, padding=0, act="none"):
    """Standard conv, NHWC activations, w = (kh, kw, cin, cout). im2col + Pallas matmul."""
    B, H, W, Cin = x.shape
    kh, kw, _, Cout = w.shape
    xb = x.astype(jnp.bfloat16)
    if padding:
        xb = jnp.pad(xb, ((0, 0), (padding, padding), (padding, padding), (0, 0)))
    Ho = (H + 2 * padding - kh) // stride + 1
    Wo = (W + 2 * padding - kw) // stride + 1
    if kh == 1 and kw == 1 and stride == 1:
        patches = xb.reshape(B * H * W, Cin)
    else:
        # TODO(synk): form kh*kw patches inside the Pallas kernel (halo'd row strips via
        # manual DMA) to avoid materializing the im2col tensor in HBM at real resolutions.
        cols = [xb[:, dh:dh + (Ho - 1) * stride + 1:stride,
                    dw:dw + (Wo - 1) * stride + 1:stride, :]
                for dh in range(kh) for dw in range(kw)]
        patches = jnp.concatenate(cols, axis=-1).reshape(B * Ho * Wo, kh * kw * Cin)
    y = matmul_bias_act(patches, w.reshape(kh * kw * Cin, Cout), b, act)
    return y.reshape(B, Ho, Wo, Cout)


def depthwise3x3(x, w, b, stride=1, act="none"):
    """Depthwise 3x3 conv (padding=1), w = (3, 3, C), via the Pallas VPU kernel."""
    B, H, W, C = x.shape
    xb = jnp.pad(x.astype(jnp.bfloat16), ((0, 0), (1, 1), (1, 1), (0, 0)))
    Ho = (H - 1) // stride + 1
    Wo = (W - 1) // stride + 1
    # TODO(synk): read the 9 shifted taps from an in-kernel VMEM strip instead of
    # stacking them in HBM (9x traffic) — acceptable at these map sizes.
    taps = [xb[:, dh:dh + (Ho - 1) * stride + 1:stride,
               dw:dw + (Wo - 1) * stride + 1:stride, :].reshape(B * Ho * Wo, C)
            for dh in range(3) for dw in range(3)]
    xs = jnp.stack(taps, axis=0)                       # (9, M, C) bf16, true C
    M = B * Ho * Wo
    Mi = M
    if M < 8:
        Mi = 8
        xs = jnp.pad(xs, ((0, 0), (0, Mi - M), (0, 0)))
    TMb = _pick_tm(Mi)
    out = pl.pallas_call(
        functools.partial(_dw_kernel, act=act),
        out_shape=jax.ShapeDtypeStruct((Mi, C), jnp.bfloat16),
        grid_spec=pltpu.PrefetchScalarGridSpec(
            num_scalar_prefetch=0,
            grid=(pl.cdiv(Mi, TMb),),
            in_specs=[
                pl.BlockSpec((9, TMb, C), lambda i: (0, i, 0)),
                pl.BlockSpec((9, C), lambda i: (0, 0)),
                pl.BlockSpec((1, C), lambda i: (0, 0)),
            ],
            out_specs=pl.BlockSpec((TMb, C), lambda i: (i, 0)),
        ),
        compiler_params=pltpu.CompilerParams(
            dimension_semantics=("parallel",),
            vmem_limit_bytes=VMEM_LIMIT),
    )(xs, w.reshape(9, C).astype(jnp.float32), b.reshape(1, C).astype(jnp.float32))
    if Mi != M:
        out = out[:M]
    return out.reshape(B, Ho, Wo, C)


def head_final(x, w, b):
    """Merged head deconv2 matmul + sigmoid + fused DB step.
    x (M, 2*hmid) @ w (2*hmid, 8) -> [shrink(4) | thresh(4)]; returns (M, 12) f32
    with binary = sigmoid(50*(P-T)) in cols 8:12 (single contiguous output)."""
    M, K = x.shape
    N = w.shape[1]                                   # 8
    Kp = _rup(K, 128)
    wp = jnp.pad(w.astype(jnp.bfloat16), ((0, Kp - K), (0, 128 - N)))
    bp = jnp.pad(b.astype(jnp.float32), (0, 128 - N)).reshape(1, 128)
    TMb = _pick_tm(M)
    return pl.pallas_call(
        _head_kernel,
        out_shape=jax.ShapeDtypeStruct((M, 12), jnp.float32),
        grid_spec=pltpu.PrefetchScalarGridSpec(
            num_scalar_prefetch=0,
            grid=(pl.cdiv(M, TMb),),
            in_specs=[
                pl.BlockSpec((TMb, K), lambda i: (i, 0)),
                pl.BlockSpec((Kp, 128), lambda i: (0, 0)),
                pl.BlockSpec((1, 128), lambda i: (0, 0)),
            ],
            out_specs=pl.BlockSpec((TMb, 12), lambda i: (i, 0)),
        ),
        compiler_params=pltpu.CompilerParams(
            dimension_semantics=("parallel",),
            vmem_limit_bytes=VMEM_LIMIT),
    )(x.astype(jnp.bfloat16), wp, bp)


def upsample_nearest(x, factor):
    if factor == 1:
        return x
    # TODO(synk): fuse nearest-upsample + add/concat into the consumer Pallas kernel via a
    # coarse-block index_map; at bf16 / real-channel width these stay inside the XLA
    # fusion feeding the next pallas_call and are small in absolute bytes.
    return jnp.repeat(jnp.repeat(x, factor, axis=1), factor, axis=2)


# ---------------------------------------------------------------------------
# Parameters (deterministic synthetic init; BN folded into conv weight/bias)
# ---------------------------------------------------------------------------
def init_params(key, inner_channels=32, out_channels=8):
    ks = list(jax.random.split(key, 40))
    it = iter(ks)

    def conv_w(kh, kw, cin, cout):
        return jax.random.normal(next(it), (kh, kw, cin, cout),
                                 jnp.float32) / math.sqrt(kh * kw * cin)

    def dw_w(c):
        return jax.random.normal(next(it), (3, 3, c), jnp.float32) / 3.0

    def deconv_w(cin, cout):
        return jax.random.normal(next(it), (cin, cout, 2, 2),
                                 jnp.float32) / math.sqrt(cin)

    z = lambda c: jnp.zeros((c,), jnp.float32)
    p = {}
    # --- backbone (simplified MobileNetV3-small; strides 2,4,8,16,32) ---
    p["stem_w"], p["stem_b"] = conv_w(3, 3, 3, 16), z(16)
    p["b1_dw_w"], p["b1_dw_b"] = dw_w(16), z(16)
    p["b1_pw_w"], p["b1_pw_b"] = conv_w(1, 1, 16, 16), z(16)
    for i, (ci, ce, co) in zip((2, 3, 4), [(16, 72, 24), (24, 96, 48), (48, 144, 96)]):
        p[f"b{i}_exp_w"], p[f"b{i}_exp_b"] = conv_w(1, 1, ci, ce), z(ce)
        p[f"b{i}_dw_w"], p[f"b{i}_dw_b"] = dw_w(ce), z(ce)
        p[f"b{i}_proj_w"], p[f"b{i}_proj_b"] = conv_w(1, 1, ce, co), z(co)
    # --- neck: FPN lateral 1x1 -> inner_channels, smooth 3x3 -> out_channels ---
    for i, c in zip((2, 3, 4, 5), (16, 24, 48, 96)):
        p[f"lat{i}_w"], p[f"lat{i}_b"] = conv_w(1, 1, c, inner_channels), z(inner_channels)
        p[f"sm{i}_w"], p[f"sm{i}_b"] = conv_w(3, 3, inner_channels, out_channels), z(out_channels)
    # --- DB head: binarize ("bin") + threshold ("thr") branches ---
    hin = 4 * out_channels            # head_in_channels
    hmid = hin // 4
    for br in ("bin", "thr"):
        p[f"{br}_c1_w"], p[f"{br}_c1_b"] = conv_w(3, 3, hin, hmid), z(hmid)
        p[f"{br}_d1_w"], p[f"{br}_d1_b"] = deconv_w(hmid, hmid), z(hmid)
        p[f"{br}_d2_w"], p[f"{br}_d2_b"] = deconv_w(hmid, 1), z(1)
    return p


# ---------------------------------------------------------------------------
# DB head (both branches merged into one kernel chain; pixel-shuffle folded away)
# ---------------------------------------------------------------------------
def db_head(fused, p):
    hm = p["bin_c1_w"].shape[-1]                               # hmid
    # merged 3x3 conv (branches share the same input; concat weights along Cout)
    c1_w = jnp.concatenate([p["bin_c1_w"], p["thr_c1_w"]], axis=-1)
    c1_b = jnp.concatenate([p["bin_c1_b"], p["thr_c1_b"]])
    y = conv2d(fused, c1_w, c1_b, stride=1, padding=1, act="relu")   # (B,H/4,W/4,2*hm)
    # merged deconv1 (block-diagonal); columns grouped (di, dj, [bin|thr]) so the
    # pixel-shuffle between deconv1 and deconv2 is a FREE row-major reshape (no HBM pass).
    wbg = jnp.transpose(p["bin_d1_w"], (2, 3, 0, 1))           # (2,2,cin,cout)
    wtg = jnp.transpose(p["thr_d1_w"], (2, 3, 0, 1))
    zz = jnp.zeros((hm, hm), jnp.float32)
    blocks = [jnp.concatenate(
                  [jnp.concatenate([wbg[di, dj], zz], axis=1),
                   jnp.concatenate([zz, wtg[di, dj]], axis=1)], axis=0)
              for di in range(2) for dj in range(2)]
    d1_w = jnp.concatenate(blocks, axis=1)                      # (2hm, 4*2hm)
    d1_b = jnp.tile(jnp.concatenate([p["bin_d1_b"], p["thr_d1_b"]]), 4)
    B, H4, W4, C = y.shape
    y1 = matmul_bias_act(y.reshape(B * H4 * W4, C), d1_w, d1_b, act="relu")  # (M4, 4*2hm)
    x2 = y1.reshape(B * H4 * W4 * 4, 2 * hm)   # rows = deconv1 output pixels (free reshape)
    # merged deconv2 -> sigmoid -> DB step, fused in one Pallas kernel
    wb2 = jnp.transpose(p["bin_d2_w"], (1, 2, 3, 0)).reshape(4, hm).T   # (hm, 4) cols=(a,b)
    wt2 = jnp.transpose(p["thr_d2_w"], (1, 2, 3, 0)).reshape(4, hm).T
    z4 = jnp.zeros((hm, 4), jnp.float32)
    d2_w = jnp.concatenate([jnp.concatenate([wb2, z4], axis=1),
                            jnp.concatenate([z4, wt2], axis=1)], axis=0)  # (2hm, 8)
    d2_b = jnp.concatenate([jnp.tile(p["bin_d2_b"], 4), jnp.tile(p["thr_d2_b"], 4)])
    out12 = head_final(x2, d2_w, d2_b)                          # (B*H4*W4*4, 12) f32
    # single final formatting transpose: (b,h4,w4,di1,dj1,type,a,b2) -> NCHW
    out = out12.reshape(B, H4, W4, 2, 2, 3, 2, 2)
    out = jnp.transpose(out, (0, 5, 1, 3, 6, 2, 4, 7))
    return out.reshape(B, 3, 4 * H4, 4 * W4)                    # (B, 3, H, W)


# ---------------------------------------------------------------------------
# Model forward
# ---------------------------------------------------------------------------
def dbnet_forward(x_nchw, p):
    x = jnp.transpose(x_nchw, (0, 2, 3, 1)).astype(jnp.bfloat16)   # NCHW -> NHWC
    # --- backbone ---
    y = conv2d(x, p["stem_w"], p["stem_b"], stride=2, padding=1, act="hardswish")
    y = depthwise3x3(y, p["b1_dw_w"], p["b1_dw_b"], stride=2, act="relu")
    c2 = conv2d(y, p["b1_pw_w"], p["b1_pw_b"])                       # stride 4, 16ch
    feats, cur = [c2], c2
    for i, act in zip((2, 3, 4), ("relu", "hardswish", "hardswish")):
        y = conv2d(cur, p[f"b{i}_exp_w"], p[f"b{i}_exp_b"], act=act)
        y = depthwise3x3(y, p[f"b{i}_dw_w"], p[f"b{i}_dw_b"], stride=2, act=act)
        cur = conv2d(y, p[f"b{i}_proj_w"], p[f"b{i}_proj_b"])
        feats.append(cur)
    c2, c3, c4, c5 = feats                                           # strides 4/8/16/32
    # --- neck: FPN top-down + concat (BackboneWithFPNC) ---
    l2 = conv2d(c2, p["lat2_w"], p["lat2_b"])
    l3 = conv2d(c3, p["lat3_w"], p["lat3_b"])
    l4 = conv2d(c4, p["lat4_w"], p["lat4_b"])
    l5 = conv2d(c5, p["lat5_w"], p["lat5_b"])
    p5 = l5
    p4 = l4 + upsample_nearest(p5, 2)
    p3 = l3 + upsample_nearest(p4, 2)
    p2 = l2 + upsample_nearest(p3, 2)
    o2 = conv2d(p2, p["sm2_w"], p["sm2_b"], padding=1)
    o3 = conv2d(p3, p["sm3_w"], p["sm3_b"], padding=1)
    o4 = conv2d(p4, p["sm4_w"], p["sm4_b"], padding=1)
    o5 = conv2d(p5, p["sm5_w"], p["sm5_b"], padding=1)
    fused = jnp.concatenate(
        [o2, upsample_nearest(o3, 2), upsample_nearest(o4, 4), upsample_nearest(o5, 8)],
        axis=-1)  # (B, H/4, W/4, 4*out_channels) == head_in_channels
    # --- DB head (merged branches + fused step) ---
    return db_head(fused, p)                                         # NCHW (B, 3, H, W)


if __name__ == "__main__":
    B, C, H, W = 2, 3, 32, 32
    x = jax.random.normal(jax.random.PRNGKey(0), (B, C, H, W), jnp.float32)
    params = init_params(jax.random.PRNGKey(42), inner_channels=32, out_channels=8)
    out = jax.jit(dbnet_forward)(x, params)
    jax.block_until_ready(out)
    assert out.shape == (B, 3, H, W), out.shape
    assert bool(jnp.all(jnp.isfinite(out)))
    print("KERNEL_OK")
</pallas_src>

<mosaic_0001>
module attributes {stable_mosaic.version = 11 : i64} {
  func.func @_mm_kernel(%arg0: i32, %arg1: memref<256x27xbf16, #tpu.memory_space<vmem>>, %arg2: memref<128x128xbf16, #tpu.memory_space<vmem>>, %arg3: memref<1x128xf32, #tpu.memory_space<vmem>>, %arg4: memref<256x16xbf16, #tpu.memory_space<vmem>>) attributes {dimension_semantics = [#tpu.dimension_semantics<parallel>], iteration_bounds = array<i64: 2>, scalar_prefetch = 0 : i64, scratch_operands = 0 : i64, tpu.core_type = #tpu.core_type<tc>, window_params = [{transform_indices = @transform_0, window_bounds = array<i64: 256, 27>}, {pipeline_mode = #tpu.pipeline_mode<synchronous>, transform_indices = @transform_1, window_bounds = array<i64: 128, 128>}, {pipeline_mode = #tpu.pipeline_mode<synchronous>, transform_indices = @transform_2, window_bounds = array<i64: 1, 128>}, {transform_indices = @transform_3, window_bounds = array<i64: 256, 16>}]} {
    %c0 = arith.constant 0 : index
    %c0_0 = arith.constant 0 : index
    %0 = vector.load %arg1[%c0, %c0_0] : memref<256x27xbf16, #tpu.memory_space<vmem>>, vector<256x27xbf16>
    %cst = arith.constant 0.000000e+00 : bf16
    %1 = vector.broadcast %cst : bf16 to vector<256x101xbf16>
    %2 = tpu.concatenate %0, %1 in 1 : vector<256x27xbf16>, vector<256x101xbf16> -> vector<256x128xbf16>
    %c0_1 = arith.constant 0 : index
    %c0_2 = arith.constant 0 : index
    %3 = vector.load %arg2[%c0_1, %c0_2] : memref<128x128xbf16, #tpu.memory_space<vmem>>, vector<128x128xbf16>
    %cst_3 = arith.constant dense<0.000000e+00> : vector<256x128xf32>
    %4 = tpu.matmul %2, %3, %cst_3 {dimension_numbers = #tpu.dot_dimension_numbers<[1], [0], [0], [1], [0, 0, 1, 1], [], []>} : vector<256x128xbf16>, vector<128x128xbf16>, vector<256x128xf32> -> vector<256x128xf32>
    %c0_4 = arith.constant 0 : index
    %c0_5 = arith.constant 0 : index
    %5 = vector.load %arg3[%c0_4, %c0_5] : memref<1x128xf32, #tpu.memory_space<vmem>>, vector<1x128xf32>
    %6 = vector.broadcast %5 : vector<1x128xf32> to vector<256x128xf32>
    %7 = arith.addf %4, %6 : vector<256x128xf32>
    %cst_6 = arith.constant 3.000000e+00 : f32
    %8 = vector.broadcast %cst_6 : f32 to vector<256x128xf32>
    %9 = arith.addf %7, %8 : vector<256x128xf32>
    %cst_7 = arith.constant 0.000000e+00 : f32
    %cst_8 = arith.constant 6.000000e+00 : f32
    %10 = vector.broadcast %cst_7 : f32 to vector<256x128xf32>
    %11 = arith.maximumf %10, %9 : vector<256x128xf32>
    %12 = vector.broadcast %cst_8 : f32 to vector<256x128xf32>
    %13 = arith.minimumf %12, %11 : vector<256x128xf32>
    %14 = arith.mulf %7, %13 : vector<256x128xf32>
    %cst_9 = arith.constant 0.166666672 : f32
    %15 = vector.broadcast %cst_9 : f32 to vector<256x128xf32>
    %16 = arith.mulf %14, %15 : vector<256x128xf32>
    %17 = vector.extract_strided_slice %16 {offsets = [0, 0], sizes = [256, 16], strides = [1, 1]} : vector<256x128xf32> to vector<256x16xf32>
    %18 = arith.truncf %17 : vector<256x16xf32> to vector<256x16xbf16>
    %c0_10 = arith.constant 0 : index
    %c0_11 = arith.constant 0 : index
    %19 = vector.load %arg4[%c0_10, %c0_11] : memref<256x16xbf16, #tpu.memory_space<vmem>>, vector<256x16xbf16>
    tpu.vector_store %arg4[%c0_10, %c0_11], %18 {strides = array<i32>} : memref<256x16xbf16, #tpu.memory_space<vmem>>, vector<256x16xbf16>,
    return
  }
  func.func @transform_0(%arg0: i32) -> (i32, i32) {
    %c0_i32 = arith.constant 0 : i32
    %c0_i32_0 = arith.constant 0 : i32
    return %arg0, %c0_i32 : i32, i32
  }
  func.func @transform_1(%arg0: i32) -> (i32, i32) {
    %c0_i32 = arith.constant 0 : i32
    %c0_i32_0 = arith.constant 0 : i32
    %c0_i32_1 = arith.constant 0 : i32
    return %c0_i32, %c0_i32_0 : i32, i32
  }
  func.func @transform_2(%arg0: i32) -> (i32, i32) {
    %c0_i32 = arith.constant 0 : i32
    %c0_i32_0 = arith.constant 0 : i32
    %c0_i32_1 = arith.constant 0 : i32
    return %c0_i32, %c0_i32_0 : i32, i32
  }
  func.func @transform_3(%arg0: i32) -> (i32, i32) {
    %c0_i32 = arith.constant 0 : i32
    %c0_i32_0 = arith.constant 0 : i32
    return %arg0, %c0_i32 : i32, i32
  }
}

module attributes {stable_mosaic.version = 11 : i64} {
  func.func @_dw_kernel(%arg0: i32, %arg1: memref<9x64x16xbf16, #tpu.memory_space<vmem>>, %arg2: memref<9x16xf32, #tpu.memory_space<vmem>>, %arg3: memref<1x16xf32, #tpu.memory_space<vmem>>, %arg4: memref<64x16xbf16, #tpu.memory_space<vmem>>) attributes {dimension_semantics = [#tpu.dimension_semantics<parallel>], iteration_bounds = array<i64: 2>, scalar_prefetch = 0 : i64, scratch_operands = 0 : i64, tpu.core_type = #tpu.core_type<tc>, window_params = [{transform_indices = @transform_0, window_bounds = array<i64: 9, 64, 16>}, {pipeline_mode = #tpu.pipeline_mode<synchronous>, transform_indices = @transform_1, window_bounds = array<i64: 9, 16>}, {pipeline_mode = #tpu.pipeline_mode<synchronous>, transform_indices = @transform_2, window_bounds = array<i64: 1, 16>}, {transform_indices = @transform_3, window_bounds = array<i64: 64, 16>}]} {
    %cst = arith.constant 0.000000e+00 : f32
    %0 = vector.broadcast %cst : f32 to vector<64x16xf32>
    %c0 = arith.constant 0 : index
    %c0_0 = arith.constant 0 : index
    %c0_1 = arith.constant 0 : index
    %1 = vector.load %arg1[%c0, %c0_0, %c0_1] : memref<9x64x16xbf16, #tpu.memory_space<vmem>>, vector<1x64x16xbf16>
    %2 = vector.shape_cast %1 : vector<1x64x16xbf16> to vector<64x16xbf16>
    %3 = arith.extf %2 : vector<64x16xbf16> to vector<64x16xf32>
    %c0_2 = arith.constant 0 : index
    %c0_3 = arith.constant 0 : index
    %4 = vector.load %arg2[%c0_2, %c0_3] : memref<9x16xf32, #tpu.memory_space<vmem>>, vector<1x16xf32>
    %5 = vector.broadcast %4 : vector<1x16xf32> to vector<64x16xf32>
    %6 = arith.mulf %3, %5 : vector<64x16xf32>
    %7 = arith.addf %0, %6 : vector<64x16xf32>
    %c1 = arith.constant 1 : index
    %c0_4 = arith.constant 0 : index
    %c0_5 = arith.constant 0 : index
    %8 = vector.load %arg1[%c1, %c0_4, %c0_5] : memref<9x64x16xbf16, #tpu.memory_space<vmem>>, vector<1x64x16xbf16>
    %9 = vector.shape_cast %8 : vector<1x64x16xbf16> to vector<64x16xbf16>
    %10 = arith.extf %9 : vector<64x16xbf16> to vector<64x16xf32>
    %c1_6 = arith.constant 1 : index
    %c0_7 = arith.constant 0 : index
    %11 = vector.load %arg2[%c1_6, %c0_7] : memref<9x16xf32, #tpu.memory_space<vmem>>, vector<1x16xf32>
    %12 = vector.broadcast %11 : vector<1x16xf32> to vector<64x16xf32>
    %13 = arith.mulf %10, %12 : vector<64x16xf32>
    %14 = arith.addf %7, %13 : vector<64x16xf32>
    %c2 = arith.constant 2 : index
    %c0_8 = arith.constant 0 : index
    %c0_9 = arith.constant 0 : index
    %15 = vector.load %arg1[%c2, %c0_8, %c0_9] : memref<9x64x16xbf16, #tpu.memory_space<vmem>>, vector<1x64x16xbf16>
    %16 = vector.shape_cast %15 : vector<1x64x16xbf16> to vector<64x16xbf16>
    %17 = arith.extf %16 : vector<64x16xbf16> to vector<64x16xf32>
    %c2_10 = arith.constant 2 : index
    %c0_11 = arith.constant 0 : index
    %18 = vector.load %arg2[%c2_10, %c0_11] : memref<9x16xf32, #tpu.memory_space<vmem>>, vector<1x16xf32>
    %19 = vector.broadcast %18 : vector<1x16xf32> to vector<64x16xf32>
    %20 = arith.mulf %17, %19 : vector<64x16xf32>
    %21 = arith.addf %14, %20 : vector<64x16xf32>
    %c3 = arith.constant 3 : index
    %c0_12 = arith.constant 0 : index
    %c0_13 = arith.constant 0 : index
    %22 = vector.load %arg1[%c3, %c0_12, %c0_13] : memref<9x64x16xbf16, #tpu.memory_space<vmem>>, vector<1x64x16xbf16>
    %23 = vector.shape_cast %22 : vector<1x64x16xbf16> to vector<64x16xbf16>
    %24 = arith.extf %23 : vector<64x16xbf16> to vector<64x16xf32>
    %c3_14 = arith.constant 3 : index
    %c0_15 = arith.constant 0 : index
    %25 = vector.load %arg2[%c3_14, %c0_15] : memref<9x16xf32, #tpu.memory_space<vmem>>, vector<1x16xf32>
    %26 = vector.broadcast %25 : vector<1x16xf32> to vector<64x16xf32>
    %27 = arith.mulf %24, %26 : vector<64x16xf32>
    %28 = arith.addf %21, %27 : vector<64x16xf32>
    %c4 = arith.constant 4 : index
    %c0_16 = arith.constant 0 : index
    %c0_17 = arith.constant 0 : index
    %29 = vector.load %arg1[%c4, %c0_16, %c0_17] : memref<9x64x16xbf16, #tpu.memory_space<vmem>>, vector<1x64x16xbf16>
    %30 = vector.shape_cast %29 : vector<1x64x16xbf16> to vector<64x16xbf16>
    %31 = arith.extf %30 : vector<64x16xbf16> to vector<64x16xf32>
    %c4_18 = arith.constant 4 : index
    %c0_19 = arith.constant 0 : index
    %32 = vector.load %arg2[%c4_18, %c0_19] : memref<9x16xf32, #tpu.memory_space<vmem>>, vector<1x16xf32>
    %33 = vector.broadcast %32 : vector<1x16xf32> to vector<64x16xf32>
    %34 = arith.mulf %31, %33 : vector<64x16xf32>
    %35 = arith.addf %28, %34 : vector<64x16xf32>
    %c5 = arith.constant 5 : index
    %c0_20 = arith.constant 0 : index
    %c0_21 = arith.constant 0 : index
    %36 = vector.load %arg1[%c5, %c0_20, %c0_21] : memref<9x64x16xbf16, #tpu.memory_space<vmem>>, vector<1x64x16xbf16>
    %37 = vector.shape_cast %36 : vector<1x64x16xbf16> to vector<64x16xbf16>
    %38 = arith.extf %37 : vector<64x16xbf16> to vector<64x16xf32>
    %c5_22 = arith.constant 5 : index
    %c0_23 = arith.constant 0 : index
    %39 = vector.load %arg2[%c5_22, %c0_23] : memref<9x16xf32, #tpu.memory_space<vmem>>, vector<1x16xf32>
    %40 = vector.broadcast %39 : vector<1x16xf32> to vector<64x16xf32>
    %41 = arith.mulf %38, %40 : vector<64x16xf32>
    %42 = arith.addf %35, %41 : vector<64x16xf32>
    %c6 = arith.constant 6 : index
    %c0_24 = arith.constant 0 : index
    %c0_25 = arith.constant 0 : index
    %43 = vector.load %arg1[%c6, %c0_24, %c0_25] : memref<9x64x16xbf16, #tpu.memory_space<vmem>>, vector<1x64x16xbf16>
    %44 = vector.shape_cast %43 : vector<1x64x16xbf16> to vector<64x16xbf16>
    %45 = arith.extf %44 : vector<64x16xbf16> to vector<64x16xf32>
    %c6_26 = arith.constant 6 : index
    %c0_27 = arith.constant 0 : index
    %46 = vector.load %arg2[%c6_26, %c0_27] : memref<9x16xf32, #tpu.memory_space<vmem>>, vector<1x16xf32>
    %47 = vector.broadcast %46 : vector<1x16xf32> to vector<64x16xf32>
    %48 = arith.mulf %45, %47 : vector<64x16xf32>
    %49 = arith.addf %42, %48 : vector<64x16xf32>
    %c7 = arith.constant 7 : index
    %c0_28 = arith.constant 0 : index
    %c0_29 = arith.constant 0 : index
    %50 = vector.load %arg1[%c7, %c0_28, %c0_29] : memref<9x64x16xbf16, #tpu.memory_space<vmem>>, vector<1x64x16xbf16>
    %51 = vector.shape_cast %50 : vector<1x64x16xbf16> to vector<64x16xbf16>
    %52 = arith.extf %51 : vector<64x16xbf16> to vector<64x16xf32>
    %c7_30 = arith.constant 7 : index
    %c0_31 = arith.constant 0 : index
    %53 = vector.load %arg2[%c7_30, %c0_31] : memref<9x16xf32, #tpu.memory_space<vmem>>, vector<1x16xf32>
    %54 = vector.broadcast %53 : vector<1x16xf32> to vector<64x16xf32>
    %55 = arith.mulf %52, %54 : vector<64x16xf32>
    %56 = arith.addf %49, %55 : vector<64x16xf32>
    %c8 = arith.constant 8 : index
    %c0_32 = arith.constant 0 : index
    %c0_33 = arith.constant 0 : index
    %57 = vector.load %arg1[%c8, %c0_32, %c0_33] : memref<9x64x16xbf16, #tpu.memory_space<vmem>>, vector<1x64x16xbf16>
    %58 = vector.shape_cast %57 : vector<1x64x16xbf16> to vector<64x16xbf16>
    %59 = arith.extf %58 : vector<64x16xbf16> to vector<64x16xf32>
    %c8_34 = arith.constant 8 : index
    %c0_35 = arith.constant 0 : index
    %60 = vector.load %arg2[%c8_34, %c0_35] : memref<9x16xf32, #tpu.memory_space<vmem>>, vector<1x16xf32>
    %61 = vector.broadcast %60 : vector<1x16xf32> to vector<64x16xf32>
    %62 = arith.mulf %59, %61 : vector<64x16xf32>
    %63 = arith.addf %56, %62 : vector<64x16xf32>
    %c0_36 = arith.constant 0 : index
    %c0_37 = arith.constant 0 : index
    %64 = vector.load %arg3[%c0_36, %c0_37] : memref<1x16xf32, #tpu.memory_space<vmem>>, vector<1x16xf32>
    %65 = vector.broadcast %64 : vector<1x16xf32> to vector<64x16xf32>
    %66 = arith.addf %63, %65 : vector<64x16xf32>
    %cst_38 = arith.constant 0.000000e+00 : f32
    %67 = vector.broadcast %cst_38 : f32 to vector<64x16xf32>
    %68 = arith.maximumf %66, %67 : vector<64x16xf32>
    %69 = arith.truncf %68 : vector<64x16xf32> to vector<64x16xbf16>
    %c0_39 = arith.constant 0 : index
    %c0_40 = arith.constant 0 : index
    %70 = vector.load %arg4[%c0_39, %c0_40] : memref<64x16xbf16, #tpu.memory_space<vmem>>, vector<64x16xbf16>
    tpu.vector_store %arg4[%c0_39, %c0_40], %69 {strides = array<i32>} : memref<64x16xbf16, #tpu.memory_space<vmem>>, vector<64x16xbf16>,
    return
  }
  func.func @transform_0(%arg0: i32) -> (i32, i32, i32) {
    %c0_i32 = arith.constant 0 : i32
    %c0_i32_0 = arith.constant 0 : i32
    %c0_i32_1 = arith.constant 0 : i32
    return %c0_i32, %arg0, %c0_i32_0 : i32, i32, i32
  }
  func.func @transform_1(%arg0: i32) -> (i32, i32) {
    %c0_i32 = arith.constant 0 : i32
    %c0_i32_0 = arith.constant 0 : i32
    %c0_i32_1 = arith.constant 0 : i32
    return %c0_i32, %c0_i32_0 : i32, i32
  }
  func.func @transform_2(%arg0: i32) -> (i32, i32) {
    %c0_i32 = arith.constant 0 : i32
    %c0_i32_0 = arith.constant 0 : i32
    %c0_i32_1 = arith.constant 0 : i32
    return %c0_i32, %c0_i32_0 : i32, i32
  }
  func.func @transform_3(%arg0: i32) -> (i32, i32) {
    %c0_i32 = arith.constant 0 : i32
    %c0_i32_0 = arith.constant 0 : i32
    return %arg0, %c0_i32 : i32, i32
  }
}

module attributes {stable_mosaic.version = 11 : i64} {
  func.func @_mm_kernel(%arg0: i32, %arg1: memref<64x16xbf16, #tpu.memory_space<vmem>>, %arg2: memref<128x128xbf16, #tpu.memory_space<vmem>>, %arg3: memref<1x128xf32, #tpu.memory_space<vmem>>, %arg4: memref<64x16xbf16, #tpu.memory_space<vmem>>) attributes {dimension_semantics = [#tpu.dimension_semantics<parallel>], iteration_bounds = array<i64: 2>, scalar_prefetch = 0 : i64, scratch_operands = 0 : i64, tpu.core_type = #tpu.core_type<tc>, window_params = [{transform_indices = @transform_0, window_bounds = array<i64: 64, 16>}, {pipeline_mode = #tpu.pipeline_mode<synchronous>, transform_indices = @transform_1, window_bounds = array<i64: 128, 128>}, {pipeline_mode = #tpu.pipeline_mode<synchronous>, transform_indices = @transform_2, window_bounds = array<i64: 1, 128>}, {transform_indices = @transform_3, window_bounds = array<i64: 64, 16>}]} {
    %c0 = arith.constant 0 : index
    %c0_0 = arith.constant 0 : index
    %0 = vector.load %arg1[%c0, %c0_0] : memref<64x16xbf16, #tpu.memory_space<vmem>>, vector<64x16xbf16>
    %cst = arith.constant 0.000000e+00 : bf16
    %1 = vector.broadcast %cst : bf16 to vector<64x112xbf16>
    %2 = tpu.concatenate %0, %1 in 1 : vector<64x16xbf16>, vector<64x112xbf16> -> vector<64x128xbf16>
    %c0_1 = arith.constant 0 : index
    %c0_2 = arith.constant 0 : index
    %3 = vector.load %arg2[%c0_1, %c0_2] : memref<128x128xbf16, #tpu.memory_space<vmem>>, vector<128x128xbf16>
    %cst_3 = arith.constant dense<0.000000e+00> : vector<64x128xf32>
    %4 = tpu.matmul %2, %3, %cst_3 {dimension_numbers = #tpu.dot_dimension_numbers<[1], [0], [0], [1], [0, 0, 1, 1], [], []>} : vector<64x128xbf16>, vector<128x128xbf16>, vector<64x128xf32> -> vector<64x128xf32>
    %c0_4 = arith.constant 0 : index
    %c0_5 = arith.constant 0 : index
    %5 = vector.load %arg3[%c0_4, %c0_5] : memref<1x128xf32, #tpu.memory_space<vmem>>, vector<1x128xf32>
    %6 = vector.broadcast %5 : vector<1x128xf32> to vector<64x128xf32>
    %7 = arith.addf %4, %6 : vector<64x128xf32>
    %8 = vector.extract_strided_slice %7 {offsets = [0, 0], sizes = [64, 16], strides = [1, 1]} : vector<64x128xf32> to vector<64x16xf32>
    %9 = arith.truncf %8 : vector<64x16xf32> to vector<64x16xbf16>
    %c0_6 = arith.constant 0 : index
    %c0_7 = arith.constant 0 : index
    %10 = vector.load %arg4[%c0_6, %c0_7] : memref<64x16xbf16, #tpu.memory_space<vmem>>, vector<64x16xbf16>
    tpu.vector_store %arg4[%c0_6, %c0_7], %9 {strides = array<i32>} : memref<64x16xbf16, #tpu.memory_space<vmem>>, vector<64x16xbf16>,
    return
  }
  func.func @transform_0(%arg0: i32) -> (i32, i32) {
    %c0_i32 = arith.constant 0 : i32
    %c0_i32_0 = arith.constant 0 : i32
    return %arg0, %c0_i32 : i32, i32
  }
  func.func @transform_1(%arg0: i32) -> (i32, i32) {
    %c0_i32 = arith.constant 0 : i32
    %c0_i32_0 = arith.constant 0 : i32
    %c0_i32_1 = arith.constant 0 : i32
    return %c0_i32, %c0_i32_0 : i32, i32
  }
  func.func @transform_2(%arg0: i32) -> (i32, i32) {
    %c0_i32 = arith.constant 0 : i32
    %c0_i32_0 = arith.constant 0 : i32
    %c0_i32_1 = arith.constant 0 : i32
    return %c0_i32, %c0_i32_0 : i32, i32
  }
  func.func @transform_3(%arg0: i32) -> (i32, i32) {
    %c0_i32 = arith.constant 0 : i32
    %c0_i32_0 = arith.constant 0 : i32
    return %arg0, %c0_i32 : i32, i32
  }
}

module attributes {stable_mosaic.version = 11 : i64} {
  func.func @_mm_kernel(%arg0: i32, %arg1: memref<64x16xbf16, #tpu.memory_space<vmem>>, %arg2: memref<128x128xbf16, #tpu.memory_space<vmem>>, %arg3: memref<1x128xf32, #tpu.memory_space<vmem>>, %arg4: memref<64x72xbf16, #tpu.memory_space<vmem>>) attributes {dimension_semantics = [#tpu.dimension_semantics<parallel>], iteration_bounds = array<i64: 2>, scalar_prefetch = 0 : i64, scratch_operands = 0 : i64, tpu.core_type = #tpu.core_type<tc>, window_params = [{transform_indices = @transform_0, window_bounds = array<i64: 64, 16>}, {pipeline_mode = #tpu.pipeline_mode<synchronous>, transform_indices = @transform_1, window_bounds = array<i64: 128, 128>}, {pipeline_mode = #tpu.pipeline_mode<synchronous>, transform_indices = @transform_2, window_bounds = array<i64: 1, 128>}, {transform_indices = @transform_3, window_bounds = array<i64: 64, 72>}]} {
    %c0 = arith.constant 0 : index
    %c0_0 = arith.constant 0 : index
    %0 = vector.load %arg1[%c0, %c0_0] : memref<64x16xbf16, #tpu.memory_space<vmem>>, vector<64x16xbf16>
    %cst = arith.constant 0.000000e+00 : bf16
    %1 = vector.broadcast %cst : bf16 to vector<64x112xbf16>
    %2 = tpu.concatenate %0, %1 in 1 : vector<64x16xbf16>, vector<64x112xbf16> -> vector<64x128xbf16>
    %c0_1 = arith.constant 0 : index
    %c0_2 = arith.constant 0 : index
    %3 = vector.load %arg2[%c0_1, %c0_2] : memref<128x128xbf16, #tpu.memory_space<vmem>>, vector<128x128xbf16>
    %cst_3 = arith.constant dense<0.000000e+00> : vector<64x128xf32>
    %4 = tpu.matmul %2, %3, %cst_3 {dimension_numbers = #tpu.dot_dimension_numbers<[1], [0], [0], [1], [0, 0, 1, 1], [], []>} : vector<64x128xbf16>, vector<128x128xbf16>, vector<64x128xf32> -> vector<64x128xf32>
    %c0_4 = arith.constant 0 : index
    %c0_5 = arith.constant 0 : index
    %5 = vector.load %arg3[%c0_4, %c0_5] : memref<1x128xf32, #tpu.memory_space<vmem>>, vector<1x128xf32>
    %6 = vector.broadcast %5 : vector<1x128xf32> to vector<64x128xf32>
    %7 = arith.addf %4, %6 : vector<64x128xf32>
    %cst_6 = arith.constant 0.000000e+00 : f32
    %8 = vector.broadcast %cst_6 : f32 to vector<64x128xf32>
    %9 = arith.maximumf %7, %8 : vector<64x128xf32>
    %10 = vector.extract_strided_slice %9 {offsets = [0, 0], sizes = [64, 72], strides = [1, 1]} : vector<64x128xf32> to vector<64x72xf32>
    %11 = arith.truncf %10 : vector<64x72xf32> to vector<64x72xbf16>
    %c0_7 = arith.constant 0 : index
    %c0_8 = arith.constant 0 : index
    %12 = vector.load %arg4[%c0_7, %c0_8] : memref<64x72xbf16, #tpu.memory_space<vmem>>, vector<64x72xbf16>
    tpu.vector_store %arg4[%c0_7, %c0_8], %11 {strides = array<i32>} : memref<64x72xbf16, #tpu.memory_space<vmem>>, vector<64x72xbf16>,
    return
  }
  func.func @transform_0(%arg0: i32) -> (i32, i32) {
    %c0_i32 = arith.constant 0 : i32
    %c0_i32_0 = arith.constant 0 : i32
    return %arg0, %c0_i32 : i32, i32
  }
  func.func @transform_1(%arg0: i32) -> (i32, i32) {
    %c0_i32 = arith.constant 0 : i32
    %c0_i32_0 = arith.constant 0 : i32
    %c0_i32_1 = arith.constant 0 : i32
    return %c0_i32, %c0_i32_0 : i32, i32
  }
  func.func @transform_2(%arg0: i32) -> (i32, i32) {
    %c0_i32 = arith.constant 0 : i32
    %c0_i32_0 = arith.constant 0 : i32
    %c0_i32_1 = arith.constant 0 : i32
    return %c0_i32, %c0_i32_0 : i32, i32
  }
  func.func @transform_3(%arg0: i32) -> (i32, i32) {
    %c0_i32 = arith.constant 0 : i32
    %c0_i32_0 = arith.constant 0 : i32
    return %arg0, %c0_i32 : i32, i32
  }
}

module attributes {stable_mosaic.version = 11 : i64} {
  func.func @_mm_kernel(%arg0: i32, %arg1: memref<64x16xbf16, #tpu.memory_space<vmem>>, %arg2: memref<128x128xbf16, #tpu.memory_space<vmem>>, %arg3: memref<1x128xf32, #tpu.memory_space<vmem>>, %arg4: memref<64x32xbf16, #tpu.memory_space<vmem>>) attributes {dimension_semantics = [#tpu.dimension_semantics<parallel>], iteration_bounds = array<i64: 2>, scalar_prefetch = 0 : i64, scratch_operands = 0 : i64, tpu.core_type = #tpu.core_type<tc>, window_params = [{transform_indices = @transform_0, window_bounds = array<i64: 64, 16>}, {pipeline_mode = #tpu.pipeline_mode<synchronous>, transform_indices = @transform_1, window_bounds = array<i64: 128, 128>}, {pipeline_mode = #tpu.pipeline_mode<synchronous>, transform_indices = @transform_2, window_bounds = array<i64: 1, 128>}, {transform_indices = @transform_3, window_bounds = array<i64: 64, 32>}]} {
    %c0 = arith.constant 0 : index
    %c0_0 = arith.constant 0 : index
    %0 = vector.load %arg1[%c0, %c0_0] : memref<64x16xbf16, #tpu.memory_space<vmem>>, vector<64x16xbf16>
    %cst = arith.constant 0.000000e+00 : bf16
    %1 = vector.broadcast %cst : bf16 to vector<64x112xbf16>
    %2 = tpu.concatenate %0, %1 in 1 : vector<64x16xbf16>, vector<64x112xbf16> -> vector<64x128xbf16>
    %c0_1 = arith.constant 0 : index
    %c0_2 = arith.constant 0 : index
    %3 = vector.load %arg2[%c0_1, %c0_2] : memref<128x128xbf16, #tpu.memory_space<vmem>>, vector<128x128xbf16>
    %cst_3 = arith.constant dense<0.000000e+00> : vector<64x128xf32>
    %4 = tpu.matmul %2, %3, %cst_3 {dimension_numbers = #tpu.dot_dimension_numbers<[1], [0], [0], [1], [0, 0, 1, 1], [], []>} : vector<64x128xbf16>, vector<128x128xbf16>, vector<64x128xf32> -> vector<64x128xf32>
    %c0_4 = arith.constant 0 : index
    %c0_5 = arith.constant 0 : index
    %5 = vector.load %arg3[%c0_4, %c0_5] : memref<1x128xf32, #tpu.memory_space<vmem>>, vector<1x128xf32>
    %6 = vector.broadcast %5 : vector<1x128xf32> to vector<64x128xf32>
    %7 = arith.addf %4, %6 : vector<64x128xf32>
    %8 = vector.extract_strided_slice %7 {offsets = [0, 0], sizes = [64, 32], strides = [1, 1]} : vector<64x128xf32> to vector<64x32xf32>
    %9 = arith.truncf %8 : vector<64x32xf32> to vector<64x32xbf16>
    %c0_6 = arith.constant 0 : index
    %c0_7 = arith.constant 0 : index
    %10 = vector.load %arg4[%c0_6, %c0_7] : memref<64x32xbf16, #tpu.memory_space<vmem>>, vector<64x32xbf16>
    tpu.vector_store %arg4[%c0_6, %c0_7], %9 {strides = array<i32>} : memref<64x32xbf16, #tpu.memory_space<vmem>>, vector<64x32xbf16>,
    return
  }
  func.func @transform_0(%arg0: i32) -> (i32, i32) {
    %c0_i32 = arith.constant 0 : i32
    %c0_i32_0 = arith.constant 0 : i32
    return %arg0, %c0_i32 : i32, i32
  }
  func.func @transform_1(%arg0: i32) -> (i32, i32) {
    %c0_i32 = arith.constant 0 : i32
    %c0_i32_0 = arith.constant 0 : i32
    %c0_i32_1 = arith.constant 0 : i32
    return %c0_i32, %c0_i32_0 : i32, i32
  }
  func.func @transform_2(%arg0: i32) -> (i32, i32) {
    %c0_i32 = arith.constant 0 : i32
    %c0_i32_0 = arith.constant 0 : i32
    %c0_i32_1 = arith.constant 0 : i32
    return %c0_i32, %c0_i32_0 : i32, i32
  }
  func.func @transform_3(%arg0: i32) -> (i32, i32) {
    %c0_i32 = arith.constant 0 : i32
    %c0_i32_0 = arith.constant 0 : i32
    return %arg0, %c0_i32 : i32, i32
  }
}

module attributes {stable_mosaic.version = 11 : i64} {
  func.func @_mm_kernel(%arg0: i32, %arg1: memref<32x72xbf16, #tpu.memory_space<vmem>>, %arg2: memref<128x128xbf16, #tpu.memory_space<vmem>>, %arg3: memref<1x128xf32, #tpu.memory_space<vmem>>, %arg4: memref<32x24xbf16, #tpu.memory_space<vmem>>) attributes {dimension_semantics = [#tpu.dimension_semantics<parallel>], iteration_bounds = array<i64: 1>, scalar_prefetch = 0 : i64, scratch_operands = 0 : i64, tpu.core_type = #tpu.core_type<tc>, window_params = [{transform_indices = @transform_0, window_bounds = array<i64: 32, 72>}, {pipeline_mode = #tpu.pipeline_mode<synchronous>, transform_indices = @transform_1, window_bounds = array<i64: 128, 128>}, {pipeline_mode = #tpu.pipeline_mode<synchronous>, transform_indices = @transform_2, window_bounds = array<i64: 1, 128>}, {transform_indices = @transform_3, window_bounds = array<i64: 32, 24>}]} {
    %c0 = arith.constant 0 : index
    %c0_0 = arith.constant 0 : index
    %0 = vector.load %arg1[%c0, %c0_0] : memref<32x72xbf16, #tpu.memory_space<vmem>>, vector<32x72xbf16>
    %cst = arith.constant 0.000000e+00 : bf16
    %1 = vector.broadcast %cst : bf16 to vector<32x56xbf16>
    %2 = tpu.concatenate %0, %1 in 1 : vector<32x72xbf16>, vector<32x56xbf16> -> vector<32x128xbf16>
    %c0_1 = arith.constant 0 : index
    %c0_2 = arith.constant 0 : index
    %3 = vector.load %arg2[%c0_1, %c0_2] : memref<128x128xbf16, #tpu.memory_space<vmem>>, vector<128x128xbf16>
    %cst_3 = arith.constant dense<0.000000e+00> : vector<32x128xf32>
    %4 = tpu.matmul %2, %3, %cst_3 {dimension_numbers = #tpu.dot_dimension_numbers<[1], [0], [0], [1], [0, 0, 1, 1], [], []>} : vector<32x128xbf16>, vector<128x128xbf16>, vector<32x128xf32> -> vector<32x128xf32>
    %c0_4 = arith.constant 0 : index
    %c0_5 = arith.constant 0 : index
    %5 = vector.load %arg3[%c0_4, %c0_5] : memref<1x128xf32, #tpu.memory_space<vmem>>, vector<1x128xf32>
    %6 = vector.broadcast %5 : vector<1x128xf32> to vector<32x128xf32>
    %7 = arith.addf %4, %6 : vector<32x128xf32>
    %8 = vector.extract_strided_slice %7 {offsets = [0, 0], sizes = [32, 24], strides = [1, 1]} : vector<32x128xf32> to vector<32x24xf32>
    %9 = arith.truncf %8 : vector<32x24xf32> to vector<32x24xbf16>
    %c0_6 = arith.constant 0 : index
    %c0_7 = arith.constant 0 : index
    %10 = vector.load %arg4[%c0_6, %c0_7] : memref<32x24xbf16, #tpu.memory_space<vmem>>, vector<32x24xbf16>
    tpu.vector_store %arg4[%c0_6, %c0_7], %9 {strides = array<i32>} : memref<32x24xbf16, #tpu.memory_space<vmem>>, vector<32x24xbf16>,
    return
  }
  func.func @transform_0(%arg0: i32) -> (i32, i32) {
    %c0_i32 = arith.constant 0 : i32
    %c0_i32_0 = arith.constant 0 : i32
    return %arg0, %c0_i32 : i32, i32
  }
  func.func @transform_1(%arg0: i32) -> (i32, i32) {
    %c0_i32 = arith.constant 0 : i32
    %c0_i32_0 = arith.constant 0 : i32
    %c0_i32_1 = arith.constant 0 : i32
    return %c0_i32, %c0_i32_0 : i32, i32
  }
  func.func @transform_2(%arg0: i32) -> (i32, i32) {
    %c0_i32 = arith.constant 0 : i32
    %c0_i32_0 = arith.constant 0 : i32
    %c0_i32_1 = arith.constant 0 : i32
    return %c0_i32, %c0_i32_0 : i32, i32
  }
  func.func @transform_3(%arg0: i32) -> (i32, i32) {
    %c0_i32 = arith.constant 0 : i32
    %c0_i32_0 = arith.constant 0 : i32
    return %arg0, %c0_i32 : i32, i32
  }
}

module attributes {stable_mosaic.version = 11 : i64} {
  func.func @_dw_kernel(%arg0: i32, %arg1: memref<9x32x72xbf16, #tpu.memory_space<vmem>>, %arg2: memref<9x72xf32, #tpu.memory_space<vmem>>, %arg3: memref<1x72xf32, #tpu.memory_space<vmem>>, %arg4: memref<32x72xbf16, #tpu.memory_space<vmem>>) attributes {dimension_semantics = [#tpu.dimension_semantics<parallel>], iteration_bounds = array<i64: 1>, scalar_prefetch = 0 : i64, scratch_operands = 0 : i64, tpu.core_type = #tpu.core_type<tc>, window_params = [{transform_indices = @transform_0, window_bounds = array<i64: 9, 32, 72>}, {pipeline_mode = #tpu.pipeline_mode<synchronous>, transform_indices = @transform_1, window_bounds = array<i64: 9, 72>}, {pipeline_mode = #tpu.pipeline_mode<synchronous>, transform_indices = @transform_2, window_bounds = array<i64: 1, 72>}, {transform_indices = @transform_3, window_bounds = array<i64: 32, 72>}]} {
    %cst = arith.constant 0.000000e+00 : f32
    %0 = vector.broadcast %cst : f32 to vector<32x72xf32>
    %c0 = arith.constant 0 : index
    %c0_0 = arith.constant 0 : index
    %c0_1 = arith.constant 0 : index
    %1 = vector.load %arg1[%c0, %c0_0, %c0_1] : memref<9x32x72xbf16, #tpu.memory_space<vmem>>, vector<1x32x72xbf16>
    %2 = vector.shape_cast %1 : vector<1x32x72xbf16> to vector<32x72xbf16>
    %3 = arith.extf %2 : vector<32x72xbf16> to vector<32x72xf32>
    %c0_2 = arith.constant 0 : index
    %c0_3 = arith.constant 0 : index
    %4 = vector.load %arg2[%c0_2, %c0_3] : memref<9x72xf32, #tpu.memory_space<vmem>>, vector<1x72xf32>
    %5 = vector.broadcast %4 : vector<1x72xf32> to vector<32x72xf32>
    %6 = arith.mulf %3, %5 : vector<32x72xf32>
    %7 = arith.addf %0, %6 : vector<32x72xf32>
    %c1 = arith.constant 1 : index
    %c0_4 = arith.constant 0 : index
    %c0_5 = arith.constant 0 : index
    %8 = vector.load %arg1[%c1, %c0_4, %c0_5] : memref<9x32x72xbf16, #tpu.memory_space<vmem>>, vector<1x32x72xbf16>
    %9 = vector.shape_cast %8 : vector<1x32x72xbf16> to vector<32x72xbf16>
    %10 = arith.extf %9 : vector<32x72xbf16> to vector<32x72xf32>
    %c1_6 = arith.constant 1 : index
    %c0_7 = arith.constant 0 : index
    %11 = vector.load %arg2[%c1_6, %c0_7] : memref<9x72xf32, #tpu.memory_space<vmem>>, vector<1x72xf32>
    %12 = vector.broadcast %11 : vector<1x72xf32> to vector<32x72xf32>
    %13 = arith.mulf %10, %12 : vector<32x72xf32>
    %14 = arith.addf %7, %13 : vector<32x72xf32>
    %c2 = arith.constant 2 : index
    %c0_8 = arith.constant 0 : index
    %c0_9 = arith.constant 0 : index
    %15 = vector.load %arg1[%c2, %c0_8, %c0_9] : memref<9x32x72xbf16, #tpu.memory_space<vmem>>, vector<1x32x72xbf16>
    %16 = vector.shape_cast %15 : vector<1x32x72xbf16> to vector<32x72xbf16>
    %17 = arith.extf %16 : vector<32x72xbf16> to vector<32x72xf32>
    %c2_10 = arith.constant 2 : index
    %c0_11 = arith.constant 0 : index
    %18 = vector.load %arg2[%c2_10, %c0_11] : memref<9x72xf32, #tpu.memory_space<vmem>>, vector<1x72xf32>
    %19 = vector.broadcast %18 : vector<1x72xf32> to vector<32x72xf32>
    %20 = arith.mulf %17, %19 : vector<32x72xf32>
    %21 = arith.addf %14, %20 : vector<32x72xf32>
    %c3 = arith.constant 3 : index
    %c0_12 = arith.constant 0 : index
    %c0_13 = arith.constant 0 : index
    %22 = vector.load %arg1[%c3, %c0_12, %c0_13] : memref<9x32x72xbf16, #tpu.memory_space<vmem>>, vector<1x32x72xbf16>
    %23 = vector.shape_cast %22 : vector<1x32x72xbf16> to vector<32x72xbf16>
    %24 = arith.extf %23 : vector<32x72xbf16> to vector<32x72xf32>
    %c3_14 = arith.constant 3 : index
    %c0_15 = arith.constant 0 : index
    %25 = vector.load %arg2[%c3_14, %c0_15] : memref<9x72xf32, #tpu.memory_space<vmem>>, vector<1x72xf32>
    %26 = vector.broadcast %25 : vector<1x72xf32> to vector<32x72xf32>
    %27 = arith.mulf %24, %26 : vector<32x72xf32>
    %28 = arith.addf %21, %27 : vector<32x72xf32>
    %c4 = arith.constant 4 : index
    %c0_16 = arith.constant 0 : index
    %c0_17 = arith.constant 0 : index
    %29 = vector.load %arg1[%c4, %c0_16, %c0_17] : memref<9x32x72xbf16, #tpu.memory_space<vmem>>, vector<1x32x72xbf16>
    %30 = vector.shape_cast %29 : vector<1x32x72xbf16> to vector<32x72xbf16>
    %31 = arith.extf %30 : vector<32x72xbf16> to vector<32x72xf32>
    %c4_18 = arith.constant 4 : index
    %c0_19 = arith.constant 0 : index
    %32 = vector.load %arg2[%c4_18, %c0_19] : memref<9x72xf32, #tpu.memory_space<vmem>>, vector<1x72xf32>
    %33 = vector.broadcast %32 : vector<1x72xf32> to vector<32x72xf32>
    %34 = arith.mulf %31, %33 : vector<32x72xf32>
    %35 = arith.addf %28, %34 : vector<32x72xf32>
    %c5 = arith.constant 5 : index
    %c0_20 = arith.constant 0 : index
    %c0_21 = arith.constant 0 : index
    %36 = vector.load %arg1[%c5, %c0_20, %c0_21] : memref<9x32x72xbf16, #tpu.memory_space<vmem>>, vector<1x32x72xbf16>
    %37 = vector.shape_cast %36 : vector<1x32x72xbf16> to vector<32x72xbf16>
    %38 = arith.extf %37 : vector<32x72xbf16> to vector<32x72xf32>
    %c5_22 = arith.constant 5 : index
    %c0_23 = arith.constant 0 : index
    %39 = vector.load %arg2[%c5_22, %c0_23] : memref<9x72xf32, #tpu.memory_space<vmem>>, vector<1x72xf32>
    %40 = vector.broadcast %39 : vector<1x72xf32> to vector<32x72xf32>
    %41 = arith.mulf %38, %40 : vector<32x72xf32>
    %42 = arith.addf %35, %41 : vector<32x72xf32>
    %c6 = arith.constant 6 : index
    %c0_24 = arith.constant 0 : index
    %c0_25 = arith.constant 0 : index
    %43 = vector.load %arg1[%c6, %c0_24, %c0_25] : memref<9x32x72xbf16, #tpu.memory_space<vmem>>, vector<1x32x72xbf16>
    %44 = vector.shape_cast %43 : vector<1x32x72xbf16> to vector<32x72xbf16>
    %45 = arith.extf %44 : vector<32x72xbf16> to vector<32x72xf32>
    %c6_26 = arith.constant 6 : index
    %c0_27 = arith.constant 0 : index
    %46 = vector.load %arg2[%c6_26, %c0_27] : memref<9x72xf32, #tpu.memory_space<vmem>>, vector<1x72xf32>
    %47 = vector.broadcast %46 : vector<1x72xf32> to vector<32x72xf32>
    %48 = arith.mulf %45, %47 : vector<32x72xf32>
    %49 = arith.addf %42, %48 : vector<32x72xf32>
    %c7 = arith.constant 7 : index
    %c0_28 = arith.constant 0 : index
    %c0_29 = arith.constant 0 : index
    %50 = vector.load %arg1[%c7, %c0_28, %c0_29] : memref<9x32x72xbf16, #tpu.memory_space<vmem>>, vector<1x32x72xbf16>
    %51 = vector.shape_cast %50 : vector<1x32x72xbf16> to vector<32x72xbf16>
    %52 = arith.extf %51 : vector<32x72xbf16> to vector<32x72xf32>
    %c7_30 = arith.constant 7 : index
    %c0_31 = arith.constant 0 : index
    %53 = vector.load %arg2[%c7_30, %c0_31] : memref<9x72xf32, #tpu.memory_space<vmem>>, vector<1x72xf32>
    %54 = vector.broadcast %53 : vector<1x72xf32> to vector<32x72xf32>
    %55 = arith.mulf %52, %54 : vector<32x72xf32>
    %56 = arith.addf %49, %55 : vector<32x72xf32>
    %c8 = arith.constant 8 : index
    %c0_32 = arith.constant 0 : index
    %c0_33 = arith.constant 0 : index
    %57 = vector.load %arg1[%c8, %c0_32, %c0_33] : memref<9x32x72xbf16, #tpu.memory_space<vmem>>, vector<1x32x72xbf16>
    %58 = vector.shape_cast %57 : vector<1x32x72xbf16> to vector<32x72xbf16>
    %59 = arith.extf %58 : vector<32x72xbf16> to vector<32x72xf32>
    %c8_34 = arith.constant 8 : index
    %c0_35 = arith.constant 0 : index
    %60 = vector.load %arg2[%c8_34, %c0_35] : memref<9x72xf32, #tpu.memory_space<vmem>>, vector<1x72xf32>
    %61 = vector.broadcast %60 : vector<1x72xf32> to vector<32x72xf32>
    %62 = arith.mulf %59, %61 : vector<32x72xf32>
    %63 = arith.addf %56, %62 : vector<32x72xf32>
    %c0_36 = arith.constant 0 : index
    %c0_37 = arith.constant 0 : index
    %64 = vector.load %arg3[%c0_36, %c0_37] : memref<1x72xf32, #tpu.memory_space<vmem>>, vector<1x72xf32>
    %65 = vector.broadcast %64 : vector<1x72xf32> to vector<32x72xf32>
    %66 = arith.addf %63, %65 : vector<32x72xf32>
    %cst_38 = arith.constant 0.000000e+00 : f32
    %67 = vector.broadcast %cst_38 : f32 to vector<32x72xf32>
    %68 = arith.maximumf %66, %67 : vector<32x72xf32>
    %69 = arith.truncf %68 : vector<32x72xf32> to vector<32x72xbf16>
    %c0_39 = arith.constant 0 : index
    %c0_40 = arith.constant 0 : index
    %70 = vector.load %arg4[%c0_39, %c0_40] : memref<32x72xbf16, #tpu.memory_space<vmem>>, vector<32x72xbf16>
    tpu.vector_store %arg4[%c0_39, %c0_40], %69 {strides = array<i32>} : memref<32x72xbf16, #tpu.memory_space<vmem>>, vector<32x72xbf16>,
    return
  }
  func.func @transform_0(%arg0: i32) -> (i32, i32, i32) {
    %c0_i32 = arith.constant 0 : i32
    %c0_i32_0 = arith.constant 0 : i32
    %c0_i32_1 = arith.constant 0 : i32
    return %c0_i32, %arg0, %c0_i32_0 : i32, i32, i32
  }
  func.func @transform_1(%arg0: i32) -> (i32, i32) {
    %c0_i32 = arith.constant 0 : i32
    %c0_i32_0 = arith.constant 0 : i32
    %c0_i32_1 = arith.constant 0 : i32
    return %c0_i32, %c0_i32_0 : i32, i32
  }
  func.func @transform_2(%arg0: i32) -> (i32, i32) {
    %c0_i32 = arith.constant 0 : i32
    %c0_i32_0 = arith.constant 0 : i32
    %c0_i32_1 = arith.constant 0 : i32
    return %c0_i32, %c0_i32_0 : i32, i32
  }
  func.func @transform_3(%arg0: i32) -> (i32, i32) {
    %c0_i32 = arith.constant 0 : i32
    %c0_i32_0 = arith.constant 0 : i32
    return %arg0, %c0_i32 : i32, i32
  }
}

module attributes {stable_mosaic.version = 11 : i64} {
  func.func @_mm_kernel(%arg0: i32, %arg1: memref<32x24xbf16, #tpu.memory_space<vmem>>, %arg2: memref<128x128xbf16, #tpu.memory_space<vmem>>, %arg3: memref<1x128xf32, #tpu.memory_space<vmem>>, %arg4: memref<32x96xbf16, #tpu.memory_space<vmem>>) attributes {dimension_semantics = [#tpu.dimension_semantics<parallel>], iteration_bounds = array<i64: 1>, scalar_prefetch = 0 : i64, scratch_operands = 0 : i64, tpu.core_type = #tpu.core_type<tc>, window_params = [{transform_indices = @transform_0, window_bounds = array<i64: 32, 24>}, {pipeline_mode = #tpu.pipeline_mode<synchronous>, transform_indices = @transform_1, window_bounds = array<i64: 128, 128>}, {pipeline_mode = #tpu.pipeline_mode<synchronous>, transform_indices = @transform_2, window_bounds = array<i64: 1, 128>}, {transform_indices = @transform_3, window_bounds = array<i64: 32, 96>}]} {
    %c0 = arith.constant 0 : index
    %c0_0 = arith.constant 0 : index
    %0 = vector.load %arg1[%c0, %c0_0] : memref<32x24xbf16, #tpu.memory_space<vmem>>, vector<32x24xbf16>
    %cst = arith.constant 0.000000e+00 : bf16
    %1 = vector.broadcast %cst : bf16 to vector<32x104xbf16>
    %2 = tpu.concatenate %0, %1 in 1 : vector<32x24xbf16>, vector<32x104xbf16> -> vector<32x128xbf16>
    %c0_1 = arith.constant 0 : index
    %c0_2 = arith.constant 0 : index
    %3 = vector.load %arg2[%c0_1, %c0_2] : memref<128x128xbf16, #tpu.memory_space<vmem>>, vector<128x128xbf16>
    %cst_3 = arith.constant dense<0.000000e+00> : vector<32x128xf32>
    %4 = tpu.matmul %2, %3, %cst_3 {dimension_numbers = #tpu.dot_dimension_numbers<[1], [0], [0], [1], [0, 0, 1, 1], [], []>} : vector<32x128xbf16>, vector<128x128xbf16>, vector<32x128xf32> -> vector<32x128xf32>
    %c0_4 = arith.constant 0 : index
    %c0_5 = arith.constant 0 : index
    %5 = vector.load %arg3[%c0_4, %c0_5] : memref<1x128xf32, #tpu.memory_space<vmem>>, vector<1x128xf32>
    %6 = vector.broadcast %5 : vector<1x128xf32> to vector<32x128xf32>
    %7 = arith.addf %4, %6 : vector<32x128xf32>
    %cst_6 = arith.constant 3.000000e+00 : f32
    %8 = vector.broadcast %cst_6 : f32 to vector<32x128xf32>
    %9 = arith.addf %7, %8 : vector<32x128xf32>
    %cst_7 = arith.constant 0.000000e+00 : f32
    %cst_8 = arith.constant 6.000000e+00 : f32
    %10 = vector.broadcast %cst_7 : f32 to vector<32x128xf32>
    %11 = arith.maximumf %10, %9 : vector<32x128xf32>
    %12 = vector.broadcast %cst_8 : f32 to vector<32x128xf32>
    %13 = arith.minimumf %12, %11 : vector<32x128xf32>
    %14 = arith.mulf %7, %13 : vector<32x128xf32>
    %cst_9 = arith.constant 0.166666672 : f32
    %15 = vector.broadcast %cst_9 : f32 to vector<32x128xf32>
    %16 = arith.mulf %14, %15 : vector<32x128xf32>
    %17 = vector.extract_strided_slice %16 {offsets = [0, 0], sizes = [32, 96], strides = [1, 1]} : vector<32x128xf32> to vector<32x96xf32>
    %18 = arith.truncf %17 : vector<32x96xf32> to vector<32x96xbf16>
    %c0_10 = arith.constant 0 : index
    %c0_11 = arith.constant 0 : index
    %19 = vector.load %arg4[%c0_10, %c0_11] : memref<32x96xbf16, #tpu.memory_space<vmem>>, vector<32x96xbf16>
    tpu.vector_store %arg4[%c0_10, %c0_11], %18 {strides = array<i32>} : memref<32x96xbf16, #tpu.memory_space<vmem>>, vector<32x96xbf16>,
    return
  }
  func.func @transform_0(%arg0: i32) -> (i32, i32) {
    %c0_i32 = arith.constant 0 : i32
    %c0_i32_0 = arith.constant 0 : i32
    return %arg0, %c0_i32 : i32, i32
  }
  func.func @transform_1(%arg0: i32) -> (i32, i32) {
    %c0_i32 = arith.constant 0 : i32
    %c0_i32_0 = arith.constant 0 : i32
    %c0_i32_1 = arith.constant 0 : i32
    return %c0_i32, %c0_i32_0 : i32, i32
  }
  func.func @transform_2(%arg0: i32) -> (i32, i32) {
    %c0_i32 = arith.constant 0 : i32
    %c0_i32_0 = arith.constant 0 : i32
    %c0_i32_1 = arith.constant 0 : i32
    return %c0_i32, %c0_i32_0 : i32, i32
  }
  func.func @transform_3(%arg0: i32) -> (i32, i32) {
    %c0_i32 = arith.constant 0 : i32
    %c0_i32_0 = arith.constant 0 : i32
    return %arg0, %c0_i32 : i32, i32
  }
}

module attributes {stable_mosaic.version = 11 : i64} {
  func.func @_mm_kernel(%arg0: i32, %arg1: memref<32x24xbf16, #tpu.memory_space<vmem>>, %arg2: memref<128x128xbf16, #tpu.memory_space<vmem>>, %arg3: memref<1x128xf32, #tpu.memory_space<vmem>>, %arg4: memref<32x32xbf16, #tpu.memory_space<vmem>>) attributes {dimension_semantics = [#tpu.dimension_semantics<parallel>], iteration_bounds = array<i64: 1>, scalar_prefetch = 0 : i64, scratch_operands = 0 : i64, tpu.core_type = #tpu.core_type<tc>, window_params = [{transform_indices = @transform_0, window_bounds = array<i64: 32, 24>}, {pipeline_mode = #tpu.pipeline_mode<synchronous>, transform_indices = @transform_1, window_bounds = array<i64: 128, 128>}, {pipeline_mode = #tpu.pipeline_mode<synchronous>, transform_indices = @transform_2, window_bounds = array<i64: 1, 128>}, {transform_indices = @transform_3, window_bounds = array<i64: 32, 32>}]} {
    %c0 = arith.constant 0 : index
    %c0_0 = arith.constant 0 : index
    %0 = vector.load %arg1[%c0, %c0_0] : memref<32x24xbf16, #tpu.memory_space<vmem>>, vector<32x24xbf16>
    %cst = arith.constant 0.000000e+00 : bf16
    %1 = vector.broadcast %cst : bf16 to vector<32x104xbf16>
    %2 = tpu.concatenate %0, %1 in 1 : vector<32x24xbf16>, vector<32x104xbf16> -> vector<32x128xbf16>
    %c0_1 = arith.constant 0 : index
    %c0_2 = arith.constant 0 : index
    %3 = vector.load %arg2[%c0_1, %c0_2] : memref<128x128xbf16, #tpu.memory_space<vmem>>, vector<128x128xbf16>
    %cst_3 = arith.constant dense<0.000000e+00> : vector<32x128xf32>
    %4 = tpu.matmul %2, %3, %cst_3 {dimension_numbers = #tpu.dot_dimension_numbers<[1], [0], [0], [1], [0, 0, 1, 1], [], []>} : vector<32x128xbf16>, vector<128x128xbf16>, vector<32x128xf32> -> vector<32x128xf32>
    %c0_4 = arith.constant 0 : index
    %c0_5 = arith.constant 0 : index
    %5 = vector.load %arg3[%c0_4, %c0_5] : memref<1x128xf32, #tpu.memory_space<vmem>>, vector<1x128xf32>
    %6 = vector.broadcast %5 : vector<1x128xf32> to vector<32x128xf32>
    %7 = arith.addf %4, %6 : vector<32x128xf32>
    %8 = vector.extract_strided_slice %7 {offsets = [0, 0], sizes = [32, 32], strides = [1, 1]} : vector<32x128xf32> to vector<32x32xf32>
    %9 = arith.truncf %8 : vector<32x32xf32> to vector<32x32xbf16>
    %c0_6 = arith.constant 0 : index
    %c0_7 = arith.constant 0 : index
    %10 = vector.load %arg4[%c0_6, %c0_7] : memref<32x32xbf16, #tpu.memory_space<vmem>>, vector<32x32xbf16>
    tpu.vector_store %arg4[%c0_6, %c0_7], %9 {strides = array<i32>} : memref<32x32xbf16, #tpu.memory_space<vmem>>, vector<32x32xbf16>,
    return
  }
  func.func @transform_0(%arg0: i32) -> (i32, i32) {
    %c0_i32 = arith.constant 0 : i32
    %c0_i32_0 = arith.constant 0 : i32
    return %arg0, %c0_i32 : i32, i32
  }
  func.func @transform_1(%arg0: i32) -> (i32, i32) {
    %c0_i32 = arith.constant 0 : i32
    %c0_i32_0 = arith.constant 0 : i32
    %c0_i32_1 = arith.constant 0 : i32
    return %c0_i32, %c0_i32_0 : i32, i32
  }
  func.func @transform_2(%arg0: i32) -> (i32, i32) {
    %c0_i32 = arith.constant 0 : i32
    %c0_i32_0 = arith.constant 0 : i32
    %c0_i32_1 = arith.constant 0 : i32
    return %c0_i32, %c0_i32_0 : i32, i32
  }
  func.func @transform_3(%arg0: i32) -> (i32, i32) {
    %c0_i32 = arith.constant 0 : i32
    %c0_i32_0 = arith.constant 0 : i32
    return %arg0, %c0_i32 : i32, i32
  }
}

module attributes {stable_mosaic.version = 11 : i64} {
  func.func @_dw_kernel(%arg0: i32, %arg1: memref<9x8x96xbf16, #tpu.memory_space<vmem>>, %arg2: memref<9x96xf32, #tpu.memory_space<vmem>>, %arg3: memref<1x96xf32, #tpu.memory_space<vmem>>, %arg4: memref<8x96xbf16, #tpu.memory_space<vmem>>) attributes {dimension_semantics = [#tpu.dimension_semantics<parallel>], iteration_bounds = array<i64: 1>, scalar_prefetch = 0 : i64, scratch_operands = 0 : i64, tpu.core_type = #tpu.core_type<tc>, window_params = [{transform_indices = @transform_0, window_bounds = array<i64: 9, 8, 96>}, {pipeline_mode = #tpu.pipeline_mode<synchronous>, transform_indices = @transform_1, window_bounds = array<i64: 9, 96>}, {pipeline_mode = #tpu.pipeline_mode<synchronous>, transform_indices = @transform_2, window_bounds = array<i64: 1, 96>}, {transform_indices = @transform_3, window_bounds = array<i64: 8, 96>}]} {
    %cst = arith.constant 0.000000e+00 : f32
    %0 = vector.broadcast %cst : f32 to vector<8x96xf32>
    %c0 = arith.constant 0 : index
    %c0_0 = arith.constant 0 : index
    %c0_1 = arith.constant 0 : index
    %1 = vector.load %arg1[%c0, %c0_0, %c0_1] : memref<9x8x96xbf16, #tpu.memory_space<vmem>>, vector<1x8x96xbf16>
    %2 = vector.shape_cast %1 : vector<1x8x96xbf16> to vector<8x96xbf16>
    %3 = arith.extf %2 : vector<8x96xbf16> to vector<8x96xf32>
    %c0_2 = arith.constant 0 : index
    %c0_3 = arith.constant 0 : index
    %4 = vector.load %arg2[%c0_2, %c0_3] : memref<9x96xf32, #tpu.memory_space<vmem>>, vector<1x96xf32>
    %5 = vector.broadcast %4 : vector<1x96xf32> to vector<8x96xf32>
    %6 = arith.mulf %3, %5 : vector<8x96xf32>
    %7 = arith.addf %0, %6 : vector<8x96xf32>
    %c1 = arith.constant 1 : index
    %c0_4 = arith.constant 0 : index
    %c0_5 = arith.constant 0 : index
    %8 = vector.load %arg1[%c1, %c0_4, %c0_5] : memref<9x8x96xbf16, #tpu.memory_space<vmem>>, vector<1x8x96xbf16>
    %9 = vector.shape_cast %8 : vector<1x8x96xbf16> to vector<8x96xbf16>
    %10 = arith.extf %9 : vector<8x96xbf16> to vector<8x96xf32>
    %c1_6 = arith.constant 1 : index
    %c0_7 = arith.constant 0 : index
    %11 = vector.load %arg2[%c1_6, %c0_7] : memref<9x96xf32, #tpu.memory_space<vmem>>, vector<1x96xf32>
    %12 = vector.broadcast %11 : vector<1x96xf32> to vector<8x96xf32>
    %13 = arith.mulf %10, %12 : vector<8x96xf32>
    %14 = arith.addf %7, %13 : vector<8x96xf32>
    %c2 = arith.constant 2 : index
    %c0_8 = arith.constant 0 : index
    %c0_9 = arith.constant 0 : index
    %15 = vector.load %arg1[%c2, %c0_8, %c0_9] : memref<9x8x96xbf16, #tpu.memory_space<vmem>>, vector<1x8x96xbf16>
    %16 = vector.shape_cast %15 : vector<1x8x96xbf16> to vector<8x96xbf16>
    %17 = arith.extf %16 : vector<8x96xbf16> to vector<8x96xf32>
    %c2_10 = arith.constant 2 : index
    %c0_11 = arith.constant 0 : index
    %18 = vector.load %arg2[%c2_10, %c0_11] : memref<9x96xf32, #tpu.memory_space<vmem>>, vector<1x96xf32>
    %19 = vector.broadcast %18 : vector<1x96xf32> to vector<8x96xf32>
    %20 = arith.mulf %17, %19 : vector<8x96xf32>
    %21 = arith.addf %14, %20 : vector<8x96xf32>
    %c3 = arith.constant 3 : index
    %c0_12 = arith.constant 0 : index
    %c0_13 = arith.constant 0 : index
    %22 = vector.load %arg1[%c3, %c0_12, %c0_13] : memref<9x8x96xbf16, #tpu.memory_space<vmem>>, vector<1x8x96xbf16>
    %23 = vector.shape_cast %22 : vector<1x8x96xbf16> to vector<8x96xbf16>
    %24 = arith.extf %23 : vector<8x96xbf16> to vector<8x96xf32>
    %c3_14 = arith.constant 3 : index
    %c0_15 = arith.constant 0 : index
    %25 = vector.load %arg2[%c3_14, %c0_15] : memref<9x96xf32, #tpu.memory_space<vmem>>, vector<1x96xf32>
    %26 = vector.broadcast %25 : vector<1x96xf32> to vector<8x96xf32>
    %27 = arith.mulf %24, %26 : vector<8x96xf32>
    %28 = arith.addf %21, %27 : vector<8x96xf32>
    %c4 = arith.constant 4 : index
    %c0_16 = arith.constant 0 : index
    %c0_17 = arith.constant 0 : index
    %29 = vector.load %arg1[%c4, %c0_16, %c0_17] : memref<9x8x96xbf16, #tpu.memory_space<vmem>>, vector<1x8x96xbf16>
    %30 = vector.shape_cast %29 : vector<1x8x96xbf16> to vector<8x96xbf16>
    %31 = arith.extf %30 : vector<8x96xbf16> to vector<8x96xf32>
    %c4_18 = arith.constant 4 : index
    %c0_19 = arith.constant 0 : index
    %32 = vector.load %arg2[%c4_18, %c0_19] : memref<9x96xf32, #tpu.memory_space<vmem>>, vector<1x96xf32>
    %33 = vector.broadcast %32 : vector<1x96xf32> to vector<8x96xf32>
    %34 = arith.mulf %31, %33 : vector<8x96xf32>
    %35 = arith.addf %28, %34 : vector<8x96xf32>
    %c5 = arith.constant 5 : index
    %c0_20 = arith.constant 0 : index
    %c0_21 = arith.constant 0 : index
    %36 = vector.load %arg1[%c5, %c0_20, %c0_21] : memref<9x8x96xbf16, #tpu.memory_space<vmem>>, vector<1x8x96xbf16>
    %37 = vector.shape_cast %36 : vector<1x8x96xbf16> to vector<8x96xbf16>
    %38 = arith.extf %37 : vector<8x96xbf16> to vector<8x96xf32>
    %c5_22 = arith.constant 5 : index
    %c0_23 = arith.constant 0 : index
    %39 = vector.load %arg2[%c5_22, %c0_23] : memref<9x96xf32, #tpu.memory_space<vmem>>, vector<1x96xf32>
    %40 = vector.broadcast %39 : vector<1x96xf32> to vector<8x96xf32>
    %41 = arith.mulf %38, %40 : vector<8x96xf32>
    %42 = arith.addf %35, %41 : vector<8x96xf32>
    %c6 = arith.constant 6 : index
    %c0_24 = arith.constant 0 : index
    %c0_25 = arith.constant 0 : index
    %43 = vector.load %arg1[%c6, %c0_24, %c0_25] : memref<9x8x96xbf16, #tpu.memory_space<vmem>>, vector<1x8x96xbf16>
    %44 = vector.shape_cast %43 : vector<1x8x96xbf16> to vector<8x96xbf16>
    %45 = arith.extf %44 : vector<8x96xbf16> to vector<8x96xf32>
    %c6_26 = arith.constant 6 : index
    %c0_27 = arith.constant 0 : index
    %46 = vector.load %arg2[%c6_26, %c0_27] : memref<9x96xf32, #tpu.memory_space<vmem>>, vector<1x96xf32>
    %47 = vector.broadcast %46 : vector<1x96xf32> to vector<8x96xf32>
    %48 = arith.mulf %45, %47 : vector<8x96xf32>
    %49 = arith.addf %42, %48 : vector<8x96xf32>
    %c7 = arith.constant 7 : index
    %c0_28 = arith.constant 0 : index
    %c0_29 = arith.constant 0 : index
    %50 = vector.load %arg1[%c7, %c0_28, %c0_29] : memref<9x8x96xbf16, #tpu.memory_space<vmem>>, vector<1x8x96xbf16>
    %51 = vector.shape_cast %50 : vector<1x8x96xbf16> to vector<8x96xbf16>
    %52 = arith.extf %51 : vector<8x96xbf16> to vector<8x96xf32>
    %c7_30 = arith.constant 7 : index
    %c0_31 = arith.constant 0 : index
    %53 = vector.load %arg2[%c7_30, %c0_31] : memref<9x96xf32, #tpu.memory_space<vmem>>, vector<1x96xf32>
    %54 = vector.broadcast %53 : vector<1x96xf32> to vector<8x96xf32>
    %55 = arith.mulf %52, %54 : vector<8x96xf32>
    %56 = arith.addf %49, %55 : vector<8x96xf32>
    %c8 = arith.constant 8 : index
    %c0_32 = arith.constant 0 : index
    %c0_33 = arith.constant 0 : index
    %57 = vector.load %arg1[%c8, %c0_32, %c0_33] : memref<9x8x96xbf16, #tpu.memory_space<vmem>>, vector<1x8x96xbf16>
    %58 = vector.shape_cast %57 : vector<1x8x96xbf16> to vector<8x96xbf16>
    %59 = arith.extf %58 : vector<8x96xbf16> to vector<8x96xf32>
    %c8_34 = arith.constant 8 : index
    %c0_35 = arith.constant 0 : index
    %60 = vector.load %arg2[%c8_34, %c0_35] : memref<9x96xf32, #tpu.memory_space<vmem>>, vector<1x96xf32>
    %61 = vector.broadcast %60 : vector<1x96xf32> to vector<8x96xf32>
    %62 = arith.mulf %59, %61 : vector<8x96xf32>
    %63 = arith.addf %56, %62 : vector<8x96xf32>
    %c0_36 = arith.constant 0 : index
    %c0_37 = arith.constant 0 : index
    %64 = vector.load %arg3[%c0_36, %c0_37] : memref<1x96xf32, #tpu.memory_space<vmem>>, vector<1x96xf32>
    %65 = vector.broadcast %64 : vector<1x96xf32> to vector<8x96xf32>
    %66 = arith.addf %63, %65 : vector<8x96xf32>
    %cst_38 = arith.constant 3.000000e+00 : f32
    %67 = vector.broadcast %cst_38 : f32 to vector<8x96xf32>
    %68 = arith.addf %66, %67 : vector<8x96xf32>
    %cst_39 = arith.constant 0.000000e+00 : f32
    %cst_40 = arith.constant 6.000000e+00 : f32
    %69 = vector.broadcast %cst_39 : f32 to vector<8x96xf32>
    %70 = arith.maximumf %69, %68 : vector<8x96xf32>
    %71 = vector.broadcast %cst_40 : f32 to vector<8x96xf32>
    %72 = arith.minimumf %71, %70 : vector<8x96xf32>
    %73 = arith.mulf %66, %72 : vector<8x96xf32>
    %cst_41 = arith.constant 0.166666672 : f32
    %74 = vector.broadcast %cst_41 : f32 to vector<8x96xf32>
    %75 = arith.mulf %73, %74 : vector<8x96xf32>
    %76 = arith.truncf %75 : vector<8x96xf32> to vector<8x96xbf16>
    %c0_42 = arith.constant 0 : index
    %c0_43 = arith.constant 0 : index
    %77 = vector.load %arg4[%c0_42, %c0_43] : memref<8x96xbf16, #tpu.memory_space<vmem>>, vector<8x96xbf16>
    tpu.vector_store %arg4[%c0_42, %c0_43], %76 {strides = array<i32>} : memref<8x96xbf16, #tpu.memory_space<vmem>>, vector<8x96xbf16>,
    return
  }
  func.func @transform_0(%arg0: i32) -> (i32, i32, i32) {
    %c0_i32 = arith.constant 0 : i32
    %c0_i32_0 = arith.constant 0 : i32
    %c0_i32_1 = arith.constant 0 : i32
    return %c0_i32, %arg0, %c0_i32_0 : i32, i32, i32
  }
  func.func @transform_1(%arg0: i32) -> (i32, i32) {
    %c0_i32 = arith.constant 0 : i32
    %c0_i32_0 = arith.constant 0 : i32
    %c0_i32_1 = arith.constant 0 : i32
    return %c0_i32, %c0_i32_0 : i32, i32
  }
  func.func @transform_2(%arg0: i32) -> (i32, i32) {
    %c0_i32 = arith.constant 0 : i32
    %c0_i32_0 = arith.constant 0 : i32
    %c0_i32_1 = arith.constant 0 : i32
    return %c0_i32, %c0_i32_0 : i32, i32
  }
  func.func @transform_3(%arg0: i32) -> (i32, i32) {
    %c0_i32 = arith.constant 0 : i32
    %c0_i32_0 = arith.constant 0 : i32
    return %arg0, %c0_i32 : i32, i32
  }
}

module attributes {stable_mosaic.version = 11 : i64} {
  func.func @_mm_kernel(%arg0: i32, %arg1: memref<8x48xbf16, #tpu.memory_space<vmem>>, %arg2: memref<128x128xbf16, #tpu.memory_space<vmem>>, %arg3: memref<1x128xf32, #tpu.memory_space<vmem>>, %arg4: memref<8x32xbf16, #tpu.memory_space<vmem>>) attributes {dimension_semantics = [#tpu.dimension_semantics<parallel>], iteration_bounds = array<i64: 1>, scalar_prefetch = 0 : i64, scratch_operands = 0 : i64, tpu.core_type = #tpu.core_type<tc>, window_params = [{transform_indices = @transform_0, window_bounds = array<i64: 8, 48>}, {pipeline_mode = #tpu.pipeline_mode<synchronous>, transform_indices = @transform_1, window_bounds = array<i64: 128, 128>}, {pipeline_mode = #tpu.pipeline_mode<synchronous>, transform_indices = @transform_2, window_bounds = array<i64: 1, 128>}, {transform_indices = @transform_3, window_bounds = array<i64: 8, 32>}]} {
    %c0 = arith.constant 0 : index
    %c0_0 = arith.constant 0 : index
    %0 = vector.load %arg1[%c0, %c0_0] : memref<8x48xbf16, #tpu.memory_space<vmem>>, vector<8x48xbf16>
    %cst = arith.constant 0.000000e+00 : bf16
    %1 = vector.broadcast %cst : bf16 to vector<8x80xbf16>
    %2 = tpu.concatenate %0, %1 in 1 : vector<8x48xbf16>, vector<8x80xbf16> -> vector<8x128xbf16>
    %c0_1 = arith.constant 0 : index
    %c0_2 = arith.constant 0 : index
    %3 = vector.load %arg2[%c0_1, %c0_2] : memref<128x128xbf16, #tpu.memory_space<vmem>>, vector<128x128xbf16>
    %cst_3 = arith.constant dense<0.000000e+00> : vector<8x128xf32>
    %4 = tpu.matmul %2, %3, %cst_3 {dimension_numbers = #tpu.dot_dimension_numbers<[1], [0], [0], [1], [0, 0, 1, 1], [], []>} : vector<8x128xbf16>, vector<128x128xbf16>, vector<8x128xf32> -> vector<8x128xf32>
    %c0_4 = arith.constant 0 : index
    %c0_5 = arith.constant 0 : index
    %5 = vector.load %arg3[%c0_4, %c0_5] : memref<1x128xf32, #tpu.memory_space<vmem>>, vector<1x128xf32>
    %6 = vector.broadcast %5 : vector<1x128xf32> to vector<8x128xf32>
    %7 = arith.addf %4, %6 : vector<8x128xf32>
    %8 = vector.extract_strided_slice %7 {offsets = [0, 0], sizes = [8, 32], strides = [1, 1]} : vector<8x128xf32> to vector<8x32xf32>
    %9 = arith.truncf %8 : vector<8x32xf32> to vector<8x32xbf16>
    %c0_6 = arith.constant 0 : index
    %c0_7 = arith.constant 0 : index
    %10 = vector.load %arg4[%c0_6, %c0_7] : memref<8x32xbf16, #tpu.memory_space<vmem>>, vector<8x32xbf16>
    tpu.vector_store %arg4[%c0_6, %c0_7], %9 {strides = array<i32>} : memref<8x32xbf16, #tpu.memory_space<vmem>>, vector<8x32xbf16>,
    return
  }
  func.func @transform_0(%arg0: i32) -> (i32, i32) {
    %c0_i32 = arith.constant 0 : i32
    %c0_i32_0 = arith.constant 0 : i32
    return %arg0, %c0_i32 : i32, i32
  }
  func.func @transform_1(%arg0: i32) -> (i32, i32) {
    %c0_i32 = arith.constant 0 : i32
    %c0_i32_0 = arith.constant 0 : i32
    %c0_i32_1 = arith.constant 0 : i32
    return %c0_i32, %c0_i32_0 : i32, i32
  }
  func.func @transform_2(%arg0: i32) -> (i32, i32) {
    %c0_i32 = arith.constant 0 : i32
    %c0_i32_0 = arith.constant 0 : i32
    %c0_i32_1 = arith.constant 0 : i32
    return %c0_i32, %c0_i32_0 : i32, i32
  }
  func.func @transform_3(%arg0: i32) -> (i32, i32) {
    %c0_i32 = arith.constant 0 : i32
    %c0_i32_0 = arith.constant 0 : i32
    return %arg0, %c0_i32 : i32, i32
  }
}

module attributes {stable_mosaic.version = 11 : i64} {
  func.func @_mm_kernel(%arg0: i32, %arg1: memref<8x96xbf16, #tpu.memory_space<vmem>>, %arg2: memref<128x128xbf16, #tpu.memory_space<vmem>>, %arg3: memref<1x128xf32, #tpu.memory_space<vmem>>, %arg4: memref<8x48xbf16, #tpu.memory_space<vmem>>) attributes {dimension_semantics = [#tpu.dimension_semantics<parallel>], iteration_bounds = array<i64: 1>, scalar_prefetch = 0 : i64, scratch_operands = 0 : i64, tpu.core_type = #tpu.core_type<tc>, window_params = [{transform_indices = @transform_0, window_bounds = array<i64: 8, 96>}, {pipeline_mode = #tpu.pipeline_mode<synchronous>, transform_indices = @transform_1, window_bounds = array<i64: 128, 128>}, {pipeline_mode = #tpu.pipeline_mode<synchronous>, transform_indices = @transform_2, window_bounds = array<i64: 1, 128>}, {transform_indices = @transform_3, window_bounds = array<i64: 8, 48>}]} {
    %c0 = arith.constant 0 : index
    %c0_0 = arith.constant 0 : index
    %0 = vector.load %arg1[%c0, %c0_0] : memref<8x96xbf16, #tpu.memory_space<vmem>>, vector<8x96xbf16>
    %cst = arith.constant 0.000000e+00 : bf16
    %1 = vector.broadcast %cst : bf16 to vector<8x32xbf16>
    %2 = tpu.concatenate %0, %1 in 1 : vector<8x96xbf16>, vector<8x32xbf16> -> vector<8x128xbf16>
    %c0_1 = arith.constant 0 : index
    %c0_2 = arith.constant 0 : index
    %3 = vector.load %arg2[%c0_1, %c0_2] : memref<128x128xbf16, #tpu.memory_space<vmem>>, vector<128x128xbf16>
    %cst_3 = arith.constant dense<0.000000e+00> : vector<8x128xf32>
    %4 = tpu.matmul %2, %3, %cst_3 {dimension_numbers = #tpu.dot_dimension_numbers<[1], [0], [0], [1], [0, 0, 1, 1], [], []>} : vector<8x128xbf16>, vector<128x128xbf16>, vector<8x128xf32> -> vector<8x128xf32>
    %c0_4 = arith.constant 0 : index
    %c0_5 = arith.constant 0 : index
    %5 = vector.load %arg3[%c0_4, %c0_5] : memref<1x128xf32, #tpu.memory_space<vmem>>, vector<1x128xf32>
    %6 = vector.broadcast %5 : vector<1x128xf32> to vector<8x128xf32>
    %7 = arith.addf %4, %6 : vector<8x128xf32>
    %8 = vector.extract_strided_slice %7 {offsets = [0, 0], sizes = [8, 48], strides = [1, 1]} : vector<8x128xf32> to vector<8x48xf32>
    %9 = arith.truncf %8 : vector<8x48xf32> to vector<8x48xbf16>
    %c0_6 = arith.constant 0 : index
    %c0_7 = arith.constant 0 : index
    %10 = vector.load %arg4[%c0_6, %c0_7] : memref<8x48xbf16, #tpu.memory_space<vmem>>, vector<8x48xbf16>
    tpu.vector_store %arg4[%c0_6, %c0_7], %9 {strides = array<i32>} : memref<8x48xbf16, #tpu.memory_space<vmem>>, vector<8x48xbf16>,
    return
  }
  func.func @transform_0(%arg0: i32) -> (i32, i32) {
    %c0_i32 = arith.constant 0 : i32
    %c0_i32_0 = arith.constant 0 : i32
    return %arg0, %c0_i32 : i32, i32
  }
  func.func @transform_1(%arg0: i32) -> (i32, i32) {
    %c0_i32 = arith.constant 0 : i32
    %c0_i32_0 = arith.constant 0 : i32
    %c0_i32_1 = arith.constant 0 : i32
    return %c0_i32, %c0_i32_0 : i32, i32
  }
  func.func @transform_2(%arg0: i32) -> (i32, i32) {
    %c0_i32 = arith.constant 0 : i32
    %c0_i32_0 = arith.constant 0 : i32
    %c0_i32_1 = arith.constant 0 : i32
    return %c0_i32, %c0_i32_0 : i32, i32
  }
  func.func @transform_3(%arg0: i32) -> (i32, i32) {
    %c0_i32 = arith.constant 0 : i32
    %c0_i32_0 = arith.constant 0 : i32
    return %arg0, %c0_i32 : i32, i32
  }
}

module attributes {stable_mosaic.version = 11 : i64} {
  func.func @_mm_kernel(%arg0: i32, %arg1: memref<8x48xbf16, #tpu.memory_space<vmem>>, %arg2: memref<128x256xbf16, #tpu.memory_space<vmem>>, %arg3: memref<1x256xf32, #tpu.memory_space<vmem>>, %arg4: memref<8x144xbf16, #tpu.memory_space<vmem>>) attributes {dimension_semantics = [#tpu.dimension_semantics<parallel>], iteration_bounds = array<i64: 1>, scalar_prefetch = 0 : i64, scratch_operands = 0 : i64, tpu.core_type = #tpu.core_type<tc>, window_params = [{transform_indices = @transform_0, window_bounds = array<i64: 8, 48>}, {pipeline_mode = #tpu.pipeline_mode<synchronous>, transform_indices = @transform_1, window_bounds = array<i64: 128, 256>}, {pipeline_mode = #tpu.pipeline_mode<synchronous>, transform_indices = @transform_2, window_bounds = array<i64: 1, 256>}, {transform_indices = @transform_3, window_bounds = array<i64: 8, 144>}]} {
    %c0 = arith.constant 0 : index
    %c0_0 = arith.constant 0 : index
    %0 = vector.load %arg1[%c0, %c0_0] : memref<8x48xbf16, #tpu.memory_space<vmem>>, vector<8x48xbf16>
    %cst = arith.constant 0.000000e+00 : bf16
    %1 = vector.broadcast %cst : bf16 to vector<8x80xbf16>
    %2 = tpu.concatenate %0, %1 in 1 : vector<8x48xbf16>, vector<8x80xbf16> -> vector<8x128xbf16>
    %c0_1 = arith.constant 0 : index
    %c0_2 = arith.constant 0 : index
    %3 = vector.load %arg2[%c0_1, %c0_2] : memref<128x256xbf16, #tpu.memory_space<vmem>>, vector<128x256xbf16>
    %cst_3 = arith.constant dense<0.000000e+00> : vector<8x256xf32>
    %4 = tpu.matmul %2, %3, %cst_3 {dimension_numbers = #tpu.dot_dimension_numbers<[1], [0], [0], [1], [0, 0, 1, 1], [], []>} : vector<8x128xbf16>, vector<128x256xbf16>, vector<8x256xf32> -> vector<8x256xf32>
    %c0_4 = arith.constant 0 : index
    %c0_5 = arith.constant 0 : index
    %5 = vector.load %arg3[%c0_4, %c0_5] : memref<1x256xf32, #tpu.memory_space<vmem>>, vector<1x256xf32>
    %6 = vector.broadcast %5 : vector<1x256xf32> to vector<8x256xf32>
    %7 = arith.addf %4, %6 : vector<8x256xf32>
    %cst_6 = arith.constant 3.000000e+00 : f32
    %8 = vector.broadcast %cst_6 : f32 to vector<8x256xf32>
    %9 = arith.addf %7, %8 : vector<8x256xf32>
    %cst_7 = arith.constant 0.000000e+00 : f32
    %cst_8 = arith.constant 6.000000e+00 : f32
    %10 = vector.broadcast %cst_7 : f32 to vector<8x256xf32>
    %11 = arith.maximumf %10, %9 : vector<8x256xf32>
    %12 = vector.broadcast %cst_8 : f32 to vector<8x256xf32>
    %13 = arith.minimumf %12, %11 : vector<8x256xf32>
    %14 = arith.mulf %7, %13 : vector<8x256xf32>
    %cst_9 = arith.constant 0.166666672 : f32
    %15 = vector.broadcast %cst_9 : f32 to vector<8x256xf32>
    %16 = arith.mulf %14, %15 : vector<8x256xf32>
    %17 = vector.extract_strided_slice %16 {offsets = [0, 0], sizes = [8, 144], strides = [1, 1]} : vector<8x256xf32> to vector<8x144xf32>
    %18 = arith.truncf %17 : vector<8x144xf32> to vector<8x144xbf16>
    %c0_10 = arith.constant 0 : index
    %c0_11 = arith.constant 0 : index
    %19 = vector.load %arg4[%c0_10, %c0_11] : memref<8x144xbf16, #tpu.memory_space<vmem>>, vector<8x144xbf16>
    tpu.vector_store %arg4[%c0_10, %c0_11], %18 {strides = array<i32>} : memref<8x144xbf16, #tpu.memory_space<vmem>>, vector<8x144xbf16>,
    return
  }
  func.func @transform_0(%arg0: i32) -> (i32, i32) {
    %c0_i32 = arith.constant 0 : i32
    %c0_i32_0 = arith.constant 0 : i32
    return %arg0, %c0_i32 : i32, i32
  }
  func.func @transform_1(%arg0: i32) -> (i32, i32) {
    %c0_i32 = arith.constant 0 : i32
    %c0_i32_0 = arith.constant 0 : i32
    %c0_i32_1 = arith.constant 0 : i32
    return %c0_i32, %c0_i32_0 : i32, i32
  }
  func.func @transform_2(%arg0: i32) -> (i32, i32) {
    %c0_i32 = arith.constant 0 : i32
    %c0_i32_0 = arith.constant 0 : i32
    %c0_i32_1 = arith.constant 0 : i32
    return %c0_i32, %c0_i32_0 : i32, i32
  }
  func.func @transform_3(%arg0: i32) -> (i32, i32) {
    %c0_i32 = arith.constant 0 : i32
    %c0_i32_0 = arith.constant 0 : i32
    return %arg0, %c0_i32 : i32, i32
  }
}

module attributes {stable_mosaic.version = 11 : i64} {
  func.func @_dw_kernel(%arg0: i32, %arg1: memref<9x8x144xbf16, #tpu.memory_space<vmem>>, %arg2: memref<9x144xf32, #tpu.memory_space<vmem>>, %arg3: memref<1x144xf32, #tpu.memory_space<vmem>>, %arg4: memref<8x144xbf16, #tpu.memory_space<vmem>>) attributes {dimension_semantics = [#tpu.dimension_semantics<parallel>], iteration_bounds = array<i64: 1>, scalar_prefetch = 0 : i64, scratch_operands = 0 : i64, tpu.core_type = #tpu.core_type<tc>, window_params = [{transform_indices = @transform_0, window_bounds = array<i64: 9, 8, 144>}, {pipeline_mode = #tpu.pipeline_mode<synchronous>, transform_indices = @transform_1, window_bounds = array<i64: 9, 144>}, {pipeline_mode = #tpu.pipeline_mode<synchronous>, transform_indices = @transform_2, window_bounds = array<i64: 1, 144>}, {transform_indices = @transform_3, window_bounds = array<i64: 8, 144>}]} {
    %cst = arith.constant 0.000000e+00 : f32
    %0 = vector.broadcast %cst : f32 to vector<8x144xf32>
    %c0 = arith.constant 0 : index
    %c0_0 = arith.constant 0 : index
    %c0_1 = arith.constant 0 : index
    %1 = vector.load %arg1[%c0, %c0_0, %c0_1] : memref<9x8x144xbf16, #tpu.memory_space<vmem>>, vector<1x8x144xbf16>
    %2 = vector.shape_cast %1 : vector<1x8x144xbf16> to vector<8x144xbf16>
    %3 = arith.extf %2 : vector<8x144xbf16> to vector<8x144xf32>
    %c0_2 = arith.constant 0 : index
    %c0_3 = arith.constant 0 : index
    %4 = vector.load %arg2[%c0_2, %c0_3] : memref<9x144xf32, #tpu.memory_space<vmem>>, vector<1x144xf32>
    %5 = vector.broadcast %4 : vector<1x144xf32> to vector<8x144xf32>
    %6 = arith.mulf %3, %5 : vector<8x144xf32>
    %7 = arith.addf %0, %6 : vector<8x144xf32>
    %c1 = arith.constant 1 : index
    %c0_4 = arith.constant 0 : index
    %c0_5 = arith.constant 0 : index
    %8 = vector.load %arg1[%c1, %c0_4, %c0_5] : memref<9x8x144xbf16, #tpu.memory_space<vmem>>, vector<1x8x144xbf16>
    %9 = vector.shape_cast %8 : vector<1x8x144xbf16> to vector<8x144xbf16>
    %10 = arith.extf %9 : vector<8x144xbf16> to vector<8x144xf32>
    %c1_6 = arith.constant 1 : index
    %c0_7 = arith.constant 0 : index
    %11 = vector.load %arg2[%c1_6, %c0_7] : memref<9x144xf32, #tpu.memory_space<vmem>>, vector<1x144xf32>
    %12 = vector.broadcast %11 : vector<1x144xf32> to vector<8x144xf32>
    %13 = arith.mulf %10, %12 : vector<8x144xf32>
    %14 = arith.addf %7, %13 : vector<8x144xf32>
    %c2 = arith.constant 2 : index
    %c0_8 = arith.constant 0 : index
    %c0_9 = arith.constant 0 : index
    %15 = vector.load %arg1[%c2, %c0_8, %c0_9] : memref<9x8x144xbf16, #tpu.memory_space<vmem>>, vector<1x8x144xbf16>
    %16 = vector.shape_cast %15 : vector<1x8x144xbf16> to vector<8x144xbf16>
    %17 = arith.extf %16 : vector<8x144xbf16> to vector<8x144xf32>
    %c2_10 = arith.constant 2 : index
    %c0_11 = arith.constant 0 : index
    %18 = vector.load %arg2[%c2_10, %c0_11] : memref<9x144xf32, #tpu.memory_space<vmem>>, vector<1x144xf32>
    %19 = vector.broadcast %18 : vector<1x144xf32> to vector<8x144xf32>
    %20 = arith.mulf %17, %19 : vector<8x144xf32>
    %21 = arith.addf %14, %20 : vector<8x144xf32>
    %c3 = arith.constant 3 : index
    %c0_12 = arith.constant 0 : index
    %c0_13 = arith.constant 0 : index
    %22 = vector.load %arg1[%c3, %c0_12, %c0_13] : memref<9x8x144xbf16, #tpu.memory_space<vmem>>, vector<1x8x144xbf16>
    %23 = vector.shape_cast %22 : vector<1x8x144xbf16> to vector<8x144xbf16>
    %24 = arith.extf %23 : vector<8x144xbf16> to vector<8x144xf32>
    %c3_14 = arith.constant 3 : index
    %c0_15 = arith.constant 0 : index
    %25 = vector.load %arg2[%c3_14, %c0_15] : memref<9x144xf32, #tpu.memory_space<vmem>>, vector<1x144xf32>
    %26 = vector.broadcast %25 : vector<1x144xf32> to vector<8x144xf32>
    %27 = arith.mulf %24, %26 : vector<8x144xf32>
    %28 = arith.addf %21, %27 : vector<8x144xf32>
    %c4 = arith.constant 4 : index
    %c0_16 = arith.constant 0 : index
    %c0_17 = arith.constant 0 : index
    %29 = vector.load %arg1[%c4, %c0_16, %c0_17] : memref<9x8x144xbf16, #tpu.memory_space<vmem>>, vector<1x8x144xbf16>
    %30 = vector.shape_cast %29 : vector<1x8x144xbf16> to vector<8x144xbf16>
    %31 = arith.extf %30 : vector<8x144xbf16> to vector<8x144xf32>
    %c4_18 = arith.constant 4 : index
    %c0_19 = arith.constant 0 : index
    %32 = vector.load %arg2[%c4_18, %c0_19] : memref<9x144xf32, #tpu.memory_space<vmem>>, vector<1x144xf32>
    %33 = vector.broadcast %32 : vector<1x144xf32> to vector<8x144xf32>
    %34 = arith.mulf %31, %33 : vector<8x144xf32>
    %35 = arith.addf %28, %34 : vector<8x144xf32>
    %c5 = arith.constant 5 : index
    %c0_20 = arith.constant 0 : index
    %c0_21 = arith.constant 0 : index
    %36 = vector.load %arg1[%c5, %c0_20, %c0_21] : memref<9x8x144xbf16, #tpu.memory_space<vmem>>, vector<1x8x144xbf16>
    %37 = vector.shape_cast %36 : vector<1x8x144xbf16> to vector<8x144xbf16>
    %38 = arith.extf %37 : vector<8x144xbf16> to vector<8x144xf32>
    %c5_22 = arith.constant 5 : index
    %c0_23 = arith.constant 0 : index
    %39 = vector.load %arg2[%c5_22, %c0_23] : memref<9x144xf32, #tpu.memory_space<vmem>>, vector<1x144xf32>
    %40 = vector.broadcast %39 : vector<1x144xf32> to vector<8x144xf32>
    %41 = arith.mulf %38, %40 : vector<8x144xf32>
    %42 = arith.addf %35, %41 : vector<8x144xf32>
    %c6 = arith.constant 6 : index
    %c0_24 = arith.constant 0 : index
    %c0_25 = arith.constant 0 : index
    %43 = vector.load %arg1[%c6, %c0_24, %c0_25] : memref<9x8x144xbf16, #tpu.memory_space<vmem>>, vector<1x8x144xbf16>
    %44 = vector.shape_cast %43 : vector<1x8x144xbf16> to vector<8x144xbf16>
    %45 = arith.extf %44 : vector<8x144xbf16> to vector<8x144xf32>
    %c6_26 = arith.constant 6 : index
    %c0_27 = arith.constant 0 : index
    %46 = vector.load %arg2[%c6_26, %c0_27] : memref<9x144xf32, #tpu.memory_space<vmem>>, vector<1x144xf32>
    %47 = vector.broadcast %46 : vector<1x144xf32> to vector<8x144xf32>
    %48 = arith.mulf %45, %47 : vector<8x144xf32>
    %49 = arith.addf %42, %48 : vector<8x144xf32>
    %c7 = arith.constant 7 : index
    %c0_28 = arith.constant 0 : index
    %c0_29 = arith.constant 0 : index
    %50 = vector.load %arg1[%c7, %c0_28, %c0_29] : memref<9x8x144xbf16, #tpu.memory_space<vmem>>, vector<1x8x144xbf16>
    %51 = vector.shape_cast %50 : vector<1x8x144xbf16> to vector<8x144xbf16>
    %52 = arith.extf %51 : vector<8x144xbf16> to vector<8x144xf32>
    %c7_30 = arith.constant 7 : index
    %c0_31 = arith.constant 0 : index
    %53 = vector.load %arg2[%c7_30, %c0_31] : memref<9x144xf32, #tpu.memory_space<vmem>>, vector<1x144xf32>
    %54 = vector.broadcast %53 : vector<1x144xf32> to vector<8x144xf32>
    %55 = arith.mulf %52, %54 : vector<8x144xf32>
    %56 = arith.addf %49, %55 : vector<8x144xf32>
    %c8 = arith.constant 8 : index
    %c0_32 = arith.constant 0 : index
    %c0_33 = arith.constant 0 : index
    %57 = vector.load %arg1[%c8, %c0_32, %c0_33] : memref<9x8x144xbf16, #tpu.memory_space<vmem>>, vector<1x8x144xbf16>
    %58 = vector.shape_cast %57 : vector<1x8x144xbf16> to vector<8x144xbf16>
    %59 = arith.extf %58 : vector<8x144xbf16> to vector<8x144xf32>
    %c8_34 = arith.constant 8 : index
    %c0_35 = arith.constant 0 : index
    %60 = vector.load %arg2[%c8_34, %c0_35] : memref<9x144xf32, #tpu.memory_space<vmem>>, vector<1x144xf32>
    %61 = vector.broadcast %60 : vector<1x144xf32> to vector<8x144xf32>
    %62 = arith.mulf %59, %61 : vector<8x144xf32>
    %63 = arith.addf %56, %62 : vector<8x144xf32>
    %c0_36 = arith.constant 0 : index
    %c0_37 = arith.constant 0 : index
    %64 = vector.load %arg3[%c0_36, %c0_37] : memref<1x144xf32, #tpu.memory_space<vmem>>, vector<1x144xf32>
    %65 = vector.broadcast %64 : vector<1x144xf32> to vector<8x144xf32>
    %66 = arith.addf %63, %65 : vector<8x144xf32>
    %cst_38 = arith.constant 3.000000e+00 : f32
    %67 = vector.broadcast %cst_38 : f32 to vector<8x144xf32>
    %68 = arith.addf %66, %67 : vector<8x144xf32>
    %cst_39 = arith.constant 0.000000e+00 : f32
    %cst_40 = arith.constant 6.000000e+00 : f32
    %69 = vector.broadcast %cst_39 : f32 to vector<8x144xf32>
    %70 = arith.maximumf %69, %68 : vector<8x144xf32>
    %71 = vector.broadcast %cst_40 : f32 to vector<8x144xf32>
    %72 = arith.minimumf %71, %70 : vector<8x144xf32>
    %73 = arith.mulf %66, %72 : vector<8x144xf32>
    %cst_41 = arith.constant 0.166666672 : f32
    %74 = vector.broadcast %cst_41 : f32 to vector<8x144xf32>
    %75 = arith.mulf %73, %74 : vector<8x144xf32>
    %76 = arith.truncf %75 : vector<8x144xf32> to vector<8x144xbf16>
    %c0_42 = arith.constant 0 : index
    %c0_43 = arith.constant 0 : index
    %77 = vector.load %arg4[%c0_42, %c0_43] : memref<8x144xbf16, #tpu.memory_space<vmem>>, vector<8x144xbf16>
    tpu.vector_store %arg4[%c0_42, %c0_43], %76 {strides = array<i32>} : memref<8x144xbf16, #tpu.memory_space<vmem>>, vector<8x144xbf16>,
    return
  }
  func.func @transform_0(%arg0: i32) -> (i32, i32, i32) {
    %c0_i32 = arith.constant 0 : i32
    %c0_i32_0 = arith.constant 0 : i32
    %c0_i32_1 = arith.constant 0 : i32
    return %c0_i32, %arg0, %c0_i32_0 : i32, i32, i32
  }
  func.func @transform_1(%arg0: i32) -> (i32, i32) {
    %c0_i32 = arith.constant 0 : i32
    %c0_i32_0 = arith.constant 0 : i32
    %c0_i32_1 = arith.constant 0 : i32
    return %c0_i32, %c0_i32_0 : i32, i32
  }
  func.func @transform_2(%arg0: i32) -> (i32, i32) {
    %c0_i32 = arith.constant 0 : i32
    %c0_i32_0 = arith.constant 0 : i32
    %c0_i32_1 = arith.constant 0 : i32
    return %c0_i32, %c0_i32_0 : i32, i32
  }
  func.func @transform_3(%arg0: i32) -> (i32, i32) {
    %c0_i32 = arith.constant 0 : i32
    %c0_i32_0 = arith.constant 0 : i32
    return %arg0, %c0_i32 : i32, i32
  }
}

module attributes {stable_mosaic.version = 11 : i64} {
  func.func @_mm_kernel(%arg0: i32, %arg1: memref<8x144xbf16, #tpu.memory_space<vmem>>, %arg2: memref<256x128xbf16, #tpu.memory_space<vmem>>, %arg3: memref<1x128xf32, #tpu.memory_space<vmem>>, %arg4: memref<8x96xbf16, #tpu.memory_space<vmem>>) attributes {dimension_semantics = [#tpu.dimension_semantics<parallel>], iteration_bounds = array<i64: 1>, scalar_prefetch = 0 : i64, scratch_operands = 0 : i64, tpu.core_type = #tpu.core_type<tc>, window_params = [{transform_indices = @transform_0, window_bounds = array<i64: 8, 144>}, {pipeline_mode = #tpu.pipeline_mode<synchronous>, transform_indices = @transform_1, window_bounds = array<i64: 256, 128>}, {pipeline_mode = #tpu.pipeline_mode<synchronous>, transform_indices = @transform_2, window_bounds = array<i64: 1, 128>}, {transform_indices = @transform_3, window_bounds = array<i64: 8, 96>}]} {
    %c0 = arith.constant 0 : index
    %c0_0 = arith.constant 0 : index
    %0 = vector.load %arg1[%c0, %c0_0] : memref<8x144xbf16, #tpu.memory_space<vmem>>, vector<8x144xbf16>
    %cst = arith.constant 0.000000e+00 : bf16
    %1 = vector.broadcast %cst : bf16 to vector<8x112xbf16>
    %2 = tpu.concatenate %0, %1 in 1 : vector<8x144xbf16>, vector<8x112xbf16> -> vector<8x256xbf16>
    %c0_1 = arith.constant 0 : index
    %c0_2 = arith.constant 0 : index
    %3 = vector.load %arg2[%c0_1, %c0_2] : memref<256x128xbf16, #tpu.memory_space<vmem>>, vector<256x128xbf16>
    %cst_3 = arith.constant dense<0.000000e+00> : vector<8x128xf32>
    %4 = tpu.matmul %2, %3, %cst_3 {dimension_numbers = #tpu.dot_dimension_numbers<[1], [0], [0], [1], [0, 0, 1, 1], [], []>} : vector<8x256xbf16>, vector<256x128xbf16>, vector<8x128xf32> -> vector<8x128xf32>
    %c0_4 = arith.constant 0 : index
    %c0_5 = arith.constant 0 : index
    %5 = vector.load %arg3[%c0_4, %c0_5] : memref<1x128xf32, #tpu.memory_space<vmem>>, vector<1x128xf32>
    %6 = vector.broadcast %5 : vector<1x128xf32> to vector<8x128xf32>
    %7 = arith.addf %4, %6 : vector<8x128xf32>
    %8 = vector.extract_strided_slice %7 {offsets = [0, 0], sizes = [8, 96], strides = [1, 1]} : vector<8x128xf32> to vector<8x96xf32>
    %9 = arith.truncf %8 : vector<8x96xf32> to vector<8x96xbf16>
    %c0_6 = arith.constant 0 : index
    %c0_7 = arith.constant 0 : index
    %10 = vector.load %arg4[%c0_6, %c0_7] : memref<8x96xbf16, #tpu.memory_space<vmem>>, vector<8x96xbf16>
    tpu.vector_store %arg4[%c0_6, %c0_7], %9 {strides = array<i32>} : memref<8x96xbf16, #tpu.memory_space<vmem>>, vector<8x96xbf16>,
    return
  }
  func.func @transform_0(%arg0: i32) -> (i32, i32) {
    %c0_i32 = arith.constant 0 : i32
    %c0_i32_0 = arith.constant 0 : i32
    return %arg0, %c0_i32 : i32, i32
  }
  func.func @transform_1(%arg0: i32) -> (i32, i32) {
    %c0_i32 = arith.constant 0 : i32
    %c0_i32_0 = arith.constant 0 : i32
    %c0_i32_1 = arith.constant 0 : i32
    return %c0_i32, %c0_i32_0 : i32, i32
  }
  func.func @transform_2(%arg0: i32) -> (i32, i32) {
    %c0_i32 = arith.constant 0 : i32
    %c0_i32_0 = arith.constant 0 : i32
    %c0_i32_1 = arith.constant 0 : i32
    return %c0_i32, %c0_i32_0 : i32, i32
  }
  func.func @transform_3(%arg0: i32) -> (i32, i32) {
    %c0_i32 = arith.constant 0 : i32
    %c0_i32_0 = arith.constant 0 : i32
    return %arg0, %c0_i32 : i32, i32
  }
}

module attributes {stable_mosaic.version = 11 : i64} {
  func.func @_mm_kernel(%arg0: i32, %arg1: memref<8x96xbf16, #tpu.memory_space<vmem>>, %arg2: memref<128x128xbf16, #tpu.memory_space<vmem>>, %arg3: memref<1x128xf32, #tpu.memory_space<vmem>>, %arg4: memref<8x32xbf16, #tpu.memory_space<vmem>>) attributes {dimension_semantics = [#tpu.dimension_semantics<parallel>], iteration_bounds = array<i64: 1>, scalar_prefetch = 0 : i64, scratch_operands = 0 : i64, tpu.core_type = #tpu.core_type<tc>, window_params = [{transform_indices = @transform_0, window_bounds = array<i64: 8, 96>}, {pipeline_mode = #tpu.pipeline_mode<synchronous>, transform_indices = @transform_1, window_bounds = array<i64: 128, 128>}, {pipeline_mode = #tpu.pipeline_mode<synchronous>, transform_indices = @transform_2, window_bounds = array<i64: 1, 128>}, {transform_indices = @transform_3, window_bounds = array<i64: 8, 32>}]} {
    %c0 = arith.constant 0 : index
    %c0_0 = arith.constant 0 : index
    %0 = vector.load %arg1[%c0, %c0_0] : memref<8x96xbf16, #tpu.memory_space<vmem>>, vector<8x96xbf16>
    %cst = arith.constant 0.000000e+00 : bf16
    %1 = vector.broadcast %cst : bf16 to vector<8x32xbf16>
    %2 = tpu.concatenate %0, %1 in 1 : vector<8x96xbf16>, vector<8x32xbf16> -> vector<8x128xbf16>
    %c0_1 = arith.constant 0 : index
    %c0_2 = arith.constant 0 : index
    %3 = vector.load %arg2[%c0_1, %c0_2] : memref<128x128xbf16, #tpu.memory_space<vmem>>, vector<128x128xbf16>
    %cst_3 = arith.constant dense<0.000000e+00> : vector<8x128xf32>
    %4 = tpu.matmul %2, %3, %cst_3 {dimension_numbers = #tpu.dot_dimension_numbers<[1], [0], [0], [1], [0, 0, 1, 1], [], []>} : vector<8x128xbf16>, vector<128x128xbf16>, vector<8x128xf32> -> vector<8x128xf32>
    %c0_4 = arith.constant 0 : index
    %c0_5 = arith.constant 0 : index
    %5 = vector.load %arg3[%c0_4, %c0_5] : memref<1x128xf32, #tpu.memory_space<vmem>>, vector<1x128xf32>
    %6 = vector.broadcast %5 : vector<1x128xf32> to vector<8x128xf32>
    %7 = arith.addf %4, %6 : vector<8x128xf32>
    %8 = vector.extract_strided_slice %7 {offsets = [0, 0], sizes = [8, 32], strides = [1, 1]} : vector<8x128xf32> to vector<8x32xf32>
    %9 = arith.truncf %8 : vector<8x32xf32> to vector<8x32xbf16>
    %c0_6 = arith.constant 0 : index
    %c0_7 = arith.constant 0 : index
    %10 = vector.load %arg4[%c0_6, %c0_7] : memref<8x32xbf16, #tpu.memory_space<vmem>>, vector<8x32xbf16>
    tpu.vector_store %arg4[%c0_6, %c0_7], %9 {strides = array<i32>} : memref<8x32xbf16, #tpu.memory_space<vmem>>, vector<8x32xbf16>,
    return
  }
  func.func @transform_0(%arg0: i32) -> (i32, i32) {
    %c0_i32 = arith.constant 0 : i32
    %c0_i32_0 = arith.constant 0 : i32
    return %arg0, %c0_i32 : i32, i32
  }
  func.func @transform_1(%arg0: i32) -> (i32, i32) {
    %c0_i32 = arith.constant 0 : i32
    %c0_i32_0 = arith.constant 0 : i32
    %c0_i32_1 = arith.constant 0 : i32
    return %c0_i32, %c0_i32_0 : i32, i32
  }
  func.func @transform_2(%arg0: i32) -> (i32, i32) {
    %c0_i32 = arith.constant 0 : i32
    %c0_i32_0 = arith.constant 0 : i32
    %c0_i32_1 = arith.constant 0 : i32
    return %c0_i32, %c0_i32_0 : i32, i32
  }
  func.func @transform_3(%arg0: i32) -> (i32, i32) {
    %c0_i32 = arith.constant 0 : i32
    %c0_i32_0 = arith.constant 0 : i32
    return %arg0, %c0_i32 : i32, i32
  }
}

module attributes {stable_mosaic.version = 11 : i64} {
  func.func @_mm_kernel(%arg0: i32, %arg1: memref<8x288xbf16, #tpu.memory_space<vmem>>, %arg2: memref<384x128xbf16, #tpu.memory_space<vmem>>, %arg3: memref<1x128xf32, #tpu.memory_space<vmem>>, %arg4: memref<8x8xbf16, #tpu.memory_space<vmem>>) attributes {dimension_semantics = [#tpu.dimension_semantics<parallel>], iteration_bounds = array<i64: 1>, scalar_prefetch = 0 : i64, scratch_operands = 0 : i64, tpu.core_type = #tpu.core_type<tc>, window_params = [{transform_indices = @transform_0, window_bounds = array<i64: 8, 288>}, {pipeline_mode = #tpu.pipeline_mode<synchronous>, transform_indices = @transform_1, window_bounds = array<i64: 384, 128>}, {pipeline_mode = #tpu.pipeline_mode<synchronous>, transform_indices = @transform_2, window_bounds = array<i64: 1, 128>}, {transform_indices = @transform_3, window_bounds = array<i64: 8, 8>}]} {
    %c0 = arith.constant 0 : index
    %c0_0 = arith.constant 0 : index
    %0 = vector.load %arg1[%c0, %c0_0] : memref<8x288xbf16, #tpu.memory_space<vmem>>, vector<8x288xbf16>
    %cst = arith.constant 0.000000e+00 : bf16
    %1 = vector.broadcast %cst : bf16 to vector<8x96xbf16>
    %2 = tpu.concatenate %0, %1 in 1 : vector<8x288xbf16>, vector<8x96xbf16> -> vector<8x384xbf16>
    %c0_1 = arith.constant 0 : index
    %c0_2 = arith.constant 0 : index
    %3 = vector.load %arg2[%c0_1, %c0_2] : memref<384x128xbf16, #tpu.memory_space<vmem>>, vector<384x128xbf16>
    %cst_3 = arith.constant dense<0.000000e+00> : vector<8x128xf32>
    %4 = tpu.matmul %2, %3, %cst_3 {dimension_numbers = #tpu.dot_dimension_numbers<[1], [0], [0], [1], [0, 0, 1, 1], [], []>} : vector<8x384xbf16>, vector<384x128xbf16>, vector<8x128xf32> -> vector<8x128xf32>
    %c0_4 = arith.constant 0 : index
    %c0_5 = arith.constant 0 : index
    %5 = vector.load %arg3[%c0_4, %c0_5] : memref<1x128xf32, #tpu.memory_space<vmem>>, vector<1x128xf32>
    %6 = vector.broadcast %5 : vector<1x128xf32> to vector<8x128xf32>
    %7 = arith.addf %4, %6 : vector<8x128xf32>
    %8 = vector.extract_strided_slice %7 {offsets = [0, 0], sizes = [8, 8], strides = [1, 1]} : vector<8x128xf32> to vector<8x8xf32>
    %9 = arith.truncf %8 : vector<8x8xf32> to vector<8x8xbf16>
    %c0_6 = arith.constant 0 : index
    %c0_7 = arith.constant 0 : index
    %10 = vector.load %arg4[%c0_6, %c0_7] : memref<8x8xbf16, #tpu.memory_space<vmem>>, vector<8x8xbf16>
    tpu.vector_store %arg4[%c0_6, %c0_7], %9 {strides = array<i32>} : memref<8x8xbf16, #tpu.memory_space<vmem>>, vector<8x8xbf16>,
    return
  }
  func.func @transform_0(%arg0: i32) -> (i32, i32) {
    %c0_i32 = arith.constant 0 : i32
    %c0_i32_0 = arith.constant 0 : i32
    return %arg0, %c0_i32 : i32, i32
  }
  func.func @transform_1(%arg0: i32) -> (i32, i32) {
    %c0_i32 = arith.constant 0 : i32
    %c0_i32_0 = arith.constant 0 : i32
    %c0_i32_1 = arith.constant 0 : i32
    return %c0_i32, %c0_i32_0 : i32, i32
  }
  func.func @transform_2(%arg0: i32) -> (i32, i32) {
    %c0_i32 = arith.constant 0 : i32
    %c0_i32_0 = arith.constant 0 : i32
    %c0_i32_1 = arith.constant 0 : i32
    return %c0_i32, %c0_i32_0 : i32, i32
  }
  func.func @transform_3(%arg0: i32) -> (i32, i32) {
    %c0_i32 = arith.constant 0 : i32
    %c0_i32_0 = arith.constant 0 : i32
    return %arg0, %c0_i32 : i32, i32
  }
}

module attributes {stable_mosaic.version = 11 : i64} {
  func.func @_mm_kernel(%arg0: i32, %arg1: memref<32x288xbf16, #tpu.memory_space<vmem>>, %arg2: memref<384x128xbf16, #tpu.memory_space<vmem>>, %arg3: memref<1x128xf32, #tpu.memory_space<vmem>>, %arg4: memref<32x8xbf16, #tpu.memory_space<vmem>>) attributes {dimension_semantics = [#tpu.dimension_semantics<parallel>], iteration_bounds = array<i64: 1>, scalar_prefetch = 0 : i64, scratch_operands = 0 : i64, tpu.core_type = #tpu.core_type<tc>, window_params = [{transform_indices = @transform_0, window_bounds = array<i64: 32, 288>}, {pipeline_mode = #tpu.pipeline_mode<synchronous>, transform_indices = @transform_1, window_bounds = array<i64: 384, 128>}, {pipeline_mode = #tpu.pipeline_mode<synchronous>, transform_indices = @transform_2, window_bounds = array<i64: 1, 128>}, {transform_indices = @transform_3, window_bounds = array<i64: 32, 8>}]} {
    %c0 = arith.constant 0 : index
    %c0_0 = arith.constant 0 : index
    %0 = vector.load %arg1[%c0, %c0_0] : memref<32x288xbf16, #tpu.memory_space<vmem>>, vector<32x288xbf16>
    %cst = arith.constant 0.000000e+00 : bf16
    %1 = vector.broadcast %cst : bf16 to vector<32x96xbf16>
    %2 = tpu.concatenate %0, %1 in 1 : vector<32x288xbf16>, vector<32x96xbf16> -> vector<32x384xbf16>
    %c0_1 = arith.constant 0 : index
    %c0_2 = arith.constant 0 : index
    %3 = vector.load %arg2[%c0_1, %c0_2] : memref<384x128xbf16, #tpu.memory_space<vmem>>, vector<384x128xbf16>
    %cst_3 = arith.constant dense<0.000000e+00> : vector<32x128xf32>
    %4 = tpu.matmul %2, %3, %cst_3 {dimension_numbers = #tpu.dot_dimension_numbers<[1], [0], [0], [1], [0, 0, 1, 1], [], []>} : vector<32x384xbf16>, vector<384x128xbf16>, vector<32x128xf32> -> vector<32x128xf32>
    %c0_4 = arith.constant 0 : index
    %c0_5 = arith.constant 0 : index
    %5 = vector.load %arg3[%c0_4, %c0_5] : memref<1x128xf32, #tpu.memory_space<vmem>>, vector<1x128xf32>
    %6 = vector.broadcast %5 : vector<1x128xf32> to vector<32x128xf32>
    %7 = arith.addf %4, %6 : vector<32x128xf32>
    %8 = vector.extract_strided_slice %7 {offsets = [0, 0], sizes = [32, 8], strides = [1, 1]} : vector<32x128xf32> to vector<32x8xf32>
    %9 = arith.truncf %8 : vector<32x8xf32> to vector<32x8xbf16>
    %c0_6 = arith.constant 0 : index
    %c0_7 = arith.constant 0 : index
    %10 = vector.load %arg4[%c0_6, %c0_7] : memref<32x8xbf16, #tpu.memory_space<vmem>>, vector<32x8xbf16>
    tpu.vector_store %arg4[%c0_6, %c0_7], %9 {strides = array<i32>} : memref<32x8xbf16, #tpu.memory_space<vmem>>, vector<32x8xbf16>,
    return
  }
  func.func @transform_0(%arg0: i32) -> (i32, i32) {
    %c0_i32 = arith.constant 0 : i32
    %c0_i32_0 = arith.constant 0 : i32
    return %arg0, %c0_i32 : i32, i32
  }
  func.func @transform_1(%arg0: i32) -> (i32, i32) {
    %c0_i32 = arith.constant 0 : i32
    %c0_i32_0 = arith.constant 0 : i32
    %c0_i32_1 = arith.constant 0 : i32
    return %c0_i32, %c0_i32_0 : i32, i32
  }
  func.func @transform_2(%arg0: i32) -> (i32, i32) {
    %c0_i32 = arith.constant 0 : i32
    %c0_i32_0 = arith.constant 0 : i32
    %c0_i32_1 = arith.constant 0 : i32
    return %c0_i32, %c0_i32_0 : i32, i32
  }
  func.func @transform_3(%arg0: i32) -> (i32, i32) {
    %c0_i32 = arith.constant 0 : i32
    %c0_i32_0 = arith.constant 0 : i32
    return %arg0, %c0_i32 : i32, i32
  }
}

module attributes {stable_mosaic.version = 11 : i64} {
  func.func @_mm_kernel(%arg0: i32, %arg1: memref<64x288xbf16, #tpu.memory_space<vmem>>, %arg2: memref<384x128xbf16, #tpu.memory_space<vmem>>, %arg3: memref<1x128xf32, #tpu.memory_space<vmem>>, %arg4: memref<64x8xbf16, #tpu.memory_space<vmem>>) attributes {dimension_semantics = [#tpu.dimension_semantics<parallel>], iteration_bounds = array<i64: 2>, scalar_prefetch = 0 : i64, scratch_operands = 0 : i64, tpu.core_type = #tpu.core_type<tc>, window_params = [{transform_indices = @transform_0, window_bounds = array<i64: 64, 288>}, {pipeline_mode = #tpu.pipeline_mode<synchronous>, transform_indices = @transform_1, window_bounds = array<i64: 384, 128>}, {pipeline_mode = #tpu.pipeline_mode<synchronous>, transform_indices = @transform_2, window_bounds = array<i64: 1, 128>}, {transform_indices = @transform_3, window_bounds = array<i64: 64, 8>}]} {
    %c0 = arith.constant 0 : index
    %c0_0 = arith.constant 0 : index
    %0 = vector.load %arg1[%c0, %c0_0] : memref<64x288xbf16, #tpu.memory_space<vmem>>, vector<64x288xbf16>
    %cst = arith.constant 0.000000e+00 : bf16
    %1 = vector.broadcast %cst : bf16 to vector<64x96xbf16>
    %2 = tpu.concatenate %0, %1 in 1 : vector<64x288xbf16>, vector<64x96xbf16> -> vector<64x384xbf16>
    %c0_1 = arith.constant 0 : index
    %c0_2 = arith.constant 0 : index
    %3 = vector.load %arg2[%c0_1, %c0_2] : memref<384x128xbf16, #tpu.memory_space<vmem>>, vector<384x128xbf16>
    %cst_3 = arith.constant dense<0.000000e+00> : vector<64x128xf32>
    %4 = tpu.matmul %2, %3, %cst_3 {dimension_numbers = #tpu.dot_dimension_numbers<[1], [0], [0], [1], [0, 0, 1, 1], [], []>} : vector<64x384xbf16>, vector<384x128xbf16>, vector<64x128xf32> -> vector<64x128xf32>
    %c0_4 = arith.constant 0 : index
    %c0_5 = arith.constant 0 : index
    %5 = vector.load %arg3[%c0_4, %c0_5] : memref<1x128xf32, #tpu.memory_space<vmem>>, vector<1x128xf32>
    %6 = vector.broadcast %5 : vector<1x128xf32> to vector<64x128xf32>
    %7 = arith.addf %4, %6 : vector<64x128xf32>
    %8 = vector.extract_strided_slice %7 {offsets = [0, 0], sizes = [64, 8], strides = [1, 1]} : vector<64x128xf32> to vector<64x8xf32>
    %9 = arith.truncf %8 : vector<64x8xf32> to vector<64x8xbf16>
    %c0_6 = arith.constant 0 : index
    %c0_7 = arith.constant 0 : index
    %10 = vector.load %arg4[%c0_6, %c0_7] : memref<64x8xbf16, #tpu.memory_space<vmem>>, vector<64x8xbf16>
    tpu.vector_store %arg4[%c0_6, %c0_7], %9 {strides = array<i32>} : memref<64x8xbf16, #tpu.memory_space<vmem>>, vector<64x8xbf16>,
    return
  }
  func.func @transform_0(%arg0: i32) -> (i32, i32) {
    %c0_i32 = arith.constant 0 : i32
    %c0_i32_0 = arith.constant 0 : i32
    return %arg0, %c0_i32 : i32, i32
  }
  func.func @transform_1(%arg0: i32) -> (i32, i32) {
    %c0_i32 = arith.constant 0 : i32
    %c0_i32_0 = arith.constant 0 : i32
    %c0_i32_1 = arith.constant 0 : i32
    return %c0_i32, %c0_i32_0 : i32, i32
  }
  func.func @transform_2(%arg0: i32) -> (i32, i32) {
    %c0_i32 = arith.constant 0 : i32
    %c0_i32_0 = arith.constant 0 : i32
    %c0_i32_1 = arith.constant 0 : i32
    return %c0_i32, %c0_i32_0 : i32, i32
  }
  func.func @transform_3(%arg0: i32) -> (i32, i32) {
    %c0_i32 = arith.constant 0 : i32
    %c0_i32_0 = arith.constant 0 : i32
    return %arg0, %c0_i32 : i32, i32
  }
}

module attributes {stable_mosaic.version = 11 : i64} {
  func.func @_mm_kernel(%arg0: i32, %arg1: memref<64x288xbf16, #tpu.memory_space<vmem>>, %arg2: memref<384x128xbf16, #tpu.memory_space<vmem>>, %arg3: memref<1x128xf32, #tpu.memory_space<vmem>>, %arg4: memref<64x16xbf16, #tpu.memory_space<vmem>>) attributes {dimension_semantics = [#tpu.dimension_semantics<parallel>], iteration_bounds = array<i64: 2>, scalar_prefetch = 0 : i64, scratch_operands = 0 : i64, tpu.core_type = #tpu.core_type<tc>, window_params = [{transform_indices = @transform_0, window_bounds = array<i64: 64, 288>}, {pipeline_mode = #tpu.pipeline_mode<synchronous>, transform_indices = @transform_1, window_bounds = array<i64: 384, 128>}, {pipeline_mode = #tpu.pipeline_mode<synchronous>, transform_indices = @transform_2, window_bounds = array<i64: 1, 128>}, {transform_indices = @transform_3, window_bounds = array<i64: 64, 16>}]} {
    %c0 = arith.constant 0 : index
    %c0_0 = arith.constant 0 : index
    %0 = vector.load %arg1[%c0, %c0_0] : memref<64x288xbf16, #tpu.memory_space<vmem>>, vector<64x288xbf16>
    %cst = arith.constant 0.000000e+00 : bf16
    %1 = vector.broadcast %cst : bf16 to vector<64x96xbf16>
    %2 = tpu.concatenate %0, %1 in 1 : vector<64x288xbf16>, vector<64x96xbf16> -> vector<64x384xbf16>
    %c0_1 = arith.constant 0 : index
    %c0_2 = arith.constant 0 : index
    %3 = vector.load %arg2[%c0_1, %c0_2] : memref<384x128xbf16, #tpu.memory_space<vmem>>, vector<384x128xbf16>
    %cst_3 = arith.constant dense<0.000000e+00> : vector<64x128xf32>
    %4 = tpu.matmul %2, %3, %cst_3 {dimension_numbers = #tpu.dot_dimension_numbers<[1], [0], [0], [1], [0, 0, 1, 1], [], []>} : vector<64x384xbf16>, vector<384x128xbf16>, vector<64x128xf32> -> vector<64x128xf32>
    %c0_4 = arith.constant 0 : index
    %c0_5 = arith.constant 0 : index
    %5 = vector.load %arg3[%c0_4, %c0_5] : memref<1x128xf32, #tpu.memory_space<vmem>>, vector<1x128xf32>
    %6 = vector.broadcast %5 : vector<1x128xf32> to vector<64x128xf32>
    %7 = arith.addf %4, %6 : vector<64x128xf32>
    %cst_6 = arith.constant 0.000000e+00 : f32
    %8 = vector.broadcast %cst_6 : f32 to vector<64x128xf32>
    %9 = arith.maximumf %7, %8 : vector<64x128xf32>
    %10 = vector.extract_strided_slice %9 {offsets = [0, 0], sizes = [64, 16], strides = [1, 1]} : vector<64x128xf32> to vector<64x16xf32>
    %11 = arith.truncf %10 : vector<64x16xf32> to vector<64x16xbf16>
    %c0_7 = arith.constant 0 : index
    %c0_8 = arith.constant 0 : index
    %12 = vector.load %arg4[%c0_7, %c0_8] : memref<64x16xbf16, #tpu.memory_space<vmem>>, vector<64x16xbf16>
    tpu.vector_store %arg4[%c0_7, %c0_8], %11 {strides = array<i32>} : memref<64x16xbf16, #tpu.memory_space<vmem>>, vector<64x16xbf16>,
    return
  }
  func.func @transform_0(%arg0: i32) -> (i32, i32) {
    %c0_i32 = arith.constant 0 : i32
    %c0_i32_0 = arith.constant 0 : i32
    return %arg0, %c0_i32 : i32, i32
  }
  func.func @transform_1(%arg0: i32) -> (i32, i32) {
    %c0_i32 = arith.constant 0 : i32
    %c0_i32_0 = arith.constant 0 : i32
    %c0_i32_1 = arith.constant 0 : i32
    return %c0_i32, %c0_i32_0 : i32, i32
  }
  func.func @transform_2(%arg0: i32) -> (i32, i32) {
    %c0_i32 = arith.constant 0 : i32
    %c0_i32_0 = arith.constant 0 : i32
    %c0_i32_1 = arith.constant 0 : i32
    return %c0_i32, %c0_i32_0 : i32, i32
  }
  func.func @transform_3(%arg0: i32) -> (i32, i32) {
    %c0_i32 = arith.constant 0 : i32
    %c0_i32_0 = arith.constant 0 : i32
    return %arg0, %c0_i32 : i32, i32
  }
}

module attributes {stable_mosaic.version = 11 : i64} {
  func.func @_mm_kernel(%arg0: i32, %arg1: memref<64x16xbf16, #tpu.memory_space<vmem>>, %arg2: memref<128x128xbf16, #tpu.memory_space<vmem>>, %arg3: memref<1x128xf32, #tpu.memory_space<vmem>>, %arg4: memref<64x64xbf16, #tpu.memory_space<vmem>>) attributes {dimension_semantics = [#tpu.dimension_semantics<parallel>], iteration_bounds = array<i64: 2>, scalar_prefetch = 0 : i64, scratch_operands = 0 : i64, tpu.core_type = #tpu.core_type<tc>, window_params = [{transform_indices = @transform_0, window_bounds = array<i64: 64, 16>}, {pipeline_mode = #tpu.pipeline_mode<synchronous>, transform_indices = @transform_1, window_bounds = array<i64: 128, 128>}, {pipeline_mode = #tpu.pipeline_mode<synchronous>, transform_indices = @transform_2, window_bounds = array<i64: 1, 128>}, {transform_indices = @transform_3, window_bounds = array<i64: 64, 64>}]} {
    %c0 = arith.constant 0 : index
    %c0_0 = arith.constant 0 : index
    %0 = vector.load %arg1[%c0, %c0_0] : memref<64x16xbf16, #tpu.memory_space<vmem>>, vector<64x16xbf16>
    %cst = arith.constant 0.000000e+00 : bf16
    %1 = vector.broadcast %cst : bf16 to vector<64x112xbf16>
    %2 = tpu.concatenate %0, %1 in 1 : vector<64x16xbf16>, vector<64x112xbf16> -> vector<64x128xbf16>
    %c0_1 = arith.constant 0 : index
    %c0_2 = arith.constant 0 : index
    %3 = vector.load %arg2[%c0_1, %c0_2] : memref<128x128xbf16, #tpu.memory_space<vmem>>, vector<128x128xbf16>
    %cst_3 = arith.constant dense<0.000000e+00> : vector<64x128xf32>
    %4 = tpu.matmul %2, %3, %cst_3 {dimension_numbers = #tpu.dot_dimension_numbers<[1], [0], [0], [1], [0, 0, 1, 1], [], []>} : vector<64x128xbf16>, vector<128x128xbf16>, vector<64x128xf32> -> vector<64x128xf32>
    %c0_4 = arith.constant 0 : index
    %c0_5 = arith.constant 0 : index
    %5 = vector.load %arg3[%c0_4, %c0_5] : memref<1x128xf32, #tpu.memory_space<vmem>>, vector<1x128xf32>
    %6 = vector.broadcast %5 : vector<1x128xf32> to vector<64x128xf32>
    %7 = arith.addf %4, %6 : vector<64x128xf32>
    %cst_6 = arith.constant 0.000000e+00 : f32
    %8 = vector.broadcast %cst_6 : f32 to vector<64x128xf32>
    %9 = arith.maximumf %7, %8 : vector<64x128xf32>
    %10 = vector.extract_strided_slice %9 {offsets = [0, 0], sizes = [64, 64], strides = [1, 1]} : vector<64x128xf32> to vector<64x64xf32>
    %11 = arith.truncf %10 : vector<64x64xf32> to vector<64x64xbf16>
    %c0_7 = arith.constant 0 : index
    %c0_8 = arith.constant 0 : index
    %12 = vector.load %arg4[%c0_7, %c0_8] : memref<64x64xbf16, #tpu.memory_space<vmem>>, vector<64x64xbf16>
    tpu.vector_store %arg4[%c0_7, %c0_8], %11 {strides = array<i32>} : memref<64x64xbf16, #tpu.memory_space<vmem>>, vector<64x64xbf16>,
    return
  }
  func.func @transform_0(%arg0: i32) -> (i32, i32) {
    %c0_i32 = arith.constant 0 : i32
    %c0_i32_0 = arith.constant 0 : i32
    return %arg0, %c0_i32 : i32, i32
  }
  func.func @transform_1(%arg0: i32) -> (i32, i32) {
    %c0_i32 = arith.constant 0 : i32
    %c0_i32_0 = arith.constant 0 : i32
    %c0_i32_1 = arith.constant 0 : i32
    return %c0_i32, %c0_i32_0 : i32, i32
  }
  func.func @transform_2(%arg0: i32) -> (i32, i32) {
    %c0_i32 = arith.constant 0 : i32
    %c0_i32_0 = arith.constant 0 : i32
    %c0_i32_1 = arith.constant 0 : i32
    return %c0_i32, %c0_i32_0 : i32, i32
  }
  func.func @transform_3(%arg0: i32) -> (i32, i32) {
    %c0_i32 = arith.constant 0 : i32
    %c0_i32_0 = arith.constant 0 : i32
    return %arg0, %c0_i32 : i32, i32
  }
}

module attributes {stable_mosaic.version = 11 : i64} {
  func.func @_head_kernel(%arg0: i32, %arg1: memref<256x16xbf16, #tpu.memory_space<vmem>>, %arg2: memref<128x128xbf16, #tpu.memory_space<vmem>>, %arg3: memref<1x128xf32, #tpu.memory_space<vmem>>, %arg4: memref<256x12xf32, #tpu.memory_space<vmem>>) attributes {dimension_semantics = [#tpu.dimension_semantics<parallel>], iteration_bounds = array<i64: 2>, scalar_prefetch = 0 : i64, scratch_operands = 0 : i64, tpu.core_type = #tpu.core_type<tc>, window_params = [{transform_indices = @transform_0, window_bounds = array<i64: 256, 16>}, {pipeline_mode = #tpu.pipeline_mode<synchronous>, transform_indices = @transform_1, window_bounds = array<i64: 128, 128>}, {pipeline_mode = #tpu.pipeline_mode<synchronous>, transform_indices = @transform_2, window_bounds = array<i64: 1, 128>}, {transform_indices = @transform_3, window_bounds = array<i64: 256, 12>}]} {
    %c0 = arith.constant 0 : index
    %c0_0 = arith.constant 0 : index
    %0 = vector.load %arg1[%c0, %c0_0] : memref<256x16xbf16, #tpu.memory_space<vmem>>, vector<256x16xbf16>
    %cst = arith.constant 0.000000e+00 : bf16
    %1 = vector.broadcast %cst : bf16 to vector<256x112xbf16>
    %2 = tpu.concatenate %0, %1 in 1 : vector<256x16xbf16>, vector<256x112xbf16> -> vector<256x128xbf16>
    %c0_1 = arith.constant 0 : index
    %c0_2 = arith.constant 0 : index
    %3 = vector.load %arg2[%c0_1, %c0_2] : memref<128x128xbf16, #tpu.memory_space<vmem>>, vector<128x128xbf16>
    %cst_3 = arith.constant dense<0.000000e+00> : vector<256x128xf32>
    %4 = tpu.matmul %2, %3, %cst_3 {dimension_numbers = #tpu.dot_dimension_numbers<[1], [0], [0], [1], [0, 0, 1, 1], [], []>} : vector<256x128xbf16>, vector<128x128xbf16>, vector<256x128xf32> -> vector<256x128xf32>
    %c0_4 = arith.constant 0 : index
    %c0_5 = arith.constant 0 : index
    %5 = vector.load %arg3[%c0_4, %c0_5] : memref<1x128xf32, #tpu.memory_space<vmem>>, vector<1x128xf32>
    %6 = vector.broadcast %5 : vector<1x128xf32> to vector<256x128xf32>
    %7 = arith.addf %4, %6 : vector<256x128xf32>
    %8 = arith.negf %7 : vector<256x128xf32>
    %9 = math.exp %8 : vector<256x128xf32>
    %cst_6 = arith.constant 1.000000e+00 : f32
    %10 = vector.broadcast %cst_6 : f32 to vector<256x128xf32>
    %11 = arith.addf %10, %9 : vector<256x128xf32>
    %12 = arith.divf %10, %11 : vector<256x128xf32>
    %13 = vector.extract_strided_slice %12 {offsets = [0, 0], sizes = [256, 4], strides = [1, 1]} : vector<256x128xf32> to vector<256x4xf32>
    %14 = vector.extract_strided_slice %12 {offsets = [0, 4], sizes = [256, 4], strides = [1, 1]} : vector<256x128xf32> to vector<256x4xf32>
    %15 = arith.subf %13, %14 : vector<256x4xf32>
    %cst_7 = arith.constant 5.000000e+01 : f32
    %16 = vector.broadcast %cst_7 : f32 to vector<256x4xf32>
    %17 = arith.mulf %16, %15 : vector<256x4xf32>
    %18 = arith.negf %17 : vector<256x4xf32>
    %19 = math.exp %18 : vector<256x4xf32>
    %cst_8 = arith.constant 1.000000e+00 : f32
    %20 = vector.broadcast %cst_8 : f32 to vector<256x4xf32>
    %21 = arith.addf %20, %19 : vector<256x4xf32>
    %22 = arith.divf %20, %21 : vector<256x4xf32>
    %23 = tpu.concatenate %13, %14, %22 in 1 : vector<256x4xf32>, vector<256x4xf32>, vector<256x4xf32> -> vector<256x12xf32>
    %c0_9 = arith.constant 0 : index
    %c0_10 = arith.constant 0 : index
    %24 = vector.load %arg4[%c0_9, %c0_10] : memref<256x12xf32, #tpu.memory_space<vmem>>, vector<256x12xf32>
    tpu.vector_store %arg4[%c0_9, %c0_10], %23 {strides = array<i32>} : memref<256x12xf32, #tpu.memory_space<vmem>>, vector<256x12xf32>,
    return
  }
  func.func @transform_0(%arg0: i32) -> (i32, i32) {
    %c0_i32 = arith.constant 0 : i32
    %c0_i32_0 = arith.constant 0 : i32
    return %arg0, %c0_i32 : i32, i32
  }
  func.func @transform_1(%arg0: i32) -> (i32, i32) {
    %c0_i32 = arith.constant 0 : i32
    %c0_i32_0 = arith.constant 0 : i32
    %c0_i32_1 = arith.constant 0 : i32
    return %c0_i32, %c0_i32_0 : i32, i32
  }
  func.func @transform_2(%arg0: i32) -> (i32, i32) {
    %c0_i32 = arith.constant 0 : i32
    %c0_i32_0 = arith.constant 0 : i32
    %c0_i32_1 = arith.constant 0 : i32
    return %c0_i32, %c0_i32_0 : i32, i32
  }
  func.func @transform_3(%arg0: i32) -> (i32, i32) {
    %c0_i32 = arith.constant 0 : i32
    %c0_i32_0 = arith.constant 0 : i32
    return %arg0, %c0_i32 : i32, i32
  }
}

</mosaic_0001>

<llo_original>
// kernel: tile.18
$region0: #{tile.18}
  #allocation0 [shape = 's32[1]{0}', space=sflag, size = 0x4, scoped, tag = 'scoped memory for tile.18']
  %s0 = inlined_call_operand.vmem [shape: f32[16], index: 0, kind: input, shape index: {}]
  %s1 = inlined_call_operand.vmem [shape: f32[4,16], index: 1, kind: output, shape index: {}]
  // Predicated region
  $region2: #{tile.18} parent=0 // pred_check
    _
  $region3: #{tile.18} parent=0 // pred_check_branch
    %3 = sbr.rel (0) target = $region5
  $region4: #{tile.18} parent=0 // pred_region
    _
  $region5: #{tile.18} parent=0 // pred_fallthru
    _
  %v4 = vld [vmem:[%s0] ss:$0 sm:$0xff]
  %5 = vst [vmem:[%s1] sm:$0xf] %v4

// kernel: tile.19
$region0: #{tile.19}
  %s0 = inlined_call_operand.vmem [shape: f32[4,16], index: 0, kind: input, shape index: {}]
  %s1 = inlined_call_operand.vmem [shape: f32[64], index: 1, kind: output, shape index: {}]
  $region1: #{tile.19} parent=0
    #allocation0 [shape = 'u8[4096]{0}', space=vmem, size = 0x1000, scoped, tag = 'scoped mem for output reshape']
    #allocation1 [shape = 'u8[4096]{0}', space=vmem, size = 0x1000, scoped, tag = 'scoped mem for input reshape']
    %s3 = sshllo.u32 0, 4
    %v4 = vld [vmem:[%s0] sm:%s3]
    %5 = vst [vmem:[#allocation1] sm:%s3] %v4
    %v6 = vld [vmem:[#allocation1] sm:$0x1]
    %vm7 = vcmask 130048
    %8 = vst.msk [vmem:[#allocation0] sm:$0x1] %vm7, %v6
    %s9 = scalar_lea.vmem [#allocation1], 3
    %v10 = vld [vmem:[%s9] sm:$0x1]
    %11 = vrot.lane.b32.xlu0 %v10, 48
    %v12 = vpop.permute.xlu0 %11
    %vm13 = vcmask 523648
    %14 = vst.msk [vmem:[#allocation0] sm:$0x1] %vm13, %v12
    %s15 = scalar_lea.vmem [#allocation1], 2
    %v16 = vld [vmem:[%s15] sm:$0x1]
    %17 = vrot.lane.b32.xlu0 %v16, 32
    %v18 = vpop.permute.xlu0 %17
    %vm19 = vcmask 392448
    %20 = vst.msk [vmem:[#allocation0] sm:$0x1] %vm19, %v18
    %s21 = scalar_lea.vmem [#allocation1], 1
    %v22 = vld [vmem:[%s21] sm:$0x1]
    %23 = vrot.lane.b32.xlu0 %v22, 16
    %v24 = vpop.permute.xlu0 %23
    %vm25 = vcmask 261248
    %26 = vst.msk [vmem:[#allocation0] sm:$0x1] %vm25, %v24
    %s28 = sshllo.u32 0, 1
    %v30 = vld [vmem:[#allocation0] sm:%s28]
    %s31 = sshllo.u32 0, 1
    %32 = vst [vmem:[%s1] sm:%s31] %v30

// kernel: dbnet_forward.23
$region0: #{dbnet_forward.23}
  #allocation0 [shape = 'u32[]', space=smem, size = 0x4, offset = 0x4, fixed_abs, tag = 'smem constant byte address 0x4 - core index']
  #allocation1 [shape = 'u32[144,128]{1,0:T(1,128)}', space=vmem, size = 0x12000, scoped, tag = 'internal scratch']
  %s0 = inlined_call_operand.vmem [shape: bf16[512,27], index: 0, kind: input, shape index: {}]
  %s1 = inlined_call_operand.vmem [shape: bf16[128,128], index: 1, kind: input, shape index: {}]
  %s2 = inlined_call_operand.vmem [shape: f32[1,128], index: 2, kind: input, shape index: {}]
  %s3 = inlined_call_operand.vmem [shape: bf16[512,16], index: 3, kind: output, shape index: {}]
  %s4 = sld [smem:[#allocation0]]
  $region45: #{dbnet_forward.23} parent=0
    _
  %s6 = ssub.s32 1, %s4
  %s7 = scalar_select 0, %s6, %s4
  loop: start=0, step=1, limit=4
  $region2: #{dbnet_forward.23} parent=0 // loop_pre_header
    _
  $region3: #{dbnet_forward.23} parent=0 // loop_header
    %s9 = sphi 0, %s13
    %p10 = scmp.ge.s32.totalorder %s9, 4
    %s19 = sphi 0, %s21
    %s22 = sphi 0, %s19
    %s23 = sphi 0, %s22
    %s39 = sphi 0, %s23
    %s43 = sphi 0, %s43
    %s45 = sphi 0, %s43
    %s46 = sphi 0, %s45
    %s60 = sphi 0, %s46
    %s64 = sphi 0, %s64
    %s66 = sphi 0, %s64
    %s67 = sphi 0, %s66
    %s81 = sphi 0, %s67
    %s87 = sphi 0, %s89
    %s90 = sphi 0, %s87
    %s91 = sphi 0, %s90
    %s107 = sphi 0, %s91
  $region4: #{dbnet_forward.23} parent=0 // loop_header_branch
    %12 = sbr.rel (%p10) target = $region8
  $region5: #{dbnet_forward.23} parent=0 // loop_body
    %s14 = ssub.s32 %s9, 1
    %s15 = ssub.s32 %s9, 2
    %s16 = sadd.s32 %s9, 1
    %s17 = ssub.s32 %s9, %s16
    %p18 = scmp.eq.s32.totalorder %s17, 0
    %s20 = sadd.s32 %s19, 1
    %s21 = scalar_select %p18, %s19, %s20
    %p24 = pneg %p18
    %p25 = scmp.eq.s32.totalorder %s9, 1
    %p26 = por %p24, %p25
    %p27 = scmp.ne.s32.totalorder %s19, %s22
    %p28 = scmp.eq.s32.totalorder %s9, 0
    %p29 = por %p27, %p28
    %p30 = scmp.ne.s32.totalorder %s19, %s22
    %p31 = scmp.eq.s32.totalorder %s14, 1
    %p32 = por %p30, %p31
    %p33 = scmp.ne.s32.totalorder %s22, %s23
    %p34 = scmp.eq.s32.totalorder %s14, 0
    %p35 = por %p33, %p34
    %p36 = scmp.ne.s32.totalorder %s22, %s23
    %p37 = scmp.eq.s32.totalorder %s15, 1
    %p38 = por %p36, %p37
    %p40 = scmp.ne.s32.totalorder %s23, %s39
    %p41 = scmp.eq.s32.totalorder %s15, 0
    %p42 = por %p40, %p41
    %s44 = sadd.s32 %s43, 1
    %p47 = scmp.eq.s32.totalorder %s9, 1
    %p48 = scmp.ne.s32.totalorder %s43, %s45
    %p49 = scmp.eq.s32.totalorder %s9, 0
    %p50 = por %p48, %p49
    %p51 = scmp.ne.s32.totalorder %s43, %s45
    %p52 = scmp.eq.s32.totalorder %s14, 1
    %p53 = por %p51, %p52
    %p54 = scmp.ne.s32.totalorder %s45, %s46
    %p55 = scmp.eq.s32.totalorder %s14, 0
    %p56 = por %p54, %p55
    %p57 = scmp.ne.s32.totalorder %s45, %s46
    %p58 = scmp.eq.s32.totalorder %s15, 1
    %p59 = por %p57, %p58
    %p61 = scmp.ne.s32.totalorder %s46, %s60
    %p62 = scmp.eq.s32.totalorder %s15, 0
    %p63 = por %p61, %p62
    %s65 = sadd.s32 %s64, 1
    %p68 = scmp.eq.s32.totalorder %s9, 1
    %p69 = scmp.ne.s32.totalorder %s64, %s66
    %p70 = scmp.eq.s32.totalorder %s9, 0
    %p71 = por %p69, %p70
    %p72 = scmp.ne.s32.totalorder %s64, %s66
    %p73 = scmp.eq.s32.totalorder %s14, 1
    %p74 = por %p72, %p73
    %p75 = scmp.ne.s32.totalorder %s66, %s67
    %p76 = scmp.eq.s32.totalorder %s14, 0
    %p77 = por %p75, %p76
    %p78 = scmp.ne.s32.totalorder %s66, %s67
    %p79 = scmp.eq.s32.totalorder %s15, 1
    %p80 = por %p78, %p79
    %p82 = scmp.ne.s32.totalorder %s67, %s81
    %p83 = scmp.eq.s32.totalorder %s15, 0
    %p84 = por %p82, %p83
    %s85 = ssub.s32 %s9, %s16
    %p86 = scmp.eq.s32.totalorder %s85, 0
    %s88 = sadd.s32 %s87, 1
    %s89 = scalar_select %p86, %s87, %s88
    %p92 = pneg %p86
    %p93 = scmp.eq.s32.totalorder %s9, 1
    %p94 = por %p92, %p93
    %p95 = scmp.ne.s32.totalorder %s87, %s90
    %p96 = scmp.eq.s32.totalorder %s9, 0
    %p97 = por %p95, %p96
    %p98 = scmp.ne.s32.totalorder %s87, %s90
    %p99 = scmp.eq.s32.totalorder %s14, 1
    %p100 = por %p98, %p99
    %p101 = scmp.ne.s32.totalorder %s90, %s91
    %p102 = scmp.eq.s32.totalorder %s14, 0
    %p103 = por %p101, %p102
    %p104 = scmp.ne.s32.totalorder %s90, %s91
    %p105 = scmp.eq.s32.totalorder %s15, 1
    %p106 = por %p104, %p105
    %p108 = scmp.ne.s32.totalorder %s91, %s107
    %p109 = scmp.eq.s32.totalorder %s15, 0
    %p110 = por %p108, %p109
    %p111 = scmp.le.s32.totalorder 1, %s9
    %p112 = scmp.lt.s32.totalorder %s9, 3
    %p113 = pnand %p111, %p112
    %p114 = pneg %p113
    // Predicated region
    $region9: #{dbnet_forward.23} parent=5 // pred_check
      _
    $region10: #{dbnet_forward.23} parent=5 // pred_check_branch
      %116 = sbr.rel (%p113) target = $region12
    $region11: #{dbnet_forward.23} parent=5 // pred_region
      %s117 = ssub.s32 %s9, 1
      // Predicated region
      $region13: #{dbnet_forward.23} parent=11 // pred_check
        %p118 = pneg %p56
      $region14: #{dbnet_forward.23} parent=11 // pred_check_branch
        %120 = sbr.rel (%p118) target = $region16
      $region15: #{dbnet_forward.23} parent=11 // pred_region
        _
      $region16: #{dbnet_forward.23} parent=11 // pred_fallthru
        _
      // Predicated region
      $region17: #{dbnet_forward.23} parent=11 // pred_check
        %p121 = pneg %p77
      $region18: #{dbnet_forward.23} parent=11 // pred_check_branch
        %123 = sbr.rel (%p121) target = $region20
      $region19: #{dbnet_forward.23} parent=11 // pred_region
        _
      $region20: #{dbnet_forward.23} parent=11 // pred_fallthru
        _
    $region12: #{dbnet_forward.23} parent=5 // pred_fallthru
      _
    %p124 = scmp.lt.s32.totalorder %s9, 2
    // Predicated region
    $region21: #{dbnet_forward.23} parent=5 // pred_check
      %p125 = pneg %p124
    $region22: #{dbnet_forward.23} parent=5 // pred_check_branch
      %127 = sbr.rel (%p125) target = $region24
    $region23: #{dbnet_forward.23} parent=5 // pred_region
      // Predicated region
      $region25: #{dbnet_forward.23} parent=23 // pred_check
        %p128 = pneg %p29
      $region26: #{dbnet_forward.23} parent=23 // pred_check_branch
        %130 = sbr.rel (%p128) target = $region28
      $region27: #{dbnet_forward.23} parent=23 // pred_region
        %s131 = smul.u32 32, %s9
        %p132 = scmp.lt.s32.totalorder %s131, 63
        %s133 = scalar_select %p132, %s131, 63
        %s134 = smul.addr %s133, 4
        %s135 = scalar_lea.vmem %s0, %s134
        %s136 = smul.u32 32, %s9
      $region28: #{dbnet_forward.23} parent=23 // pred_fallthru
        _
    $region24: #{dbnet_forward.23} parent=5 // pred_fallthru
      _
    %p137 = scmp.le.s32.totalorder 1, %s9
    %p138 = scmp.lt.s32.totalorder %s9, 3
    %p139 = pnand %p137, %p138
    %p140 = pneg %p139
    // Predicated region
    $region29: #{dbnet_forward.23} parent=5 // pred_check
      _
    $region30: #{dbnet_forward.23} parent=5 // pred_check_branch
      %142 = sbr.rel (%p139) target = $region32
    $region31: #{dbnet_forward.23} parent=5 // pred_region
      %s143 = ssub.s32 %s9, 1
      %s144 = smul.u32 32, %s14
      %p145 = scmp.lt.s32.totalorder %s144, 63
      %s146 = scalar_select %p145, %s144, 63
      %s147 = smul.addr %s146, 4
      %s148 = scalar_lea.vmem %s0, %s147
      %p149 = pneg %p35
      %p150 = pneg %p32
      %p151 = pneg %p56
      %p152 = pneg %p53
      %p153 = pneg %p77
      %p154 = pneg %p74
      %p155 = pneg %p103
      %p156 = pneg %p100
      %s157 = smul.u32 32, %s14
      %p158 = scmp.lt.s32.totalorder %s157, 63
      %s159 = scalar_select %p158, %s157, 63
      %s160 = smul.addr %s159, 4
      %s161 = scalar_lea.vmem %s3, %s160
      %s162 = smul.u32 32, %s14
      %p163 = scmp.lt.s32.totalorder %s162, 63
      %s164 = scalar_select %p163, %s162, 63
      %s165 = smul.addr %s164, 4
      %s166 = scalar_lea.vmem %s0, %s165
      %s167 = smul.u32 32, %s14
      %s168 = smul.u32 32, %s14
      %p169 = scmp.lt.s32.totalorder %s168, 63
      %s170 = scalar_select %p169, %s168, 63
      %s171 = smul.addr %s170, 4
      %s172 = scalar_lea.vmem %s3, %s171
      %s173 = smul.u32 32, %s14
      %v175 = vld [vmem:[%s166] sm:$0xf]
      %v176 = vld [vmem:[%s166 + $0x4] sm:$0xf]
      %v177 = vld [vmem:[%s166 + $0x8] sm:$0xf]
      %v178 = vld [vmem:[%s166 + $0xc] sm:$0xf]
      %v179 = vld [vmem:[%s166 + $0x10] sm:$0xf]
      %v180 = vld [vmem:[%s166 + $0x14] sm:$0xf]
      %v181 = vld [vmem:[%s166 + $0x18] sm:$0xf]
      %v182 = vld [vmem:[%s166 + $0x1c] sm:$0xf]
      %v183 = vld [vmem:[%s166 + $0x20] sm:$0xf]
      %v184 = vld [vmem:[%s166 + $0x24] sm:$0xf]
      %v185 = vld [vmem:[%s166 + $0x28] sm:$0xf]
      %v186 = vld [vmem:[%s166 + $0x2c] sm:$0xf]
      %v187 = vld [vmem:[%s166 + $0x30] sm:$0xf]
      %v188 = vld [vmem:[%s166 + $0x34] sm:$0xf]
      %v189 = vld [vmem:[%s166 + $0x38] sm:$0xf]
      %v190 = vld [vmem:[%s166 + $0x3c] sm:$0xf]
      %v191 = vld [vmem:[%s166 + $0x40] sm:$0xf]
      %v192 = vld [vmem:[%s166 + $0x44] sm:$0xf]
      %v193 = vld [vmem:[%s166 + $0x48] sm:$0xf]
      %v194 = vld [vmem:[%s166 + $0x4c] sm:$0xf]
      %v195 = vld [vmem:[%s166 + $0x50] sm:$0xf]
      %v196 = vld [vmem:[%s166 + $0x54] sm:$0xf]
      %v197 = vld [vmem:[%s166 + $0x58] sm:$0xf]
      %v198 = vld [vmem:[%s166 + $0x5c] sm:$0xf]
      %v199 = vld [vmem:[%s166 + $0x60] sm:$0xf]
      %v200 = vld [vmem:[%s166 + $0x64] sm:$0xf]
      %v201 = vld [vmem:[%s166 + $0x68] sm:$0xf]
      %v202 = vld [vmem:[%s166 + $0x6c] sm:$0xf]
      %v203 = vld [vmem:[%s166 + $0x70] sm:$0xf]
      %v204 = vld [vmem:[%s166 + $0x74] sm:$0xf]
      %v205 = vld [vmem:[%s166 + $0x78] sm:$0xf]
      %v206 = vld [vmem:[%s166 + $0x7c] sm:$0xf]
      %v239 = vunpack.c.l.b16 %v175
      %v240 = vunpack.c.l.b16 %v176
      %v241 = vunpack.c.l.b16 %v177
      %v242 = vunpack.c.l.b16 %v178
      %v243 = vunpack.c.l.b16 %v179
      %v244 = vunpack.c.l.b16 %v180
      %v245 = vunpack.c.l.b16 %v181
      %v246 = vunpack.c.l.b16 %v182
      %v247 = vunpack.c.l.b16 %v183
      %v248 = vunpack.c.l.b16 %v184
      %v249 = vunpack.c.l.b16 %v185
      %v250 = vunpack.c.l.b16 %v186
      %v251 = vunpack.c.l.b16 %v187
      %v252 = vunpack.c.l.b16 %v188
      %v253 = vunpack.c.l.b16 %v189
      %v254 = vunpack.c.l.b16 %v190
      %v255 = vunpack.c.l.b16 %v191
      %v256 = vunpack.c.l.b16 %v192
      %v257 = vunpack.c.l.b16 %v193
      %v258 = vunpack.c.l.b16 %v194
      %v259 = vunpack.c.l.b16 %v195
      %v260 = vunpack.c.l.b16 %v196
      %v261 = vunpack.c.l.b16 %v197
      %v262 = vunpack.c.l.b16 %v198
      %v263 = vunpack.c.l.b16 %v199
      %v264 = vunpack.c.l.b16 %v200
      %v265 = vunpack.c.l.b16 %v201
      %v266 = vunpack.c.l.b16 %v202
      %v267 = vunpack.c.l.b16 %v203
      %v268 = vunpack.c.l.b16 %v204
      %v269 = vunpack.c.l.b16 %v205
      %v270 = vunpack.c.l.b16 %v206
      %v271 = vpack.c.b16 %v240, %v239
      %v272 = vpack.c.b16 %v242, %v241
      %v273 = vpack.c.b16 %v244, %v243
      %v274 = vpack.c.b16 %v246, %v245
      %v275 = vpack.c.b16 %v248, %v247
      %v276 = vpack.c.b16 %v250, %v249
      %v277 = vpack.c.b16 %v252, %v251
      %v278 = vpack.c.b16 %v254, %v253
      %v279 = vpack.c.b16 %v256, %v255
      %v280 = vpack.c.b16 %v258, %v257
      %v281 = vpack.c.b16 %v260, %v259
      %v282 = vpack.c.b16 %v262, %v261
      %v283 = vpack.c.b16 %v264, %v263
      %v284 = vpack.c.b16 %v266, %v265
      %v285 = vpack.c.b16 %v268, %v267
      %v286 = vpack.c.b16 %v270, %v269
      %vm287 = vcmask 220160
      %v290 = vsel %vm287, %v271, 0
      %v293 = vsel %vm287, %v272, 0
      %v296 = vsel %vm287, %v273, 0
      %v299 = vsel %vm287, %v274, 0
      %v302 = vsel %vm287, %v275, 0
      %v305 = vsel %vm287, %v276, 0
      %v308 = vsel %vm287, %v277, 0
      %v311 = vsel %vm287, %v278, 0
      %v314 = vsel %vm287, %v279, 0
      %v317 = vsel %vm287, %v280, 0
      %v320 = vsel %vm287, %v281, 0
      %v323 = vsel %vm287, %v282, 0
      %v326 = vsel %vm287, %v283, 0
      %v329 = vsel %vm287, %v284, 0
      %v332 = vsel %vm287, %v285, 0
      %v335 = vsel %vm287, %v286, 0
      %v337 = vld [vmem:[%s1] sm:$0xf]
      %v338 = vld [vmem:[%s1 + $0x4] sm:$0xf]
      %v339 = vld [vmem:[%s1 + $0x8] sm:$0xf]
      %v340 = vld [vmem:[%s1 + $0xc] sm:$0xf]
      %v341 = vld [vmem:[%s1 + $0x10] sm:$0xf]
      %v342 = vld [vmem:[%s1 + $0x14] sm:$0xf]
      %v343 = vld [vmem:[%s1 + $0x18] sm:$0xf]
      %v344 = vld [vmem:[%s1 + $0x1c] sm:$0xf]
      %v345 = vld [vmem:[%s1 + $0x20] sm:$0xf]
      %v346 = vld [vmem:[%s1 + $0x24] sm:$0xf]
      %v347 = vld [vmem:[%s1 + $0x28] sm:$0xf]
      %v348 = vld [vmem:[%s1 + $0x2c] sm:$0xf]
      %v349 = vld [vmem:[%s1 + $0x30] sm:$0xf]
      %v350 = vld [vmem:[%s1 + $0x34] sm:$0xf]
      %v351 = vld [vmem:[%s1 + $0x38] sm:$0xf]
      %v352 = vld [vmem:[%s1 + $0x3c] sm:$0xf]
      %v353 = vld [vmem:[%s2] sm:$0x1]
      %v355 = vlaneseq
      %v356 = vshrl.u32 %v355, 7
      %v357 = vsub.s32 0, %v356
      %v358 = vrot.slane %v353, %v357
      %v376 = vunpack.c.l.b16 %v337
      %v377 = vunpack.c.l.b16 %v338
      %v378 = vunpack.c.l.b16 %v339
      %v379 = vunpack.c.l.b16 %v340
      %v380 = vunpack.c.l.b16 %v341
      %v381 = vunpack.c.l.b16 %v342
      %v382 = vunpack.c.l.b16 %v343
      %v383 = vunpack.c.l.b16 %v344
      %v384 = vunpack.c.l.b16 %v345
      %v385 = vunpack.c.l.b16 %v346
      %v386 = vunpack.c.l.b16 %v347
      %v387 = vunpack.c.l.b16 %v348
      %v388 = vunpack.c.l.b16 %v349
      %v389 = vunpack.c.l.b16 %v350
      %v390 = vunpack.c.l.b16 %v351
      %v391 = vunpack.c.l.b16 %v352
      %v392 = vpack.c.b16 %v377, %v376
      %v393 = vpack.c.b16 %v379, %v378
      %v394 = vpack.c.b16 %v381, %v380
      %v395 = vpack.c.b16 %v383, %v382
      %v396 = vpack.c.b16 %v385, %v384
      %v397 = vpack.c.b16 %v387, %v386
      %v398 = vpack.c.b16 %v389, %v388
      %v399 = vpack.c.b16 %v391, %v390
      %408 = vmatprep.subr.bf16.mxu0 0
      %409 = vmatpush1.bf16.msra.mxu0 %v392
      %410 = vmatprep.subr.bf16.mxu0 0
      %411 = vmatpush1.bf16.msra.mxu0 %v393
      %412 = vmatprep.subr.bf16.mxu0 0
      %413 = vmatpush1.bf16.msra.mxu0 %v394
      %414 = vmatprep.subr.bf16.mxu0 0
      %415 = vmatpush1.bf16.msra.mxu0 %v395
      %416 = vmatprep.subr.bf16.mxu0 0
      %417 = vmatpush1.bf16.msra.mxu0 %v396
      %418 = vmatprep.subr.bf16.mxu0 0
      %419 = vmatpush1.bf16.msra.mxu0 %v397
      %420 = vmatprep.subr.bf16.mxu0 0
      %421 = vmatpush1.bf16.msra.mxu0 %v398
      %422 = vmatprep.subr.bf16.mxu0 0
      %423 = vmatpush1.bf16.msra.mxu0 %v399
      %424 = vmatprep.subr.bf16.mxu0 0
      %425 = vmatpush1.bf16.msra.mxu0 0
      %426 = vmatprep.subr.bf16.mxu0 0
      %427 = vmatpush1.bf16.msra.mxu0 0
      %428 = vmatprep.subr.bf16.mxu0 0
      %429 = vmatpush1.bf16.msra.mxu0 0
      %430 = vmatprep.subr.bf16.mxu0 0
      %431 = vmatpush1.bf16.msra.mxu0 0
      %432 = vmatprep.subr.bf16.mxu0 0
      %433 = vmatpush1.bf16.msra.mxu0 0
      %434 = vmatprep.subr.bf16.mxu0 0
      %435 = vmatpush1.bf16.msra.mxu0 0
      %436 = vmatprep.subr.bf16.mxu0 0
      %437 = vmatpush1.bf16.msra.mxu0 0
      %438 = vmatprep.subr.bf16.mxu0 0
      %439 = vmatpush1.bf16.msra.mxu0 0
      %440 = vmatprep.mubr.bf16.mxu0 0
      %441 = vmatmul.mubr.bf16.gmra.mrb[0].mxu0 %v290
      %v442 = vpop.f32.mrb[0].mxu0
      %v443 = vadd.f32 %v358, %v442
      %v444 = vpop.f32.mrb[0].mxu0
      %v445 = vpop.f32.mrb[0].mxu0
      %v446 = vadd.f32 %v358, %v445
      %v447 = vpop.f32.mrb[0].mxu0
      %448 = vmatprep.mubr.bf16.mxu0 0
      %449 = vmatmul.mubr.bf16.gmra.mrb[0].mxu0 %v293
      %v450 = vpop.f32.mrb[0].mxu0
      %v451 = vadd.f32 %v358, %v450
      %v452 = vpop.f32.mrb[0].mxu0
      %v453 = vpop.f32.mrb[0].mxu0
      %v454 = vadd.f32 %v358, %v453
      %v455 = vpop.f32.mrb[0].mxu0
      %456 = vmatprep.mubr.bf16.mxu0 0
      %457 = vmatmul.mubr.bf16.gmra.mrb[0].mxu0 %v296
      %v458 = vpop.f32.mrb[0].mxu0
      %v459 = vadd.f32 %v358, %v458
      %v460 = vpop.f32.mrb[0].mxu0
      %v461 = vpop.f32.mrb[0].mxu0
      %v462 = vadd.f32 %v358, %v461
      %v463 = vpop.f32.mrb[0].mxu0
      %464 = vmatprep.mubr.bf16.mxu0 0
      %465 = vmatmul.mubr.bf16.gmra.mrb[0].mxu0 %v299
      %v466 = vpop.f32.mrb[0].mxu0
      %v467 = vadd.f32 %v358, %v466
      %v468 = vpop.f32.mrb[0].mxu0
      %v469 = vpop.f32.mrb[0].mxu0
      %v470 = vadd.f32 %v358, %v469
      %v471 = vpop.f32.mrb[0].mxu0
      %472 = vmatprep.mubr.bf16.mxu0 0
      %473 = vmatmul.mubr.bf16.gmra.mrb[0].mxu0 %v302
      %v474 = vpop.f32.mrb[0].mxu0
      %v475 = vadd.f32 %v358, %v474
      %v476 = vpop.f32.mrb[0].mxu0
      %v477 = vpop.f32.mrb[0].mxu0
      %v478 = vadd.f32 %v358, %v477
      %v479 = vpop.f32.mrb[0].mxu0
      %480 = vmatprep.mubr.bf16.mxu0 0
      %481 = vmatmul.mubr.bf16.gmra.mrb[0].mxu0 %v305
      %v482 = vpop.f32.mrb[0].mxu0
      %v483 = vadd.f32 %v358, %v482
      %v484 = vpop.f32.mrb[0].mxu0
      %v485 = vpop.f32.mrb[0].mxu0
      %v486 = vadd.f32 %v358, %v485
      %v487 = vpop.f32.mrb[0].mxu0
      %488 = vmatprep.mubr.bf16.mxu0 0
      %489 = vmatmul.mubr.bf16.gmra.mrb[0].mxu0 %v308
      %v490 = vpop.f32.mrb[0].mxu0
      %v491 = vadd.f32 %v358, %v490
      %v492 = vpop.f32.mrb[0].mxu0
      %v493 = vpop.f32.mrb[0].mxu0
      %v494 = vadd.f32 %v358, %v493
      %v495 = vpop.f32.mrb[0].mxu0
      %496 = vmatprep.mubr.bf16.mxu0 0
      %497 = vmatmul.mubr.bf16.gmra.mrb[0].mxu0 %v311
      %v498 = vpop.f32.mrb[0].mxu0
      %v499 = vadd.f32 %v358, %v498
      %v500 = vpop.f32.mrb[0].mxu0
      %v501 = vpop.f32.mrb[0].mxu0
      %v502 = vadd.f32 %v358, %v501
      %v503 = vpop.f32.mrb[0].mxu0
      %504 = vmatprep.mubr.bf16.mxu0 0
      %505 = vmatmul.mubr.bf16.gmra.mrb[0].mxu0 %v314
      %v506 = vpop.f32.mrb[0].mxu0
      %v507 = vadd.f32 %v358, %v506
      %v508 = vpop.f32.mrb[0].mxu0
      %v509 = vpop.f32.mrb[0].mxu0
      %v510 = vadd.f32 %v358, %v509
      %v511 = vpop.f32.mrb[0].mxu0
      %512 = vmatprep.mubr.bf16.mxu0 0
      %513 = vmatmul.mubr.bf16.gmra.mrb[0].mxu0 %v317
      %v514 = vpop.f32.mrb[0].mxu0
      %v515 = vadd.f32 %v358, %v514
      %v516 = vpop.f32.mrb[0].mxu0
      %v517 = vpop.f32.mrb[0].mxu0
      %v518 = vadd.f32 %v358, %v517
      %v519 = vpop.f32.mrb[0].mxu0
      %520 = vmatprep.mubr.bf16.mxu0 0
      %521 = vmatmul.mubr.bf16.gmra.mrb[0].mxu0 %v320
      %v522 = vpop.f32.mrb[0].mxu0
      %v523 = vadd.f32 %v358, %v522
      %v524 = vpop.f32.mrb[0].mxu0
      %v525 = vpop.f32.mrb[0].mxu0
      %v526 = vadd.f32 %v358, %v525
      %v527 = vpop.f32.mrb[0].mxu0
      %528 = vmatprep.mubr.bf16.mxu0 0
      %529 = vmatmul.mubr.bf16.gmra.mrb[0].mxu0 %v323
      %v530 = vpop.f32.mrb[0].mxu0
      %v531 = vadd.f32 %v358, %v530
      %v532 = vpop.f32.mrb[0].mxu0
      %v533 = vpop.f32.mrb[0].mxu0
      %v534 = vadd.f32 %v358, %v533
      %v535 = vpop.f32.mrb[0].mxu0
      %536 = vmatprep.mubr.bf16.mxu0 0
      %537 = vmatmul.mubr.bf16.gmra.mrb[0].mxu0 %v326
      %v538 = vpop.f32.mrb[0].mxu0
      %v539 = vadd.f32 %v358, %v538
      %v540 = vpop.f32.mrb[0].mxu0
      %v541 = vpop.f32.mrb[0].mxu0
      %v542 = vadd.f32 %v358, %v541
      %v543 = vpop.f32.mrb[0].mxu0
      %544 = vmatprep.mubr.bf16.mxu0 0
      %545 = vmatmul.mubr.bf16.gmra.mrb[0].mxu0 %v329
      %v546 = vpop.f32.mrb[0].mxu0
      %v547 = vadd.f32 %v358, %v546
      %v548 = vpop.f32.mrb[0].mxu0
      %v549 = vpop.f32.mrb[0].mxu0
      %v550 = vadd.f32 %v358, %v549
      %v551 = vpop.f32.mrb[0].mxu0
      %552 = vmatprep.mubr.bf16.mxu0 0
      %553 = vmatmul.mubr.bf16.gmra.mrb[0].mxu0 %v332
      %v554 = vpop.f32.mrb[0].mxu0
      %v555 = vadd.f32 %v358, %v554
      %v556 = vpop.f32.mrb[0].mxu0
      %v557 = vpop.f32.mrb[0].mxu0
      %v558 = vadd.f32 %v358, %v557
      %v559 = vpop.f32.mrb[0].mxu0
      %560 = vmatprep.mubr.bf16.mxu0 0
      %561 = vmatmul.mubr.bf16.gmra.mrb[0].mxu0 %v335
      %v562 = vpop.f32.mrb[0].mxu0
      %v563 = vadd.f32 %v358, %v562
      %v564 = vpop.f32.mrb[0].mxu0
      %v565 = vpop.f32.mrb[0].mxu0
      %v566 = vadd.f32 %v358, %v565
      %v567 = vpop.f32.mrb[0].mxu0
      %568 = vdwg.mxu0
      %v569 = vadd.f32 %v443, 3.0
      %v570 = vadd.f32 %v446, 3.0
      %v571 = vadd.f32 %v451, 3.0
      %v572 = vadd.f32 %v454, 3.0
      %v573 = vadd.f32 %v459, 3.0
      %v574 = vadd.f32 %v462, 3.0
      %v575 = vadd.f32 %v467, 3.0
      %v576 = vadd.f32 %v470, 3.0
      %v577 = vadd.f32 %v475, 3.0
      %v578 = vadd.f32 %v478, 3.0
      %v579 = vadd.f32 %v483, 3.0
      %v580 = vadd.f32 %v486, 3.0
      %v581 = vadd.f32 %v491, 3.0
      %v582 = vadd.f32 %v494, 3.0
      %v583 = vadd.f32 %v499, 3.0
      %v584 = vadd.f32 %v502, 3.0
      %v585 = vadd.f32 %v507, 3.0
      %v586 = vadd.f32 %v510, 3.0
      %v587 = vadd.f32 %v515, 3.0
      %v588 = vadd.f32 %v518, 3.0
      %v589 = vadd.f32 %v523, 3.0
      %v590 = vadd.f32 %v526, 3.0
      %v591 = vadd.f32 %v531, 3.0
      %v592 = vadd.f32 %v534, 3.0
      %v593 = vadd.f32 %v539, 3.0
      %v594 = vadd.f32 %v542, 3.0
      %v595 = vadd.f32 %v547, 3.0
      %v596 = vadd.f32 %v550, 3.0
      %v597 = vadd.f32 %v555, 3.0
      %v598 = vadd.f32 %v558, 3.0
      %v599 = vadd.f32 %v563, 3.0
      %v600 = vadd.f32 %v566, 3.0
      %v601 = vmax.f32 %v569, 0.0
      %v602 = vmax.f32 %v570, 0.0
      %v603 = vmax.f32 %v571, 0.0
      %v604 = vmax.f32 %v572, 0.0
      %v605 = vmax.f32 %v573, 0.0
      %v606 = vmax.f32 %v574, 0.0
      %v607 = vmax.f32 %v575, 0.0
      %v608 = vmax.f32 %v576, 0.0
      %v609 = vmax.f32 %v577, 0.0
      %v610 = vmax.f32 %v578, 0.0
      %v611 = vmax.f32 %v579, 0.0
      %v612 = vmax.f32 %v580, 0.0
      %v613 = vmax.f32 %v581, 0.0
      %v614 = vmax.f32 %v582, 0.0
      %v615 = vmax.f32 %v583, 0.0
      %v616 = vmax.f32 %v584, 0.0
      %v617 = vmax.f32 %v585, 0.0
      %v618 = vmax.f32 %v586, 0.0
      %v619 = vmax.f32 %v587, 0.0
      %v620 = vmax.f32 %v588, 0.0
      %v621 = vmax.f32 %v589, 0.0
      %v622 = vmax.f32 %v590, 0.0
      %v623 = vmax.f32 %v591, 0.0
      %v624 = vmax.f32 %v592, 0.0
      %v625 = vmax.f32 %v593, 0.0
      %v626 = vmax.f32 %v594, 0.0
      %v627 = vmax.f32 %v595, 0.0
      %v628 = vmax.f32 %v596, 0.0
      %v629 = vmax.f32 %v597, 0.0
      %v630 = vmax.f32 %v598, 0.0
      %v631 = vmax.f32 %v599, 0.0
      %v632 = vmax.f32 %v600, 0.0
      %v633 = vmin.f32 %v601, 6.0
      %v634 = vmin.f32 %v602, 6.0
      %v635 = vmin.f32 %v603, 6.0
      %v636 = vmin.f32 %v604, 6.0
      %v637 = vmin.f32 %v605, 6.0
      %v638 = vmin.f32 %v606, 6.0
      %v639 = vmin.f32 %v607, 6.0
      %v640 = vmin.f32 %v608, 6.0
      %v641 = vmin.f32 %v609, 6.0
      %v642 = vmin.f32 %v610, 6.0
      %v643 = vmin.f32 %v611, 6.0
      %v644 = vmin.f32 %v612, 6.0
      %v645 = vmin.f32 %v613, 6.0
      %v646 = vmin.f32 %v614, 6.0
      %v647 = vmin.f32 %v615, 6.0
      %v648 = vmin.f32 %v616, 6.0
      %v649 = vmin.f32 %v617, 6.0
      %v650 = vmin.f32 %v618, 6.0
      %v651 = vmin.f32 %v619, 6.0
      %v652 = vmin.f32 %v620, 6.0
      %v653 = vmin.f32 %v621, 6.0
      %v654 = vmin.f32 %v622, 6.0
      %v655 = vmin.f32 %v623, 6.0
      %v656 = vmin.f32 %v624, 6.0
      %v657 = vmin.f32 %v625, 6.0
      %v658 = vmin.f32 %v626, 6.0
      %v659 = vmin.f32 %v627, 6.0
      %v660 = vmin.f32 %v628, 6.0
      %v661 = vmin.f32 %v629, 6.0
      %v662 = vmin.f32 %v630, 6.0
      %v663 = vmin.f32 %v631, 6.0
      %v664 = vmin.f32 %v632, 6.0
      %v665 = vmul.f32 %v443, %v633
      %v666 = vmul.f32 %v446, %v634
      %v667 = vmul.f32 %v451, %v635
      %v668 = vmul.f32 %v454, %v636
      %v669 = vmul.f32 %v459, %v637
      %v670 = vmul.f32 %v462, %v638
      %v671 = vmul.f32 %v467, %v639
      %v672 = vmul.f32 %v470, %v640
      %v673 = vmul.f32 %v475, %v641
      %v674 = vmul.f32 %v478, %v642
      %v675 = vmul.f32 %v483, %v643
      %v676 = vmul.f32 %v486, %v644
      %v677 = vmul.f32 %v491, %v645
      %v678 = vmul.f32 %v494, %v646
      %v679 = vmul.f32 %v499, %v647
      %v680 = vmul.f32 %v502, %v648
      %v681 = vmul.f32 %v507, %v649
      %v682 = vmul.f32 %v510, %v650
      %v683 = vmul.f32 %v515, %v651
      %v684 = vmul.f32 %v518, %v652
      %v685 = vmul.f32 %v523, %v653
      %v686 = vmul.f32 %v526, %v654
      %v687 = vmul.f32 %v531, %v655
      %v688 = vmul.f32 %v534, %v656
      %v689 = vmul.f32 %v539, %v657
      %v690 = vmul.f32 %v542, %v658
      %v691 = vmul.f32 %v547, %v659
      %v692 = vmul.f32 %v550, %v660
      %v693 = vmul.f32 %v555, %v661
      %v694 = vmul.f32 %v558, %v662
      %v695 = vmul.f32 %v563, %v663
      %v696 = vmul.f32 %v566, %v664
      %v697 = vmul.f32 %v665, 0.16666667
      %v698 = vmul.f32 %v666, 0.16666667
      %v699 = vmul.f32 %v667, 0.16666667
      %v700 = vmul.f32 %v668, 0.16666667
      %v701 = vmul.f32 %v669, 0.16666667
      %v702 = vmul.f32 %v670, 0.16666667
      %v703 = vmul.f32 %v671, 0.16666667
      %v704 = vmul.f32 %v672, 0.16666667
      %v705 = vmul.f32 %v673, 0.16666667
      %v706 = vmul.f32 %v674, 0.16666667
      %v707 = vmul.f32 %v675, 0.16666667
      %v708 = vmul.f32 %v676, 0.16666667
      %v709 = vmul.f32 %v677, 0.16666667
      %v710 = vmul.f32 %v678, 0.16666667
      %v711 = vmul.f32 %v679, 0.16666667
      %v712 = vmul.f32 %v680, 0.16666667
      %v713 = vmul.f32 %v681, 0.16666667
      %v714 = vmul.f32 %v682, 0.16666667
      %v715 = vmul.f32 %v683, 0.16666667
      %v716 = vmul.f32 %v684, 0.16666667
      %v717 = vmul.f32 %v685, 0.16666667
      %v718 = vmul.f32 %v686, 0.16666667
      %v719 = vmul.f32 %v687, 0.16666667
      %v720 = vmul.f32 %v688, 0.16666667
      %v721 = vmul.f32 %v689, 0.16666667
      %v722 = vmul.f32 %v690, 0.16666667
      %v723 = vmul.f32 %v691, 0.16666667
      %v724 = vmul.f32 %v692, 0.16666667
      %v725 = vmul.f32 %v693, 0.16666667
      %v726 = vmul.f32 %v694, 0.16666667
      %v727 = vmul.f32 %v695, 0.16666667
      %v728 = vmul.f32 %v696, 0.16666667
      %v729 = vpack.c.bf16 %v698, %v697
      %v730 = vpack.c.bf16 %v700, %v699
      %v731 = vpack.c.bf16 %v702, %v701
      %v732 = vpack.c.bf16 %v704, %v703
      %v733 = vpack.c.bf16 %v706, %v705
      %v734 = vpack.c.bf16 %v708, %v707
      %v735 = vpack.c.bf16 %v710, %v709
      %v736 = vpack.c.bf16 %v712, %v711
      %v737 = vpack.c.bf16 %v714, %v713
      %v738 = vpack.c.bf16 %v716, %v715
      %v739 = vpack.c.bf16 %v718, %v717
      %v740 = vpack.c.bf16 %v720, %v719
      %v741 = vpack.c.bf16 %v722, %v721
      %v742 = vpack.c.bf16 %v724, %v723
      %v743 = vpack.c.bf16 %v726, %v725
      %v744 = vpack.c.bf16 %v728, %v727
      %v761 = vunpack.c.l.b16 %v729
      %v762 = vunpack.c.h.b16 %v729
      %v763 = vunpack.c.l.b16 %v730
      %v764 = vunpack.c.h.b16 %v730
      %v765 = vunpack.c.l.b16 %v731
      %v766 = vunpack.c.h.b16 %v731
      %v767 = vunpack.c.l.b16 %v732
      %v768 = vunpack.c.h.b16 %v732
      %v769 = vunpack.c.l.b16 %v733
      %v770 = vunpack.c.h.b16 %v733
      %v771 = vunpack.c.l.b16 %v734
      %v772 = vunpack.c.h.b16 %v734
      %v773 = vunpack.c.l.b16 %v735
      %v774 = vunpack.c.h.b16 %v735
      %v775 = vunpack.c.l.b16 %v736
      %v776 = vunpack.c.h.b16 %v736
      %v777 = vunpack.c.l.b16 %v737
      %v778 = vunpack.c.h.b16 %v737
      %v779 = vunpack.c.l.b16 %v738
      %v780 = vunpack.c.h.b16 %v738
      %v781 = vunpack.c.l.b16 %v739
      %v782 = vunpack.c.h.b16 %v739
      %v783 = vunpack.c.l.b16 %v740
      %v784 = vunpack.c.h.b16 %v740
      %v785 = vunpack.c.l.b16 %v741
      %v786 = vunpack.c.h.b16 %v741
      %v787 = vunpack.c.l.b16 %v742
      %v788 = vunpack.c.h.b16 %v742
      %v789 = vunpack.c.l.b16 %v743
      %v790 = vunpack.c.h.b16 %v743
      %v791 = vunpack.c.l.b16 %v744
      %v792 = vunpack.c.h.b16 %v744
      %v793 = vpack.c.b16 %v761, %v761
      %v794 = vpack.c.b16 %v762, %v762
      %v795 = vpack.c.b16 %v763, %v763
      %v796 = vpack.c.b16 %v764, %v764
      %v797 = vpack.c.b16 %v765, %v765
      %v798 = vpack.c.b16 %v766, %v766
      %v799 = vpack.c.b16 %v767, %v767
      %v800 = vpack.c.b16 %v768, %v768
      %v801 = vpack.c.b16 %v769, %v769
      %v802 = vpack.c.b16 %v770, %v770
      %v803 = vpack.c.b16 %v771, %v771
      %v804 = vpack.c.b16 %v772, %v772
      %v805 = vpack.c.b16 %v773, %v773
      %v806 = vpack.c.b16 %v774, %v774
      %v807 = vpack.c.b16 %v775, %v775
      %v808 = vpack.c.b16 %v776, %v776
      %v809 = vpack.c.b16 %v777, %v777
      %v810 = vpack.c.b16 %v778, %v778
      %v811 = vpack.c.b16 %v779, %v779
      %v812 = vpack.c.b16 %v780, %v780
      %v813 = vpack.c.b16 %v781, %v781
      %v814 = vpack.c.b16 %v782, %v782
      %v815 = vpack.c.b16 %v783, %v783
      %v816 = vpack.c.b16 %v784, %v784
      %v817 = vpack.c.b16 %v785, %v785
      %v818 = vpack.c.b16 %v786, %v786
      %v819 = vpack.c.b16 %v787, %v787
      %v820 = vpack.c.b16 %v788, %v788
      %v821 = vpack.c.b16 %v789, %v789
      %v822 = vpack.c.b16 %v790, %v790
      %v823 = vpack.c.b16 %v791, %v791
      %v824 = vpack.c.b16 %v792, %v792
      %vm857 = vcmask 125952
      %858 = vst.msk [vmem:[%s172] sm:$0xf] %vm857, %v793
      %859 = vst.msk [vmem:[%s172 + $0x4] sm:$0xf] %vm857, %v794
      %860 = vst.msk [vmem:[%s172 + $0x8] sm:$0xf] %vm857, %v795
      %861 = vst.msk [vmem:[%s172 + $0xc] sm:$0xf] %vm857, %v796
      %862 = vst.msk [vmem:[%s172 + $0x10] sm:$0xf] %vm857, %v797
      %863 = vst.msk [vmem:[%s172 + $0x14] sm:$0xf] %vm857, %v798
      %864 = vst.msk [vmem:[%s172 + $0x18] sm:$0xf] %vm857, %v799
      %865 = vst.msk [vmem:[%s172 + $0x1c] sm:$0xf] %vm857, %v800
      %866 = vst.msk [vmem:[%s172 + $0x20] sm:$0xf] %vm857, %v801
      %867 = vst.msk [vmem:[%s172 + $0x24] sm:$0xf] %vm857, %v802
      %868 = vst.msk [vmem:[%s172 + $0x28] sm:$0xf] %vm857, %v803
      %869 = vst.msk [vmem:[%s172 + $0x2c] sm:$0xf] %vm857, %v804
      %870 = vst.msk [vmem:[%s172 + $0x30] sm:$0xf] %vm857, %v805
      %871 = vst.msk [vmem:[%s172 + $0x34] sm:$0xf] %vm857, %v806
      %872 = vst.msk [vmem:[%s172 + $0x38] sm:$0xf] %vm857, %v807
      %873 = vst.msk [vmem:[%s172 + $0x3c] sm:$0xf] %vm857, %v808
      %874 = vst.msk [vmem:[%s172 + $0x40] sm:$0xf] %vm857, %v809
      %875 = vst.msk [vmem:[%s172 + $0x44] sm:$0xf] %vm857, %v810
      %876 = vst.msk [vmem:[%s172 + $0x48] sm:$0xf] %vm857, %v811
      %877 = vst.msk [vmem:[%s172 + $0x4c] sm:$0xf] %vm857, %v812
      %878 = vst.msk [vmem:[%s172 + $0x50] sm:$0xf] %vm857, %v813
      %879 = vst.msk [vmem:[%s172 + $0x54] sm:$0xf] %vm857, %v814
      %880 = vst.msk [vmem:[%s172 + $0x58] sm:$0xf] %vm857, %v815
      %881 = vst.msk [vmem:[%s172 + $0x5c] sm:$0xf] %vm857, %v816
      %882 = vst.msk [vmem:[%s172 + $0x60] sm:$0xf] %vm857, %v817
      %883 = vst.msk [vmem:[%s172 + $0x64] sm:$0xf] %vm857, %v818
      %884 = vst.msk [vmem:[%s172 + $0x68] sm:$0xf] %vm857, %v819
      %885 = vst.msk [vmem:[%s172 + $0x6c] sm:$0xf] %vm857, %v820
      %886 = vst.msk [vmem:[%s172 + $0x70] sm:$0xf] %vm857, %v821
      %887 = vst.msk [vmem:[%s172 + $0x74] sm:$0xf] %vm857, %v822
      %888 = vst.msk [vmem:[%s172 + $0x78] sm:$0xf] %vm857, %v823
      %889 = vst.msk [vmem:[%s172 + $0x7c] sm:$0xf] %vm857, %v824
      %s890 = smul.u32 32, %s14
      %p891 = scmp.lt.s32.totalorder %s890, 63
      %s892 = scalar_select %p891, %s890, 63
      %s893 = smul.addr %s892, 4
      %s894 = scalar_lea.vmem %s3, %s893
      // Predicated region
      $region33: #{dbnet_forward.23} parent=31 // pred_check
        %p895 = pneg %p100
      $region34: #{dbnet_forward.23} parent=31 // pred_check_branch
        %897 = sbr.rel (%p895) target = $region36
      $region35: #{dbnet_forward.23} parent=31 // pred_region
        %s898 = smul.u32 32, %s14
      $region36: #{dbnet_forward.23} parent=31 // pred_fallthru
        _
    $region32: #{dbnet_forward.23} parent=5 // pred_fallthru
      _
    %p899 = scmp.le.s32.totalorder 2, %s9
    // Predicated region
    $region37: #{dbnet_forward.23} parent=5 // pred_check
      %p900 = pneg %p899
    $region38: #{dbnet_forward.23} parent=5 // pred_check_branch
      %902 = sbr.rel (%p900) target = $region40
    $region39: #{dbnet_forward.23} parent=5 // pred_region
      %s903 = ssub.s32 %s9, 2
      // Predicated region
      $region41: #{dbnet_forward.23} parent=39 // pred_check
        %p904 = pneg %p106
      $region42: #{dbnet_forward.23} parent=39 // pred_check_branch
        %906 = sbr.rel (%p904) target = $region44
      $region43: #{dbnet_forward.23} parent=39 // pred_region
        %s907 = smul.u32 32, %s15
        %p908 = scmp.lt.s32.totalorder %s907, 63
        %s909 = scalar_select %p908, %s907, 63
        %s910 = smul.addr %s909, 4
        %s911 = scalar_lea.vmem %s3, %s910
      $region44: #{dbnet_forward.23} parent=39 // pred_fallthru
        _
    $region40: #{dbnet_forward.23} parent=5 // pred_fallthru
      _
  $region6: #{dbnet_forward.23} parent=0 // loop_footer
    %s13 = sadd.s32 1, %s9
  $region7: #{dbnet_forward.23} parent=0 // loop_footer_branch
    %8 = sbr.rel target = $region3
  $region8: #{dbnet_forward.23} parent=0 // loop_exit
    _

// kernel: dbnet_forward.25
$region0: #{dbnet_forward.25}
  #allocation0 [shape = 'u32[]', space=smem, size = 0x4, offset = 0x4, fixed_abs, tag = 'smem constant byte address 0x4 - core index']
  #allocation1 [shape = 'u32[144,128]{1,0:T(1,128)}', space=vmem, size = 0x12000, scoped, tag = 'internal scratch']
  %s0 = inlined_call_operand.vmem [shape: bf16[128,16], index: 0, kind: input, shape index: {}]
  %s1 = inlined_call_operand.vmem [shape: bf16[128,128], index: 1, kind: input, shape index: {}]
  %s2 = inlined_call_operand.vmem [shape: f32[1,128], index: 2, kind: input, shape index: {}]
  %s3 = inlined_call_operand.vmem [shape: bf16[128,16], index: 3, kind: output, shape index: {}]
  %s4 = sld [smem:[#allocation0]]
  $region45: #{dbnet_forward.25} parent=0
    _
  %s6 = ssub.s32 1, %s4
  %s7 = scalar_select 0, %s6, %s4
  loop: start=0, step=1, limit=4
  $region2: #{dbnet_forward.25} parent=0 // loop_pre_header
    _
  $region3: #{dbnet_forward.25} parent=0 // loop_header
    %s9 = sphi 0, %s13
    %p10 = scmp.ge.s32.totalorder %s9, 4
    %s19 = sphi 0, %s21
    %s22 = sphi 0, %s19
    %s23 = sphi 0, %s22
    %s39 = sphi 0, %s23
    %s43 = sphi 0, %s43
    %s45 = sphi 0, %s43
    %s46 = sphi 0, %s45
    %s60 = sphi 0, %s46
    %s64 = sphi 0, %s64
    %s66 = sphi 0, %s64
    %s67 = sphi 0, %s66
    %s81 = sphi 0, %s67
    %s87 = sphi 0, %s89
    %s90 = sphi 0, %s87
    %s91 = sphi 0, %s90
    %s107 = sphi 0, %s91
  $region4: #{dbnet_forward.25} parent=0 // loop_header_branch
    %12 = sbr.rel (%p10) target = $region8
  $region5: #{dbnet_forward.25} parent=0 // loop_body
    %s14 = ssub.s32 %s9, 1
    %s15 = ssub.s32 %s9, 2
    %s16 = sadd.s32 %s9, 1
    %s17 = ssub.s32 %s9, %s16
    %p18 = scmp.eq.s32.totalorder %s17, 0
    %s20 = sadd.s32 %s19, 1
    %s21 = scalar_select %p18, %s19, %s20
    %p24 = pneg %p18
    %p25 = scmp.eq.s32.totalorder %s9, 1
    %p26 = por %p24, %p25
    %p27 = scmp.ne.s32.totalorder %s19, %s22
    %p28 = scmp.eq.s32.totalorder %s9, 0
    %p29 = por %p27, %p28
    %p30 = scmp.ne.s32.totalorder %s19, %s22
    %p31 = scmp.eq.s32.totalorder %s14, 1
    %p32 = por %p30, %p31
    %p33 = scmp.ne.s32.totalorder %s22, %s23
    %p34 = scmp.eq.s32.totalorder %s14, 0
    %p35 = por %p33, %p34
    %p36 = scmp.ne.s32.totalorder %s22, %s23
    %p37 = scmp.eq.s32.totalorder %s15, 1
    %p38 = por %p36, %p37
    %p40 = scmp.ne.s32.totalorder %s23, %s39
    %p41 = scmp.eq.s32.totalorder %s15, 0
    %p42 = por %p40, %p41
    %s44 = sadd.s32 %s43, 1
    %p47 = scmp.eq.s32.totalorder %s9, 1
    %p48 = scmp.ne.s32.totalorder %s43, %s45
    %p49 = scmp.eq.s32.totalorder %s9, 0
    %p50 = por %p48, %p49
    %p51 = scmp.ne.s32.totalorder %s43, %s45
    %p52 = scmp.eq.s32.totalorder %s14, 1
    %p53 = por %p51, %p52
    %p54 = scmp.ne.s32.totalorder %s45, %s46
    %p55 = scmp.eq.s32.totalorder %s14, 0
    %p56 = por %p54, %p55
    %p57 = scmp.ne.s32.totalorder %s45, %s46
    %p58 = scmp.eq.s32.totalorder %s15, 1
    %p59 = por %p57, %p58
    %p61 = scmp.ne.s32.totalorder %s46, %s60
    %p62 = scmp.eq.s32.totalorder %s15, 0
    %p63 = por %p61, %p62
    %s65 = sadd.s32 %s64, 1
    %p68 = scmp.eq.s32.totalorder %s9, 1
    %p69 = scmp.ne.s32.totalorder %s64, %s66
    %p70 = scmp.eq.s32.totalorder %s9, 0
    %p71 = por %p69, %p70
    %p72 = scmp.ne.s32.totalorder %s64, %s66
    %p73 = scmp.eq.s32.totalorder %s14, 1
    %p74 = por %p72, %p73
    %p75 = scmp.ne.s32.totalorder %s66, %s67
    %p76 = scmp.eq.s32.totalorder %s14, 0
    %p77 = por %p75, %p76
    %p78 = scmp.ne.s32.totalorder %s66, %s67
    %p79 = scmp.eq.s32.totalorder %s15, 1
    %p80 = por %p78, %p79
    %p82 = scmp.ne.s32.totalorder %s67, %s81
    %p83 = scmp.eq.s32.totalorder %s15, 0
    %p84 = por %p82, %p83
    %s85 = ssub.s32 %s9, %s16
    %p86 = scmp.eq.s32.totalorder %s85, 0
    %s88 = sadd.s32 %s87, 1
    %s89 = scalar_select %p86, %s87, %s88
    %p92 = pneg %p86
    %p93 = scmp.eq.s32.totalorder %s9, 1
    %p94 = por %p92, %p93
    %p95 = scmp.ne.s32.totalorder %s87, %s90
    %p96 = scmp.eq.s32.totalorder %s9, 0
    %p97 = por %p95, %p96
    %p98 = scmp.ne.s32.totalorder %s87, %s90
    %p99 = scmp.eq.s32.totalorder %s14, 1
    %p100 = por %p98, %p99
    %p101 = scmp.ne.s32.totalorder %s90, %s91
    %p102 = scmp.eq.s32.totalorder %s14, 0
    %p103 = por %p101, %p102
    %p104 = scmp.ne.s32.totalorder %s90, %s91
    %p105 = scmp.eq.s32.totalorder %s15, 1
    %p106 = por %p104, %p105
    %p108 = scmp.ne.s32.totalorder %s91, %s107
    %p109 = scmp.eq.s32.totalorder %s15, 0
    %p110 = por %p108, %p109
    %p111 = scmp.le.s32.totalorder 1, %s9
    %p112 = scmp.lt.s32.totalorder %s9, 3
    %p113 = pnand %p111, %p112
    %p114 = pneg %p113
    // Predicated region
    $region9: #{dbnet_forward.25} parent=5 // pred_check
      _
    $region10: #{dbnet_forward.25} parent=5 // pred_check_branch
      %116 = sbr.rel (%p113) target = $region12
    $region11: #{dbnet_forward.25} parent=5 // pred_region
      %s117 = ssub.s32 %s9, 1
      // Predicated region
      $region13: #{dbnet_forward.25} parent=11 // pred_check
        %p118 = pneg %p56
      $region14: #{dbnet_forward.25} parent=11 // pred_check_branch
        %120 = sbr.rel (%p118) target = $region16
      $region15: #{dbnet_forward.25} parent=11 // pred_region
        _
      $region16: #{dbnet_forward.25} parent=11 // pred_fallthru
        _
      // Predicated region
      $region17: #{dbnet_forward.25} parent=11 // pred_check
        %p121 = pneg %p77
      $region18: #{dbnet_forward.25} parent=11 // pred_check_branch
        %123 = sbr.rel (%p121) target = $region20
      $region19: #{dbnet_forward.25} parent=11 // pred_region
        _
      $region20: #{dbnet_forward.25} parent=11 // pred_fallthru
        _
    $region12: #{dbnet_forward.25} parent=5 // pred_fallthru
      _
    %p124 = scmp.lt.s32.totalorder %s9, 2
    // Predicated region
    $region21: #{dbnet_forward.25} parent=5 // pred_check
      %p125 = pneg %p124
    $region22: #{dbnet_forward.25} parent=5 // pred_check_branch
      %127 = sbr.rel (%p125) target = $region24
    $region23: #{dbnet_forward.25} parent=5 // pred_region
      // Predicated region
      $region25: #{dbnet_forward.25} parent=23 // pred_check
        %p128 = pneg %p29
      $region26: #{dbnet_forward.25} parent=23 // pred_check_branch
        %130 = sbr.rel (%p128) target = $region28
      $region27: #{dbnet_forward.25} parent=23 // pred_region
        %s131 = smul.u32 8, %s9
        %p132 = scmp.lt.s32.totalorder %s131, 15
        %s133 = scalar_select %p132, %s131, 15
        %s134 = smul.addr %s133, 4
        %s135 = scalar_lea.vmem %s0, %s134
        %s136 = smul.u32 8, %s9
      $region28: #{dbnet_forward.25} parent=23 // pred_fallthru
        _
    $region24: #{dbnet_forward.25} parent=5 // pred_fallthru
      _
    %p137 = scmp.le.s32.totalorder 1, %s9
    %p138 = scmp.lt.s32.totalorder %s9, 3
    %p139 = pnand %p137, %p138
    %p140 = pneg %p139
    // Predicated region
    $region29: #{dbnet_forward.25} parent=5 // pred_check
      _
    $region30: #{dbnet_forward.25} parent=5 // pred_check_branch
      %142 = sbr.rel (%p139) target = $region32
    $region31: #{dbnet_forward.25} parent=5 // pred_region
      %s143 = ssub.s32 %s9, 1
      %s144 = smul.u32 8, %s14
      %p145 = scmp.lt.s32.totalorder %s144, 15
      %s146 = scalar_select %p145, %s144, 15
      %s147 = smul.addr %s146, 4
      %s148 = scalar_lea.vmem %s0, %s147
      %p149 = pneg %p35
      %p150 = pneg %p32
      %p151 = pneg %p56
      %p152 = pneg %p53
      %p153 = pneg %p77
      %p154 = pneg %p74
      %p155 = pneg %p103
      %p156 = pneg %p100
      %s157 = smul.u32 8, %s14
      %p158 = scmp.lt.s32.totalorder %s157, 15
      %s159 = scalar_select %p158, %s157, 15
      %s160 = smul.addr %s159, 4
      %s161 = scalar_lea.vmem %s3, %s160
      %s162 = smul.u32 8, %s14
      %p163 = scmp.lt.s32.totalorder %s162, 15
      %s164 = scalar_select %p163, %s162, 15
      %s165 = smul.addr %s164, 4
      %s166 = scalar_lea.vmem %s0, %s165
      %s167 = smul.u32 8, %s14
      %s168 = smul.u32 8, %s14
      %p169 = scmp.lt.s32.totalorder %s168, 15
      %s170 = scalar_select %p169, %s168, 15
      %s171 = smul.addr %s170, 4
      %s172 = scalar_lea.vmem %s3, %s171
      %s173 = smul.u32 8, %s14
      %v175 = vld [vmem:[%s166] sm:$0xf]
      %v176 = vld [vmem:[%s166 + $0x4] sm:$0xf]
      %v177 = vld [vmem:[%s166 + $0x8] sm:$0xf]
      %v178 = vld [vmem:[%s166 + $0xc] sm:$0xf]
      %v179 = vld [vmem:[%s166 + $0x10] sm:$0xf]
      %v180 = vld [vmem:[%s166 + $0x14] sm:$0xf]
      %v181 = vld [vmem:[%s166 + $0x18] sm:$0xf]
      %v182 = vld [vmem:[%s166 + $0x1c] sm:$0xf]
      %v191 = vunpack.c.l.b16 %v175
      %v192 = vunpack.c.l.b16 %v176
      %v193 = vunpack.c.l.b16 %v177
      %v194 = vunpack.c.l.b16 %v178
      %v195 = vunpack.c.l.b16 %v179
      %v196 = vunpack.c.l.b16 %v180
      %v197 = vunpack.c.l.b16 %v181
      %v198 = vunpack.c.l.b16 %v182
      %v199 = vpack.c.b16 %v192, %v191
      %v200 = vpack.c.b16 %v194, %v193
      %v201 = vpack.c.b16 %v196, %v195
      %v202 = vpack.c.b16 %v198, %v197
      %vm203 = vcmask 130048
      %v206 = vsel %vm203, %v199, 0
      %v209 = vsel %vm203, %v200, 0
      %v212 = vsel %vm203, %v201, 0
      %v215 = vsel %vm203, %v202, 0
      %v217 = vld [vmem:[%s1] sm:$0xf]
      %v218 = vld [vmem:[%s1 + $0x4] sm:$0xf]
      %v219 = vld [vmem:[%s1 + $0x8] sm:$0xf]
      %v220 = vld [vmem:[%s1 + $0xc] sm:$0xf]
      %v221 = vld [vmem:[%s1 + $0x10] sm:$0xf]
      %v222 = vld [vmem:[%s1 + $0x14] sm:$0xf]
      %v223 = vld [vmem:[%s1 + $0x18] sm:$0xf]
      %v224 = vld [vmem:[%s1 + $0x1c] sm:$0xf]
      %v225 = vld [vmem:[%s1 + $0x20] sm:$0xf]
      %v226 = vld [vmem:[%s1 + $0x24] sm:$0xf]
      %v227 = vld [vmem:[%s1 + $0x28] sm:$0xf]
      %v228 = vld [vmem:[%s1 + $0x2c] sm:$0xf]
      %v229 = vld [vmem:[%s1 + $0x30] sm:$0xf]
      %v230 = vld [vmem:[%s1 + $0x34] sm:$0xf]
      %v231 = vld [vmem:[%s1 + $0x38] sm:$0xf]
      %v232 = vld [vmem:[%s1 + $0x3c] sm:$0xf]
      %v233 = vld [vmem:[%s2] sm:$0x1]
      %v235 = vlaneseq
      %v236 = vshrl.u32 %v235, 7
      %v237 = vsub.s32 0, %v236
      %v238 = vrot.slane %v233, %v237
      %v256 = vunpack.c.l.b16 %v217
      %v257 = vunpack.c.l.b16 %v218
      %v258 = vunpack.c.l.b16 %v219
      %v259 = vunpack.c.l.b16 %v220
      %v260 = vunpack.c.l.b16 %v221
      %v261 = vunpack.c.l.b16 %v222
      %v262 = vunpack.c.l.b16 %v223
      %v263 = vunpack.c.l.b16 %v224
      %v264 = vunpack.c.l.b16 %v225
      %v265 = vunpack.c.l.b16 %v226
      %v266 = vunpack.c.l.b16 %v227
      %v267 = vunpack.c.l.b16 %v228
      %v268 = vunpack.c.l.b16 %v229
      %v269 = vunpack.c.l.b16 %v230
      %v270 = vunpack.c.l.b16 %v231
      %v271 = vunpack.c.l.b16 %v232
      %v272 = vpack.c.b16 %v257, %v256
      %v273 = vpack.c.b16 %v259, %v258
      %v274 = vpack.c.b16 %v261, %v260
      %v275 = vpack.c.b16 %v263, %v262
      %v276 = vpack.c.b16 %v265, %v264
      %v277 = vpack.c.b16 %v267, %v266
      %v278 = vpack.c.b16 %v269, %v268
      %v279 = vpack.c.b16 %v271, %v270
      %288 = vmatprep.subr.bf16.mxu0 0
      %289 = vmatpush1.bf16.msra.mxu0 %v272
      %290 = vmatprep.subr.bf16.mxu0 0
      %291 = vmatpush1.bf16.msra.mxu0 %v273
      %292 = vmatprep.subr.bf16.mxu0 0
      %293 = vmatpush1.bf16.msra.mxu0 %v274
      %294 = vmatprep.subr.bf16.mxu0 0
      %295 = vmatpush1.bf16.msra.mxu0 %v275
      %296 = vmatprep.subr.bf16.mxu0 0
      %297 = vmatpush1.bf16.msra.mxu0 %v276
      %298 = vmatprep.subr.bf16.mxu0 0
      %299 = vmatpush1.bf16.msra.mxu0 %v277
      %300 = vmatprep.subr.bf16.mxu0 0
      %301 = vmatpush1.bf16.msra.mxu0 %v278
      %302 = vmatprep.subr.bf16.mxu0 0
      %303 = vmatpush1.bf16.msra.mxu0 %v279
      %304 = vmatprep.subr.bf16.mxu0 0
      %305 = vmatpush1.bf16.msra.mxu0 0
      %306 = vmatprep.subr.bf16.mxu0 0
      %307 = vmatpush1.bf16.msra.mxu0 0
      %308 = vmatprep.subr.bf16.mxu0 0
      %309 = vmatpush1.bf16.msra.mxu0 0
      %310 = vmatprep.subr.bf16.mxu0 0
      %311 = vmatpush1.bf16.msra.mxu0 0
      %312 = vmatprep.subr.bf16.mxu0 0
      %313 = vmatpush1.bf16.msra.mxu0 0
      %314 = vmatprep.subr.bf16.mxu0 0
      %315 = vmatpush1.bf16.msra.mxu0 0
      %316 = vmatprep.subr.bf16.mxu0 0
      %317 = vmatpush1.bf16.msra.mxu0 0
      %318 = vmatprep.subr.bf16.mxu0 0
      %319 = vmatpush1.bf16.msra.mxu0 0
      %320 = vmatprep.mubr.bf16.mxu0 0
      %321 = vmatmul.mubr.bf16.gmra.mrb[0].mxu0 %v206
      %v322 = vpop.f32.mrb[0].mxu0
      %v323 = vadd.f32 %v238, %v322
      %v324 = vpop.f32.mrb[0].mxu0
      %v325 = vpop.f32.mrb[0].mxu0
      %v326 = vadd.f32 %v238, %v325
      %v327 = vpop.f32.mrb[0].mxu0
      %328 = vmatprep.mubr.bf16.mxu0 0
      %329 = vmatmul.mubr.bf16.gmra.mrb[0].mxu0 %v209
      %v330 = vpop.f32.mrb[0].mxu0
      %v331 = vadd.f32 %v238, %v330
      %v332 = vpop.f32.mrb[0].mxu0
      %v333 = vpop.f32.mrb[0].mxu0
      %v334 = vadd.f32 %v238, %v333
      %v335 = vpop.f32.mrb[0].mxu0
      %336 = vmatprep.mubr.bf16.mxu0 0
      %337 = vmatmul.mubr.bf16.gmra.mrb[0].mxu0 %v212
      %v338 = vpop.f32.mrb[0].mxu0
      %v339 = vadd.f32 %v238, %v338
      %v340 = vpop.f32.mrb[0].mxu0
      %v341 = vpop.f32.mrb[0].mxu0
      %v342 = vadd.f32 %v238, %v341
      %v343 = vpop.f32.mrb[0].mxu0
      %344 = vmatprep.mubr.bf16.mxu0 0
      %345 = vmatmul.mubr.bf16.gmra.mrb[0].mxu0 %v215
      %v346 = vpop.f32.mrb[0].mxu0
      %v347 = vadd.f32 %v238, %v346
      %v348 = vpop.f32.mrb[0].mxu0
      %v349 = vpop.f32.mrb[0].mxu0
      %v350 = vadd.f32 %v238, %v349
      %v351 = vpop.f32.mrb[0].mxu0
      %352 = vdwg.mxu0
      %v353 = vpack.c.bf16 %v326, %v323
      %v354 = vpack.c.bf16 %v334, %v331
      %v355 = vpack.c.bf16 %v342, %v339
      %v356 = vpack.c.bf16 %v350, %v347
      %v361 = vunpack.c.l.b16 %v353
      %v362 = vunpack.c.h.b16 %v353
      %v363 = vunpack.c.l.b16 %v354
      %v364 = vunpack.c.h.b16 %v354
      %v365 = vunpack.c.l.b16 %v355
      %v366 = vunpack.c.h.b16 %v355
      %v367 = vunpack.c.l.b16 %v356
      %v368 = vunpack.c.h.b16 %v356
      %v369 = vpack.c.b16 %v361, %v361
      %v370 = vpack.c.b16 %v362, %v362
      %v371 = vpack.c.b16 %v363, %v363
      %v372 = vpack.c.b16 %v364, %v364
      %v373 = vpack.c.b16 %v365, %v365
      %v374 = vpack.c.b16 %v366, %v366
      %v375 = vpack.c.b16 %v367, %v367
      %v376 = vpack.c.b16 %v368, %v368
      %vm385 = vcmask 125952
      %386 = vst.msk [vmem:[%s172] sm:$0xf] %vm385, %v369
      %387 = vst.msk [vmem:[%s172 + $0x4] sm:$0xf] %vm385, %v370
      %388 = vst.msk [vmem:[%s172 + $0x8] sm:$0xf] %vm385, %v371
      %389 = vst.msk [vmem:[%s172 + $0xc] sm:$0xf] %vm385, %v372
      %390 = vst.msk [vmem:[%s172 + $0x10] sm:$0xf] %vm385, %v373
      %391 = vst.msk [vmem:[%s172 + $0x14] sm:$0xf] %vm385, %v374
      %392 = vst.msk [vmem:[%s172 + $0x18] sm:$0xf] %vm385, %v375
      %393 = vst.msk [vmem:[%s172 + $0x1c] sm:$0xf] %vm385, %v376
      %s394 = smul.u32 8, %s14
      %p395 = scmp.lt.s32.totalorder %s394, 15
      %s396 = scalar_select %p395, %s394, 15
      %s397 = smul.addr %s396, 4
      %s398 = scalar_lea.vmem %s3, %s397
      // Predicated region
      $region33: #{dbnet_forward.25} parent=31 // pred_check
        %p399 = pneg %p100
      $region34: #{dbnet_forward.25} parent=31 // pred_check_branch
        %401 = sbr.rel (%p399) target = $region36
      $region35: #{dbnet_forward.25} parent=31 // pred_region
        %s402 = smul.u32 8, %s14
      $region36: #{dbnet_forward.25} parent=31 // pred_fallthru
        _
    $region32: #{dbnet_forward.25} parent=5 // pred_fallthru
      _
    %p403 = scmp.le.s32.totalorder 2, %s9
    // Predicated region
    $region37: #{dbnet_forward.25} parent=5 // pred_check
      %p404 = pneg %p403
    $region38: #{dbnet_forward.25} parent=5 // pred_check_branch
      %406 = sbr.rel (%p404) target = $region40
    $region39: #{dbnet_forward.25} parent=5 // pred_region
      %s407 = ssub.s32 %s9, 2
      // Predicated region
      $region41: #{dbnet_forward.25} parent=39 // pred_check
        %p408 = pneg %p106
      $region42: #{dbnet_forward.25} parent=39 // pred_check_branch
        %410 = sbr.rel (%p408) target = $region44
      $region43: #{dbnet_forward.25} parent=39 // pred_region
        %s411 = smul.u32 8, %s15
        %p412 = scmp.lt.s32.totalorder %s411, 15
        %s413 = scalar_select %p412, %s411, 15
        %s414 = smul.addr %s413, 4
        %s415 = scalar_lea.vmem %s3, %s414
      $region44: #{dbnet_forward.25} parent=39 // pred_fallthru
        _
    $region40: #{dbnet_forward.25} parent=5 // pred_fallthru
      _
  $region6: #{dbnet_forward.25} parent=0 // loop_footer
    %s13 = sadd.s32 1, %s9
  $region7: #{dbnet_forward.25} parent=0 // loop_footer_branch
    %8 = sbr.rel target = $region3
  $region8: #{dbnet_forward.25} parent=0 // loop_exit
    _

// kernel: dbnet_forward.24
$region0: #{dbnet_forward.24}
  #allocation0 [shape = 'u32[]', space=smem, size = 0x4, offset = 0x4, fixed_abs, tag = 'smem constant byte address 0x4 - core index']
  #allocation1 [shape = 'u32[144,128]{1,0:T(1,128)}', space=vmem, size = 0x12000, scoped, tag = 'internal scratch']
  %s0 = inlined_call_operand.vmem [shape: bf16[9,128,16], index: 0, kind: input, shape index: {}]
  %s1 = inlined_call_operand.vmem [shape: f32[9,16], index: 1, kind: input, shape index: {}]
  %s2 = inlined_call_operand.vmem [shape: f32[1,16], index: 2, kind: input, shape index: {}]
  %s3 = inlined_call_operand.vmem [shape: bf16[128,16], index: 3, kind: output, shape index: {}]
  %s4 = sld [smem:[#allocation0]]
  $region86: #{dbnet_forward.24} parent=0
    _
  %s6 = ssub.s32 1, %s4
  %s7 = scalar_select 0, %s6, %s4
  $region1: #{dbnet_forward.24} parent=0
    #allocation2 [shape = 'u8[294912]{0}', space=vmem, size = 0x48000, scoped, tag = 'input window, operand 0']
    loop: start=0, step=1, limit=4
    $region2: #{dbnet_forward.24} parent=1 // loop_pre_header
      _
    $region3: #{dbnet_forward.24} parent=1 // loop_header
      %s9 = sphi 0, %s13
      %p10 = scmp.ge.s32.totalorder %s9, 4
      %s19 = sphi 0, %s21
      %s22 = sphi 0, %s19
      %s23 = sphi 0, %s22
      %s39 = sphi 0, %s23
      %s43 = sphi 0, %s43
      %s45 = sphi 0, %s43
      %s46 = sphi 0, %s45
      %s60 = sphi 0, %s46
      %s64 = sphi 0, %s64
      %s66 = sphi 0, %s64
      %s67 = sphi 0, %s66
      %s81 = sphi 0, %s67
      %s87 = sphi 0, %s89
      %s90 = sphi 0, %s87
      %s91 = sphi 0, %s90
      %s107 = sphi 0, %s91
    $region4: #{dbnet_forward.24} parent=1 // loop_header_branch
      %12 = sbr.rel (%p10) target = $region8
    $region5: #{dbnet_forward.24} parent=1 // loop_body
      %s14 = ssub.s32 %s9, 1
      %s15 = ssub.s32 %s9, 2
      %s16 = sadd.s32 %s9, 1
      %s17 = ssub.s32 %s9, %s16
      %p18 = scmp.eq.s32.totalorder %s17, 0
      %s20 = sadd.s32 %s19, 1
      %s21 = scalar_select %p18, %s19, %s20
      %p24 = pneg %p18
      %p25 = scmp.eq.s32.totalorder %s9, 1
      %p26 = por %p24, %p25
      %p27 = scmp.ne.s32.totalorder %s19, %s22
      %p28 = scmp.eq.s32.totalorder %s9, 0
      %p29 = por %p27, %p28
      %p30 = scmp.ne.s32.totalorder %s19, %s22
      %p31 = scmp.eq.s32.totalorder %s14, 1
      %p32 = por %p30, %p31
      %p33 = scmp.ne.s32.totalorder %s22, %s23
      %p34 = scmp.eq.s32.totalorder %s14, 0
      %p35 = por %p33, %p34
      %p36 = scmp.ne.s32.totalorder %s22, %s23
      %p37 = scmp.eq.s32.totalorder %s15, 1
      %p38 = por %p36, %p37
      %p40 = scmp.ne.s32.totalorder %s23, %s39
      %p41 = scmp.eq.s32.totalorder %s15, 0
      %p42 = por %p40, %p41
      %s44 = sadd.s32 %s43, 1
      %p47 = scmp.eq.s32.totalorder %s9, 1
      %p48 = scmp.ne.s32.totalorder %s43, %s45
      %p49 = scmp.eq.s32.totalorder %s9, 0
      %p50 = por %p48, %p49
      %p51 = scmp.ne.s32.totalorder %s43, %s45
      %p52 = scmp.eq.s32.totalorder %s14, 1
      %p53 = por %p51, %p52
      %p54 = scmp.ne.s32.totalorder %s45, %s46
      %p55 = scmp.eq.s32.totalorder %s14, 0
      %p56 = por %p54, %p55
      %p57 = scmp.ne.s32.totalorder %s45, %s46
      %p58 = scmp.eq.s32.totalorder %s15, 1
      %p59 = por %p57, %p58
      %p61 = scmp.ne.s32.totalorder %s46, %s60
      %p62 = scmp.eq.s32.totalorder %s15, 0
      %p63 = por %p61, %p62
      %s65 = sadd.s32 %s64, 1
      %p68 = scmp.eq.s32.totalorder %s9, 1
      %p69 = scmp.ne.s32.totalorder %s64, %s66
      %p70 = scmp.eq.s32.totalorder %s9, 0
      %p71 = por %p69, %p70
      %p72 = scmp.ne.s32.totalorder %s64, %s66
      %p73 = scmp.eq.s32.totalorder %s14, 1
      %p74 = por %p72, %p73
      %p75 = scmp.ne.s32.totalorder %s66, %s67
      %p76 = scmp.eq.s32.totalorder %s14, 0
      %p77 = por %p75, %p76
      %p78 = scmp.ne.s32.totalorder %s66, %s67
      %p79 = scmp.eq.s32.totalorder %s15, 1
      %p80 = por %p78, %p79
      %p82 = scmp.ne.s32.totalorder %s67, %s81
      %p83 = scmp.eq.s32.totalorder %s15, 0
      %p84 = por %p82, %p83
      %s85 = ssub.s32 %s9, %s16
      %p86 = scmp.eq.s32.totalorder %s85, 0
      %s88 = sadd.s32 %s87, 1
      %s89 = scalar_select %p86, %s87, %s88
      %p92 = pneg %p86
      %p93 = scmp.eq.s32.totalorder %s9, 1
      %p94 = por %p92, %p93
      %p95 = scmp.ne.s32.totalorder %s87, %s90
      %p96 = scmp.eq.s32.totalorder %s9, 0
      %p97 = por %p95, %p96
      %p98 = scmp.ne.s32.totalorder %s87, %s90
      %p99 = scmp.eq.s32.totalorder %s14, 1
      %p100 = por %p98, %p99
      %p101 = scmp.ne.s32.totalorder %s90, %s91
      %p102 = scmp.eq.s32.totalorder %s14, 0
      %p103 = por %p101, %p102
      %p104 = scmp.ne.s32.totalorder %s90, %s91
      %p105 = scmp.eq.s32.totalorder %s15, 1
      %p106 = por %p104, %p105
      %p108 = scmp.ne.s32.totalorder %s91, %s107
      %p109 = scmp.eq.s32.totalorder %s15, 0
      %p110 = por %p108, %p109
      %p111 = scmp.le.s32.totalorder 1, %s9
      %p112 = scmp.lt.s32.totalorder %s9, 3
      %p113 = pnand %p111, %p112
      %p114 = pneg %p113
      // Predicated region
      $region9: #{dbnet_forward.24} parent=5 // pred_check
        _
      $region10: #{dbnet_forward.24} parent=5 // pred_check_branch
        %116 = sbr.rel (%p113) target = $region12
      $region11: #{dbnet_forward.24} parent=5 // pred_region
        %s117 = ssub.s32 %s9, 1
        // Predicated region
        $region13: #{dbnet_forward.24} parent=11 // pred_check
          %p118 = pneg %p56
        $region14: #{dbnet_forward.24} parent=11 // pred_check_branch
          %120 = sbr.rel (%p118) target = $region16
        $region15: #{dbnet_forward.24} parent=11 // pred_region
          _
        $region16: #{dbnet_forward.24} parent=11 // pred_fallthru
          _
        // Predicated region
        $region17: #{dbnet_forward.24} parent=11 // pred_check
          %p121 = pneg %p77
        $region18: #{dbnet_forward.24} parent=11 // pred_check_branch
          %123 = sbr.rel (%p121) target = $region20
        $region19: #{dbnet_forward.24} parent=11 // pred_region
          _
        $region20: #{dbnet_forward.24} parent=11 // pred_fallthru
          _
      $region12: #{dbnet_forward.24} parent=5 // pred_fallthru
        _
      %p124 = scmp.lt.s32.totalorder %s9, 2
      // Predicated region
      $region21: #{dbnet_forward.24} parent=5 // pred_check
        %p125 = pneg %p124
      $region22: #{dbnet_forward.24} parent=5 // pred_check_branch
        %127 = sbr.rel (%p125) target = $region24
      $region23: #{dbnet_forward.24} parent=5 // pred_region
        // Predicated region
        $region25: #{dbnet_forward.24} parent=23 // pred_check
          %p128 = pneg %p29
        $region26: #{dbnet_forward.24} parent=23 // pred_check_branch
          %130 = sbr.rel (%p128) target = $region28
        $region27: #{dbnet_forward.24} parent=23 // pred_region
          %s131 = sand.u32 %s19, 1
          %s132 = sand.u32 %s19, 1
          %s133 = smul.addr %s132, 288
          %s134 = scalar_lea.vmem [#allocation2], %s133
          %s135 = smul.u32 8, %s9
          %s136 = smul.addr %s135, 4
          %s137 = scalar_lea.vmem %s0, %s136
          // Predicated region
          $region29: #{dbnet_forward.24} parent=27 // pred_check
            _
          $region30: #{dbnet_forward.24} parent=27 // pred_check_branch
            %139 = sbr.rel (0) target = $region32
          $region31: #{dbnet_forward.24} parent=27 // pred_region
            // Predicated region
            $region33: #{dbnet_forward.24} parent=31 // pred_check
              _
            $region34: #{dbnet_forward.24} parent=31 // pred_check_branch
              %141 = sbr.rel target = $region36
            $region35: #{dbnet_forward.24} parent=31 // pred_region
              // Predicated region
              $region48: #{dbnet_forward.24} parent=35 // pred_check
                _
              $region49: #{dbnet_forward.24} parent=35 // pred_check_branch
                %298 = sbr.rel (0) target = $region51
              $region50: #{dbnet_forward.24} parent=35 // pred_region
                loop: start=0, step=1, limit=1
                $region52: #{dbnet_forward.24} parent=50 // loop_pre_header
                  _
                $region53: #{dbnet_forward.24} parent=50 // loop_header
                  %s300 = sphi 0, %s304
                  %p301 = scmp.ge.s32.totalorder %s300, 1
                  %s305 = sphi %s137, %s137
                  %s306 = sphi %s134, %s134
                $region54: #{dbnet_forward.24} parent=50 // loop_header_branch
                  %303 = sbr.rel (%p301) target = $region58
                $region55: #{dbnet_forward.24} parent=50 // loop_body
                  _
                $region56: #{dbnet_forward.24} parent=50 // loop_footer
                  %s304 = sadd.s32 1, %s300
                $region57: #{dbnet_forward.24} parent=50 // loop_footer_branch
                  %299 = sbr.rel target = $region53
                $region58: #{dbnet_forward.24} parent=50 // loop_exit
                  _
                loop: start=0, step=1, limit=1
                $region59: #{dbnet_forward.24} parent=50 // loop_pre_header
                  _
                $region60: #{dbnet_forward.24} parent=50 // loop_header
                  %s309 = sphi 0, %s313
                  %p310 = scmp.ge.s32.totalorder %s309, 1
                  %s314 = sphi %s137, %s137
                  %s315 = sphi %s134, %s134
                $region61: #{dbnet_forward.24} parent=50 // loop_header_branch
                  %312 = sbr.rel (%p310) target = $region65
                $region62: #{dbnet_forward.24} parent=50 // loop_body
                  %v316 = vld [vmem:[%s314] sm:$0xf]
                  %317 = vst [vmem:[%s315] sm:$0xf] %v316
                  %v318 = vld [vmem:[%s314 + $0x4] sm:$0xf]
                  %319 = vst [vmem:[%s315 + $0x4] sm:$0xf] %v318
                  %v320 = vld [vmem:[%s314 + $0x8] sm:$0xf]
                  %321 = vst [vmem:[%s315 + $0x8] sm:$0xf] %v320
                  %v322 = vld [vmem:[%s314 + $0xc] sm:$0xf]
                  %323 = vst [vmem:[%s315 + $0xc] sm:$0xf] %v322
                  %v324 = vld [vmem:[%s314 + $0x10] sm:$0xf]
                  %325 = vst [vmem:[%s315 + $0x10] sm:$0xf] %v324
                  %v326 = vld [vmem:[%s314 + $0x14] sm:$0xf]
                  %327 = vst [vmem:[%s315 + $0x14] sm:$0xf] %v326
                  %v328 = vld [vmem:[%s314 + $0x18] sm:$0xf]
                  %329 = vst [vmem:[%s315 + $0x18] sm:$0xf] %v328
                  %v330 = vld [vmem:[%s314 + $0x1c] sm:$0xf]
                  %331 = vst [vmem:[%s315 + $0x1c] sm:$0xf] %v330
                  %v332 = vld [vmem:[%s314 + $0x40] sm:$0xf]
                  %333 = vst [vmem:[%s315 + $0x20] sm:$0xf] %v332
                  %v334 = vld [vmem:[%s314 + $0x44] sm:$0xf]
                  %335 = vst [vmem:[%s315 + $0x24] sm:$0xf] %v334
                  %v336 = vld [vmem:[%s314 + $0x48] sm:$0xf]
                  %337 = vst [vmem:[%s315 + $0x28] sm:$0xf] %v336
                  %v338 = vld [vmem:[%s314 + $0x4c] sm:$0xf]
                  %339 = vst [vmem:[%s315 + $0x2c] sm:$0xf] %v338
                  %v340 = vld [vmem:[%s314 + $0x50] sm:$0xf]
                  %341 = vst [vmem:[%s315 + $0x30] sm:$0xf] %v340
                  %v342 = vld [vmem:[%s314 + $0x54] sm:$0xf]
                  %343 = vst [vmem:[%s315 + $0x34] sm:$0xf] %v342
                  %v344 = vld [vmem:[%s314 + $0x58] sm:$0xf]
                  %345 = vst [vmem:[%s315 + $0x38] sm:$0xf] %v344
                  %v346 = vld [vmem:[%s314 + $0x5c] sm:$0xf]
                  %347 = vst [vmem:[%s315 + $0x3c] sm:$0xf] %v346
                  %v348 = vld [vmem:[%s314 + $0x80] sm:$0xf]
                  %349 = vst [vmem:[%s315 + $0x40] sm:$0xf] %v348
                  %v350 = vld [vmem:[%s314 + $0x84] sm:$0xf]
                  %351 = vst [vmem:[%s315 + $0x44] sm:$0xf] %v350
                  %v352 = vld [vmem:[%s314 + $0x88] sm:$0xf]
                  %353 = vst [vmem:[%s315 + $0x48] sm:$0xf] %v352
                  %v354 = vld [vmem:[%s314 + $0x8c] sm:$0xf]
                  %355 = vst [vmem:[%s315 + $0x4c] sm:$0xf] %v354
                  %v356 = vld [vmem:[%s314 + $0x90] sm:$0xf]
                  %357 = vst [vmem:[%s315 + $0x50] sm:$0xf] %v356
                  %v358 = vld [vmem:[%s314 + $0x94] sm:$0xf]
                  %359 = vst [vmem:[%s315 + $0x54] sm:$0xf] %v358
                  %v360 = vld [vmem:[%s314 + $0x98] sm:$0xf]
                  %361 = vst [vmem:[%s315 + $0x58] sm:$0xf] %v360
                  %v362 = vld [vmem:[%s314 + $0x9c] sm:$0xf]
                  %363 = vst [vmem:[%s315 + $0x5c] sm:$0xf] %v362
                  %v364 = vld [vmem:[%s314 + $0xc0] sm:$0xf]
                  %365 = vst [vmem:[%s315 + $0x60] sm:$0xf] %v364
                  %v366 = vld [vmem:[%s314 + $0xc4] sm:$0xf]
                  %367 = vst [vmem:[%s315 + $0x64] sm:$0xf] %v366
                  %v368 = vld [vmem:[%s314 + $0xc8] sm:$0xf]
                  %369 = vst [vmem:[%s315 + $0x68] sm:$0xf] %v368
                  %v370 = vld [vmem:[%s314 + $0xcc] sm:$0xf]
                  %371 = vst [vmem:[%s315 + $0x6c] sm:$0xf] %v370
                  %v372 = vld [vmem:[%s314 + $0xd0] sm:$0xf]
                  %373 = vst [vmem:[%s315 + $0x70] sm:$0xf] %v372
                  %v374 = vld [vmem:[%s314 + $0xd4] sm:$0xf]
                  %375 = vst [vmem:[%s315 + $0x74] sm:$0xf] %v374
                  %v376 = vld [vmem:[%s314 + $0xd8] sm:$0xf]
                  %377 = vst [vmem:[%s315 + $0x78] sm:$0xf] %v376
                  %v378 = vld [vmem:[%s314 + $0xdc] sm:$0xf]
                  %379 = vst [vmem:[%s315 + $0x7c] sm:$0xf] %v378
                  %v380 = vld [vmem:[%s314 + $0x100] sm:$0xf]
                  %381 = vst [vmem:[%s315 + $0x80] sm:$0xf] %v380
                  %v382 = vld [vmem:[%s314 + $0x104] sm:$0xf]
                  %383 = vst [vmem:[%s315 + $0x84] sm:$0xf] %v382
                  %v384 = vld [vmem:[%s314 + $0x108] sm:$0xf]
                  %385 = vst [vmem:[%s315 + $0x88] sm:$0xf] %v384
                  %v386 = vld [vmem:[%s314 + $0x10c] sm:$0xf]
                  %387 = vst [vmem:[%s315 + $0x8c] sm:$0xf] %v386
                  %v388 = vld [vmem:[%s314 + $0x110] sm:$0xf]
                  %389 = vst [vmem:[%s315 + $0x90] sm:$0xf] %v388
                  %v390 = vld [vmem:[%s314 + $0x114] sm:$0xf]
                  %391 = vst [vmem:[%s315 + $0x94] sm:$0xf] %v390
                  %v392 = vld [vmem:[%s314 + $0x118] sm:$0xf]
                  %393 = vst [vmem:[%s315 + $0x98] sm:$0xf] %v392
                  %v394 = vld [vmem:[%s314 + $0x11c] sm:$0xf]
                  %395 = vst [vmem:[%s315 + $0x9c] sm:$0xf] %v394
                  %v396 = vld [vmem:[%s314 + $0x140] sm:$0xf]
                  %397 = vst [vmem:[%s315 + $0xa0] sm:$0xf] %v396
                  %v398 = vld [vmem:[%s314 + $0x144] sm:$0xf]
                  %399 = vst [vmem:[%s315 + $0xa4] sm:$0xf] %v398
                  %v400 = vld [vmem:[%s314 + $0x148] sm:$0xf]
                  %401 = vst [vmem:[%s315 + $0xa8] sm:$0xf] %v400
                  %v402 = vld [vmem:[%s314 + $0x14c] sm:$0xf]
                  %403 = vst [vmem:[%s315 + $0xac] sm:$0xf] %v402
                  %v404 = vld [vmem:[%s314 + $0x150] sm:$0xf]
                  %405 = vst [vmem:[%s315 + $0xb0] sm:$0xf] %v404
                  %v406 = vld [vmem:[%s314 + $0x154] sm:$0xf]
                  %407 = vst [vmem:[%s315 + $0xb4] sm:$0xf] %v406
                  %v408 = vld [vmem:[%s314 + $0x158] sm:$0xf]
                  %409 = vst [vmem:[%s315 + $0xb8] sm:$0xf] %v408
                  %v410 = vld [vmem:[%s314 + $0x15c] sm:$0xf]
                  %411 = vst [vmem:[%s315 + $0xbc] sm:$0xf] %v410
                  %v412 = vld [vmem:[%s314 + $0x180] sm:$0xf]
                  %413 = vst [vmem:[%s315 + $0xc0] sm:$0xf] %v412
                  %v414 = vld [vmem:[%s314 + $0x184] sm:$0xf]
                  %415 = vst [vmem:[%s315 + $0xc4] sm:$0xf] %v414
                  %v416 = vld [vmem:[%s314 + $0x188] sm:$0xf]
                  %417 = vst [vmem:[%s315 + $0xc8] sm:$0xf] %v416
                  %v418 = vld [vmem:[%s314 + $0x18c] sm:$0xf]
                  %419 = vst [vmem:[%s315 + $0xcc] sm:$0xf] %v418
                  %v420 = vld [vmem:[%s314 + $0x190] sm:$0xf]
                  %421 = vst [vmem:[%s315 + $0xd0] sm:$0xf] %v420
                  %v422 = vld [vmem:[%s314 + $0x194] sm:$0xf]
                  %423 = vst [vmem:[%s315 + $0xd4] sm:$0xf] %v422
                  %v424 = vld [vmem:[%s314 + $0x198] sm:$0xf]
                  %425 = vst [vmem:[%s315 + $0xd8] sm:$0xf] %v424
                  %v426 = vld [vmem:[%s314 + $0x19c] sm:$0xf]
                  %427 = vst [vmem:[%s315 + $0xdc] sm:$0xf] %v426
                  %v428 = vld [vmem:[%s314 + $0x1c0] sm:$0xf]
                  %429 = vst [vmem:[%s315 + $0xe0] sm:$0xf] %v428
                  %v430 = vld [vmem:[%s314 + $0x1c4] sm:$0xf]
                  %431 = vst [vmem:[%s315 + $0xe4] sm:$0xf] %v430
                  %v432 = vld [vmem:[%s314 + $0x1c8] sm:$0xf]
                  %433 = vst [vmem:[%s315 + $0xe8] sm:$0xf] %v432
                  %v434 = vld [vmem:[%s314 + $0x1cc] sm:$0xf]
                  %435 = vst [vmem:[%s315 + $0xec] sm:$0xf] %v434
                  %v436 = vld [vmem:[%s314 + $0x1d0] sm:$0xf]
                  %437 = vst [vmem:[%s315 + $0xf0] sm:$0xf] %v436
                  %v438 = vld [vmem:[%s314 + $0x1d4] sm:$0xf]
                  %439 = vst [vmem:[%s315 + $0xf4] sm:$0xf] %v438
                  %v440 = vld [vmem:[%s314 + $0x1d8] sm:$0xf]
                  %441 = vst [vmem:[%s315 + $0xf8] sm:$0xf] %v440
                  %v442 = vld [vmem:[%s314 + $0x1dc] sm:$0xf]
                  %443 = vst [vmem:[%s315 + $0xfc] sm:$0xf] %v442
                  %v444 = vld [vmem:[%s314 + $0x200] sm:$0xf]
                  %445 = vst [vmem:[%s315 + $0x100] sm:$0xf] %v444
                  %v446 = vld [vmem:[%s314 + $0x204] sm:$0xf]
                  %447 = vst [vmem:[%s315 + $0x104] sm:$0xf] %v446
                  %v448 = vld [vmem:[%s314 + $0x208] sm:$0xf]
                  %449 = vst [vmem:[%s315 + $0x108] sm:$0xf] %v448
                  %v450 = vld [vmem:[%s314 + $0x20c] sm:$0xf]
                  %451 = vst [vmem:[%s315 + $0x10c] sm:$0xf] %v450
                  %v452 = vld [vmem:[%s314 + $0x210] sm:$0xf]
                  %453 = vst [vmem:[%s315 + $0x110] sm:$0xf] %v452
                  %v454 = vld [vmem:[%s314 + $0x214] sm:$0xf]
                  %455 = vst [vmem:[%s315 + $0x114] sm:$0xf] %v454
                  %v456 = vld [vmem:[%s314 + $0x218] sm:$0xf]
                  %457 = vst [vmem:[%s315 + $0x118] sm:$0xf] %v456
                  %v458 = vld [vmem:[%s314 + $0x21c] sm:$0xf]
                  %459 = vst [vmem:[%s315 + $0x11c] sm:$0xf] %v458
                $region63: #{dbnet_forward.24} parent=50 // loop_footer
                  %s313 = sadd.s32 1, %s309
                $region64: #{dbnet_forward.24} parent=50 // loop_footer_branch
                  %308 = sbr.rel target = $region60
                $region65: #{dbnet_forward.24} parent=50 // loop_exit
                  _
              $region51: #{dbnet_forward.24} parent=35 // pred_fallthru
                _
            $region36: #{dbnet_forward.24} parent=31 // pred_fallthru
              _
            // Predicated region
            $region37: #{dbnet_forward.24} parent=31 // pred_check
              _
            $region38: #{dbnet_forward.24} parent=31 // pred_check_branch
              %143 = sbr.rel (0) target = $region40
            $region39: #{dbnet_forward.24} parent=31 // pred_region
              loop: start=0, step=1, limit=1
              $region41: #{dbnet_forward.24} parent=39 // loop_pre_header
                _
              $region42: #{dbnet_forward.24} parent=39 // loop_header
                %s146 = sphi 0, %s150
                %p147 = scmp.ge.s32.totalorder %s146, 1
                %s151 = sphi %s137, %s137
                %s152 = sphi %s134, %s134
              $region43: #{dbnet_forward.24} parent=39 // loop_header_branch
                %149 = sbr.rel (%p147) target = $region47
              $region44: #{dbnet_forward.24} parent=39 // loop_body
                %v153 = vld [vmem:[%s151] sm:$0xf]
                %154 = vst [vmem:[%s152] sm:$0xf] %v153
                %v155 = vld [vmem:[%s151 + $0x4] sm:$0xf]
                %156 = vst [vmem:[%s152 + $0x4] sm:$0xf] %v155
                %v157 = vld [vmem:[%s151 + $0x8] sm:$0xf]
                %158 = vst [vmem:[%s152 + $0x8] sm:$0xf] %v157
                %v159 = vld [vmem:[%s151 + $0xc] sm:$0xf]
                %160 = vst [vmem:[%s152 + $0xc] sm:$0xf] %v159
                %v161 = vld [vmem:[%s151 + $0x10] sm:$0xf]
                %162 = vst [vmem:[%s152 + $0x10] sm:$0xf] %v161
                %v163 = vld [vmem:[%s151 + $0x14] sm:$0xf]
                %164 = vst [vmem:[%s152 + $0x14] sm:$0xf] %v163
                %v165 = vld [vmem:[%s151 + $0x18] sm:$0xf]
                %166 = vst [vmem:[%s152 + $0x18] sm:$0xf] %v165
                %v167 = vld [vmem:[%s151 + $0x1c] sm:$0xf]
                %168 = vst [vmem:[%s152 + $0x1c] sm:$0xf] %v167
                %v169 = vld [vmem:[%s151 + $0x40] sm:$0xf]
                %170 = vst [vmem:[%s152 + $0x20] sm:$0xf] %v169
                %v171 = vld [vmem:[%s151 + $0x44] sm:$0xf]
                %172 = vst [vmem:[%s152 + $0x24] sm:$0xf] %v171
                %v173 = vld [vmem:[%s151 + $0x48] sm:$0xf]
                %174 = vst [vmem:[%s152 + $0x28] sm:$0xf] %v173
                %v175 = vld [vmem:[%s151 + $0x4c] sm:$0xf]
                %176 = vst [vmem:[%s152 + $0x2c] sm:$0xf] %v175
                %v177 = vld [vmem:[%s151 + $0x50] sm:$0xf]
                %178 = vst [vmem:[%s152 + $0x30] sm:$0xf] %v177
                %v179 = vld [vmem:[%s151 + $0x54] sm:$0xf]
                %180 = vst [vmem:[%s152 + $0x34] sm:$0xf] %v179
                %v181 = vld [vmem:[%s151 + $0x58] sm:$0xf]
                %182 = vst [vmem:[%s152 + $0x38] sm:$0xf] %v181
                %v183 = vld [vmem:[%s151 + $0x5c] sm:$0xf]
                %184 = vst [vmem:[%s152 + $0x3c] sm:$0xf] %v183
                %v185 = vld [vmem:[%s151 + $0x80] sm:$0xf]
                %186 = vst [vmem:[%s152 + $0x40] sm:$0xf] %v185
                %v187 = vld [vmem:[%s151 + $0x84] sm:$0xf]
                %188 = vst [vmem:[%s152 + $0x44] sm:$0xf] %v187
                %v189 = vld [vmem:[%s151 + $0x88] sm:$0xf]
                %190 = vst [vmem:[%s152 + $0x48] sm:$0xf] %v189
                %v191 = vld [vmem:[%s151 + $0x8c] sm:$0xf]
                %192 = vst [vmem:[%s152 + $0x4c] sm:$0xf] %v191
                %v193 = vld [vmem:[%s151 + $0x90] sm:$0xf]
                %194 = vst [vmem:[%s152 + $0x50] sm:$0xf] %v193
                %v195 = vld [vmem:[%s151 + $0x94] sm:$0xf]
                %196 = vst [vmem:[%s152 + $0x54] sm:$0xf] %v195
                %v197 = vld [vmem:[%s151 + $0x98] sm:$0xf]
                %198 = vst [vmem:[%s152 + $0x58] sm:$0xf] %v197
                %v199 = vld [vmem:[%s151 + $0x9c] sm:$0xf]
                %200 = vst [vmem:[%s152 + $0x5c] sm:$0xf] %v199
                %v201 = vld [vmem:[%s151 + $0xc0] sm:$0xf]
                %202 = vst [vmem:[%s152 + $0x60] sm:$0xf] %v201
                %v203 = vld [vmem:[%s151 + $0xc4] sm:$0xf]
                %204 = vst [vmem:[%s152 + $0x64] sm:$0xf] %v203
                %v205 = vld [vmem:[%s151 + $0xc8] sm:$0xf]
                %206 = vst [vmem:[%s152 + $0x68] sm:$0xf] %v205
                %v207 = vld [vmem:[%s151 + $0xcc] sm:$0xf]
                %208 = vst [vmem:[%s152 + $0x6c] sm:$0xf] %v207
                %v209 = vld [vmem:[%s151 + $0xd0] sm:$0xf]
                %210 = vst [vmem:[%s152 + $0x70] sm:$0xf] %v209
                %v211 = vld [vmem:[%s151 + $0xd4] sm:$0xf]
                %212 = vst [vmem:[%s152 + $0x74] sm:$0xf] %v211
                %v213 = vld [vmem:[%s151 + $0xd8] sm:$0xf]
                %214 = vst [vmem:[%s152 + $0x78] sm:$0xf] %v213
                %v215 = vld [vmem:[%s151 + $0xdc] sm:$0xf]
                %216 = vst [vmem:[%s152 + $0x7c] sm:$0xf] %v215
                %v217 = vld [vmem:[%s151 + $0x100] sm:$0xf]
                %218 = vst [vmem:[%s152 + $0x80] sm:$0xf] %v217
                %v219 = vld [vmem:[%s151 + $0x104] sm:$0xf]
                %220 = vst [vmem:[%s152 + $0x84] sm:$0xf] %v219
                %v221 = vld [vmem:[%s151 + $0x108] sm:$0xf]
                %222 = vst [vmem:[%s152 + $0x88] sm:$0xf] %v221
                %v223 = vld [vmem:[%s151 + $0x10c] sm:$0xf]
                %224 = vst [vmem:[%s152 + $0x8c] sm:$0xf] %v223
                %v225 = vld [vmem:[%s151 + $0x110] sm:$0xf]
                %226 = vst [vmem:[%s152 + $0x90] sm:$0xf] %v225
                %v227 = vld [vmem:[%s151 + $0x114] sm:$0xf]
                %228 = vst [vmem:[%s152 + $0x94] sm:$0xf] %v227
                %v229 = vld [vmem:[%s151 + $0x118] sm:$0xf]
                %230 = vst [vmem:[%s152 + $0x98] sm:$0xf] %v229
                %v231 = vld [vmem:[%s151 + $0x11c] sm:$0xf]
                %232 = vst [vmem:[%s152 + $0x9c] sm:$0xf] %v231
                %v233 = vld [vmem:[%s151 + $0x140] sm:$0xf]
                %234 = vst [vmem:[%s152 + $0xa0] sm:$0xf] %v233
                %v235 = vld [vmem:[%s151 + $0x144] sm:$0xf]
                %236 = vst [vmem:[%s152 + $0xa4] sm:$0xf] %v235
                %v237 = vld [vmem:[%s151 + $0x148] sm:$0xf]
                %238 = vst [vmem:[%s152 + $0xa8] sm:$0xf] %v237
                %v239 = vld [vmem:[%s151 + $0x14c] sm:$0xf]
                %240 = vst [vmem:[%s152 + $0xac] sm:$0xf] %v239
                %v241 = vld [vmem:[%s151 + $0x150] sm:$0xf]
                %242 = vst [vmem:[%s152 + $0xb0] sm:$0xf] %v241
                %v243 = vld [vmem:[%s151 + $0x154] sm:$0xf]
                %244 = vst [vmem:[%s152 + $0xb4] sm:$0xf] %v243
                %v245 = vld [vmem:[%s151 + $0x158] sm:$0xf]
                %246 = vst [vmem:[%s152 + $0xb8] sm:$0xf] %v245
                %v247 = vld [vmem:[%s151 + $0x15c] sm:$0xf]
                %248 = vst [vmem:[%s152 + $0xbc] sm:$0xf] %v247
                %v249 = vld [vmem:[%s151 + $0x180] sm:$0xf]
                %250 = vst [vmem:[%s152 + $0xc0] sm:$0xf] %v249
                %v251 = vld [vmem:[%s151 + $0x184] sm:$0xf]
                %252 = vst [vmem:[%s152 + $0xc4] sm:$0xf] %v251
                %v253 = vld [vmem:[%s151 + $0x188] sm:$0xf]
                %254 = vst [vmem:[%s152 + $0xc8] sm:$0xf] %v253
                %v255 = vld [vmem:[%s151 + $0x18c] sm:$0xf]
                %256 = vst [vmem:[%s152 + $0xcc] sm:$0xf] %v255
                %v257 = vld [vmem:[%s151 + $0x190] sm:$0xf]
                %258 = vst [vmem:[%s152 + $0xd0] sm:$0xf] %v257
                %v259 = vld [vmem:[%s151 + $0x194] sm:$0xf]
                %260 = vst [vmem:[%s152 + $0xd4] sm:$0xf] %v259
                %v261 = vld [vmem:[%s151 + $0x198] sm:$0xf]
                %262 = vst [vmem:[%s152 + $0xd8] sm:$0xf] %v261
                %v263 = vld [vmem:[%s151 + $0x19c] sm:$0xf]
                %264 = vst [vmem:[%s152 + $0xdc] sm:$0xf] %v263
                %v265 = vld [vmem:[%s151 + $0x1c0] sm:$0xf]
                %266 = vst [vmem:[%s152 + $0xe0] sm:$0xf] %v265
                %v267 = vld [vmem:[%s151 + $0x1c4] sm:$0xf]
                %268 = vst [vmem:[%s152 + $0xe4] sm:$0xf] %v267
                %v269 = vld [vmem:[%s151 + $0x1c8] sm:$0xf]
                %270 = vst [vmem:[%s152 + $0xe8] sm:$0xf] %v269
                %v271 = vld [vmem:[%s151 + $0x1cc] sm:$0xf]
                %272 = vst [vmem:[%s152 + $0xec] sm:$0xf] %v271
                %v273 = vld [vmem:[%s151 + $0x1d0] sm:$0xf]
                %274 = vst [vmem:[%s152 + $0xf0] sm:$0xf] %v273
                %v275 = vld [vmem:[%s151 + $0x1d4] sm:$0xf]
                %276 = vst [vmem:[%s152 + $0xf4] sm:$0xf] %v275
                %v277 = vld [vmem:[%s151 + $0x1d8] sm:$0xf]
                %278 = vst [vmem:[%s152 + $0xf8] sm:$0xf] %v277
                %v279 = vld [vmem:[%s151 + $0x1dc] sm:$0xf]
                %280 = vst [vmem:[%s152 + $0xfc] sm:$0xf] %v279
                %v281 = vld [vmem:[%s151 + $0x200] sm:$0xf]
                %282 = vst [vmem:[%s152 + $0x100] sm:$0xf] %v281
                %v283 = vld [vmem:[%s151 + $0x204] sm:$0xf]
                %284 = vst [vmem:[%s152 + $0x104] sm:$0xf] %v283
                %v285 = vld [vmem:[%s151 + $0x208] sm:$0xf]
                %286 = vst [vmem:[%s152 + $0x108] sm:$0xf] %v285
                %v287 = vld [vmem:[%s151 + $0x20c] sm:$0xf]
                %288 = vst [vmem:[%s152 + $0x10c] sm:$0xf] %v287
                %v289 = vld [vmem:[%s151 + $0x210] sm:$0xf]
                %290 = vst [vmem:[%s152 + $0x110] sm:$0xf] %v289
                %v291 = vld [vmem:[%s151 + $0x214] sm:$0xf]
                %292 = vst [vmem:[%s152 + $0x114] sm:$0xf] %v291
                %v293 = vld [vmem:[%s151 + $0x218] sm:$0xf]
                %294 = vst [vmem:[%s152 + $0x118] sm:$0xf] %v293
                %v295 = vld [vmem:[%s151 + $0x21c] sm:$0xf]
                %296 = vst [vmem:[%s152 + $0x11c] sm:$0xf] %v295
              $region45: #{dbnet_forward.24} parent=39 // loop_footer
                %s150 = sadd.s32 1, %s146
              $region46: #{dbnet_forward.24} parent=39 // loop_footer_branch
                %145 = sbr.rel target = $region42
              $region47: #{dbnet_forward.24} parent=39 // loop_exit
                _
            $region40: #{dbnet_forward.24} parent=31 // pred_fallthru
              _
          $region32: #{dbnet_forward.24} parent=27 // pred_fallthru
            _
          %460 = vnop
        $region28: #{dbnet_forward.24} parent=23 // pred_fallthru
          _
      $region24: #{dbnet_forward.24} parent=5 // pred_fallthru
        _
      %p461 = scmp.le.s32.totalorder 1, %s9
      %p462 = scmp.lt.s32.totalorder %s9, 3
      %p463 = pnand %p461, %p462
      %p464 = pneg %p463
      // Predicated region
      $region66: #{dbnet_forward.24} parent=5 // pred_check
        _
      $region67: #{dbnet_forward.24} parent=5 // pred_check_branch
        %466 = sbr.rel (%p463) target = $region69
      $region68: #{dbnet_forward.24} parent=5 // pred_region
        %s467 = ssub.s32 %s9, 1
        %s468 = sand.u32 %s22, 1
        %s469 = sand.u32 %s22, 1
        %s470 = smul.addr %s469, 288
        %s471 = scalar_lea.vmem [#allocation2], %s470
        // Predicated region
        $region70: #{dbnet_forward.24} parent=68 // pred_check
          %p472 = pneg %p35
        $region71: #{dbnet_forward.24} parent=68 // pred_check_branch
          %474 = sbr.rel (%p472) target = $region73
        $region72: #{dbnet_forward.24} parent=68 // pred_region
          _
        $region73: #{dbnet_forward.24} parent=68 // pred_fallthru
          _
        %s475 = sand.u32 %s22, 1
        %s476 = sand.u32 %s22, 1
        %s477 = smul.addr %s476, 288
        %s478 = scalar_lea.vmem [#allocation2], %s477
        %p479 = pneg %p35
        %p480 = pneg %p32
        %p481 = pneg %p56
        %p482 = pneg %p53
        %p483 = pneg %p77
        %p484 = pneg %p74
        %p485 = pneg %p103
        %p486 = pneg %p100
        %s487 = smul.u32 8, %s14
        %p488 = scmp.lt.s32.totalorder %s487, 15
        %s489 = scalar_select %p488, %s487, 15
        %s490 = smul.addr %s489, 4
        %s491 = scalar_lea.vmem %s3, %s490
        %s492 = smul.u32 8, %s14
        %s493 = smul.u32 8, %s14
        %p494 = scmp.lt.s32.totalorder %s493, 15
        %s495 = scalar_select %p494, %s493, 15
        %s496 = smul.addr %s495, 4
        %s497 = scalar_lea.vmem %s3, %s496
        %s498 = smul.u32 8, %s14
        %v499 = vld [vmem:[%s471] sm:$0xf]
        %v500 = vld [vmem:[%s471 + $0x4] sm:$0xf]
        %v501 = vld [vmem:[%s471 + $0x8] sm:$0xf]
        %v502 = vld [vmem:[%s471 + $0xc] sm:$0xf]
        %v503 = vld [vmem:[%s471 + $0x10] sm:$0xf]
        %v504 = vld [vmem:[%s471 + $0x14] sm:$0xf]
        %v505 = vld [vmem:[%s471 + $0x18] sm:$0xf]
        %v506 = vld [vmem:[%s471 + $0x1c] sm:$0xf]
        %v507 = vunpack.c.l.bf16 %v499
        %v508 = vunpack.c.l.bf16 %v500
        %v509 = vunpack.c.l.bf16 %v501
        %v510 = vunpack.c.l.bf16 %v502
        %v511 = vunpack.c.l.bf16 %v503
        %v512 = vunpack.c.l.bf16 %v504
        %v513 = vunpack.c.l.bf16 %v505
        %v514 = vunpack.c.l.bf16 %v506
        %v515 = vld [vmem:[%s1] sm:$0x1]
        %v516 = vlaneseq
        %v517 = vshrl.u32 %v516, 7
        %v518 = vsub.s32 0, %v517
        %v519 = vrot.slane %v515, %v518
        %v520 = vmul.f32 %v507, %v519
        %v521 = vmul.f32 %v508, %v519
        %v522 = vmul.f32 %v509, %v519
        %v523 = vmul.f32 %v510, %v519
        %v524 = vmul.f32 %v511, %v519
        %v525 = vmul.f32 %v512, %v519
        %v526 = vmul.f32 %v513, %v519
        %v527 = vmul.f32 %v514, %v519
        %v528 = vadd.f32 %v520, 0.0
        %v529 = vadd.f32 %v521, 0.0
        %v530 = vadd.f32 %v522, 0.0
        %v531 = vadd.f32 %v523, 0.0
        %v532 = vadd.f32 %v524, 0.0
        %v533 = vadd.f32 %v525, 0.0
        %v534 = vadd.f32 %v526, 0.0
        %v535 = vadd.f32 %v527, 0.0
        %s536 = scalar_lea.vmem %s471, 32 [#allocation2]
        %v537 = vld [vmem:[%s536] sm:$0xf]
        %v538 = vld [vmem:[%s536 + $0x4] sm:$0xf]
        %v539 = vld [vmem:[%s536 + $0x8] sm:$0xf]
        %v540 = vld [vmem:[%s536 + $0xc] sm:$0xf]
        %v541 = vld [vmem:[%s536 + $0x10] sm:$0xf]
        %v542 = vld [vmem:[%s536 + $0x14] sm:$0xf]
        %v543 = vld [vmem:[%s536 + $0x18] sm:$0xf]
        %v544 = vld [vmem:[%s536 + $0x1c] sm:$0xf]
        %v545 = vunpack.c.l.bf16 %v537
        %v546 = vunpack.c.l.bf16 %v538
        %v547 = vunpack.c.l.bf16 %v539
        %v548 = vunpack.c.l.bf16 %v540
        %v549 = vunpack.c.l.bf16 %v541
        %v550 = vunpack.c.l.bf16 %v542
        %v551 = vunpack.c.l.bf16 %v543
        %v552 = vunpack.c.l.bf16 %v544
        %v553 = vld [vmem:[%s1 + $0x1] sm:$0x1]
        %v554 = vlaneseq
        %v555 = vshrl.u32 %v554, 7
        %v556 = vsub.s32 0, %v555
        %v557 = vrot.slane %v553, %v556
        %v558 = vmul.f32 %v545, %v557
        %v559 = vmul.f32 %v546, %v557
        %v560 = vmul.f32 %v547, %v557
        %v561 = vmul.f32 %v548, %v557
        %v562 = vmul.f32 %v549, %v557
        %v563 = vmul.f32 %v550, %v557
        %v564 = vmul.f32 %v551, %v557
        %v565 = vmul.f32 %v552, %v557
        %v566 = vadd.f32 %v528, %v558
        %v567 = vadd.f32 %v529, %v559
        %v568 = vadd.f32 %v530, %v560
        %v569 = vadd.f32 %v531, %v561
        %v570 = vadd.f32 %v532, %v562
        %v571 = vadd.f32 %v533, %v563
        %v572 = vadd.f32 %v534, %v564
        %v573 = vadd.f32 %v535, %v565
        %s574 = scalar_lea.vmem %s471, 64 [#allocation2]
        %v575 = vld [vmem:[%s574] sm:$0xf]
        %v576 = vld [vmem:[%s574 + $0x4] sm:$0xf]
        %v577 = vld [vmem:[%s574 + $0x8] sm:$0xf]
        %v578 = vld [vmem:[%s574 + $0xc] sm:$0xf]
        %v579 = vld [vmem:[%s574 + $0x10] sm:$0xf]
        %v580 = vld [vmem:[%s574 + $0x14] sm:$0xf]
        %v581 = vld [vmem:[%s574 + $0x18] sm:$0xf]
        %v582 = vld [vmem:[%s574 + $0x1c] sm:$0xf]
        %v583 = vunpack.c.l.bf16 %v575
        %v584 = vunpack.c.l.bf16 %v576
        %v585 = vunpack.c.l.bf16 %v577
        %v586 = vunpack.c.l.bf16 %v578
        %v587 = vunpack.c.l.bf16 %v579
        %v588 = vunpack.c.l.bf16 %v580
        %v589 = vunpack.c.l.bf16 %v581
        %v590 = vunpack.c.l.bf16 %v582
        %v591 = vld [vmem:[%s1 + $0x2] sm:$0x1]
        %v592 = vlaneseq
        %v593 = vshrl.u32 %v592, 7
        %v594 = vsub.s32 0, %v593
        %v595 = vrot.slane %v591, %v594
        %v596 = vmul.f32 %v583, %v595
        %v597 = vmul.f32 %v584, %v595
        %v598 = vmul.f32 %v585, %v595
        %v599 = vmul.f32 %v586, %v595
        %v600 = vmul.f32 %v587, %v595
        %v601 = vmul.f32 %v588, %v595
        %v602 = vmul.f32 %v589, %v595
        %v603 = vmul.f32 %v590, %v595
        %v604 = vadd.f32 %v566, %v596
        %v605 = vadd.f32 %v567, %v597
        %v606 = vadd.f32 %v568, %v598
        %v607 = vadd.f32 %v569, %v599
        %v608 = vadd.f32 %v570, %v600
        %v609 = vadd.f32 %v571, %v601
        %v610 = vadd.f32 %v572, %v602
        %v611 = vadd.f32 %v573, %v603
        %s612 = scalar_lea.vmem %s471, 96 [#allocation2]
        %v613 = vld [vmem:[%s612] sm:$0xf]
        %v614 = vld [vmem:[%s612 + $0x4] sm:$0xf]
        %v615 = vld [vmem:[%s612 + $0x8] sm:$0xf]
        %v616 = vld [vmem:[%s612 + $0xc] sm:$0xf]
        %v617 = vld [vmem:[%s612 + $0x10] sm:$0xf]
        %v618 = vld [vmem:[%s612 + $0x14] sm:$0xf]
        %v619 = vld [vmem:[%s612 + $0x18] sm:$0xf]
        %v620 = vld [vmem:[%s612 + $0x1c] sm:$0xf]
        %v621 = vunpack.c.l.bf16 %v613
        %v622 = vunpack.c.l.bf16 %v614
        %v623 = vunpack.c.l.bf16 %v615
        %v624 = vunpack.c.l.bf16 %v616
        %v625 = vunpack.c.l.bf16 %v617
        %v626 = vunpack.c.l.bf16 %v618
        %v627 = vunpack.c.l.bf16 %v619
        %v628 = vunpack.c.l.bf16 %v620
        %v629 = vld [vmem:[%s1 + $0x3] sm:$0x1]
        %v630 = vlaneseq
        %v631 = vshrl.u32 %v630, 7
        %v632 = vsub.s32 0, %v631
        %v633 = vrot.slane %v629, %v632
        %v634 = vmul.f32 %v621, %v633
        %v635 = vmul.f32 %v622, %v633
        %v636 = vmul.f32 %v623, %v633
        %v637 = vmul.f32 %v624, %v633
        %v638 = vmul.f32 %v625, %v633
        %v639 = vmul.f32 %v626, %v633
        %v640 = vmul.f32 %v627, %v633
        %v641 = vmul.f32 %v628, %v633
        %v642 = vadd.f32 %v604, %v634
        %v643 = vadd.f32 %v605, %v635
        %v644 = vadd.f32 %v606, %v636
        %v645 = vadd.f32 %v607, %v637
        %v646 = vadd.f32 %v608, %v638
        %v647 = vadd.f32 %v609, %v639
        %v648 = vadd.f32 %v610, %v640
        %v649 = vadd.f32 %v611, %v641
        %s650 = scalar_lea.vmem %s471, 128 [#allocation2]
        %v651 = vld [vmem:[%s650] sm:$0xf]
        %v652 = vld [vmem:[%s650 + $0x4] sm:$0xf]
        %v653 = vld [vmem:[%s650 + $0x8] sm:$0xf]
        %v654 = vld [vmem:[%s650 + $0xc] sm:$0xf]
        %v655 = vld [vmem:[%s650 + $0x10] sm:$0xf]
        %v656 = vld [vmem:[%s650 + $0x14] sm:$0xf]
        %v657 = vld [vmem:[%s650 + $0x18] sm:$0xf]
        %v658 = vld [vmem:[%s650 + $0x1c] sm:$0xf]
        %v659 = vunpack.c.l.bf16 %v651
        %v660 = vunpack.c.l.bf16 %v652
        %v661 = vunpack.c.l.bf16 %v653
        %v662 = vunpack.c.l.bf16 %v654
        %v663 = vunpack.c.l.bf16 %v655
        %v664 = vunpack.c.l.bf16 %v656
        %v665 = vunpack.c.l.bf16 %v657
        %v666 = vunpack.c.l.bf16 %v658
        %v667 = vld [vmem:[%s1 + $0x4] sm:$0x1]
        %v668 = vlaneseq
        %v669 = vshrl.u32 %v668, 7
        %v670 = vsub.s32 0, %v669
        %v671 = vrot.slane %v667, %v670
        %v672 = vmul.f32 %v659, %v671
        %v673 = vmul.f32 %v660, %v671
        %v674 = vmul.f32 %v661, %v671
        %v675 = vmul.f32 %v662, %v671
        %v676 = vmul.f32 %v663, %v671
        %v677 = vmul.f32 %v664, %v671
        %v678 = vmul.f32 %v665, %v671
        %v679 = vmul.f32 %v666, %v671
        %v680 = vadd.f32 %v642, %v672
        %v681 = vadd.f32 %v643, %v673
        %v682 = vadd.f32 %v644, %v674
        %v683 = vadd.f32 %v645, %v675
        %v684 = vadd.f32 %v646, %v676
        %v685 = vadd.f32 %v647, %v677
        %v686 = vadd.f32 %v648, %v678
        %v687 = vadd.f32 %v649, %v679
        %s688 = scalar_lea.vmem %s471, 160 [#allocation2]
        %v689 = vld [vmem:[%s688] sm:$0xf]
        %v690 = vld [vmem:[%s688 + $0x4] sm:$0xf]
        %v691 = vld [vmem:[%s688 + $0x8] sm:$0xf]
        %v692 = vld [vmem:[%s688 + $0xc] sm:$0xf]
        %v693 = vld [vmem:[%s688 + $0x10] sm:$0xf]
        %v694 = vld [vmem:[%s688 + $0x14] sm:$0xf]
        %v695 = vld [vmem:[%s688 + $0x18] sm:$0xf]
        %v696 = vld [vmem:[%s688 + $0x1c] sm:$0xf]
        %v697 = vunpack.c.l.bf16 %v689
        %v698 = vunpack.c.l.bf16 %v690
        %v699 = vunpack.c.l.bf16 %v691
        %v700 = vunpack.c.l.bf16 %v692
        %v701 = vunpack.c.l.bf16 %v693
        %v702 = vunpack.c.l.bf16 %v694
        %v703 = vunpack.c.l.bf16 %v695
        %v704 = vunpack.c.l.bf16 %v696
        %v705 = vld [vmem:[%s1 + $0x5] sm:$0x1]
        %v706 = vlaneseq
        %v707 = vshrl.u32 %v706, 7
        %v708 = vsub.s32 0, %v707
        %v709 = vrot.slane %v705, %v708
        %v710 = vmul.f32 %v697, %v709
        %v711 = vmul.f32 %v698, %v709
        %v712 = vmul.f32 %v699, %v709
        %v713 = vmul.f32 %v700, %v709
        %v714 = vmul.f32 %v701, %v709
        %v715 = vmul.f32 %v702, %v709
        %v716 = vmul.f32 %v703, %v709
        %v717 = vmul.f32 %v704, %v709
        %v718 = vadd.f32 %v680, %v710
        %v719 = vadd.f32 %v681, %v711
        %v720 = vadd.f32 %v682, %v712
        %v721 = vadd.f32 %v683, %v713
        %v722 = vadd.f32 %v684, %v714
        %v723 = vadd.f32 %v685, %v715
        %v724 = vadd.f32 %v686, %v716
        %v725 = vadd.f32 %v687, %v717
        %s726 = scalar_lea.vmem %s471, 192 [#allocation2]
        %v727 = vld [vmem:[%s726] sm:$0xf]
        %v728 = vld [vmem:[%s726 + $0x4] sm:$0xf]
        %v729 = vld [vmem:[%s726 + $0x8] sm:$0xf]
        %v730 = vld [vmem:[%s726 + $0xc] sm:$0xf]
        %v731 = vld [vmem:[%s726 + $0x10] sm:$0xf]
        %v732 = vld [vmem:[%s726 + $0x14] sm:$0xf]
        %v733 = vld [vmem:[%s726 + $0x18] sm:$0xf]
        %v734 = vld [vmem:[%s726 + $0x1c] sm:$0xf]
        %v735 = vunpack.c.l.bf16 %v727
        %v736 = vunpack.c.l.bf16 %v728
        %v737 = vunpack.c.l.bf16 %v729
        %v738 = vunpack.c.l.bf16 %v730
        %v739 = vunpack.c.l.bf16 %v731
        %v740 = vunpack.c.l.bf16 %v732
        %v741 = vunpack.c.l.bf16 %v733
        %v742 = vunpack.c.l.bf16 %v734
        %v743 = vld [vmem:[%s1 + $0x6] sm:$0x1]
        %v744 = vlaneseq
        %v745 = vshrl.u32 %v744, 7
        %v746 = vsub.s32 0, %v745
        %v747 = vrot.slane %v743, %v746
        %v748 = vmul.f32 %v735, %v747
        %v749 = vmul.f32 %v736, %v747
        %v750 = vmul.f32 %v737, %v747
        %v751 = vmul.f32 %v738, %v747
        %v752 = vmul.f32 %v739, %v747
        %v753 = vmul.f32 %v740, %v747
        %v754 = vmul.f32 %v741, %v747
        %v755 = vmul.f32 %v742, %v747
        %v756 = vadd.f32 %v718, %v748
        %v757 = vadd.f32 %v719, %v749
        %v758 = vadd.f32 %v720, %v750
        %v759 = vadd.f32 %v721, %v751
        %v760 = vadd.f32 %v722, %v752
        %v761 = vadd.f32 %v723, %v753
        %v762 = vadd.f32 %v724, %v754
        %v763 = vadd.f32 %v725, %v755
        %s764 = scalar_lea.vmem %s471, 224 [#allocation2]
        %v765 = vld [vmem:[%s764] sm:$0xf]
        %v766 = vld [vmem:[%s764 + $0x4] sm:$0xf]
        %v767 = vld [vmem:[%s764 + $0x8] sm:$0xf]
        %v768 = vld [vmem:[%s764 + $0xc] sm:$0xf]
        %v769 = vld [vmem:[%s764 + $0x10] sm:$0xf]
        %v770 = vld [vmem:[%s764 + $0x14] sm:$0xf]
        %v771 = vld [vmem:[%s764 + $0x18] sm:$0xf]
        %v772 = vld [vmem:[%s764 + $0x1c] sm:$0xf]
        %v773 = vunpack.c.l.bf16 %v765
        %v774 = vunpack.c.l.bf16 %v766
        %v775 = vunpack.c.l.bf16 %v767
        %v776 = vunpack.c.l.bf16 %v768
        %v777 = vunpack.c.l.bf16 %v769
        %v778 = vunpack.c.l.bf16 %v770
        %v779 = vunpack.c.l.bf16 %v771
        %v780 = vunpack.c.l.bf16 %v772
        %v781 = vld [vmem:[%s1 + $0x7] sm:$0x1]
        %v782 = vlaneseq
        %v783 = vshrl.u32 %v782, 7
        %v784 = vsub.s32 0, %v783
        %v785 = vrot.slane %v781, %v784
        %v786 = vmul.f32 %v773, %v785
        %v787 = vmul.f32 %v774, %v785
        %v788 = vmul.f32 %v775, %v785
        %v789 = vmul.f32 %v776, %v785
        %v790 = vmul.f32 %v777, %v785
        %v791 = vmul.f32 %v778, %v785
        %v792 = vmul.f32 %v779, %v785
        %v793 = vmul.f32 %v780, %v785
        %v794 = vadd.f32 %v756, %v786
        %v795 = vadd.f32 %v757, %v787
        %v796 = vadd.f32 %v758, %v788
        %v797 = vadd.f32 %v759, %v789
        %v798 = vadd.f32 %v760, %v790
        %v799 = vadd.f32 %v761, %v791
        %v800 = vadd.f32 %v762, %v792
        %v801 = vadd.f32 %v763, %v793
        %s802 = scalar_lea.vmem %s471, 256 [#allocation2]
        %v803 = vld [vmem:[%s802] sm:$0xf]
        %v804 = vld [vmem:[%s802 + $0x4] sm:$0xf]
        %v805 = vld [vmem:[%s802 + $0x8] sm:$0xf]
        %v806 = vld [vmem:[%s802 + $0xc] sm:$0xf]
        %v807 = vld [vmem:[%s802 + $0x10] sm:$0xf]
        %v808 = vld [vmem:[%s802 + $0x14] sm:$0xf]
        %v809 = vld [vmem:[%s802 + $0x18] sm:$0xf]
        %v810 = vld [vmem:[%s802 + $0x1c] sm:$0xf]
        %v811 = vunpack.c.l.bf16 %v803
        %v812 = vunpack.c.l.bf16 %v804
        %v813 = vunpack.c.l.bf16 %v805
        %v814 = vunpack.c.l.bf16 %v806
        %v815 = vunpack.c.l.bf16 %v807
        %v816 = vunpack.c.l.bf16 %v808
        %v817 = vunpack.c.l.bf16 %v809
        %v818 = vunpack.c.l.bf16 %v810
        %v819 = vld [vmem:[%s1 + $0x8] sm:$0x1]
        %v820 = vlaneseq
        %v821 = vshrl.u32 %v820, 7
        %v822 = vsub.s32 0, %v821
        %v823 = vrot.slane %v819, %v822
        %v824 = vmul.f32 %v811, %v823
        %v825 = vmul.f32 %v812, %v823
        %v826 = vmul.f32 %v813, %v823
        %v827 = vmul.f32 %v814, %v823
        %v828 = vmul.f32 %v815, %v823
        %v829 = vmul.f32 %v816, %v823
        %v830 = vmul.f32 %v817, %v823
        %v831 = vmul.f32 %v818, %v823
        %v832 = vadd.f32 %v794, %v824
        %v833 = vadd.f32 %v795, %v825
        %v834 = vadd.f32 %v796, %v826
        %v835 = vadd.f32 %v797, %v827
        %v836 = vadd.f32 %v798, %v828
        %v837 = vadd.f32 %v799, %v829
        %v838 = vadd.f32 %v800, %v830
        %v839 = vadd.f32 %v801, %v831
        %v840 = vld [vmem:[%s2] sm:$0x1]
        %v842 = vlaneseq
        %v843 = vshrl.u32 %v842, 7
        %v844 = vsub.s32 0, %v843
        %v845 = vrot.slane %v840, %v844
        %v847 = vadd.f32 %v832, %v845
        %v848 = vadd.f32 %v833, %v845
        %v849 = vadd.f32 %v834, %v845
        %v850 = vadd.f32 %v835, %v845
        %v851 = vadd.f32 %v836, %v845
        %v852 = vadd.f32 %v837, %v845
        %v853 = vadd.f32 %v838, %v845
        %v854 = vadd.f32 %v839, %v845
        %v855 = vmax.f32 %v847, 0.0
        %v856 = vmax.f32 %v848, 0.0
        %v857 = vmax.f32 %v849, 0.0
        %v858 = vmax.f32 %v850, 0.0
        %v859 = vmax.f32 %v851, 0.0
        %v860 = vmax.f32 %v852, 0.0
        %v861 = vmax.f32 %v853, 0.0
        %v862 = vmax.f32 %v854, 0.0
        %v863 = vpack.c.bf16 %v856, %v855
        %v864 = vpack.c.bf16 %v858, %v857
        %v865 = vpack.c.bf16 %v860, %v859
        %v866 = vpack.c.bf16 %v862, %v861
        %v871 = vunpack.c.l.b16 %v863
        %v872 = vunpack.c.h.b16 %v863
        %v873 = vunpack.c.l.b16 %v864
        %v874 = vunpack.c.h.b16 %v864
        %v875 = vunpack.c.l.b16 %v865
        %v876 = vunpack.c.h.b16 %v865
        %v877 = vunpack.c.l.b16 %v866
        %v878 = vunpack.c.h.b16 %v866
        %v879 = vpack.c.b16 %v871, %v871
        %v880 = vpack.c.b16 %v872, %v872
        %v881 = vpack.c.b16 %v873, %v873
        %v882 = vpack.c.b16 %v874, %v874
        %v883 = vpack.c.b16 %v875, %v875
        %v884 = vpack.c.b16 %v876, %v876
        %v885 = vpack.c.b16 %v877, %v877
        %v886 = vpack.c.b16 %v878, %v878
        %vm895 = vcmask 125952
        %896 = vst.msk [vmem:[%s497] sm:$0xf] %vm895, %v879
        %897 = vst.msk [vmem:[%s497 + $0x4] sm:$0xf] %vm895, %v880
        %898 = vst.msk [vmem:[%s497 + $0x8] sm:$0xf] %vm895, %v881
        %899 = vst.msk [vmem:[%s497 + $0xc] sm:$0xf] %vm895, %v882
        %900 = vst.msk [vmem:[%s497 + $0x10] sm:$0xf] %vm895, %v883
        %901 = vst.msk [vmem:[%s497 + $0x14] sm:$0xf] %vm895, %v884
        %902 = vst.msk [vmem:[%s497 + $0x18] sm:$0xf] %vm895, %v885
        %903 = vst.msk [vmem:[%s497 + $0x1c] sm:$0xf] %vm895, %v886
        %s904 = smul.u32 8, %s14
        %p905 = scmp.lt.s32.totalorder %s904, 15
        %s906 = scalar_select %p905, %s904, 15
        %s907 = smul.addr %s906, 4
        %s908 = scalar_lea.vmem %s3, %s907
        // Predicated region
        $region74: #{dbnet_forward.24} parent=68 // pred_check
          %p909 = pneg %p100
        $region75: #{dbnet_forward.24} parent=68 // pred_check_branch
          %911 = sbr.rel (%p909) target = $region77
        $region76: #{dbnet_forward.24} parent=68 // pred_region
          %s912 = smul.u32 8, %s14
        $region77: #{dbnet_forward.24} parent=68 // pred_fallthru
          _
      $region69: #{dbnet_forward.24} parent=5 // pred_fallthru
        _
      %p913 = scmp.le.s32.totalorder 2, %s9
      // Predicated region
      $region78: #{dbnet_forward.24} parent=5 // pred_check
        %p914 = pneg %p913
      $region79: #{dbnet_forward.24} parent=5 // pred_check_branch
        %916 = sbr.rel (%p914) target = $region81
      $region80: #{dbnet_forward.24} parent=5 // pred_region
        %s917 = ssub.s32 %s9, 2
        // Predicated region
        $region82: #{dbnet_forward.24} parent=80 // pred_check
          %p918 = pneg %p106
        $region83: #{dbnet_forward.24} parent=80 // pred_check_branch
          %920 = sbr.rel (%p918) target = $region85
        $region84: #{dbnet_forward.24} parent=80 // pred_region
          %s921 = smul.u32 8, %s15
          %p922 = scmp.lt.s32.totalorder %s921, 15
          %s923 = scalar_select %p922, %s921, 15
          %s924 = smul.addr %s923, 4
          %s925 = scalar_lea.vmem %s3, %s924
        $region85: #{dbnet_forward.24} parent=80 // pred_fallthru
          _
      $region81: #{dbnet_forward.24} parent=5 // pred_fallthru
        _
    $region6: #{dbnet_forward.24} parent=1 // loop_footer
      %s13 = sadd.s32 1, %s9
    $region7: #{dbnet_forward.24} parent=1 // loop_footer_branch
      %8 = sbr.rel target = $region3
    $region8: #{dbnet_forward.24} parent=1 // loop_exit
      _

// kernel: dbnet_forward.26
$region0: #{dbnet_forward.26}
  #allocation0 [shape = 'u32[]', space=smem, size = 0x4, offset = 0x4, fixed_abs, tag = 'smem constant byte address 0x4 - core index']
  #allocation1 [shape = 'u32[144,128]{1,0:T(1,128)}', space=vmem, size = 0x12000, scoped, tag = 'internal scratch']
  %s0 = inlined_call_operand.vmem [shape: bf16[128,16], index: 0, kind: input, shape index: {}]
  %s1 = inlined_call_operand.vmem [shape: bf16[128,128], index: 1, kind: input, shape index: {}]
  %s2 = inlined_call_operand.vmem [shape: f32[1,128], index: 2, kind: input, shape index: {}]
  %s3 = inlined_call_operand.vmem [shape: bf16[128,72], index: 3, kind: output, shape index: {}]
  %s4 = sld [smem:[#allocation0]]
  $region45: #{dbnet_forward.26} parent=0
    _
  %s6 = ssub.s32 1, %s4
  %s7 = scalar_select 0, %s6, %s4
  loop: start=0, step=1, limit=4
  $region2: #{dbnet_forward.26} parent=0 // loop_pre_header
    _
  $region3: #{dbnet_forward.26} parent=0 // loop_header
    %s9 = sphi 0, %s13
    %p10 = scmp.ge.s32.totalorder %s9, 4
    %s19 = sphi 0, %s21
    %s22 = sphi 0, %s19
    %s23 = sphi 0, %s22
    %s39 = sphi 0, %s23
    %s43 = sphi 0, %s43
    %s45 = sphi 0, %s43
    %s46 = sphi 0, %s45
    %s60 = sphi 0, %s46
    %s64 = sphi 0, %s64
    %s66 = sphi 0, %s64
    %s67 = sphi 0, %s66
    %s81 = sphi 0, %s67
    %s87 = sphi 0, %s89
    %s90 = sphi 0, %s87
    %s91 = sphi 0, %s90
    %s107 = sphi 0, %s91
  $region4: #{dbnet_forward.26} parent=0 // loop_header_branch
    %12 = sbr.rel (%p10) target = $region8
  $region5: #{dbnet_forward.26} parent=0 // loop_body
    %s14 = ssub.s32 %s9, 1
    %s15 = ssub.s32 %s9, 2
    %s16 = sadd.s32 %s9, 1
    %s17 = ssub.s32 %s9, %s16
    %p18 = scmp.eq.s32.totalorder %s17, 0
    %s20 = sadd.s32 %s19, 1
    %s21 = scalar_select %p18, %s19, %s20
    %p24 = pneg %p18
    %p25 = scmp.eq.s32.totalorder %s9, 1
    %p26 = por %p24, %p25
    %p27 = scmp.ne.s32.totalorder %s19, %s22
    %p28 = scmp.eq.s32.totalorder %s9, 0
    %p29 = por %p27, %p28
    %p30 = scmp.ne.s32.totalorder %s19, %s22
    %p31 = scmp.eq.s32.totalorder %s14, 1
    %p32 = por %p30, %p31
    %p33 = scmp.ne.s32.totalorder %s22, %s23
    %p34 = scmp.eq.s32.totalorder %s14, 0
    %p35 = por %p33, %p34
    %p36 = scmp.ne.s32.totalorder %s22, %s23
    %p37 = scmp.eq.s32.totalorder %s15, 1
    %p38 = por %p36, %p37
    %p40 = scmp.ne.s32.totalorder %s23, %s39
    %p41 = scmp.eq.s32.totalorder %s15, 0
    %p42 = por %p40, %p41
    %s44 = sadd.s32 %s43, 1
    %p47 = scmp.eq.s32.totalorder %s9, 1
    %p48 = scmp.ne.s32.totalorder %s43, %s45
    %p49 = scmp.eq.s32.totalorder %s9, 0
    %p50 = por %p48, %p49
    %p51 = scmp.ne.s32.totalorder %s43, %s45
    %p52 = scmp.eq.s32.totalorder %s14, 1
    %p53 = por %p51, %p52
    %p54 = scmp.ne.s32.totalorder %s45, %s46
    %p55 = scmp.eq.s32.totalorder %s14, 0
    %p56 = por %p54, %p55
    %p57 = scmp.ne.s32.totalorder %s45, %s46
    %p58 = scmp.eq.s32.totalorder %s15, 1
    %p59 = por %p57, %p58
    %p61 = scmp.ne.s32.totalorder %s46, %s60
    %p62 = scmp.eq.s32.totalorder %s15, 0
    %p63 = por %p61, %p62
    %s65 = sadd.s32 %s64, 1
    %p68 = scmp.eq.s32.totalorder %s9, 1
    %p69 = scmp.ne.s32.totalorder %s64, %s66
    %p70 = scmp.eq.s32.totalorder %s9, 0
    %p71 = por %p69, %p70
    %p72 = scmp.ne.s32.totalorder %s64, %s66
    %p73 = scmp.eq.s32.totalorder %s14, 1
    %p74 = por %p72, %p73
    %p75 = scmp.ne.s32.totalorder %s66, %s67
    %p76 = scmp.eq.s32.totalorder %s14, 0
    %p77 = por %p75, %p76
    %p78 = scmp.ne.s32.totalorder %s66, %s67
    %p79 = scmp.eq.s32.totalorder %s15, 1
    %p80 = por %p78, %p79
    %p82 = scmp.ne.s32.totalorder %s67, %s81
    %p83 = scmp.eq.s32.totalorder %s15, 0
    %p84 = por %p82, %p83
    %s85 = ssub.s32 %s9, %s16
    %p86 = scmp.eq.s32.totalorder %s85, 0
    %s88 = sadd.s32 %s87, 1
    %s89 = scalar_select %p86, %s87, %s88
    %p92 = pneg %p86
    %p93 = scmp.eq.s32.totalorder %s9, 1
    %p94 = por %p92, %p93
    %p95 = scmp.ne.s32.totalorder %s87, %s90
    %p96 = scmp.eq.s32.totalorder %s9, 0
    %p97 = por %p95, %p96
    %p98 = scmp.ne.s32.totalorder %s87, %s90
    %p99 = scmp.eq.s32.totalorder %s14, 1
    %p100 = por %p98, %p99
    %p101 = scmp.ne.s32.totalorder %s90, %s91
    %p102 = scmp.eq.s32.totalorder %s14, 0
    %p103 = por %p101, %p102
    %p104 = scmp.ne.s32.totalorder %s90, %s91
    %p105 = scmp.eq.s32.totalorder %s15, 1
    %p106 = por %p104, %p105
    %p108 = scmp.ne.s32.totalorder %s91, %s107
    %p109 = scmp.eq.s32.totalorder %s15, 0
    %p110 = por %p108, %p109
    %p111 = scmp.le.s32.totalorder 1, %s9
    %p112 = scmp.lt.s32.totalorder %s9, 3
    %p113 = pnand %p111, %p112
    %p114 = pneg %p113
    // Predicated region
    $region9: #{dbnet_forward.26} parent=5 // pred_check
      _
    $region10: #{dbnet_forward.26} parent=5 // pred_check_branch
      %116 = sbr.rel (%p113) target = $region12
    $region11: #{dbnet_forward.26} parent=5 // pred_region
      %s117 = ssub.s32 %s9, 1
      // Predicated region
      $region13: #{dbnet_forward.26} parent=11 // pred_check
        %p118 = pneg %p56
      $region14: #{dbnet_forward.26} parent=11 // pred_check_branch
        %120 = sbr.rel (%p118) target = $region16
      $region15: #{dbnet_forward.26} parent=11 // pred_region
        _
      $region16: #{dbnet_forward.26} parent=11 // pred_fallthru
        _
      // Predicated region
      $region17: #{dbnet_forward.26} parent=11 // pred_check
        %p121 = pneg %p77
      $region18: #{dbnet_forward.26} parent=11 // pred_check_branch
        %123 = sbr.rel (%p121) target = $region20
      $region19: #{dbnet_forward.26} parent=11 // pred_region
        _
      $region20: #{dbnet_forward.26} parent=11 // pred_fallthru
        _
    $region12: #{dbnet_forward.26} parent=5 // pred_fallthru
      _
    %p124 = scmp.lt.s32.totalorder %s9, 2
    // Predicated region
    $region21: #{dbnet_forward.26} parent=5 // pred_check
      %p125 = pneg %p124
    $region22: #{dbnet_forward.26} parent=5 // pred_check_branch
      %127 = sbr.rel (%p125) target = $region24
    $region23: #{dbnet_forward.26} parent=5 // pred_region
      // Predicated region
      $region25: #{dbnet_forward.26} parent=23 // pred_check
        %p128 = pneg %p29
      $region26: #{dbnet_forward.26} parent=23 // pred_check_branch
        %130 = sbr.rel (%p128) target = $region28
      $region27: #{dbnet_forward.26} parent=23 // pred_region
        %s131 = smul.u32 8, %s9
        %p132 = scmp.lt.s32.totalorder %s131, 15
        %s133 = scalar_select %p132, %s131, 15
        %s134 = smul.addr %s133, 4
        %s135 = scalar_lea.vmem %s0, %s134
        %s136 = smul.u32 8, %s9
      $region28: #{dbnet_forward.26} parent=23 // pred_fallthru
        _
    $region24: #{dbnet_forward.26} parent=5 // pred_fallthru
      _
    %p137 = scmp.le.s32.totalorder 1, %s9
    %p138 = scmp.lt.s32.totalorder %s9, 3
    %p139 = pnand %p137, %p138
    %p140 = pneg %p139
    // Predicated region
    $region29: #{dbnet_forward.26} parent=5 // pred_check
      _
    $region30: #{dbnet_forward.26} parent=5 // pred_check_branch
      %142 = sbr.rel (%p139) target = $region32
    $region31: #{dbnet_forward.26} parent=5 // pred_region
      %s143 = ssub.s32 %s9, 1
      %s144 = smul.u32 8, %s14
      %p145 = scmp.lt.s32.totalorder %s144, 15
      %s146 = scalar_select %p145, %s144, 15
      %s147 = smul.addr %s146, 4
      %s148 = scalar_lea.vmem %s0, %s147
      %p149 = pneg %p35
      %p150 = pneg %p32
      %p151 = pneg %p56
      %p152 = pneg %p53
      %p153 = pneg %p77
      %p154 = pneg %p74
      %p155 = pneg %p103
      %p156 = pneg %p100
      %s157 = smul.u32 8, %s14
      %p158 = scmp.lt.s32.totalorder %s157, 15
      %s159 = scalar_select %p158, %s157, 15
      %s160 = smul.addr %s159, 4
      %s161 = scalar_lea.vmem %s3, %s160
      %s162 = smul.u32 8, %s14
      %p163 = scmp.lt.s32.totalorder %s162, 15
      %s164 = scalar_select %p163, %s162, 15
      %s165 = smul.addr %s164, 4
      %s166 = scalar_lea.vmem %s0, %s165
      %s167 = smul.u32 8, %s14
      %s168 = smul.u32 8, %s14
      %p169 = scmp.lt.s32.totalorder %s168, 15
      %s170 = scalar_select %p169, %s168, 15
      %s171 = smul.addr %s170, 4
      %s172 = scalar_lea.vmem %s3, %s171
      %s173 = smul.u32 8, %s14
      %v175 = vld [vmem:[%s166] sm:$0xf]
      %v176 = vld [vmem:[%s166 + $0x4] sm:$0xf]
      %v177 = vld [vmem:[%s166 + $0x8] sm:$0xf]
      %v178 = vld [vmem:[%s166 + $0xc] sm:$0xf]
      %v179 = vld [vmem:[%s166 + $0x10] sm:$0xf]
      %v180 = vld [vmem:[%s166 + $0x14] sm:$0xf]
      %v181 = vld [vmem:[%s166 + $0x18] sm:$0xf]
      %v182 = vld [vmem:[%s166 + $0x1c] sm:$0xf]
      %v191 = vunpack.c.l.b16 %v175
      %v192 = vunpack.c.l.b16 %v176
      %v193 = vunpack.c.l.b16 %v177
      %v194 = vunpack.c.l.b16 %v178
      %v195 = vunpack.c.l.b16 %v179
      %v196 = vunpack.c.l.b16 %v180
      %v197 = vunpack.c.l.b16 %v181
      %v198 = vunpack.c.l.b16 %v182
      %v199 = vpack.c.b16 %v192, %v191
      %v200 = vpack.c.b16 %v194, %v193
      %v201 = vpack.c.b16 %v196, %v195
      %v202 = vpack.c.b16 %v198, %v197
      %vm203 = vcmask 130048
      %v206 = vsel %vm203, %v199, 0
      %v209 = vsel %vm203, %v200, 0
      %v212 = vsel %vm203, %v201, 0
      %v215 = vsel %vm203, %v202, 0
      %v217 = vld [vmem:[%s1] sm:$0xf]
      %v218 = vld [vmem:[%s1 + $0x4] sm:$0xf]
      %v219 = vld [vmem:[%s1 + $0x8] sm:$0xf]
      %v220 = vld [vmem:[%s1 + $0xc] sm:$0xf]
      %v221 = vld [vmem:[%s1 + $0x10] sm:$0xf]
      %v222 = vld [vmem:[%s1 + $0x14] sm:$0xf]
      %v223 = vld [vmem:[%s1 + $0x18] sm:$0xf]
      %v224 = vld [vmem:[%s1 + $0x1c] sm:$0xf]
      %v225 = vld [vmem:[%s1 + $0x20] sm:$0xf]
      %v226 = vld [vmem:[%s1 + $0x24] sm:$0xf]
      %v227 = vld [vmem:[%s1 + $0x28] sm:$0xf]
      %v228 = vld [vmem:[%s1 + $0x2c] sm:$0xf]
      %v229 = vld [vmem:[%s1 + $0x30] sm:$0xf]
      %v230 = vld [vmem:[%s1 + $0x34] sm:$0xf]
      %v231 = vld [vmem:[%s1 + $0x38] sm:$0xf]
      %v232 = vld [vmem:[%s1 + $0x3c] sm:$0xf]
      %v233 = vld [vmem:[%s2] sm:$0x1]
      %v235 = vlaneseq
      %v236 = vshrl.u32 %v235, 7
      %v237 = vsub.s32 0, %v236
      %v238 = vrot.slane %v233, %v237
      %v256 = vunpack.c.l.b16 %v217
      %v257 = vunpack.c.l.b16 %v218
      %v258 = vunpack.c.l.b16 %v219
      %v259 = vunpack.c.l.b16 %v220
      %v260 = vunpack.c.l.b16 %v221
      %v261 = vunpack.c.l.b16 %v222
      %v262 = vunpack.c.l.b16 %v223
      %v263 = vunpack.c.l.b16 %v224
      %v264 = vunpack.c.l.b16 %v225
      %v265 = vunpack.c.l.b16 %v226
      %v266 = vunpack.c.l.b16 %v227
      %v267 = vunpack.c.l.b16 %v228
      %v268 = vunpack.c.l.b16 %v229
      %v269 = vunpack.c.l.b16 %v230
      %v270 = vunpack.c.l.b16 %v231
      %v271 = vunpack.c.l.b16 %v232
      %v272 = vpack.c.b16 %v257, %v256
      %v273 = vpack.c.b16 %v259, %v258
      %v274 = vpack.c.b16 %v261, %v260
      %v275 = vpack.c.b16 %v263, %v262
      %v276 = vpack.c.b16 %v265, %v264
      %v277 = vpack.c.b16 %v267, %v266
      %v278 = vpack.c.b16 %v269, %v268
      %v279 = vpack.c.b16 %v271, %v270
      %288 = vmatprep.subr.bf16.mxu0 0
      %289 = vmatpush1.bf16.msra.mxu0 %v272
      %290 = vmatprep.subr.bf16.mxu0 0
      %291 = vmatpush1.bf16.msra.mxu0 %v273
      %292 = vmatprep.subr.bf16.mxu0 0
      %293 = vmatpush1.bf16.msra.mxu0 %v274
      %294 = vmatprep.subr.bf16.mxu0 0
      %295 = vmatpush1.bf16.msra.mxu0 %v275
      %296 = vmatprep.subr.bf16.mxu0 0
      %297 = vmatpush1.bf16.msra.mxu0 %v276
      %298 = vmatprep.subr.bf16.mxu0 0
      %299 = vmatpush1.bf16.msra.mxu0 %v277
      %300 = vmatprep.subr.bf16.mxu0 0
      %301 = vmatpush1.bf16.msra.mxu0 %v278
      %302 = vmatprep.subr.bf16.mxu0 0
      %303 = vmatpush1.bf16.msra.mxu0 %v279
      %304 = vmatprep.subr.bf16.mxu0 0
      %305 = vmatpush1.bf16.msra.mxu0 0
      %306 = vmatprep.subr.bf16.mxu0 0
      %307 = vmatpush1.bf16.msra.mxu0 0
      %308 = vmatprep.subr.bf16.mxu0 0
      %309 = vmatpush1.bf16.msra.mxu0 0
      %310 = vmatprep.subr.bf16.mxu0 0
      %311 = vmatpush1.bf16.msra.mxu0 0
      %312 = vmatprep.subr.bf16.mxu0 0
      %313 = vmatpush1.bf16.msra.mxu0 0
      %314 = vmatprep.subr.bf16.mxu0 0
      %315 = vmatpush1.bf16.msra.mxu0 0
      %316 = vmatprep.subr.bf16.mxu0 0
      %317 = vmatpush1.bf16.msra.mxu0 0
      %318 = vmatprep.subr.bf16.mxu0 0
      %319 = vmatpush1.bf16.msra.mxu0 0
      %320 = vmatprep.mubr.bf16.mxu0 0
      %321 = vmatmul.mubr.bf16.gmra.mrb[0].mxu0 %v206
      %v322 = vpop.f32.mrb[0].mxu0
      %v323 = vadd.f32 %v238, %v322
      %v324 = vpop.f32.mrb[0].mxu0
      %v325 = vpop.f32.mrb[0].mxu0
      %v326 = vadd.f32 %v238, %v325
      %v327 = vpop.f32.mrb[0].mxu0
      %328 = vmatprep.mubr.bf16.mxu0 0
      %329 = vmatmul.mubr.bf16.gmra.mrb[0].mxu0 %v209
      %v330 = vpop.f32.mrb[0].mxu0
      %v331 = vadd.f32 %v238, %v330
      %v332 = vpop.f32.mrb[0].mxu0
      %v333 = vpop.f32.mrb[0].mxu0
      %v334 = vadd.f32 %v238, %v333
      %v335 = vpop.f32.mrb[0].mxu0
      %336 = vmatprep.mubr.bf16.mxu0 0
      %337 = vmatmul.mubr.bf16.gmra.mrb[0].mxu0 %v212
      %v338 = vpop.f32.mrb[0].mxu0
      %v339 = vadd.f32 %v238, %v338
      %v340 = vpop.f32.mrb[0].mxu0
      %v341 = vpop.f32.mrb[0].mxu0
      %v342 = vadd.f32 %v238, %v341
      %v343 = vpop.f32.mrb[0].mxu0
      %344 = vmatprep.mubr.bf16.mxu0 0
      %345 = vmatmul.mubr.bf16.gmra.mrb[0].mxu0 %v215
      %v346 = vpop.f32.mrb[0].mxu0
      %v347 = vadd.f32 %v238, %v346
      %v348 = vpop.f32.mrb[0].mxu0
      %v349 = vpop.f32.mrb[0].mxu0
      %v350 = vadd.f32 %v238, %v349
      %v351 = vpop.f32.mrb[0].mxu0
      %352 = vdwg.mxu0
      %v353 = vmax.f32 %v323, 0.0
      %v354 = vmax.f32 %v326, 0.0
      %v355 = vmax.f32 %v331, 0.0
      %v356 = vmax.f32 %v334, 0.0
      %v357 = vmax.f32 %v339, 0.0
      %v358 = vmax.f32 %v342, 0.0
      %v359 = vmax.f32 %v347, 0.0
      %v360 = vmax.f32 %v350, 0.0
      %v361 = vpack.c.bf16 %v354, %v353
      %v362 = vpack.c.bf16 %v356, %v355
      %v363 = vpack.c.bf16 %v358, %v357
      %v364 = vpack.c.bf16 %v360, %v359
      %v369 = vunpack.c.l.b16 %v361
      %v370 = vunpack.c.h.b16 %v361
      %v371 = vunpack.c.l.b16 %v362
      %v372 = vunpack.c.h.b16 %v362
      %v373 = vunpack.c.l.b16 %v363
      %v374 = vunpack.c.h.b16 %v363
      %v375 = vunpack.c.l.b16 %v364
      %v376 = vunpack.c.h.b16 %v364
      %v377 = vpack.c.b16 %v369, %v369
      %v378 = vpack.c.b16 %v370, %v370
      %v379 = vpack.c.b16 %v371, %v371
      %v380 = vpack.c.b16 %v372, %v372
      %v381 = vpack.c.b16 %v373, %v373
      %v382 = vpack.c.b16 %v374, %v374
      %v383 = vpack.c.b16 %v375, %v375
      %v384 = vpack.c.b16 %v376, %v376
      %vm393 = vcmask 584704
      %394 = vst.msk [vmem:[%s172] sm:$0xf] %vm393, %v377
      %395 = vst.msk [vmem:[%s172 + $0x4] sm:$0xf] %vm393, %v378
      %396 = vst.msk [vmem:[%s172 + $0x8] sm:$0xf] %vm393, %v379
      %397 = vst.msk [vmem:[%s172 + $0xc] sm:$0xf] %vm393, %v380
      %398 = vst.msk [vmem:[%s172 + $0x10] sm:$0xf] %vm393, %v381
      %399 = vst.msk [vmem:[%s172 + $0x14] sm:$0xf] %vm393, %v382
      %400 = vst.msk [vmem:[%s172 + $0x18] sm:$0xf] %vm393, %v383
      %401 = vst.msk [vmem:[%s172 + $0x1c] sm:$0xf] %vm393, %v384
      %s402 = smul.u32 8, %s14
      %p403 = scmp.lt.s32.totalorder %s402, 15
      %s404 = scalar_select %p403, %s402, 15
      %s405 = smul.addr %s404, 4
      %s406 = scalar_lea.vmem %s3, %s405
      // Predicated region
      $region33: #{dbnet_forward.26} parent=31 // pred_check
        %p407 = pneg %p100
      $region34: #{dbnet_forward.26} parent=31 // pred_check_branch
        %409 = sbr.rel (%p407) target = $region36
      $region35: #{dbnet_forward.26} parent=31 // pred_region
        %s410 = smul.u32 8, %s14
      $region36: #{dbnet_forward.26} parent=31 // pred_fallthru
        _
    $region32: #{dbnet_forward.26} parent=5 // pred_fallthru
      _
    %p411 = scmp.le.s32.totalorder 2, %s9
    // Predicated region
    $region37: #{dbnet_forward.26} parent=5 // pred_check
      %p412 = pneg %p411
    $region38: #{dbnet_forward.26} parent=5 // pred_check_branch
      %414 = sbr.rel (%p412) target = $region40
    $region39: #{dbnet_forward.26} parent=5 // pred_region
      %s415 = ssub.s32 %s9, 2
      // Predicated region
      $region41: #{dbnet_forward.26} parent=39 // pred_check
        %p416 = pneg %p106
      $region42: #{dbnet_forward.26} parent=39 // pred_check_branch
        %418 = sbr.rel (%p416) target = $region44
      $region43: #{dbnet_forward.26} parent=39 // pred_region
        %s419 = smul.u32 8, %s15
        %p420 = scmp.lt.s32.totalorder %s419, 15
        %s421 = scalar_select %p420, %s419, 15
        %s422 = smul.addr %s421, 4
        %s423 = scalar_lea.vmem %s3, %s422
      $region44: #{dbnet_forward.26} parent=39 // pred_fallthru
        _
    $region40: #{dbnet_forward.26} parent=5 // pred_fallthru
      _
  $region6: #{dbnet_forward.26} parent=0 // loop_footer
    %s13 = sadd.s32 1, %s9
  $region7: #{dbnet_forward.26} parent=0 // loop_footer_branch
    %8 = sbr.rel target = $region3
  $region8: #{dbnet_forward.26} parent=0 // loop_exit
    _

// kernel: dbnet_forward.35
$region0: #{dbnet_forward.35}
  #allocation0 [shape = 'u32[]', space=smem, size = 0x4, offset = 0x4, fixed_abs, tag = 'smem constant byte address 0x4 - core index']
  #allocation1 [shape = 'u32[144,128]{1,0:T(1,128)}', space=vmem, size = 0x12000, scoped, tag = 'internal scratch']
  %s0 = inlined_call_operand.vmem [shape: bf16[128,16], index: 0, kind: input, shape index: {}]
  %s1 = inlined_call_operand.vmem [shape: bf16[128,128], index: 1, kind: input, shape index: {}]
  %s2 = inlined_call_operand.vmem [shape: f32[1,128], index: 2, kind: input, shape index: {}]
  %s3 = inlined_call_operand.vmem [shape: bf16[128,32], index: 3, kind: output, shape index: {}]
  %s4 = sld [smem:[#allocation0]]
  $region45: #{dbnet_forward.35} parent=0
    _
  %s6 = ssub.s32 1, %s4
  %s7 = scalar_select 0, %s6, %s4
  loop: start=0, step=1, limit=4
  $region2: #{dbnet_forward.35} parent=0 // loop_pre_header
    _
  $region3: #{dbnet_forward.35} parent=0 // loop_header
    %s9 = sphi 0, %s13
    %p10 = scmp.ge.s32.totalorder %s9, 4
    %s19 = sphi 0, %s21
    %s22 = sphi 0, %s19
    %s23 = sphi 0, %s22
    %s39 = sphi 0, %s23
    %s43 = sphi 0, %s43
    %s45 = sphi 0, %s43
    %s46 = sphi 0, %s45
    %s60 = sphi 0, %s46
    %s64 = sphi 0, %s64
    %s66 = sphi 0, %s64
    %s67 = sphi 0, %s66
    %s81 = sphi 0, %s67
    %s87 = sphi 0, %s89
    %s90 = sphi 0, %s87
    %s91 = sphi 0, %s90
    %s107 = sphi 0, %s91
  $region4: #{dbnet_forward.35} parent=0 // loop_header_branch
    %12 = sbr.rel (%p10) target = $region8
  $region5: #{dbnet_forward.35} parent=0 // loop_body
    %s14 = ssub.s32 %s9, 1
    %s15 = ssub.s32 %s9, 2
    %s16 = sadd.s32 %s9, 1
    %s17 = ssub.s32 %s9, %s16
    %p18 = scmp.eq.s32.totalorder %s17, 0
    %s20 = sadd.s32 %s19, 1
    %s21 = scalar_select %p18, %s19, %s20
    %p24 = pneg %p18
    %p25 = scmp.eq.s32.totalorder %s9, 1
    %p26 = por %p24, %p25
    %p27 = scmp.ne.s32.totalorder %s19, %s22
    %p28 = scmp.eq.s32.totalorder %s9, 0
    %p29 = por %p27, %p28
    %p30 = scmp.ne.s32.totalorder %s19, %s22
    %p31 = scmp.eq.s32.totalorder %s14, 1
    %p32 = por %p30, %p31
    %p33 = scmp.ne.s32.totalorder %s22, %s23
    %p34 = scmp.eq.s32.totalorder %s14, 0
    %p35 = por %p33, %p34
    %p36 = scmp.ne.s32.totalorder %s22, %s23
    %p37 = scmp.eq.s32.totalorder %s15, 1
    %p38 = por %p36, %p37
    %p40 = scmp.ne.s32.totalorder %s23, %s39
    %p41 = scmp.eq.s32.totalorder %s15, 0
    %p42 = por %p40, %p41
    %s44 = sadd.s32 %s43, 1
    %p47 = scmp.eq.s32.totalorder %s9, 1
    %p48 = scmp.ne.s32.totalorder %s43, %s45
    %p49 = scmp.eq.s32.totalorder %s9, 0
    %p50 = por %p48, %p49
    %p51 = scmp.ne.s32.totalorder %s43, %s45
    %p52 = scmp.eq.s32.totalorder %s14, 1
    %p53 = por %p51, %p52
    %p54 = scmp.ne.s32.totalorder %s45, %s46
    %p55 = scmp.eq.s32.totalorder %s14, 0
    %p56 = por %p54, %p55
    %p57 = scmp.ne.s32.totalorder %s45, %s46
    %p58 = scmp.eq.s32.totalorder %s15, 1
    %p59 = por %p57, %p58
    %p61 = scmp.ne.s32.totalorder %s46, %s60
    %p62 = scmp.eq.s32.totalorder %s15, 0
    %p63 = por %p61, %p62
    %s65 = sadd.s32 %s64, 1
    %p68 = scmp.eq.s32.totalorder %s9, 1
    %p69 = scmp.ne.s32.totalorder %s64, %s66
    %p70 = scmp.eq.s32.totalorder %s9, 0
    %p71 = por %p69, %p70
    %p72 = scmp.ne.s32.totalorder %s64, %s66
    %p73 = scmp.eq.s32.totalorder %s14, 1
    %p74 = por %p72, %p73
    %p75 = scmp.ne.s32.totalorder %s66, %s67
    %p76 = scmp.eq.s32.totalorder %s14, 0
    %p77 = por %p75, %p76
    %p78 = scmp.ne.s32.totalorder %s66, %s67
    %p79 = scmp.eq.s32.totalorder %s15, 1
    %p80 = por %p78, %p79
    %p82 = scmp.ne.s32.totalorder %s67, %s81
    %p83 = scmp.eq.s32.totalorder %s15, 0
    %p84 = por %p82, %p83
    %s85 = ssub.s32 %s9, %s16
    %p86 = scmp.eq.s32.totalorder %s85, 0
    %s88 = sadd.s32 %s87, 1
    %s89 = scalar_select %p86, %s87, %s88
    %p92 = pneg %p86
    %p93 = scmp.eq.s32.totalorder %s9, 1
    %p94 = por %p92, %p93
    %p95 = scmp.ne.s32.totalorder %s87, %s90
    %p96 = scmp.eq.s32.totalorder %s9, 0
    %p97 = por %p95, %p96
    %p98 = scmp.ne.s32.totalorder %s87, %s90
    %p99 = scmp.eq.s32.totalorder %s14, 1
    %p100 = por %p98, %p99
    %p101 = scmp.ne.s32.totalorder %s90, %s91
    %p102 = scmp.eq.s32.totalorder %s14, 0
    %p103 = por %p101, %p102
    %p104 = scmp.ne.s32.totalorder %s90, %s91
    %p105 = scmp.eq.s32.totalorder %s15, 1
    %p106 = por %p104, %p105
    %p108 = scmp.ne.s32.totalorder %s91, %s107
    %p109 = scmp.eq.s32.totalorder %s15, 0
    %p110 = por %p108, %p109
    %p111 = scmp.le.s32.totalorder 1, %s9
    %p112 = scmp.lt.s32.totalorder %s9, 3
    %p113 = pnand %p111, %p112
    %p114 = pneg %p113
    // Predicated region
    $region9: #{dbnet_forward.35} parent=5 // pred_check
      _
    $region10: #{dbnet_forward.35} parent=5 // pred_check_branch
      %116 = sbr.rel (%p113) target = $region12
    $region11: #{dbnet_forward.35} parent=5 // pred_region
      %s117 = ssub.s32 %s9, 1
      // Predicated region
      $region13: #{dbnet_forward.35} parent=11 // pred_check
        %p118 = pneg %p56
      $region14: #{dbnet_forward.35} parent=11 // pred_check_branch
        %120 = sbr.rel (%p118) target = $region16
      $region15: #{dbnet_forward.35} parent=11 // pred_region
        _
      $region16: #{dbnet_forward.35} parent=11 // pred_fallthru
        _
      // Predicated region
      $region17: #{dbnet_forward.35} parent=11 // pred_check
        %p121 = pneg %p77
      $region18: #{dbnet_forward.35} parent=11 // pred_check_branch
        %123 = sbr.rel (%p121) target = $region20
      $region19: #{dbnet_forward.35} parent=11 // pred_region
        _
      $region20: #{dbnet_forward.35} parent=11 // pred_fallthru
        _
    $region12: #{dbnet_forward.35} parent=5 // pred_fallthru
      _
    %p124 = scmp.lt.s32.totalorder %s9, 2
    // Predicated region
    $region21: #{dbnet_forward.35} parent=5 // pred_check
      %p125 = pneg %p124
    $region22: #{dbnet_forward.35} parent=5 // pred_check_branch
      %127 = sbr.rel (%p125) target = $region24
    $region23: #{dbnet_forward.35} parent=5 // pred_region
      // Predicated region
      $region25: #{dbnet_forward.35} parent=23 // pred_check
        %p128 = pneg %p29
      $region26: #{dbnet_forward.35} parent=23 // pred_check_branch
        %130 = sbr.rel (%p128) target = $region28
      $region27: #{dbnet_forward.35} parent=23 // pred_region
        %s131 = smul.u32 8, %s9
        %p132 = scmp.lt.s32.totalorder %s131, 15
        %s133 = scalar_select %p132, %s131, 15
        %s134 = smul.addr %s133, 4
        %s135 = scalar_lea.vmem %s0, %s134
        %s136 = smul.u32 8, %s9
      $region28: #{dbnet_forward.35} parent=23 // pred_fallthru
        _
    $region24: #{dbnet_forward.35} parent=5 // pred_fallthru
      _
    %p137 = scmp.le.s32.totalorder 1, %s9
    %p138 = scmp.lt.s32.totalorder %s9, 3
    %p139 = pnand %p137, %p138
    %p140 = pneg %p139
    // Predicated region
    $region29: #{dbnet_forward.35} parent=5 // pred_check
      _
    $region30: #{dbnet_forward.35} parent=5 // pred_check_branch
      %142 = sbr.rel (%p139) target = $region32
    $region31: #{dbnet_forward.35} parent=5 // pred_region
      %s143 = ssub.s32 %s9, 1
      %s144 = smul.u32 8, %s14
      %p145 = scmp.lt.s32.totalorder %s144, 15
      %s146 = scalar_select %p145, %s144, 15
      %s147 = smul.addr %s146, 4
      %s148 = scalar_lea.vmem %s0, %s147
      %p149 = pneg %p35
      %p150 = pneg %p32
      %p151 = pneg %p56
      %p152 = pneg %p53
      %p153 = pneg %p77
      %p154 = pneg %p74
      %p155 = pneg %p103
      %p156 = pneg %p100
      %s157 = smul.u32 8, %s14
      %p158 = scmp.lt.s32.totalorder %s157, 15
      %s159 = scalar_select %p158, %s157, 15
      %s160 = smul.addr %s159, 4
      %s161 = scalar_lea.vmem %s3, %s160
      %s162 = smul.u32 8, %s14
      %p163 = scmp.lt.s32.totalorder %s162, 15
      %s164 = scalar_select %p163, %s162, 15
      %s165 = smul.addr %s164, 4
      %s166 = scalar_lea.vmem %s0, %s165
      %s167 = smul.u32 8, %s14
      %s168 = smul.u32 8, %s14
      %p169 = scmp.lt.s32.totalorder %s168, 15
      %s170 = scalar_select %p169, %s168, 15
      %s171 = smul.addr %s170, 4
      %s172 = scalar_lea.vmem %s3, %s171
      %s173 = smul.u32 8, %s14
      %v175 = vld [vmem:[%s166] sm:$0xf]
      %v176 = vld [vmem:[%s166 + $0x4] sm:$0xf]
      %v177 = vld [vmem:[%s166 + $0x8] sm:$0xf]
      %v178 = vld [vmem:[%s166 + $0xc] sm:$0xf]
      %v179 = vld [vmem:[%s166 + $0x10] sm:$0xf]
      %v180 = vld [vmem:[%s166 + $0x14] sm:$0xf]
      %v181 = vld [vmem:[%s166 + $0x18] sm:$0xf]
      %v182 = vld [vmem:[%s166 + $0x1c] sm:$0xf]
      %v191 = vunpack.c.l.b16 %v175
      %v192 = vunpack.c.l.b16 %v176
      %v193 = vunpack.c.l.b16 %v177
      %v194 = vunpack.c.l.b16 %v178
      %v195 = vunpack.c.l.b16 %v179
      %v196 = vunpack.c.l.b16 %v180
      %v197 = vunpack.c.l.b16 %v181
      %v198 = vunpack.c.l.b16 %v182
      %v199 = vpack.c.b16 %v192, %v191
      %v200 = vpack.c.b16 %v194, %v193
      %v201 = vpack.c.b16 %v196, %v195
      %v202 = vpack.c.b16 %v198, %v197
      %vm203 = vcmask 130048
      %v206 = vsel %vm203, %v199, 0
      %v209 = vsel %vm203, %v200, 0
      %v212 = vsel %vm203, %v201, 0
      %v215 = vsel %vm203, %v202, 0
      %v217 = vld [vmem:[%s1] sm:$0xf]
      %v218 = vld [vmem:[%s1 + $0x4] sm:$0xf]
      %v219 = vld [vmem:[%s1 + $0x8] sm:$0xf]
      %v220 = vld [vmem:[%s1 + $0xc] sm:$0xf]
      %v221 = vld [vmem:[%s1 + $0x10] sm:$0xf]
      %v222 = vld [vmem:[%s1 + $0x14] sm:$0xf]
      %v223 = vld [vmem:[%s1 + $0x18] sm:$0xf]
      %v224 = vld [vmem:[%s1 + $0x1c] sm:$0xf]
      %v225 = vld [vmem:[%s1 + $0x20] sm:$0xf]
      %v226 = vld [vmem:[%s1 + $0x24] sm:$0xf]
      %v227 = vld [vmem:[%s1 + $0x28] sm:$0xf]
      %v228 = vld [vmem:[%s1 + $0x2c] sm:$0xf]
      %v229 = vld [vmem:[%s1 + $0x30] sm:$0xf]
      %v230 = vld [vmem:[%s1 + $0x34] sm:$0xf]
      %v231 = vld [vmem:[%s1 + $0x38] sm:$0xf]
      %v232 = vld [vmem:[%s1 + $0x3c] sm:$0xf]
      %v233 = vld [vmem:[%s2] sm:$0x1]
      %v235 = vlaneseq
      %v236 = vshrl.u32 %v235, 7
      %v237 = vsub.s32 0, %v236
      %v238 = vrot.slane %v233, %v237
      %v256 = vunpack.c.l.b16 %v217
      %v257 = vunpack.c.l.b16 %v218
      %v258 = vunpack.c.l.b16 %v219
      %v259 = vunpack.c.l.b16 %v220
      %v260 = vunpack.c.l.b16 %v221
      %v261 = vunpack.c.l.b16 %v222
      %v262 = vunpack.c.l.b16 %v223
      %v263 = vunpack.c.l.b16 %v224
      %v264 = vunpack.c.l.b16 %v225
      %v265 = vunpack.c.l.b16 %v226
      %v266 = vunpack.c.l.b16 %v227
      %v267 = vunpack.c.l.b16 %v228
      %v268 = vunpack.c.l.b16 %v229
      %v269 = vunpack.c.l.b16 %v230
      %v270 = vunpack.c.l.b16 %v231
      %v271 = vunpack.c.l.b16 %v232
      %v272 = vpack.c.b16 %v257, %v256
      %v273 = vpack.c.b16 %v259, %v258
      %v274 = vpack.c.b16 %v261, %v260
      %v275 = vpack.c.b16 %v263, %v262
      %v276 = vpack.c.b16 %v265, %v264
      %v277 = vpack.c.b16 %v267, %v266
      %v278 = vpack.c.b16 %v269, %v268
      %v279 = vpack.c.b16 %v271, %v270
      %288 = vmatprep.subr.bf16.mxu0 0
      %289 = vmatpush1.bf16.msra.mxu0 %v272
      %290 = vmatprep.subr.bf16.mxu0 0
      %291 = vmatpush1.bf16.msra.mxu0 %v273
      %292 = vmatprep.subr.bf16.mxu0 0
      %293 = vmatpush1.bf16.msra.mxu0 %v274
      %294 = vmatprep.subr.bf16.mxu0 0
      %295 = vmatpush1.bf16.msra.mxu0 %v275
      %296 = vmatprep.subr.bf16.mxu0 0
      %297 = vmatpush1.bf16.msra.mxu0 %v276
      %298 = vmatprep.subr.bf16.mxu0 0
      %299 = vmatpush1.bf16.msra.mxu0 %v277
      %300 = vmatprep.subr.bf16.mxu0 0
      %301 = vmatpush1.bf16.msra.mxu0 %v278
      %302 = vmatprep.subr.bf16.mxu0 0
      %303 = vmatpush1.bf16.msra.mxu0 %v279
      %304 = vmatprep.subr.bf16.mxu0 0
      %305 = vmatpush1.bf16.msra.mxu0 0
      %306 = vmatprep.subr.bf16.mxu0 0
      %307 = vmatpush1.bf16.msra.mxu0 0
      %308 = vmatprep.subr.bf16.mxu0 0
      %309 = vmatpush1.bf16.msra.mxu0 0
      %310 = vmatprep.subr.bf16.mxu0 0
      %311 = vmatpush1.bf16.msra.mxu0 0
      %312 = vmatprep.subr.bf16.mxu0 0
      %313 = vmatpush1.bf16.msra.mxu0 0
      %314 = vmatprep.subr.bf16.mxu0 0
      %315 = vmatpush1.bf16.msra.mxu0 0
      %316 = vmatprep.subr.bf16.mxu0 0
      %317 = vmatpush1.bf16.msra.mxu0 0
      %318 = vmatprep.subr.bf16.mxu0 0
      %319 = vmatpush1.bf16.msra.mxu0 0
      %320 = vmatprep.mubr.bf16.mxu0 0
      %321 = vmatmul.mubr.bf16.gmra.mrb[0].mxu0 %v206
      %v322 = vpop.f32.mrb[0].mxu0
      %v323 = vadd.f32 %v238, %v322
      %v324 = vpop.f32.mrb[0].mxu0
      %v325 = vpop.f32.mrb[0].mxu0
      %v326 = vadd.f32 %v238, %v325
      %v327 = vpop.f32.mrb[0].mxu0
      %328 = vmatprep.mubr.bf16.mxu0 0
      %329 = vmatmul.mubr.bf16.gmra.mrb[0].mxu0 %v209
      %v330 = vpop.f32.mrb[0].mxu0
      %v331 = vadd.f32 %v238, %v330
      %v332 = vpop.f32.mrb[0].mxu0
      %v333 = vpop.f32.mrb[0].mxu0
      %v334 = vadd.f32 %v238, %v333
      %v335 = vpop.f32.mrb[0].mxu0
      %336 = vmatprep.mubr.bf16.mxu0 0
      %337 = vmatmul.mubr.bf16.gmra.mrb[0].mxu0 %v212
      %v338 = vpop.f32.mrb[0].mxu0
      %v339 = vadd.f32 %v238, %v338
      %v340 = vpop.f32.mrb[0].mxu0
      %v341 = vpop.f32.mrb[0].mxu0
      %v342 = vadd.f32 %v238, %v341
      %v343 = vpop.f32.mrb[0].mxu0
      %344 = vmatprep.mubr.bf16.mxu0 0
      %345 = vmatmul.mubr.bf16.gmra.mrb[0].mxu0 %v215
      %v346 = vpop.f32.mrb[0].mxu0
      %v347 = vadd.f32 %v238, %v346
      %v348 = vpop.f32.mrb[0].mxu0
      %v349 = vpop.f32.mrb[0].mxu0
      %v350 = vadd.f32 %v238, %v349
      %v351 = vpop.f32.mrb[0].mxu0
      %352 = vdwg.mxu0
      %v353 = vpack.c.bf16 %v326, %v323
      %v354 = vpack.c.bf16 %v334, %v331
      %v355 = vpack.c.bf16 %v342, %v339
      %v356 = vpack.c.bf16 %v350, %v347
      %v361 = vunpack.c.l.b16 %v353
      %v362 = vunpack.c.h.b16 %v353
      %v363 = vunpack.c.l.b16 %v354
      %v364 = vunpack.c.h.b16 %v354
      %v365 = vunpack.c.l.b16 %v355
      %v366 = vunpack.c.h.b16 %v355
      %v367 = vunpack.c.l.b16 %v356
      %v368 = vunpack.c.h.b16 %v356
      %v369 = vpack.c.b16 %v361, %v361
      %v370 = vpack.c.b16 %v362, %v362
      %v371 = vpack.c.b16 %v363, %v363
      %v372 = vpack.c.b16 %v364, %v364
      %v373 = vpack.c.b16 %v365, %v365
      %v374 = vpack.c.b16 %v366, %v366
      %v375 = vpack.c.b16 %v367, %v367
      %v376 = vpack.c.b16 %v368, %v368
      %vm385 = vcmask 257024
      %386 = vst.msk [vmem:[%s172] sm:$0xf] %vm385, %v369
      %387 = vst.msk [vmem:[%s172 + $0x4] sm:$0xf] %vm385, %v370
      %388 = vst.msk [vmem:[%s172 + $0x8] sm:$0xf] %vm385, %v371
      %389 = vst.msk [vmem:[%s172 + $0xc] sm:$0xf] %vm385, %v372
      %390 = vst.msk [vmem:[%s172 + $0x10] sm:$0xf] %vm385, %v373
      %391 = vst.msk [vmem:[%s172 + $0x14] sm:$0xf] %vm385, %v374
      %392 = vst.msk [vmem:[%s172 + $0x18] sm:$0xf] %vm385, %v375
      %393 = vst.msk [vmem:[%s172 + $0x1c] sm:$0xf] %vm385, %v376
      %s394 = smul.u32 8, %s14
      %p395 = scmp.lt.s32.totalorder %s394, 15
      %s396 = scalar_select %p395, %s394, 15
      %s397 = smul.addr %s396, 4
      %s398 = scalar_lea.vmem %s3, %s397
      // Predicated region
      $region33: #{dbnet_forward.35} parent=31 // pred_check
        %p399 = pneg %p100
      $region34: #{dbnet_forward.35} parent=31 // pred_check_branch
        %401 = sbr.rel (%p399) target = $region36
      $region35: #{dbnet_forward.35} parent=31 // pred_region
        %s402 = smul.u32 8, %s14
      $region36: #{dbnet_forward.35} parent=31 // pred_fallthru
        _
    $region32: #{dbnet_forward.35} parent=5 // pred_fallthru
      _
    %p403 = scmp.le.s32.totalorder 2, %s9
    // Predicated region
    $region37: #{dbnet_forward.35} parent=5 // pred_check
      %p404 = pneg %p403
    $region38: #{dbnet_forward.35} parent=5 // pred_check_branch
      %406 = sbr.rel (%p404) target = $region40
    $region39: #{dbnet_forward.35} parent=5 // pred_region
      %s407 = ssub.s32 %s9, 2
      // Predicated region
      $region41: #{dbnet_forward.35} parent=39 // pred_check
        %p408 = pneg %p106
      $region42: #{dbnet_forward.35} parent=39 // pred_check_branch
        %410 = sbr.rel (%p408) target = $region44
      $region43: #{dbnet_forward.35} parent=39 // pred_region
        %s411 = smul.u32 8, %s15
        %p412 = scmp.lt.s32.totalorder %s411, 15
        %s413 = scalar_select %p412, %s411, 15
        %s414 = smul.addr %s413, 4
        %s415 = scalar_lea.vmem %s3, %s414
      $region44: #{dbnet_forward.35} parent=39 // pred_fallthru
        _
    $region40: #{dbnet_forward.35} parent=5 // pred_fallthru
      _
  $region6: #{dbnet_forward.35} parent=0 // loop_footer
    %s13 = sadd.s32 1, %s9
  $region7: #{dbnet_forward.35} parent=0 // loop_footer_branch
    %8 = sbr.rel target = $region3
  $region8: #{dbnet_forward.35} parent=0 // loop_exit
    _

// kernel: dbnet_forward.28
$region0: #{dbnet_forward.28}
  #allocation0 [shape = 'u32[]', space=smem, size = 0x4, offset = 0x4, fixed_abs, tag = 'smem constant byte address 0x4 - core index']
  #allocation1 [shape = 'u32[144,128]{1,0:T(1,128)}', space=vmem, size = 0x12000, scoped, tag = 'internal scratch']
  %s0 = inlined_call_operand.vmem [shape: bf16[32,72], index: 0, kind: input, shape index: {}]
  %s1 = inlined_call_operand.vmem [shape: bf16[128,128], index: 1, kind: input, shape index: {}]
  %s2 = inlined_call_operand.vmem [shape: f32[1,128], index: 2, kind: input, shape index: {}]
  %s3 = inlined_call_operand.vmem [shape: bf16[32,24], index: 3, kind: output, shape index: {}]
  %s4 = sld [smem:[#allocation0]]
  $region22: #{dbnet_forward.28} parent=0
    _
  %s6 = ssub.s32 1, %s4
  %s7 = scalar_select 0, %s6, %s4
  // Predicated region
  $region2: #{dbnet_forward.28} parent=0 // pred_check
    _
  $region3: #{dbnet_forward.28} parent=0 // pred_check_branch
    %9 = sbr.rel (0) target = $region5
  $region4: #{dbnet_forward.28} parent=0 // pred_region
    _
  $region5: #{dbnet_forward.28} parent=0 // pred_fallthru
    _
  // Predicated region
  $region6: #{dbnet_forward.28} parent=0 // pred_check
    _
  $region7: #{dbnet_forward.28} parent=0 // pred_check_branch
    %11 = sbr.rel (0) target = $region9
  $region8: #{dbnet_forward.28} parent=0 // pred_region
    _
  $region9: #{dbnet_forward.28} parent=0 // pred_fallthru
    _
  // Predicated region
  $region10: #{dbnet_forward.28} parent=0 // pred_check
    _
  $region11: #{dbnet_forward.28} parent=0 // pred_check_branch
    %13 = sbr.rel (0) target = $region13
  $region12: #{dbnet_forward.28} parent=0 // pred_region
    _
  $region13: #{dbnet_forward.28} parent=0 // pred_fallthru
    _
  %v15 = vld [vmem:[%s0] sm:$0xf]
  %v16 = vld [vmem:[%s0 + $0x4] sm:$0xf]
  %v17 = vld [vmem:[%s0 + $0x8] sm:$0xf]
  %v18 = vld [vmem:[%s0 + $0xc] sm:$0xf]
  %v23 = vunpack.c.l.b16 %v15
  %v24 = vunpack.c.l.b16 %v16
  %v25 = vunpack.c.l.b16 %v17
  %v26 = vunpack.c.l.b16 %v18
  %v27 = vpack.c.b16 %v24, %v23
  %v28 = vpack.c.b16 %v26, %v25
  %vm29 = vcmask 588800
  %v32 = vsel %vm29, %v27, 0
  %v35 = vsel %vm29, %v28, 0
  %v37 = vld [vmem:[%s1] sm:$0xf]
  %v38 = vld [vmem:[%s1 + $0x4] sm:$0xf]
  %v39 = vld [vmem:[%s1 + $0x8] sm:$0xf]
  %v40 = vld [vmem:[%s1 + $0xc] sm:$0xf]
  %v41 = vld [vmem:[%s1 + $0x10] sm:$0xf]
  %v42 = vld [vmem:[%s1 + $0x14] sm:$0xf]
  %v43 = vld [vmem:[%s1 + $0x18] sm:$0xf]
  %v44 = vld [vmem:[%s1 + $0x1c] sm:$0xf]
  %v45 = vld [vmem:[%s1 + $0x20] sm:$0xf]
  %v46 = vld [vmem:[%s1 + $0x24] sm:$0xf]
  %v47 = vld [vmem:[%s1 + $0x28] sm:$0xf]
  %v48 = vld [vmem:[%s1 + $0x2c] sm:$0xf]
  %v49 = vld [vmem:[%s1 + $0x30] sm:$0xf]
  %v50 = vld [vmem:[%s1 + $0x34] sm:$0xf]
  %v51 = vld [vmem:[%s1 + $0x38] sm:$0xf]
  %v52 = vld [vmem:[%s1 + $0x3c] sm:$0xf]
  %v53 = vld [vmem:[%s2] sm:$0x1]
  %v55 = vlaneseq
  %v56 = vshrl.u32 %v55, 7
  %v57 = vsub.s32 0, %v56
  %v58 = vrot.slane %v53, %v57
  %v76 = vunpack.c.l.b16 %v37
  %v77 = vunpack.c.l.b16 %v38
  %v78 = vunpack.c.l.b16 %v39
  %v79 = vunpack.c.l.b16 %v40
  %v80 = vunpack.c.l.b16 %v41
  %v81 = vunpack.c.l.b16 %v42
  %v82 = vunpack.c.l.b16 %v43
  %v83 = vunpack.c.l.b16 %v44
  %v84 = vunpack.c.l.b16 %v45
  %v85 = vunpack.c.l.b16 %v46
  %v86 = vunpack.c.l.b16 %v47
  %v87 = vunpack.c.l.b16 %v48
  %v88 = vunpack.c.l.b16 %v49
  %v89 = vunpack.c.l.b16 %v50
  %v90 = vunpack.c.l.b16 %v51
  %v91 = vunpack.c.l.b16 %v52
  %v92 = vpack.c.b16 %v77, %v76
  %v93 = vpack.c.b16 %v79, %v78
  %v94 = vpack.c.b16 %v81, %v80
  %v95 = vpack.c.b16 %v83, %v82
  %v96 = vpack.c.b16 %v85, %v84
  %v97 = vpack.c.b16 %v87, %v86
  %v98 = vpack.c.b16 %v89, %v88
  %v99 = vpack.c.b16 %v91, %v90
  %108 = vmatprep.subr.bf16.mxu0 0
  %109 = vmatpush1.bf16.msra.mxu0 %v92
  %110 = vmatprep.subr.bf16.mxu0 0
  %111 = vmatpush1.bf16.msra.mxu0 %v93
  %112 = vmatprep.subr.bf16.mxu0 0
  %113 = vmatpush1.bf16.msra.mxu0 %v94
  %114 = vmatprep.subr.bf16.mxu0 0
  %115 = vmatpush1.bf16.msra.mxu0 %v95
  %116 = vmatprep.subr.bf16.mxu0 0
  %117 = vmatpush1.bf16.msra.mxu0 %v96
  %118 = vmatprep.subr.bf16.mxu0 0
  %119 = vmatpush1.bf16.msra.mxu0 %v97
  %120 = vmatprep.subr.bf16.mxu0 0
  %121 = vmatpush1.bf16.msra.mxu0 %v98
  %122 = vmatprep.subr.bf16.mxu0 0
  %123 = vmatpush1.bf16.msra.mxu0 %v99
  %124 = vmatprep.subr.bf16.mxu0 0
  %125 = vmatpush1.bf16.msra.mxu0 0
  %126 = vmatprep.subr.bf16.mxu0 0
  %127 = vmatpush1.bf16.msra.mxu0 0
  %128 = vmatprep.subr.bf16.mxu0 0
  %129 = vmatpush1.bf16.msra.mxu0 0
  %130 = vmatprep.subr.bf16.mxu0 0
  %131 = vmatpush1.bf16.msra.mxu0 0
  %132 = vmatprep.subr.bf16.mxu0 0
  %133 = vmatpush1.bf16.msra.mxu0 0
  %134 = vmatprep.subr.bf16.mxu0 0
  %135 = vmatpush1.bf16.msra.mxu0 0
  %136 = vmatprep.subr.bf16.mxu0 0
  %137 = vmatpush1.bf16.msra.mxu0 0
  %138 = vmatprep.subr.bf16.mxu0 0
  %139 = vmatpush1.bf16.msra.mxu0 0
  %140 = vmatprep.mubr.bf16.mxu0 0
  %141 = vmatmul.mubr.bf16.gmra.mrb[0].mxu0 %v32
  %v142 = vpop.f32.mrb[0].mxu0
  %v143 = vadd.f32 %v58, %v142
  %v144 = vpop.f32.mrb[0].mxu0
  %v145 = vpop.f32.mrb[0].mxu0
  %v146 = vadd.f32 %v58, %v145
  %v147 = vpop.f32.mrb[0].mxu0
  %148 = vmatprep.mubr.bf16.mxu0 0
  %149 = vmatmul.mubr.bf16.gmra.mrb[0].mxu0 %v35
  %v150 = vpop.f32.mrb[0].mxu0
  %v151 = vadd.f32 %v58, %v150
  %v152 = vpop.f32.mrb[0].mxu0
  %v153 = vpop.f32.mrb[0].mxu0
  %v154 = vadd.f32 %v58, %v153
  %v155 = vpop.f32.mrb[0].mxu0
  %156 = vdwg.mxu0
  %v157 = vpack.c.bf16 %v146, %v143
  %v158 = vpack.c.bf16 %v154, %v151
  %v161 = vunpack.c.l.b16 %v157
  %v162 = vunpack.c.h.b16 %v157
  %v163 = vunpack.c.l.b16 %v158
  %v164 = vunpack.c.h.b16 %v158
  %v165 = vpack.c.b16 %v161, %v161
  %v166 = vpack.c.b16 %v162, %v162
  %v167 = vpack.c.b16 %v163, %v163
  %v168 = vpack.c.b16 %v164, %v164
  %vm173 = vcmask 191488
  %174 = vst.msk [vmem:[%s3] sm:$0xf] %vm173, %v165
  %175 = vst.msk [vmem:[%s3 + $0x4] sm:$0xf] %vm173, %v166
  %176 = vst.msk [vmem:[%s3 + $0x8] sm:$0xf] %vm173, %v167
  %177 = vst.msk [vmem:[%s3 + $0xc] sm:$0xf] %vm173, %v168
  // Predicated region
  $region14: #{dbnet_forward.28} parent=0 // pred_check
    _
  $region15: #{dbnet_forward.28} parent=0 // pred_check_branch
    %179 = sbr.rel (0) target = $region17
  $region16: #{dbnet_forward.28} parent=0 // pred_region
    _
  $region17: #{dbnet_forward.28} parent=0 // pred_fallthru
    _
  // Predicated region
  $region18: #{dbnet_forward.28} parent=0 // pred_check
    _
  $region19: #{dbnet_forward.28} parent=0 // pred_check_branch
    %181 = sbr.rel (0) target = $region21
  $region20: #{dbnet_forward.28} parent=0 // pred_region
    _
  $region21: #{dbnet_forward.28} parent=0 // pred_fallthru
    _

// kernel: dbnet_forward.29
$region0: #{dbnet_forward.29}
  #allocation0 [shape = 'u32[]', space=smem, size = 0x4, offset = 0x4, fixed_abs, tag = 'smem constant byte address 0x4 - core index']
  #allocation1 [shape = 'u32[144,128]{1,0:T(1,128)}', space=vmem, size = 0x12000, scoped, tag = 'internal scratch']
  %s0 = inlined_call_operand.vmem [shape: bf16[32,24], index: 0, kind: input, shape index: {}]
  %s1 = inlined_call_operand.vmem [shape: bf16[128,128], index: 1, kind: input, shape index: {}]
  %s2 = inlined_call_operand.vmem [shape: f32[1,128], index: 2, kind: input, shape index: {}]
  %s3 = inlined_call_operand.vmem [shape: bf16[32,96], index: 3, kind: output, shape index: {}]
  %s4 = sld [smem:[#allocation0]]
  $region22: #{dbnet_forward.29} parent=0
    _
  %s6 = ssub.s32 1, %s4
  %s7 = scalar_select 0, %s6, %s4
  // Predicated region
  $region2: #{dbnet_forward.29} parent=0 // pred_check
    _
  $region3: #{dbnet_forward.29} parent=0 // pred_check_branch
    %9 = sbr.rel (0) target = $region5
  $region4: #{dbnet_forward.29} parent=0 // pred_region
    _
  $region5: #{dbnet_forward.29} parent=0 // pred_fallthru
    _
  // Predicated region
  $region6: #{dbnet_forward.29} parent=0 // pred_check
    _
  $region7: #{dbnet_forward.29} parent=0 // pred_check_branch
    %11 = sbr.rel (0) target = $region9
  $region8: #{dbnet_forward.29} parent=0 // pred_region
    _
  $region9: #{dbnet_forward.29} parent=0 // pred_fallthru
    _
  // Predicated region
  $region10: #{dbnet_forward.29} parent=0 // pred_check
    _
  $region11: #{dbnet_forward.29} parent=0 // pred_check_branch
    %13 = sbr.rel (0) target = $region13
  $region12: #{dbnet_forward.29} parent=0 // pred_region
    _
  $region13: #{dbnet_forward.29} parent=0 // pred_fallthru
    _
  %v15 = vld [vmem:[%s0] sm:$0xf]
  %v16 = vld [vmem:[%s0 + $0x4] sm:$0xf]
  %v17 = vld [vmem:[%s0 + $0x8] sm:$0xf]
  %v18 = vld [vmem:[%s0 + $0xc] sm:$0xf]
  %v23 = vunpack.c.l.b16 %v15
  %v24 = vunpack.c.l.b16 %v16
  %v25 = vunpack.c.l.b16 %v17
  %v26 = vunpack.c.l.b16 %v18
  %v27 = vpack.c.b16 %v24, %v23
  %v28 = vpack.c.b16 %v26, %v25
  %vm29 = vcmask 195584
  %v32 = vsel %vm29, %v27, 0
  %v35 = vsel %vm29, %v28, 0
  %v37 = vld [vmem:[%s1] sm:$0xf]
  %v38 = vld [vmem:[%s1 + $0x4] sm:$0xf]
  %v39 = vld [vmem:[%s1 + $0x8] sm:$0xf]
  %v40 = vld [vmem:[%s1 + $0xc] sm:$0xf]
  %v41 = vld [vmem:[%s1 + $0x10] sm:$0xf]
  %v42 = vld [vmem:[%s1 + $0x14] sm:$0xf]
  %v43 = vld [vmem:[%s1 + $0x18] sm:$0xf]
  %v44 = vld [vmem:[%s1 + $0x1c] sm:$0xf]
  %v45 = vld [vmem:[%s1 + $0x20] sm:$0xf]
  %v46 = vld [vmem:[%s1 + $0x24] sm:$0xf]
  %v47 = vld [vmem:[%s1 + $0x28] sm:$0xf]
  %v48 = vld [vmem:[%s1 + $0x2c] sm:$0xf]
  %v49 = vld [vmem:[%s1 + $0x30] sm:$0xf]
  %v50 = vld [vmem:[%s1 + $0x34] sm:$0xf]
  %v51 = vld [vmem:[%s1 + $0x38] sm:$0xf]
  %v52 = vld [vmem:[%s1 + $0x3c] sm:$0xf]
  %v53 = vld [vmem:[%s2] sm:$0x1]
  %v55 = vlaneseq
  %v56 = vshrl.u32 %v55, 7
  %v57 = vsub.s32 0, %v56
  %v58 = vrot.slane %v53, %v57
  %v76 = vunpack.c.l.b16 %v37
  %v77 = vunpack.c.l.b16 %v38
  %v78 = vunpack.c.l.b16 %v39
  %v79 = vunpack.c.l.b16 %v40
  %v80 = vunpack.c.l.b16 %v41
  %v81 = vunpack.c.l.b16 %v42
  %v82 = vunpack.c.l.b16 %v43
  %v83 = vunpack.c.l.b16 %v44
  %v84 = vunpack.c.l.b16 %v45
  %v85 = vunpack.c.l.b16 %v46
  %v86 = vunpack.c.l.b16 %v47
  %v87 = vunpack.c.l.b16 %v48
  %v88 = vunpack.c.l.b16 %v49
  %v89 = vunpack.c.l.b16 %v50
  %v90 = vunpack.c.l.b16 %v51
  %v91 = vunpack.c.l.b16 %v52
  %v92 = vpack.c.b16 %v77, %v76
  %v93 = vpack.c.b16 %v79, %v78
  %v94 = vpack.c.b16 %v81, %v80
  %v95 = vpack.c.b16 %v83, %v82
  %v96 = vpack.c.b16 %v85, %v84
  %v97 = vpack.c.b16 %v87, %v86
  %v98 = vpack.c.b16 %v89, %v88
  %v99 = vpack.c.b16 %v91, %v90
  %108 = vmatprep.subr.bf16.mxu0 0
  %109 = vmatpush1.bf16.msra.mxu0 %v92
  %110 = vmatprep.subr.bf16.mxu0 0
  %111 = vmatpush1.bf16.msra.mxu0 %v93
  %112 = vmatprep.subr.bf16.mxu0 0
  %113 = vmatpush1.bf16.msra.mxu0 %v94
  %114 = vmatprep.subr.bf16.mxu0 0
  %115 = vmatpush1.bf16.msra.mxu0 %v95
  %116 = vmatprep.subr.bf16.mxu0 0
  %117 = vmatpush1.bf16.msra.mxu0 %v96
  %118 = vmatprep.subr.bf16.mxu0 0
  %119 = vmatpush1.bf16.msra.mxu0 %v97
  %120 = vmatprep.subr.bf16.mxu0 0
  %121 = vmatpush1.bf16.msra.mxu0 %v98
  %122 = vmatprep.subr.bf16.mxu0 0
  %123 = vmatpush1.bf16.msra.mxu0 %v99
  %124 = vmatprep.subr.bf16.mxu0 0
  %125 = vmatpush1.bf16.msra.mxu0 0
  %126 = vmatprep.subr.bf16.mxu0 0
  %127 = vmatpush1.bf16.msra.mxu0 0
  %128 = vmatprep.subr.bf16.mxu0 0
  %129 = vmatpush1.bf16.msra.mxu0 0
  %130 = vmatprep.subr.bf16.mxu0 0
  %131 = vmatpush1.bf16.msra.mxu0 0
  %132 = vmatprep.subr.bf16.mxu0 0
  %133 = vmatpush1.bf16.msra.mxu0 0
  %134 = vmatprep.subr.bf16.mxu0 0
  %135 = vmatpush1.bf16.msra.mxu0 0
  %136 = vmatprep.subr.bf16.mxu0 0
  %137 = vmatpush1.bf16.msra.mxu0 0
  %138 = vmatprep.subr.bf16.mxu0 0
  %139 = vmatpush1.bf16.msra.mxu0 0
  %140 = vmatprep.mubr.bf16.mxu0 0
  %141 = vmatmul.mubr.bf16.gmra.mrb[0].mxu0 %v32
  %v142 = vpop.f32.mrb[0].mxu0
  %v143 = vadd.f32 %v58, %v142
  %v144 = vpop.f32.mrb[0].mxu0
  %v145 = vpop.f32.mrb[0].mxu0
  %v146 = vadd.f32 %v58, %v145
  %v147 = vpop.f32.mrb[0].mxu0
  %148 = vmatprep.mubr.bf16.mxu0 0
  %149 = vmatmul.mubr.bf16.gmra.mrb[0].mxu0 %v35
  %v150 = vpop.f32.mrb[0].mxu0
  %v151 = vadd.f32 %v58, %v150
  %v152 = vpop.f32.mrb[0].mxu0
  %v153 = vpop.f32.mrb[0].mxu0
  %v154 = vadd.f32 %v58, %v153
  %v155 = vpop.f32.mrb[0].mxu0
  %156 = vdwg.mxu0
  %v157 = vadd.f32 %v143, 3.0
  %v158 = vadd.f32 %v146, 3.0
  %v159 = vadd.f32 %v151, 3.0
  %v160 = vadd.f32 %v154, 3.0
  %v161 = vmax.f32 %v157, 0.0
  %v162 = vmax.f32 %v158, 0.0
  %v163 = vmax.f32 %v159, 0.0
  %v164 = vmax.f32 %v160, 0.0
  %v165 = vmin.f32 %v161, 6.0
  %v166 = vmin.f32 %v162, 6.0
  %v167 = vmin.f32 %v163, 6.0
  %v168 = vmin.f32 %v164, 6.0
  %v169 = vmul.f32 %v143, %v165
  %v170 = vmul.f32 %v146, %v166
  %v171 = vmul.f32 %v151, %v167
  %v172 = vmul.f32 %v154, %v168
  %v173 = vmul.f32 %v169, 0.16666667
  %v174 = vmul.f32 %v170, 0.16666667
  %v175 = vmul.f32 %v171, 0.16666667
  %v176 = vmul.f32 %v172, 0.16666667
  %v177 = vpack.c.bf16 %v174, %v173
  %v178 = vpack.c.bf16 %v176, %v175
  %v181 = vunpack.c.l.b16 %v177
  %v182 = vunpack.c.h.b16 %v177
  %v183 = vunpack.c.l.b16 %v178
  %v184 = vunpack.c.h.b16 %v178
  %v185 = vpack.c.b16 %v181, %v181
  %v186 = vpack.c.b16 %v182, %v182
  %v187 = vpack.c.b16 %v183, %v183
  %v188 = vpack.c.b16 %v184, %v184
  %vm193 = vcmask 781312
  %194 = vst.msk [vmem:[%s3] sm:$0xf] %vm193, %v185
  %195 = vst.msk [vmem:[%s3 + $0x4] sm:$0xf] %vm193, %v186
  %196 = vst.msk [vmem:[%s3 + $0x8] sm:$0xf] %vm193, %v187
  %197 = vst.msk [vmem:[%s3 + $0xc] sm:$0xf] %vm193, %v188
  // Predicated region
  $region14: #{dbnet_forward.29} parent=0 // pred_check
    _
  $region15: #{dbnet_forward.29} parent=0 // pred_check_branch
    %199 = sbr.rel (0) target = $region17
  $region16: #{dbnet_forward.29} parent=0 // pred_region
    _
  $region17: #{dbnet_forward.29} parent=0 // pred_fallthru
    _
  // Predicated region
  $region18: #{dbnet_forward.29} parent=0 // pred_check
    _
  $region19: #{dbnet_forward.29} parent=0 // pred_check_branch
    %201 = sbr.rel (0) target = $region21
  $region20: #{dbnet_forward.29} parent=0 // pred_region
    _
  $region21: #{dbnet_forward.29} parent=0 // pred_fallthru
    _

// kernel: dbnet_forward.36
$region0: #{dbnet_forward.36}
  #allocation0 [shape = 'u32[]', space=smem, size = 0x4, offset = 0x4, fixed_abs, tag = 'smem constant byte address 0x4 - core index']
  #allocation1 [shape = 'u32[144,128]{1,0:T(1,128)}', space=vmem, size = 0x12000, scoped, tag = 'internal scratch']
  %s0 = inlined_call_operand.vmem [shape: bf16[32,24], index: 0, kind: input, shape index: {}]
  %s1 = inlined_call_operand.vmem [shape: bf16[128,128], index: 1, kind: input, shape index: {}]
  %s2 = inlined_call_operand.vmem [shape: f32[1,128], index: 2, kind: input, shape index: {}]
  %s3 = inlined_call_operand.vmem [shape: bf16[32,32], index: 3, kind: output, shape index: {}]
  %s4 = sld [smem:[#allocation0]]
  $region22: #{dbnet_forward.36} parent=0
    _
  %s6 = ssub.s32 1, %s4
  %s7 = scalar_select 0, %s6, %s4
  // Predicated region
  $region2: #{dbnet_forward.36} parent=0 // pred_check
    _
  $region3: #{dbnet_forward.36} parent=0 // pred_check_branch
    %9 = sbr.rel (0) target = $region5
  $region4: #{dbnet_forward.36} parent=0 // pred_region
    _
  $region5: #{dbnet_forward.36} parent=0 // pred_fallthru
    _
  // Predicated region
  $region6: #{dbnet_forward.36} parent=0 // pred_check
    _
  $region7: #{dbnet_forward.36} parent=0 // pred_check_branch
    %11 = sbr.rel (0) target = $region9
  $region8: #{dbnet_forward.36} parent=0 // pred_region
    _
  $region9: #{dbnet_forward.36} parent=0 // pred_fallthru
    _
  // Predicated region
  $region10: #{dbnet_forward.36} parent=0 // pred_check
    _
  $region11: #{dbnet_forward.36} parent=0 // pred_check_branch
    %13 = sbr.rel (0) target = $region13
  $region12: #{dbnet_forward.36} parent=0 // pred_region
    _
  $region13: #{dbnet_forward.36} parent=0 // pred_fallthru
    _
  %v15 = vld [vmem:[%s0] sm:$0xf]
  %v16 = vld [vmem:[%s0 + $0x4] sm:$0xf]
  %v17 = vld [vmem:[%s0 + $0x8] sm:$0xf]
  %v18 = vld [vmem:[%s0 + $0xc] sm:$0xf]
  %v23 = vunpack.c.l.b16 %v15
  %v24 = vunpack.c.l.b16 %v16
  %v25 = vunpack.c.l.b16 %v17
  %v26 = vunpack.c.l.b16 %v18
  %v27 = vpack.c.b16 %v24, %v23
  %v28 = vpack.c.b16 %v26, %v25
  %vm29 = vcmask 195584
  %v32 = vsel %vm29, %v27, 0
  %v35 = vsel %vm29, %v28, 0
  %v37 = vld [vmem:[%s1] sm:$0xf]
  %v38 = vld [vmem:[%s1 + $0x4] sm:$0xf]
  %v39 = vld [vmem:[%s1 + $0x8] sm:$0xf]
  %v40 = vld [vmem:[%s1 + $0xc] sm:$0xf]
  %v41 = vld [vmem:[%s1 + $0x10] sm:$0xf]
  %v42 = vld [vmem:[%s1 + $0x14] sm:$0xf]
  %v43 = vld [vmem:[%s1 + $0x18] sm:$0xf]
  %v44 = vld [vmem:[%s1 + $0x1c] sm:$0xf]
  %v45 = vld [vmem:[%s1 + $0x20] sm:$0xf]
  %v46 = vld [vmem:[%s1 + $0x24] sm:$0xf]
  %v47 = vld [vmem:[%s1 + $0x28] sm:$0xf]
  %v48 = vld [vmem:[%s1 + $0x2c] sm:$0xf]
  %v49 = vld [vmem:[%s1 + $0x30] sm:$0xf]
  %v50 = vld [vmem:[%s1 + $0x34] sm:$0xf]
  %v51 = vld [vmem:[%s1 + $0x38] sm:$0xf]
  %v52 = vld [vmem:[%s1 + $0x3c] sm:$0xf]
  %v53 = vld [vmem:[%s2] sm:$0x1]
  %v55 = vlaneseq
  %v56 = vshrl.u32 %v55, 7
  %v57 = vsub.s32 0, %v56
  %v58 = vrot.slane %v53, %v57
  %v76 = vunpack.c.l.b16 %v37
  %v77 = vunpack.c.l.b16 %v38
  %v78 = vunpack.c.l.b16 %v39
  %v79 = vunpack.c.l.b16 %v40
  %v80 = vunpack.c.l.b16 %v41
  %v81 = vunpack.c.l.b16 %v42
  %v82 = vunpack.c.l.b16 %v43
  %v83 = vunpack.c.l.b16 %v44
  %v84 = vunpack.c.l.b16 %v45
  %v85 = vunpack.c.l.b16 %v46
  %v86 = vunpack.c.l.b16 %v47
  %v87 = vunpack.c.l.b16 %v48
  %v88 = vunpack.c.l.b16 %v49
  %v89 = vunpack.c.l.b16 %v50
  %v90 = vunpack.c.l.b16 %v51
  %v91 = vunpack.c.l.b16 %v52
  %v92 = vpack.c.b16 %v77, %v76
  %v93 = vpack.c.b16 %v79, %v78
  %v94 = vpack.c.b16 %v81, %v80
  %v95 = vpack.c.b16 %v83, %v82
  %v96 = vpack.c.b16 %v85, %v84
  %v97 = vpack.c.b16 %v87, %v86
  %v98 = vpack.c.b16 %v89, %v88
  %v99 = vpack.c.b16 %v91, %v90
  %108 = vmatprep.subr.bf16.mxu0 0
  %109 = vmatpush1.bf16.msra.mxu0 %v92
  %110 = vmatprep.subr.bf16.mxu0 0
  %111 = vmatpush1.bf16.msra.mxu0 %v93
  %112 = vmatprep.subr.bf16.mxu0 0
  %113 = vmatpush1.bf16.msra.mxu0 %v94
  %114 = vmatprep.subr.bf16.mxu0 0
  %115 = vmatpush1.bf16.msra.mxu0 %v95
  %116 = vmatprep.subr.bf16.mxu0 0
  %117 = vmatpush1.bf16.msra.mxu0 %v96
  %118 = vmatprep.subr.bf16.mxu0 0
  %119 = vmatpush1.bf16.msra.mxu0 %v97
  %120 = vmatprep.subr.bf16.mxu0 0
  %121 = vmatpush1.bf16.msra.mxu0 %v98
  %122 = vmatprep.subr.bf16.mxu0 0
  %123 = vmatpush1.bf16.msra.mxu0 %v99
  %124 = vmatprep.subr.bf16.mxu0 0
  %125 = vmatpush1.bf16.msra.mxu0 0
  %126 = vmatprep.subr.bf16.mxu0 0
  %127 = vmatpush1.bf16.msra.mxu0 0
  %128 = vmatprep.subr.bf16.mxu0 0
  %129 = vmatpush1.bf16.msra.mxu0 0
  %130 = vmatprep.subr.bf16.mxu0 0
  %131 = vmatpush1.bf16.msra.mxu0 0
  %132 = vmatprep.subr.bf16.mxu0 0
  %133 = vmatpush1.bf16.msra.mxu0 0
  %134 = vmatprep.subr.bf16.mxu0 0
  %135 = vmatpush1.bf16.msra.mxu0 0
  %136 = vmatprep.subr.bf16.mxu0 0
  %137 = vmatpush1.bf16.msra.mxu0 0
  %138 = vmatprep.subr.bf16.mxu0 0
  %139 = vmatpush1.bf16.msra.mxu0 0
  %140 = vmatprep.mubr.bf16.mxu0 0
  %141 = vmatmul.mubr.bf16.gmra.mrb[0].mxu0 %v32
  %v142 = vpop.f32.mrb[0].mxu0
  %v143 = vadd.f32 %v58, %v142
  %v144 = vpop.f32.mrb[0].mxu0
  %v145 = vpop.f32.mrb[0].mxu0
  %v146 = vadd.f32 %v58, %v145
  %v147 = vpop.f32.mrb[0].mxu0
  %148 = vmatprep.mubr.bf16.mxu0 0
  %149 = vmatmul.mubr.bf16.gmra.mrb[0].mxu0 %v35
  %v150 = vpop.f32.mrb[0].mxu0
  %v151 = vadd.f32 %v58, %v150
  %v152 = vpop.f32.mrb[0].mxu0
  %v153 = vpop.f32.mrb[0].mxu0
  %v154 = vadd.f32 %v58, %v153
  %v155 = vpop.f32.mrb[0].mxu0
  %156 = vdwg.mxu0
  %v157 = vpack.c.bf16 %v146, %v143
  %v158 = vpack.c.bf16 %v154, %v151
  %v161 = vunpack.c.l.b16 %v157
  %v162 = vunpack.c.h.b16 %v157
  %v163 = vunpack.c.l.b16 %v158
  %v164 = vunpack.c.h.b16 %v158
  %v165 = vpack.c.b16 %v161, %v161
  %v166 = vpack.c.b16 %v162, %v162
  %v167 = vpack.c.b16 %v163, %v163
  %v168 = vpack.c.b16 %v164, %v164
  %vm173 = vcmask 257024
  %174 = vst.msk [vmem:[%s3] sm:$0xf] %vm173, %v165
  %175 = vst.msk [vmem:[%s3 + $0x4] sm:$0xf] %vm173, %v166
  %176 = vst.msk [vmem:[%s3 + $0x8] sm:$0xf] %vm173, %v167
  %177 = vst.msk [vmem:[%s3 + $0xc] sm:$0xf] %vm173, %v168
  // Predicated region
  $region14: #{dbnet_forward.36} parent=0 // pred_check
    _
  $region15: #{dbnet_forward.36} parent=0 // pred_check_branch
    %179 = sbr.rel (0) target = $region17
  $region16: #{dbnet_forward.36} parent=0 // pred_region
    _
  $region17: #{dbnet_forward.36} parent=0 // pred_fallthru
    _
  // Predicated region
  $region18: #{dbnet_forward.36} parent=0 // pred_check
    _
  $region19: #{dbnet_forward.36} parent=0 // pred_check_branch
    %181 = sbr.rel (0) target = $region21
  $region20: #{dbnet_forward.36} parent=0 // pred_region
    _
  $region21: #{dbnet_forward.36} parent=0 // pred_fallthru
    _

// kernel: dbnet_forward.27
$region0: #{dbnet_forward.27}
  #allocation0 [shape = 'u32[]', space=smem, size = 0x4, offset = 0x4, fixed_abs, tag = 'smem constant byte address 0x4 - core index']
  #allocation1 [shape = 'u32[144,128]{1,0:T(1,128)}', space=vmem, size = 0x12000, scoped, tag = 'internal scratch']
  %s0 = inlined_call_operand.vmem [shape: bf16[9,32,72], index: 0, kind: input, shape index: {}]
  %s1 = inlined_call_operand.vmem [shape: f32[9,72], index: 1, kind: input, shape index: {}]
  %s2 = inlined_call_operand.vmem [shape: f32[1,72], index: 2, kind: input, shape index: {}]
  %s3 = inlined_call_operand.vmem [shape: bf16[32,72], index: 3, kind: output, shape index: {}]
  %s4 = sld [smem:[#allocation0]]
  $region22: #{dbnet_forward.27} parent=0
    _
  %s6 = ssub.s32 1, %s4
  %s7 = scalar_select 0, %s6, %s4
  // Predicated region
  $region2: #{dbnet_forward.27} parent=0 // pred_check
    _
  $region3: #{dbnet_forward.27} parent=0 // pred_check_branch
    %9 = sbr.rel (0) target = $region5
  $region4: #{dbnet_forward.27} parent=0 // pred_region
    _
  $region5: #{dbnet_forward.27} parent=0 // pred_fallthru
    _
  // Predicated region
  $region6: #{dbnet_forward.27} parent=0 // pred_check
    _
  $region7: #{dbnet_forward.27} parent=0 // pred_check_branch
    %11 = sbr.rel (0) target = $region9
  $region8: #{dbnet_forward.27} parent=0 // pred_region
    _
  $region9: #{dbnet_forward.27} parent=0 // pred_fallthru
    _
  // Predicated region
  $region10: #{dbnet_forward.27} parent=0 // pred_check
    _
  $region11: #{dbnet_forward.27} parent=0 // pred_check_branch
    %13 = sbr.rel (0) target = $region13
  $region12: #{dbnet_forward.27} parent=0 // pred_region
    _
  $region13: #{dbnet_forward.27} parent=0 // pred_fallthru
    _
  %v14 = vld [vmem:[%s0] sm:$0xf]
  %v15 = vld [vmem:[%s0 + $0x4] sm:$0xf]
  %v16 = vld [vmem:[%s0 + $0x8] sm:$0xf]
  %v17 = vld [vmem:[%s0 + $0xc] sm:$0xf]
  %v18 = vunpack.c.l.bf16 %v14
  %v19 = vunpack.c.l.bf16 %v15
  %v20 = vunpack.c.l.bf16 %v16
  %v21 = vunpack.c.l.bf16 %v17
  %v22 = vld [vmem:[%s1] sm:$0x1]
  %v23 = vlaneseq
  %v24 = vshrl.u32 %v23, 7
  %v25 = vsub.s32 0, %v24
  %v26 = vrot.slane %v22, %v25
  %v27 = vmul.f32 %v18, %v26
  %v28 = vmul.f32 %v19, %v26
  %v29 = vmul.f32 %v20, %v26
  %v30 = vmul.f32 %v21, %v26
  %v31 = vadd.f32 %v27, 0.0
  %v32 = vadd.f32 %v28, 0.0
  %v33 = vadd.f32 %v29, 0.0
  %v34 = vadd.f32 %v30, 0.0
  %s35 = scalar_lea.vmem %s0, 16
  %v36 = vld [vmem:[%s35] sm:$0xf]
  %v37 = vld [vmem:[%s35 + $0x4] sm:$0xf]
  %v38 = vld [vmem:[%s35 + $0x8] sm:$0xf]
  %v39 = vld [vmem:[%s35 + $0xc] sm:$0xf]
  %v40 = vunpack.c.l.bf16 %v36
  %v41 = vunpack.c.l.bf16 %v37
  %v42 = vunpack.c.l.bf16 %v38
  %v43 = vunpack.c.l.bf16 %v39
  %v44 = vld [vmem:[%s1 + $0x1] sm:$0x1]
  %v45 = vlaneseq
  %v46 = vshrl.u32 %v45, 7
  %v47 = vsub.s32 0, %v46
  %v48 = vrot.slane %v44, %v47
  %v49 = vmul.f32 %v40, %v48
  %v50 = vmul.f32 %v41, %v48
  %v51 = vmul.f32 %v42, %v48
  %v52 = vmul.f32 %v43, %v48
  %v53 = vadd.f32 %v31, %v49
  %v54 = vadd.f32 %v32, %v50
  %v55 = vadd.f32 %v33, %v51
  %v56 = vadd.f32 %v34, %v52
  %s57 = scalar_lea.vmem %s0, 32
  %v58 = vld [vmem:[%s57] sm:$0xf]
  %v59 = vld [vmem:[%s57 + $0x4] sm:$0xf]
  %v60 = vld [vmem:[%s57 + $0x8] sm:$0xf]
  %v61 = vld [vmem:[%s57 + $0xc] sm:$0xf]
  %v62 = vunpack.c.l.bf16 %v58
  %v63 = vunpack.c.l.bf16 %v59
  %v64 = vunpack.c.l.bf16 %v60
  %v65 = vunpack.c.l.bf16 %v61
  %v66 = vld [vmem:[%s1 + $0x2] sm:$0x1]
  %v67 = vlaneseq
  %v68 = vshrl.u32 %v67, 7
  %v69 = vsub.s32 0, %v68
  %v70 = vrot.slane %v66, %v69
  %v71 = vmul.f32 %v62, %v70
  %v72 = vmul.f32 %v63, %v70
  %v73 = vmul.f32 %v64, %v70
  %v74 = vmul.f32 %v65, %v70
  %v75 = vadd.f32 %v53, %v71
  %v76 = vadd.f32 %v54, %v72
  %v77 = vadd.f32 %v55, %v73
  %v78 = vadd.f32 %v56, %v74
  %s79 = scalar_lea.vmem %s0, 48
  %v80 = vld [vmem:[%s79] sm:$0xf]
  %v81 = vld [vmem:[%s79 + $0x4] sm:$0xf]
  %v82 = vld [vmem:[%s79 + $0x8] sm:$0xf]
  %v83 = vld [vmem:[%s79 + $0xc] sm:$0xf]
  %v84 = vunpack.c.l.bf16 %v80
  %v85 = vunpack.c.l.bf16 %v81
  %v86 = vunpack.c.l.bf16 %v82
  %v87 = vunpack.c.l.bf16 %v83
  %v88 = vld [vmem:[%s1 + $0x3] sm:$0x1]
  %v89 = vlaneseq
  %v90 = vshrl.u32 %v89, 7
  %v91 = vsub.s32 0, %v90
  %v92 = vrot.slane %v88, %v91
  %v93 = vmul.f32 %v84, %v92
  %v94 = vmul.f32 %v85, %v92
  %v95 = vmul.f32 %v86, %v92
  %v96 = vmul.f32 %v87, %v92
  %v97 = vadd.f32 %v75, %v93
  %v98 = vadd.f32 %v76, %v94
  %v99 = vadd.f32 %v77, %v95
  %v100 = vadd.f32 %v78, %v96
  %s101 = scalar_lea.vmem %s0, 64
  %v102 = vld [vmem:[%s101] sm:$0xf]
  %v103 = vld [vmem:[%s101 + $0x4] sm:$0xf]
  %v104 = vld [vmem:[%s101 + $0x8] sm:$0xf]
  %v105 = vld [vmem:[%s101 + $0xc] sm:$0xf]
  %v106 = vunpack.c.l.bf16 %v102
  %v107 = vunpack.c.l.bf16 %v103
  %v108 = vunpack.c.l.bf16 %v104
  %v109 = vunpack.c.l.bf16 %v105
  %v110 = vld [vmem:[%s1 + $0x4] sm:$0x1]
  %v111 = vlaneseq
  %v112 = vshrl.u32 %v111, 7
  %v113 = vsub.s32 0, %v112
  %v114 = vrot.slane %v110, %v113
  %v115 = vmul.f32 %v106, %v114
  %v116 = vmul.f32 %v107, %v114
  %v117 = vmul.f32 %v108, %v114
  %v118 = vmul.f32 %v109, %v114
  %v119 = vadd.f32 %v97, %v115
  %v120 = vadd.f32 %v98, %v116
  %v121 = vadd.f32 %v99, %v117
  %v122 = vadd.f32 %v100, %v118
  %s123 = scalar_lea.vmem %s0, 80
  %v124 = vld [vmem:[%s123] sm:$0xf]
  %v125 = vld [vmem:[%s123 + $0x4] sm:$0xf]
  %v126 = vld [vmem:[%s123 + $0x8] sm:$0xf]
  %v127 = vld [vmem:[%s123 + $0xc] sm:$0xf]
  %v128 = vunpack.c.l.bf16 %v124
  %v129 = vunpack.c.l.bf16 %v125
  %v130 = vunpack.c.l.bf16 %v126
  %v131 = vunpack.c.l.bf16 %v127
  %v132 = vld [vmem:[%s1 + $0x5] sm:$0x1]
  %v133 = vlaneseq
  %v134 = vshrl.u32 %v133, 7
  %v135 = vsub.s32 0, %v134
  %v136 = vrot.slane %v132, %v135
  %v137 = vmul.f32 %v128, %v136
  %v138 = vmul.f32 %v129, %v136
  %v139 = vmul.f32 %v130, %v136
  %v140 = vmul.f32 %v131, %v136
  %v141 = vadd.f32 %v119, %v137
  %v142 = vadd.f32 %v120, %v138
  %v143 = vadd.f32 %v121, %v139
  %v144 = vadd.f32 %v122, %v140
  %s145 = scalar_lea.vmem %s0, 96
  %v146 = vld [vmem:[%s145] sm:$0xf]
  %v147 = vld [vmem:[%s145 + $0x4] sm:$0xf]
  %v148 = vld [vmem:[%s145 + $0x8] sm:$0xf]
  %v149 = vld [vmem:[%s145 + $0xc] sm:$0xf]
  %v150 = vunpack.c.l.bf16 %v146
  %v151 = vunpack.c.l.bf16 %v147
  %v152 = vunpack.c.l.bf16 %v148
  %v153 = vunpack.c.l.bf16 %v149
  %v154 = vld [vmem:[%s1 + $0x6] sm:$0x1]
  %v155 = vlaneseq
  %v156 = vshrl.u32 %v155, 7
  %v157 = vsub.s32 0, %v156
  %v158 = vrot.slane %v154, %v157
  %v159 = vmul.f32 %v150, %v158
  %v160 = vmul.f32 %v151, %v158
  %v161 = vmul.f32 %v152, %v158
  %v162 = vmul.f32 %v153, %v158
  %v163 = vadd.f32 %v141, %v159
  %v164 = vadd.f32 %v142, %v160
  %v165 = vadd.f32 %v143, %v161
  %v166 = vadd.f32 %v144, %v162
  %s167 = scalar_lea.vmem %s0, 112
  %v168 = vld [vmem:[%s167] sm:$0xf]
  %v169 = vld [vmem:[%s167 + $0x4] sm:$0xf]
  %v170 = vld [vmem:[%s167 + $0x8] sm:$0xf]
  %v171 = vld [vmem:[%s167 + $0xc] sm:$0xf]
  %v172 = vunpack.c.l.bf16 %v168
  %v173 = vunpack.c.l.bf16 %v169
  %v174 = vunpack.c.l.bf16 %v170
  %v175 = vunpack.c.l.bf16 %v171
  %v176 = vld [vmem:[%s1 + $0x7] sm:$0x1]
  %v177 = vlaneseq
  %v178 = vshrl.u32 %v177, 7
  %v179 = vsub.s32 0, %v178
  %v180 = vrot.slane %v176, %v179
  %v181 = vmul.f32 %v172, %v180
  %v182 = vmul.f32 %v173, %v180
  %v183 = vmul.f32 %v174, %v180
  %v184 = vmul.f32 %v175, %v180
  %v185 = vadd.f32 %v163, %v181
  %v186 = vadd.f32 %v164, %v182
  %v187 = vadd.f32 %v165, %v183
  %v188 = vadd.f32 %v166, %v184
  %s189 = scalar_lea.vmem %s0, 128
  %v190 = vld [vmem:[%s189] sm:$0xf]
  %v191 = vld [vmem:[%s189 + $0x4] sm:$0xf]
  %v192 = vld [vmem:[%s189 + $0x8] sm:$0xf]
  %v193 = vld [vmem:[%s189 + $0xc] sm:$0xf]
  %v194 = vunpack.c.l.bf16 %v190
  %v195 = vunpack.c.l.bf16 %v191
  %v196 = vunpack.c.l.bf16 %v192
  %v197 = vunpack.c.l.bf16 %v193
  %v198 = vld [vmem:[%s1 + $0x8] sm:$0x1]
  %v199 = vlaneseq
  %v200 = vshrl.u32 %v199, 7
  %v201 = vsub.s32 0, %v200
  %v202 = vrot.slane %v198, %v201
  %v203 = vmul.f32 %v194, %v202
  %v204 = vmul.f32 %v195, %v202
  %v205 = vmul.f32 %v196, %v202
  %v206 = vmul.f32 %v197, %v202
  %v207 = vadd.f32 %v185, %v203
  %v208 = vadd.f32 %v186, %v204
  %v209 = vadd.f32 %v187, %v205
  %v210 = vadd.f32 %v188, %v206
  %v211 = vld [vmem:[%s2] sm:$0x1]
  %v213 = vlaneseq
  %v214 = vshrl.u32 %v213, 7
  %v215 = vsub.s32 0, %v214
  %v216 = vrot.slane %v211, %v215
  %v218 = vadd.f32 %v207, %v216
  %v219 = vadd.f32 %v208, %v216
  %v220 = vadd.f32 %v209, %v216
  %v221 = vadd.f32 %v210, %v216
  %v222 = vmax.f32 %v218, 0.0
  %v223 = vmax.f32 %v219, 0.0
  %v224 = vmax.f32 %v220, 0.0
  %v225 = vmax.f32 %v221, 0.0
  %v226 = vpack.c.bf16 %v223, %v222
  %v227 = vpack.c.bf16 %v225, %v224
  %v230 = vunpack.c.l.b16 %v226
  %v231 = vunpack.c.h.b16 %v226
  %v232 = vunpack.c.l.b16 %v227
  %v233 = vunpack.c.h.b16 %v227
  %v234 = vpack.c.b16 %v230, %v230
  %v235 = vpack.c.b16 %v231, %v231
  %v236 = vpack.c.b16 %v232, %v232
  %v237 = vpack.c.b16 %v233, %v233
  %vm242 = vcmask 584704
  %243 = vst.msk [vmem:[%s3] sm:$0xf] %vm242, %v234
  %244 = vst.msk [vmem:[%s3 + $0x4] sm:$0xf] %vm242, %v235
  %245 = vst.msk [vmem:[%s3 + $0x8] sm:$0xf] %vm242, %v236
  %246 = vst.msk [vmem:[%s3 + $0xc] sm:$0xf] %vm242, %v237
  // Predicated region
  $region14: #{dbnet_forward.27} parent=0 // pred_check
    _
  $region15: #{dbnet_forward.27} parent=0 // pred_check_branch
    %248 = sbr.rel (0) target = $region17
  $region16: #{dbnet_forward.27} parent=0 // pred_region
    _
  $region17: #{dbnet_forward.27} parent=0 // pred_fallthru
    _
  // Predicated region
  $region18: #{dbnet_forward.27} parent=0 // pred_check
    _
  $region19: #{dbnet_forward.27} parent=0 // pred_check_branch
    %250 = sbr.rel (0) target = $region21
  $region20: #{dbnet_forward.27} parent=0 // pred_region
    _
  $region21: #{dbnet_forward.27} parent=0 // pred_fallthru
    _

// kernel: dbnet_forward.31
$region0: #{dbnet_forward.31}
  #allocation0 [shape = 'u32[]', space=smem, size = 0x4, offset = 0x4, fixed_abs, tag = 'smem constant byte address 0x4 - core index']
  #allocation1 [shape = 'u32[144,128]{1,0:T(1,128)}', space=vmem, size = 0x12000, scoped, tag = 'internal scratch']
  %s0 = inlined_call_operand.vmem [shape: bf16[8,96], index: 0, kind: input, shape index: {}]
  %s1 = inlined_call_operand.vmem [shape: bf16[128,128], index: 1, kind: input, shape index: {}]
  %s2 = inlined_call_operand.vmem [shape: f32[1,128], index: 2, kind: input, shape index: {}]
  %s3 = inlined_call_operand.vmem [shape: bf16[8,48], index: 3, kind: output, shape index: {}]
  %s4 = sld [smem:[#allocation0]]
  $region22: #{dbnet_forward.31} parent=0
    _
  %s6 = ssub.s32 1, %s4
  %s7 = scalar_select 0, %s6, %s4
  // Predicated region
  $region2: #{dbnet_forward.31} parent=0 // pred_check
    _
  $region3: #{dbnet_forward.31} parent=0 // pred_check_branch
    %9 = sbr.rel (0) target = $region5
  $region4: #{dbnet_forward.31} parent=0 // pred_region
    _
  $region5: #{dbnet_forward.31} parent=0 // pred_fallthru
    _
  // Predicated region
  $region6: #{dbnet_forward.31} parent=0 // pred_check
    _
  $region7: #{dbnet_forward.31} parent=0 // pred_check_branch
    %11 = sbr.rel (0) target = $region9
  $region8: #{dbnet_forward.31} parent=0 // pred_region
    _
  $region9: #{dbnet_forward.31} parent=0 // pred_fallthru
    _
  // Predicated region
  $region10: #{dbnet_forward.31} parent=0 // pred_check
    _
  $region11: #{dbnet_forward.31} parent=0 // pred_check_branch
    %13 = sbr.rel (0) target = $region13
  $region12: #{dbnet_forward.31} parent=0 // pred_region
    _
  $region13: #{dbnet_forward.31} parent=0 // pred_fallthru
    _
  %v15 = vld [vmem:[%s0] sm:$0xf]
  %vm16 = vcmask 785408
  %v19 = vsel %vm16, %v15, 0
  %v21 = vld [vmem:[%s1] sm:$0xf]
  %v22 = vld [vmem:[%s1 + $0x4] sm:$0xf]
  %v23 = vld [vmem:[%s1 + $0x8] sm:$0xf]
  %v24 = vld [vmem:[%s1 + $0xc] sm:$0xf]
  %v25 = vld [vmem:[%s1 + $0x10] sm:$0xf]
  %v26 = vld [vmem:[%s1 + $0x14] sm:$0xf]
  %v27 = vld [vmem:[%s1 + $0x18] sm:$0xf]
  %v28 = vld [vmem:[%s1 + $0x1c] sm:$0xf]
  %v29 = vld [vmem:[%s1 + $0x20] sm:$0xf]
  %v30 = vld [vmem:[%s1 + $0x24] sm:$0xf]
  %v31 = vld [vmem:[%s1 + $0x28] sm:$0xf]
  %v32 = vld [vmem:[%s1 + $0x2c] sm:$0xf]
  %v33 = vld [vmem:[%s1 + $0x30] sm:$0xf]
  %v34 = vld [vmem:[%s1 + $0x34] sm:$0xf]
  %v35 = vld [vmem:[%s1 + $0x38] sm:$0xf]
  %v36 = vld [vmem:[%s1 + $0x3c] sm:$0xf]
  %v37 = vld [vmem:[%s2] sm:$0x1]
  %v39 = vlaneseq
  %v40 = vshrl.u32 %v39, 7
  %v41 = vsub.s32 0, %v40
  %v42 = vrot.slane %v37, %v41
  %v60 = vunpack.c.l.b16 %v21
  %v61 = vunpack.c.l.b16 %v22
  %v62 = vunpack.c.l.b16 %v23
  %v63 = vunpack.c.l.b16 %v24
  %v64 = vunpack.c.l.b16 %v25
  %v65 = vunpack.c.l.b16 %v26
  %v66 = vunpack.c.l.b16 %v27
  %v67 = vunpack.c.l.b16 %v28
  %v68 = vunpack.c.l.b16 %v29
  %v69 = vunpack.c.l.b16 %v30
  %v70 = vunpack.c.l.b16 %v31
  %v71 = vunpack.c.l.b16 %v32
  %v72 = vunpack.c.l.b16 %v33
  %v73 = vunpack.c.l.b16 %v34
  %v74 = vunpack.c.l.b16 %v35
  %v75 = vunpack.c.l.b16 %v36
  %v76 = vpack.c.b16 %v61, %v60
  %v77 = vpack.c.b16 %v63, %v62
  %v78 = vpack.c.b16 %v65, %v64
  %v79 = vpack.c.b16 %v67, %v66
  %v80 = vpack.c.b16 %v69, %v68
  %v81 = vpack.c.b16 %v71, %v70
  %v82 = vpack.c.b16 %v73, %v72
  %v83 = vpack.c.b16 %v75, %v74
  %92 = vmatprep.subr.bf16.mxu0 0
  %93 = vmatpush1.bf16.msra.mxu0 %v76
  %94 = vmatprep.subr.bf16.mxu0 0
  %95 = vmatpush1.bf16.msra.mxu0 %v77
  %96 = vmatprep.subr.bf16.mxu0 0
  %97 = vmatpush1.bf16.msra.mxu0 %v78
  %98 = vmatprep.subr.bf16.mxu0 0
  %99 = vmatpush1.bf16.msra.mxu0 %v79
  %100 = vmatprep.subr.bf16.mxu0 0
  %101 = vmatpush1.bf16.msra.mxu0 %v80
  %102 = vmatprep.subr.bf16.mxu0 0
  %103 = vmatpush1.bf16.msra.mxu0 %v81
  %104 = vmatprep.subr.bf16.mxu0 0
  %105 = vmatpush1.bf16.msra.mxu0 %v82
  %106 = vmatprep.subr.bf16.mxu0 0
  %107 = vmatpush1.bf16.msra.mxu0 %v83
  %108 = vmatprep.subr.bf16.mxu0 0
  %109 = vmatpush1.bf16.msra.mxu0 0
  %110 = vmatprep.subr.bf16.mxu0 0
  %111 = vmatpush1.bf16.msra.mxu0 0
  %112 = vmatprep.subr.bf16.mxu0 0
  %113 = vmatpush1.bf16.msra.mxu0 0
  %114 = vmatprep.subr.bf16.mxu0 0
  %115 = vmatpush1.bf16.msra.mxu0 0
  %116 = vmatprep.subr.bf16.mxu0 0
  %117 = vmatpush1.bf16.msra.mxu0 0
  %118 = vmatprep.subr.bf16.mxu0 0
  %119 = vmatpush1.bf16.msra.mxu0 0
  %120 = vmatprep.subr.bf16.mxu0 0
  %121 = vmatpush1.bf16.msra.mxu0 0
  %122 = vmatprep.subr.bf16.mxu0 0
  %123 = vmatpush1.bf16.msra.mxu0 0
  %124 = vmatprep.mubr.bf16.mxu0 0
  %125 = vmatmul.mubr.bf16.gmra.mrb[0].mxu0 %v19
  %v126 = vpop.f32.mrb[0].mxu0
  %v127 = vadd.f32 %v42, %v126
  %v128 = vpop.f32.mrb[0].mxu0
  %v129 = vpop.f32.mrb[0].mxu0
  %v130 = vpop.f32.mrb[0].mxu0
  %131 = vdwg.mxu0
  %v132 = vpack.c.bf16 %v127, %v127
  %vm133 = vcmask 388096
  %134 = vst.msk [vmem:[%s3] sm:$0xf] %vm133, %v132
  // Predicated region
  $region14: #{dbnet_forward.31} parent=0 // pred_check
    _
  $region15: #{dbnet_forward.31} parent=0 // pred_check_branch
    %136 = sbr.rel (0) target = $region17
  $region16: #{dbnet_forward.31} parent=0 // pred_region
    _
  $region17: #{dbnet_forward.31} parent=0 // pred_fallthru
    _
  // Predicated region
  $region18: #{dbnet_forward.31} parent=0 // pred_check
    _
  $region19: #{dbnet_forward.31} parent=0 // pred_check_branch
    %138 = sbr.rel (0) target = $region21
  $region20: #{dbnet_forward.31} parent=0 // pred_region
    _
  $region21: #{dbnet_forward.31} parent=0 // pred_fallthru
    _

// kernel: dbnet_forward.37
$region0: #{dbnet_forward.37}
  #allocation0 [shape = 'u32[]', space=smem, size = 0x4, offset = 0x4, fixed_abs, tag = 'smem constant byte address 0x4 - core index']
  #allocation1 [shape = 'u32[144,128]{1,0:T(1,128)}', space=vmem, size = 0x12000, scoped, tag = 'internal scratch']
  %s0 = inlined_call_operand.vmem [shape: bf16[8,48], index: 0, kind: input, shape index: {}]
  %s1 = inlined_call_operand.vmem [shape: bf16[128,128], index: 1, kind: input, shape index: {}]
  %s2 = inlined_call_operand.vmem [shape: f32[1,128], index: 2, kind: input, shape index: {}]
  %s3 = inlined_call_operand.vmem [shape: bf16[8,32], index: 3, kind: output, shape index: {}]
  %s4 = sld [smem:[#allocation0]]
  $region22: #{dbnet_forward.37} parent=0
    _
  %s6 = ssub.s32 1, %s4
  %s7 = scalar_select 0, %s6, %s4
  // Predicated region
  $region2: #{dbnet_forward.37} parent=0 // pred_check
    _
  $region3: #{dbnet_forward.37} parent=0 // pred_check_branch
    %9 = sbr.rel (0) target = $region5
  $region4: #{dbnet_forward.37} parent=0 // pred_region
    _
  $region5: #{dbnet_forward.37} parent=0 // pred_fallthru
    _
  // Predicated region
  $region6: #{dbnet_forward.37} parent=0 // pred_check
    _
  $region7: #{dbnet_forward.37} parent=0 // pred_check_branch
    %11 = sbr.rel (0) target = $region9
  $region8: #{dbnet_forward.37} parent=0 // pred_region
    _
  $region9: #{dbnet_forward.37} parent=0 // pred_fallthru
    _
  // Predicated region
  $region10: #{dbnet_forward.37} parent=0 // pred_check
    _
  $region11: #{dbnet_forward.37} parent=0 // pred_check_branch
    %13 = sbr.rel (0) target = $region13
  $region12: #{dbnet_forward.37} parent=0 // pred_region
    _
  $region13: #{dbnet_forward.37} parent=0 // pred_fallthru
    _
  %v15 = vld [vmem:[%s0] sm:$0xf]
  %vm16 = vcmask 392192
  %v19 = vsel %vm16, %v15, 0
  %v21 = vld [vmem:[%s1] sm:$0xf]
  %v22 = vld [vmem:[%s1 + $0x4] sm:$0xf]
  %v23 = vld [vmem:[%s1 + $0x8] sm:$0xf]
  %v24 = vld [vmem:[%s1 + $0xc] sm:$0xf]
  %v25 = vld [vmem:[%s1 + $0x10] sm:$0xf]
  %v26 = vld [vmem:[%s1 + $0x14] sm:$0xf]
  %v27 = vld [vmem:[%s1 + $0x18] sm:$0xf]
  %v28 = vld [vmem:[%s1 + $0x1c] sm:$0xf]
  %v29 = vld [vmem:[%s1 + $0x20] sm:$0xf]
  %v30 = vld [vmem:[%s1 + $0x24] sm:$0xf]
  %v31 = vld [vmem:[%s1 + $0x28] sm:$0xf]
  %v32 = vld [vmem:[%s1 + $0x2c] sm:$0xf]
  %v33 = vld [vmem:[%s1 + $0x30] sm:$0xf]
  %v34 = vld [vmem:[%s1 + $0x34] sm:$0xf]
  %v35 = vld [vmem:[%s1 + $0x38] sm:$0xf]
  %v36 = vld [vmem:[%s1 + $0x3c] sm:$0xf]
  %v37 = vld [vmem:[%s2] sm:$0x1]
  %v39 = vlaneseq
  %v40 = vshrl.u32 %v39, 7
  %v41 = vsub.s32 0, %v40
  %v42 = vrot.slane %v37, %v41
  %v60 = vunpack.c.l.b16 %v21
  %v61 = vunpack.c.l.b16 %v22
  %v62 = vunpack.c.l.b16 %v23
  %v63 = vunpack.c.l.b16 %v24
  %v64 = vunpack.c.l.b16 %v25
  %v65 = vunpack.c.l.b16 %v26
  %v66 = vunpack.c.l.b16 %v27
  %v67 = vunpack.c.l.b16 %v28
  %v68 = vunpack.c.l.b16 %v29
  %v69 = vunpack.c.l.b16 %v30
  %v70 = vunpack.c.l.b16 %v31
  %v71 = vunpack.c.l.b16 %v32
  %v72 = vunpack.c.l.b16 %v33
  %v73 = vunpack.c.l.b16 %v34
  %v74 = vunpack.c.l.b16 %v35
  %v75 = vunpack.c.l.b16 %v36
  %v76 = vpack.c.b16 %v61, %v60
  %v77 = vpack.c.b16 %v63, %v62
  %v78 = vpack.c.b16 %v65, %v64
  %v79 = vpack.c.b16 %v67, %v66
  %v80 = vpack.c.b16 %v69, %v68
  %v81 = vpack.c.b16 %v71, %v70
  %v82 = vpack.c.b16 %v73, %v72
  %v83 = vpack.c.b16 %v75, %v74
  %92 = vmatprep.subr.bf16.mxu0 0
  %93 = vmatpush1.bf16.msra.mxu0 %v76
  %94 = vmatprep.subr.bf16.mxu0 0
  %95 = vmatpush1.bf16.msra.mxu0 %v77
  %96 = vmatprep.subr.bf16.mxu0 0
  %97 = vmatpush1.bf16.msra.mxu0 %v78
  %98 = vmatprep.subr.bf16.mxu0 0
  %99 = vmatpush1.bf16.msra.mxu0 %v79
  %100 = vmatprep.subr.bf16.mxu0 0
  %101 = vmatpush1.bf16.msra.mxu0 %v80
  %102 = vmatprep.subr.bf16.mxu0 0
  %103 = vmatpush1.bf16.msra.mxu0 %v81
  %104 = vmatprep.subr.bf16.mxu0 0
  %105 = vmatpush1.bf16.msra.mxu0 %v82
  %106 = vmatprep.subr.bf16.mxu0 0
  %107 = vmatpush1.bf16.msra.mxu0 %v83
  %108 = vmatprep.subr.bf16.mxu0 0
  %109 = vmatpush1.bf16.msra.mxu0 0
  %110 = vmatprep.subr.bf16.mxu0 0
  %111 = vmatpush1.bf16.msra.mxu0 0
  %112 = vmatprep.subr.bf16.mxu0 0
  %113 = vmatpush1.bf16.msra.mxu0 0
  %114 = vmatprep.subr.bf16.mxu0 0
  %115 = vmatpush1.bf16.msra.mxu0 0
  %116 = vmatprep.subr.bf16.mxu0 0
  %117 = vmatpush1.bf16.msra.mxu0 0
  %118 = vmatprep.subr.bf16.mxu0 0
  %119 = vmatpush1.bf16.msra.mxu0 0
  %120 = vmatprep.subr.bf16.mxu0 0
  %121 = vmatpush1.bf16.msra.mxu0 0
  %122 = vmatprep.subr.bf16.mxu0 0
  %123 = vmatpush1.bf16.msra.mxu0 0
  %124 = vmatprep.mubr.bf16.mxu0 0
  %125 = vmatmul.mubr.bf16.gmra.mrb[0].mxu0 %v19
  %v126 = vpop.f32.mrb[0].mxu0
  %v127 = vadd.f32 %v42, %v126
  %v128 = vpop.f32.mrb[0].mxu0
  %v129 = vpop.f32.mrb[0].mxu0
  %v130 = vpop.f32.mrb[0].mxu0
  %131 = vdwg.mxu0
  %v132 = vpack.c.bf16 %v127, %v127
  %vm133 = vcmask 257024
  %134 = vst.msk [vmem:[%s3] sm:$0xf] %vm133, %v132
  // Predicated region
  $region14: #{dbnet_forward.37} parent=0 // pred_check
    _
  $region15: #{dbnet_forward.37} parent=0 // pred_check_branch
    %136 = sbr.rel (0) target = $region17
  $region16: #{dbnet_forward.37} parent=0 // pred_region
    _
  $region17: #{dbnet_forward.37} parent=0 // pred_fallthru
    _
  // Predicated region
  $region18: #{dbnet_forward.37} parent=0 // pred_check
    _
  $region19: #{dbnet_forward.37} parent=0 // pred_check_branch
    %138 = sbr.rel (0) target = $region21
  $region20: #{dbnet_forward.37} parent=0 // pred_region
    _
  $region21: #{dbnet_forward.37} parent=0 // pred_fallthru
    _

// kernel: dbnet_forward.32
$region0: #{dbnet_forward.32}
  #allocation0 [shape = 'u32[]', space=smem, size = 0x4, offset = 0x4, fixed_abs, tag = 'smem constant byte address 0x4 - core index']
  #allocation1 [shape = 'u32[144,128]{1,0:T(1,128)}', space=vmem, size = 0x12000, scoped, tag = 'internal scratch']
  %s0 = inlined_call_operand.vmem [shape: bf16[8,48], index: 0, kind: input, shape index: {}]
  %s1 = inlined_call_operand.vmem [shape: bf16[128,256], index: 1, kind: input, shape index: {}]
  %s2 = inlined_call_operand.vmem [shape: f32[1,256], index: 2, kind: input, shape index: {}]
  %s3 = inlined_call_operand.vmem [shape: bf16[8,144], index: 3, kind: output, shape index: {}]
  %s4 = sld [smem:[#allocation0]]
  $region22: #{dbnet_forward.32} parent=0
    _
  %s6 = ssub.s32 1, %s4
  %s7 = scalar_select 0, %s6, %s4
  // Predicated region
  $region2: #{dbnet_forward.32} parent=0 // pred_check
    _
  $region3: #{dbnet_forward.32} parent=0 // pred_check_branch
    %9 = sbr.rel (0) target = $region5
  $region4: #{dbnet_forward.32} parent=0 // pred_region
    _
  $region5: #{dbnet_forward.32} parent=0 // pred_fallthru
    _
  // Predicated region
  $region6: #{dbnet_forward.32} parent=0 // pred_check
    _
  $region7: #{dbnet_forward.32} parent=0 // pred_check_branch
    %11 = sbr.rel (0) target = $region9
  $region8: #{dbnet_forward.32} parent=0 // pred_region
    _
  $region9: #{dbnet_forward.32} parent=0 // pred_fallthru
    _
  // Predicated region
  $region10: #{dbnet_forward.32} parent=0 // pred_check
    _
  $region11: #{dbnet_forward.32} parent=0 // pred_check_branch
    %13 = sbr.rel (0) target = $region13
  $region12: #{dbnet_forward.32} parent=0 // pred_region
    _
  $region13: #{dbnet_forward.32} parent=0 // pred_fallthru
    _
  %v15 = vld [vmem:[%s0] sm:$0xf]
  %vm16 = vcmask 392192
  %v19 = vsel %vm16, %v15, 0
  %v21 = vld [vmem:[%s1] sm:$0xff]
  %v22 = vld [vmem:[%s1 + $0x8] sm:$0xff]
  %v23 = vld [vmem:[%s1 + $0x10] sm:$0xff]
  %v24 = vld [vmem:[%s1 + $0x18] sm:$0xff]
  %v25 = vld [vmem:[%s1 + $0x20] sm:$0xff]
  %v26 = vld [vmem:[%s1 + $0x28] sm:$0xff]
  %v27 = vld [vmem:[%s1 + $0x30] sm:$0xff]
  %v28 = vld [vmem:[%s1 + $0x38] sm:$0xff]
  %v29 = vld [vmem:[%s1 + $0x40] sm:$0xff]
  %v30 = vld [vmem:[%s1 + $0x48] sm:$0xff]
  %v31 = vld [vmem:[%s1 + $0x50] sm:$0xff]
  %v32 = vld [vmem:[%s1 + $0x58] sm:$0xff]
  %v33 = vld [vmem:[%s1 + $0x60] sm:$0xff]
  %v34 = vld [vmem:[%s1 + $0x68] sm:$0xff]
  %v35 = vld [vmem:[%s1 + $0x70] sm:$0xff]
  %v36 = vld [vmem:[%s1 + $0x78] sm:$0xff]
  %v37 = vld [vmem:[%s2] sm:$0x3]
  %v39 = vlaneseq
  %v40 = vshrl.u32 %v39, 7
  %v41 = vsub.s32 0, %v40
  %v42 = vrot.slane %v37, %v41
  %v43 = vlaneseq
  %v44 = vshrl.u32 %v43, 7
  %v45 = vsub.s32 1, %v44
  %v46 = vrot.slane %v37, %v45
  %v65 = vunpack.c.l.b16 %v21
  %v66 = vunpack.c.h.b16 %v21
  %v67 = vunpack.c.l.b16 %v22
  %v68 = vunpack.c.h.b16 %v22
  %v69 = vunpack.c.l.b16 %v23
  %v70 = vunpack.c.h.b16 %v23
  %v71 = vunpack.c.l.b16 %v24
  %v72 = vunpack.c.h.b16 %v24
  %v73 = vunpack.c.l.b16 %v25
  %v74 = vunpack.c.h.b16 %v25
  %v75 = vunpack.c.l.b16 %v26
  %v76 = vunpack.c.h.b16 %v26
  %v77 = vunpack.c.l.b16 %v27
  %v78 = vunpack.c.h.b16 %v27
  %v79 = vunpack.c.l.b16 %v28
  %v80 = vunpack.c.h.b16 %v28
  %v81 = vunpack.c.l.b16 %v29
  %v82 = vunpack.c.h.b16 %v29
  %v83 = vunpack.c.l.b16 %v30
  %v84 = vunpack.c.h.b16 %v30
  %v85 = vunpack.c.l.b16 %v31
  %v86 = vunpack.c.h.b16 %v31
  %v87 = vunpack.c.l.b16 %v32
  %v88 = vunpack.c.h.b16 %v32
  %v89 = vunpack.c.l.b16 %v33
  %v90 = vunpack.c.h.b16 %v33
  %v91 = vunpack.c.l.b16 %v34
  %v92 = vunpack.c.h.b16 %v34
  %v93 = vunpack.c.l.b16 %v35
  %v94 = vunpack.c.h.b16 %v35
  %v95 = vunpack.c.l.b16 %v36
  %v96 = vunpack.c.h.b16 %v36
  %v97 = vpack.c.b16 %v67, %v65
  %v98 = vpack.c.b16 %v68, %v66
  %v99 = vpack.c.b16 %v71, %v69
  %v100 = vpack.c.b16 %v72, %v70
  %v101 = vpack.c.b16 %v75, %v73
  %v102 = vpack.c.b16 %v76, %v74
  %v103 = vpack.c.b16 %v79, %v77
  %v104 = vpack.c.b16 %v80, %v78
  %v105 = vpack.c.b16 %v83, %v81
  %v106 = vpack.c.b16 %v84, %v82
  %v107 = vpack.c.b16 %v87, %v85
  %v108 = vpack.c.b16 %v88, %v86
  %v109 = vpack.c.b16 %v91, %v89
  %v110 = vpack.c.b16 %v92, %v90
  %v111 = vpack.c.b16 %v95, %v93
  %v112 = vpack.c.b16 %v96, %v94
  %129 = vmatprep.subr.bf16.mxu0 %v98
  %130 = vmatpush1.bf16.msra.mxu0 %v97
  %131 = vmatprep.subr.bf16.mxu0 %v100
  %132 = vmatpush1.bf16.msra.mxu0 %v99
  %133 = vmatprep.subr.bf16.mxu0 %v102
  %134 = vmatpush1.bf16.msra.mxu0 %v101
  %135 = vmatprep.subr.bf16.mxu0 %v104
  %136 = vmatpush1.bf16.msra.mxu0 %v103
  %137 = vmatprep.subr.bf16.mxu0 %v106
  %138 = vmatpush1.bf16.msra.mxu0 %v105
  %139 = vmatprep.subr.bf16.mxu0 %v108
  %140 = vmatpush1.bf16.msra.mxu0 %v107
  %141 = vmatprep.subr.bf16.mxu0 %v110
  %142 = vmatpush1.bf16.msra.mxu0 %v109
  %143 = vmatprep.subr.bf16.mxu0 %v112
  %144 = vmatpush1.bf16.msra.mxu0 %v111
  %145 = vmatprep.subr.bf16.mxu0 0
  %146 = vmatpush1.bf16.msra.mxu0 0
  %147 = vmatprep.subr.bf16.mxu0 0
  %148 = vmatpush1.bf16.msra.mxu0 0
  %149 = vmatprep.subr.bf16.mxu0 0
  %150 = vmatpush1.bf16.msra.mxu0 0
  %151 = vmatprep.subr.bf16.mxu0 0
  %152 = vmatpush1.bf16.msra.mxu0 0
  %153 = vmatprep.subr.bf16.mxu0 0
  %154 = vmatpush1.bf16.msra.mxu0 0
  %155 = vmatprep.subr.bf16.mxu0 0
  %156 = vmatpush1.bf16.msra.mxu0 0
  %157 = vmatprep.subr.bf16.mxu0 0
  %158 = vmatpush1.bf16.msra.mxu0 0
  %159 = vmatprep.subr.bf16.mxu0 0
  %160 = vmatpush1.bf16.msra.mxu0 0
  %161 = vmatprep.mubr.bf16.mxu0 0
  %162 = vmatmul.mubr.bf16.gmra.mrb[0].mxu0 %v19
  %v163 = vpop.f32.mrb[0].mxu0
  %v164 = vadd.f32 %v42, %v163
  %v165 = vpop.f32.mrb[0].mxu0
  %v166 = vadd.f32 %v46, %v165
  %v167 = vpop.f32.mrb[0].mxu0
  %v168 = vpop.f32.mrb[0].mxu0
  %169 = vdwg.mxu0
  %v170 = vadd.f32 %v164, 3.0
  %v171 = vadd.f32 %v166, 3.0
  %v172 = vmax.f32 %v170, 0.0
  %v173 = vmax.f32 %v171, 0.0
  %v174 = vmin.f32 %v172, 6.0
  %v175 = vmin.f32 %v173, 6.0
  %v176 = vmul.f32 %v164, %v174
  %v177 = vmul.f32 %v166, %v175
  %v178 = vmul.f32 %v176, 0.16666667
  %v179 = vmul.f32 %v177, 0.16666667
  %v180 = vpack.c.bf16 %v178, %v178
  %v181 = vpack.c.bf16 %v179, %v179
  %v184 = vunpack.c.l.b16 %v180
  %v185 = vunpack.c.l.b16 %v181
  %v186 = vpack.c.b16 %v185, %v184
  %vm188 = vcmask 1043456
  %vm189 = vcmask 130052
  %vm190 = vmor %vm189, %vm188
  %191 = vst.msk [vmem:[%s3] sm:$0xff] %vm190, %v186
  // Predicated region
  $region14: #{dbnet_forward.32} parent=0 // pred_check
    _
  $region15: #{dbnet_forward.32} parent=0 // pred_check_branch
    %193 = sbr.rel (0) target = $region17
  $region16: #{dbnet_forward.32} parent=0 // pred_region
    _
  $region17: #{dbnet_forward.32} parent=0 // pred_fallthru
    _
  // Predicated region
  $region18: #{dbnet_forward.32} parent=0 // pred_check
    _
  $region19: #{dbnet_forward.32} parent=0 // pred_check_branch
    %195 = sbr.rel (0) target = $region21
  $region20: #{dbnet_forward.32} parent=0 // pred_region
    _
  $region21: #{dbnet_forward.32} parent=0 // pred_fallthru
    _

// kernel: dbnet_forward.30
$region0: #{dbnet_forward.30}
  #allocation0 [shape = 'u32[]', space=smem, size = 0x4, offset = 0x4, fixed_abs, tag = 'smem constant byte address 0x4 - core index']
  #allocation1 [shape = 'u32[144,128]{1,0:T(1,128)}', space=vmem, size = 0x12000, scoped, tag = 'internal scratch']
  %s0 = inlined_call_operand.vmem [shape: bf16[9,8,96], index: 0, kind: input, shape index: {}]
  %s1 = inlined_call_operand.vmem [shape: f32[9,96], index: 1, kind: input, shape index: {}]
  %s2 = inlined_call_operand.vmem [shape: f32[1,96], index: 2, kind: input, shape index: {}]
  %s3 = inlined_call_operand.vmem [shape: bf16[8,96], index: 3, kind: output, shape index: {}]
  %s4 = sld [smem:[#allocation0]]
  $region22: #{dbnet_forward.30} parent=0
    _
  %s6 = ssub.s32 1, %s4
  %s7 = scalar_select 0, %s6, %s4
  // Predicated region
  $region2: #{dbnet_forward.30} parent=0 // pred_check
    _
  $region3: #{dbnet_forward.30} parent=0 // pred_check_branch
    %9 = sbr.rel (0) target = $region5
  $region4: #{dbnet_forward.30} parent=0 // pred_region
    _
  $region5: #{dbnet_forward.30} parent=0 // pred_fallthru
    _
  // Predicated region
  $region6: #{dbnet_forward.30} parent=0 // pred_check
    _
  $region7: #{dbnet_forward.30} parent=0 // pred_check_branch
    %11 = sbr.rel (0) target = $region9
  $region8: #{dbnet_forward.30} parent=0 // pred_region
    _
  $region9: #{dbnet_forward.30} parent=0 // pred_fallthru
    _
  // Predicated region
  $region10: #{dbnet_forward.30} parent=0 // pred_check
    _
  $region11: #{dbnet_forward.30} parent=0 // pred_check_branch
    %13 = sbr.rel (0) target = $region13
  $region12: #{dbnet_forward.30} parent=0 // pred_region
    _
  $region13: #{dbnet_forward.30} parent=0 // pred_fallthru
    _
  %v14 = vld [vmem:[%s0] sm:$0xf]
  %v15 = vunpack.c.l.bf16 %v14
  %v16 = vld [vmem:[%s1] sm:$0x1]
  %v17 = vlaneseq
  %v18 = vshrl.u32 %v17, 7
  %v19 = vsub.s32 0, %v18
  %v20 = vrot.slane %v16, %v19
  %v21 = vmul.f32 %v15, %v20
  %v22 = vadd.f32 %v21, 0.0
  %s23 = scalar_lea.vmem %s0, 4
  %v24 = vld [vmem:[%s23] sm:$0xf]
  %v25 = vunpack.c.l.bf16 %v24
  %v26 = vld [vmem:[%s1 + $0x1] sm:$0x1]
  %v27 = vlaneseq
  %v28 = vshrl.u32 %v27, 7
  %v29 = vsub.s32 0, %v28
  %v30 = vrot.slane %v26, %v29
  %v31 = vmul.f32 %v25, %v30
  %v32 = vadd.f32 %v22, %v31
  %s33 = scalar_lea.vmem %s0, 8
  %v34 = vld [vmem:[%s33] sm:$0xf]
  %v35 = vunpack.c.l.bf16 %v34
  %v36 = vld [vmem:[%s1 + $0x2] sm:$0x1]
  %v37 = vlaneseq
  %v38 = vshrl.u32 %v37, 7
  %v39 = vsub.s32 0, %v38
  %v40 = vrot.slane %v36, %v39
  %v41 = vmul.f32 %v35, %v40
  %v42 = vadd.f32 %v32, %v41
  %s43 = scalar_lea.vmem %s0, 12
  %v44 = vld [vmem:[%s43] sm:$0xf]
  %v45 = vunpack.c.l.bf16 %v44
  %v46 = vld [vmem:[%s1 + $0x3] sm:$0x1]
  %v47 = vlaneseq
  %v48 = vshrl.u32 %v47, 7
  %v49 = vsub.s32 0, %v48
  %v50 = vrot.slane %v46, %v49
  %v51 = vmul.f32 %v45, %v50
  %v52 = vadd.f32 %v42, %v51
  %s53 = scalar_lea.vmem %s0, 16
  %v54 = vld [vmem:[%s53] sm:$0xf]
  %v55 = vunpack.c.l.bf16 %v54
  %v56 = vld [vmem:[%s1 + $0x4] sm:$0x1]
  %v57 = vlaneseq
  %v58 = vshrl.u32 %v57, 7
  %v59 = vsub.s32 0, %v58
  %v60 = vrot.slane %v56, %v59
  %v61 = vmul.f32 %v55, %v60
  %v62 = vadd.f32 %v52, %v61
  %s63 = scalar_lea.vmem %s0, 20
  %v64 = vld [vmem:[%s63] sm:$0xf]
  %v65 = vunpack.c.l.bf16 %v64
  %v66 = vld [vmem:[%s1 + $0x5] sm:$0x1]
  %v67 = vlaneseq
  %v68 = vshrl.u32 %v67, 7
  %v69 = vsub.s32 0, %v68
  %v70 = vrot.slane %v66, %v69
  %v71 = vmul.f32 %v65, %v70
  %v72 = vadd.f32 %v62, %v71
  %s73 = scalar_lea.vmem %s0, 24
  %v74 = vld [vmem:[%s73] sm:$0xf]
  %v75 = vunpack.c.l.bf16 %v74
  %v76 = vld [vmem:[%s1 + $0x6] sm:$0x1]
  %v77 = vlaneseq
  %v78 = vshrl.u32 %v77, 7
  %v79 = vsub.s32 0, %v78
  %v80 = vrot.slane %v76, %v79
  %v81 = vmul.f32 %v75, %v80
  %v82 = vadd.f32 %v72, %v81
  %s83 = scalar_lea.vmem %s0, 28
  %v84 = vld [vmem:[%s83] sm:$0xf]
  %v85 = vunpack.c.l.bf16 %v84
  %v86 = vld [vmem:[%s1 + $0x7] sm:$0x1]
  %v87 = vlaneseq
  %v88 = vshrl.u32 %v87, 7
  %v89 = vsub.s32 0, %v88
  %v90 = vrot.slane %v86, %v89
  %v91 = vmul.f32 %v85, %v90
  %v92 = vadd.f32 %v82, %v91
  %s93 = scalar_lea.vmem %s0, 32
  %v94 = vld [vmem:[%s93] sm:$0xf]
  %v95 = vunpack.c.l.bf16 %v94
  %v96 = vld [vmem:[%s1 + $0x8] sm:$0x1]
  %v97 = vlaneseq
  %v98 = vshrl.u32 %v97, 7
  %v99 = vsub.s32 0, %v98
  %v100 = vrot.slane %v96, %v99
  %v101 = vmul.f32 %v95, %v100
  %v102 = vadd.f32 %v92, %v101
  %v103 = vld [vmem:[%s2] sm:$0x1]
  %v105 = vlaneseq
  %v106 = vshrl.u32 %v105, 7
  %v107 = vsub.s32 0, %v106
  %v108 = vrot.slane %v103, %v107
  %v110 = vadd.f32 %v102, %v108
  %v111 = vadd.f32 %v110, 3.0
  %v112 = vmax.f32 %v111, 0.0
  %v113 = vmin.f32 %v112, 6.0
  %v114 = vmul.f32 %v110, %v113
  %v115 = vmul.f32 %v114, 0.16666667
  %v116 = vpack.c.bf16 %v115, %v115
  %vm117 = vcmask 781312
  %118 = vst.msk [vmem:[%s3] sm:$0xf] %vm117, %v116
  // Predicated region
  $region14: #{dbnet_forward.30} parent=0 // pred_check
    _
  $region15: #{dbnet_forward.30} parent=0 // pred_check_branch
    %120 = sbr.rel (0) target = $region17
  $region16: #{dbnet_forward.30} parent=0 // pred_region
    _
  $region17: #{dbnet_forward.30} parent=0 // pred_fallthru
    _
  // Predicated region
  $region18: #{dbnet_forward.30} parent=0 // pred_check
    _
  $region19: #{dbnet_forward.30} parent=0 // pred_check_branch
    %122 = sbr.rel (0) target = $region21
  $region20: #{dbnet_forward.30} parent=0 // pred_region
    _
  $region21: #{dbnet_forward.30} parent=0 // pred_fallthru
    _

// kernel: dbnet_forward.38
$region0: #{dbnet_forward.38}
  #allocation0 [shape = 'u32[]', space=smem, size = 0x4, offset = 0x4, fixed_abs, tag = 'smem constant byte address 0x4 - core index']
  #allocation1 [shape = 'u32[144,128]{1,0:T(1,128)}', space=vmem, size = 0x12000, scoped, tag = 'internal scratch']
  %s0 = inlined_call_operand.vmem [shape: bf16[8,96], index: 0, kind: input, shape index: {}]
  %s1 = inlined_call_operand.vmem [shape: bf16[128,128], index: 1, kind: input, shape index: {}]
  %s2 = inlined_call_operand.vmem [shape: f32[1,128], index: 2, kind: input, shape index: {}]
  %s3 = inlined_call_operand.vmem [shape: bf16[8,32], index: 3, kind: output, shape index: {}]
  %s4 = sld [smem:[#allocation0]]
  $region22: #{dbnet_forward.38} parent=0
    _
  %s6 = ssub.s32 1, %s4
  %s7 = scalar_select 0, %s6, %s4
  // Predicated region
  $region2: #{dbnet_forward.38} parent=0 // pred_check
    _
  $region3: #{dbnet_forward.38} parent=0 // pred_check_branch
    %9 = sbr.rel (0) target = $region5
  $region4: #{dbnet_forward.38} parent=0 // pred_region
    _
  $region5: #{dbnet_forward.38} parent=0 // pred_fallthru
    _
  // Predicated region
  $region6: #{dbnet_forward.38} parent=0 // pred_check
    _
  $region7: #{dbnet_forward.38} parent=0 // pred_check_branch
    %11 = sbr.rel (0) target = $region9
  $region8: #{dbnet_forward.38} parent=0 // pred_region
    _
  $region9: #{dbnet_forward.38} parent=0 // pred_fallthru
    _
  // Predicated region
  $region10: #{dbnet_forward.38} parent=0 // pred_check
    _
  $region11: #{dbnet_forward.38} parent=0 // pred_check_branch
    %13 = sbr.rel (0) target = $region13
  $region12: #{dbnet_forward.38} parent=0 // pred_region
    _
  $region13: #{dbnet_forward.38} parent=0 // pred_fallthru
    _
  %v15 = vld [vmem:[%s0] sm:$0xf]
  %vm16 = vcmask 785408
  %v19 = vsel %vm16, %v15, 0
  %v21 = vld [vmem:[%s1] sm:$0xf]
  %v22 = vld [vmem:[%s1 + $0x4] sm:$0xf]
  %v23 = vld [vmem:[%s1 + $0x8] sm:$0xf]
  %v24 = vld [vmem:[%s1 + $0xc] sm:$0xf]
  %v25 = vld [vmem:[%s1 + $0x10] sm:$0xf]
  %v26 = vld [vmem:[%s1 + $0x14] sm:$0xf]
  %v27 = vld [vmem:[%s1 + $0x18] sm:$0xf]
  %v28 = vld [vmem:[%s1 + $0x1c] sm:$0xf]
  %v29 = vld [vmem:[%s1 + $0x20] sm:$0xf]
  %v30 = vld [vmem:[%s1 + $0x24] sm:$0xf]
  %v31 = vld [vmem:[%s1 + $0x28] sm:$0xf]
  %v32 = vld [vmem:[%s1 + $0x2c] sm:$0xf]
  %v33 = vld [vmem:[%s1 + $0x30] sm:$0xf]
  %v34 = vld [vmem:[%s1 + $0x34] sm:$0xf]
  %v35 = vld [vmem:[%s1 + $0x38] sm:$0xf]
  %v36 = vld [vmem:[%s1 + $0x3c] sm:$0xf]
  %v37 = vld [vmem:[%s2] sm:$0x1]
  %v39 = vlaneseq
  %v40 = vshrl.u32 %v39, 7
  %v41 = vsub.s32 0, %v40
  %v42 = vrot.slane %v37, %v41
  %v60 = vunpack.c.l.b16 %v21
  %v61 = vunpack.c.l.b16 %v22
  %v62 = vunpack.c.l.b16 %v23
  %v63 = vunpack.c.l.b16 %v24
  %v64 = vunpack.c.l.b16 %v25
  %v65 = vunpack.c.l.b16 %v26
  %v66 = vunpack.c.l.b16 %v27
  %v67 = vunpack.c.l.b16 %v28
  %v68 = vunpack.c.l.b16 %v29
  %v69 = vunpack.c.l.b16 %v30
  %v70 = vunpack.c.l.b16 %v31
  %v71 = vunpack.c.l.b16 %v32
  %v72 = vunpack.c.l.b16 %v33
  %v73 = vunpack.c.l.b16 %v34
  %v74 = vunpack.c.l.b16 %v35
  %v75 = vunpack.c.l.b16 %v36
  %v76 = vpack.c.b16 %v61, %v60
  %v77 = vpack.c.b16 %v63, %v62
  %v78 = vpack.c.b16 %v65, %v64
  %v79 = vpack.c.b16 %v67, %v66
  %v80 = vpack.c.b16 %v69, %v68
  %v81 = vpack.c.b16 %v71, %v70
  %v82 = vpack.c.b16 %v73, %v72
  %v83 = vpack.c.b16 %v75, %v74
  %92 = vmatprep.subr.bf16.mxu0 0
  %93 = vmatpush1.bf16.msra.mxu0 %v76
  %94 = vmatprep.subr.bf16.mxu0 0
  %95 = vmatpush1.bf16.msra.mxu0 %v77
  %96 = vmatprep.subr.bf16.mxu0 0
  %97 = vmatpush1.bf16.msra.mxu0 %v78
  %98 = vmatprep.subr.bf16.mxu0 0
  %99 = vmatpush1.bf16.msra.mxu0 %v79
  %100 = vmatprep.subr.bf16.mxu0 0
  %101 = vmatpush1.bf16.msra.mxu0 %v80
  %102 = vmatprep.subr.bf16.mxu0 0
  %103 = vmatpush1.bf16.msra.mxu0 %v81
  %104 = vmatprep.subr.bf16.mxu0 0
  %105 = vmatpush1.bf16.msra.mxu0 %v82
  %106 = vmatprep.subr.bf16.mxu0 0
  %107 = vmatpush1.bf16.msra.mxu0 %v83
  %108 = vmatprep.subr.bf16.mxu0 0
  %109 = vmatpush1.bf16.msra.mxu0 0
  %110 = vmatprep.subr.bf16.mxu0 0
  %111 = vmatpush1.bf16.msra.mxu0 0
  %112 = vmatprep.subr.bf16.mxu0 0
  %113 = vmatpush1.bf16.msra.mxu0 0
  %114 = vmatprep.subr.bf16.mxu0 0
  %115 = vmatpush1.bf16.msra.mxu0 0
  %116 = vmatprep.subr.bf16.mxu0 0
  %117 = vmatpush1.bf16.msra.mxu0 0
  %118 = vmatprep.subr.bf16.mxu0 0
  %119 = vmatpush1.bf16.msra.mxu0 0
  %120 = vmatprep.subr.bf16.mxu0 0
  %121 = vmatpush1.bf16.msra.mxu0 0
  %122 = vmatprep.subr.bf16.mxu0 0
  %123 = vmatpush1.bf16.msra.mxu0 0
  %124 = vmatprep.mubr.bf16.mxu0 0
  %125 = vmatmul.mubr.bf16.gmra.mrb[0].mxu0 %v19
  %v126 = vpop.f32.mrb[0].mxu0
  %v127 = vadd.f32 %v42, %v126
  %v128 = vpop.f32.mrb[0].mxu0
  %v129 = vpop.f32.mrb[0].mxu0
  %v130 = vpop.f32.mrb[0].mxu0
  %131 = vdwg.mxu0
  %v132 = vpack.c.bf16 %v127, %v127
  %vm133 = vcmask 257024
  %134 = vst.msk [vmem:[%s3] sm:$0xf] %vm133, %v132
  // Predicated region
  $region14: #{dbnet_forward.38} parent=0 // pred_check
    _
  $region15: #{dbnet_forward.38} parent=0 // pred_check_branch
    %136 = sbr.rel (0) target = $region17
  $region16: #{dbnet_forward.38} parent=0 // pred_region
    _
  $region17: #{dbnet_forward.38} parent=0 // pred_fallthru
    _
  // Predicated region
  $region18: #{dbnet_forward.38} parent=0 // pred_check
    _
  $region19: #{dbnet_forward.38} parent=0 // pred_check_branch
    %138 = sbr.rel (0) target = $region21
  $region20: #{dbnet_forward.38} parent=0 // pred_region
    _
  $region21: #{dbnet_forward.38} parent=0 // pred_fallthru
    _

// kernel: dbnet_forward.33
$region0: #{dbnet_forward.33}
  #allocation0 [shape = 'u32[]', space=smem, size = 0x4, offset = 0x4, fixed_abs, tag = 'smem constant byte address 0x4 - core index']
  #allocation1 [shape = 'u32[144,128]{1,0:T(1,128)}', space=vmem, size = 0x12000, scoped, tag = 'internal scratch']
  %s0 = inlined_call_operand.vmem [shape: bf16[9,8,144], index: 0, kind: input, shape index: {}]
  %s1 = inlined_call_operand.vmem [shape: f32[9,144], index: 1, kind: input, shape index: {}]
  %s2 = inlined_call_operand.vmem [shape: f32[1,144], index: 2, kind: input, shape index: {}]
  %s3 = inlined_call_operand.vmem [shape: bf16[8,144], index: 3, kind: output, shape index: {}]
  %s4 = sld [smem:[#allocation0]]
  $region22: #{dbnet_forward.33} parent=0
    _
  %s6 = ssub.s32 1, %s4
  %s7 = scalar_select 0, %s6, %s4
  // Predicated region
  $region2: #{dbnet_forward.33} parent=0 // pred_check
    _
  $region3: #{dbnet_forward.33} parent=0 // pred_check_branch
    %9 = sbr.rel (0) target = $region5
  $region4: #{dbnet_forward.33} parent=0 // pred_region
    _
  $region5: #{dbnet_forward.33} parent=0 // pred_fallthru
    _
  // Predicated region
  $region6: #{dbnet_forward.33} parent=0 // pred_check
    _
  $region7: #{dbnet_forward.33} parent=0 // pred_check_branch
    %11 = sbr.rel (0) target = $region9
  $region8: #{dbnet_forward.33} parent=0 // pred_region
    _
  $region9: #{dbnet_forward.33} parent=0 // pred_fallthru
    _
  // Predicated region
  $region10: #{dbnet_forward.33} parent=0 // pred_check
    _
  $region11: #{dbnet_forward.33} parent=0 // pred_check_branch
    %13 = sbr.rel (0) target = $region13
  $region12: #{dbnet_forward.33} parent=0 // pred_region
    _
  $region13: #{dbnet_forward.33} parent=0 // pred_fallthru
    _
  %v14 = vld [vmem:[%s0] sm:$0xff]
  %v15 = vunpack.c.l.bf16 %v14
  %v16 = vunpack.c.h.bf16 %v14
  %v17 = vld [vmem:[%s1] ss:$8 sm:$0x3]
  %v19 = vlaneseq
  %v20 = vshrl.u32 %v19, 7
  %v21 = vsub.s32 0, %v20
  %v22 = vrot.slane %v17, %v21
  %v23 = vlaneseq
  %v24 = vshrl.u32 %v23, 7
  %v25 = vsub.s32 1, %v24
  %v26 = vrot.slane %v17, %v25
  %v29 = vmul.f32 %v15, %v22
  %v30 = vmul.f32 %v16, %v26
  %v31 = vadd.f32 %v29, 0.0
  %v32 = vadd.f32 %v30, 0.0
  %s33 = scalar_lea.vmem %s0, 8
  %v34 = vld [vmem:[%s33] sm:$0xff]
  %v35 = vunpack.c.l.bf16 %v34
  %v36 = vunpack.c.h.bf16 %v34
  %s37 = scalar_lea.vmem %s1, 1
  %v38 = vld [vmem:[%s37] ss:$8 sm:$0x3]
  %v40 = vlaneseq
  %v41 = vshrl.u32 %v40, 7
  %v42 = vsub.s32 0, %v41
  %v43 = vrot.slane %v38, %v42
  %v44 = vlaneseq
  %v45 = vshrl.u32 %v44, 7
  %v46 = vsub.s32 1, %v45
  %v47 = vrot.slane %v38, %v46
  %v50 = vmul.f32 %v35, %v43
  %v51 = vmul.f32 %v36, %v47
  %v52 = vadd.f32 %v31, %v50
  %v53 = vadd.f32 %v32, %v51
  %s54 = scalar_lea.vmem %s0, 16
  %v55 = vld [vmem:[%s54] sm:$0xff]
  %v56 = vunpack.c.l.bf16 %v55
  %v57 = vunpack.c.h.bf16 %v55
  %s58 = scalar_lea.vmem %s1, 2
  %v59 = vld [vmem:[%s58] ss:$8 sm:$0x3]
  %v61 = vlaneseq
  %v62 = vshrl.u32 %v61, 7
  %v63 = vsub.s32 0, %v62
  %v64 = vrot.slane %v59, %v63
  %v65 = vlaneseq
  %v66 = vshrl.u32 %v65, 7
  %v67 = vsub.s32 1, %v66
  %v68 = vrot.slane %v59, %v67
  %v71 = vmul.f32 %v56, %v64
  %v72 = vmul.f32 %v57, %v68
  %v73 = vadd.f32 %v52, %v71
  %v74 = vadd.f32 %v53, %v72
  %s75 = scalar_lea.vmem %s0, 24
  %v76 = vld [vmem:[%s75] sm:$0xff]
  %v77 = vunpack.c.l.bf16 %v76
  %v78 = vunpack.c.h.bf16 %v76
  %s79 = scalar_lea.vmem %s1, 3
  %v80 = vld [vmem:[%s79] ss:$8 sm:$0x3]
  %v82 = vlaneseq
  %v83 = vshrl.u32 %v82, 7
  %v84 = vsub.s32 0, %v83
  %v85 = vrot.slane %v80, %v84
  %v86 = vlaneseq
  %v87 = vshrl.u32 %v86, 7
  %v88 = vsub.s32 1, %v87
  %v89 = vrot.slane %v80, %v88
  %v92 = vmul.f32 %v77, %v85
  %v93 = vmul.f32 %v78, %v89
  %v94 = vadd.f32 %v73, %v92
  %v95 = vadd.f32 %v74, %v93
  %s96 = scalar_lea.vmem %s0, 32
  %v97 = vld [vmem:[%s96] sm:$0xff]
  %v98 = vunpack.c.l.bf16 %v97
  %v99 = vunpack.c.h.bf16 %v97
  %s100 = scalar_lea.vmem %s1, 4
  %v101 = vld [vmem:[%s100] ss:$8 sm:$0x3]
  %v103 = vlaneseq
  %v104 = vshrl.u32 %v103, 7
  %v105 = vsub.s32 0, %v104
  %v106 = vrot.slane %v101, %v105
  %v107 = vlaneseq
  %v108 = vshrl.u32 %v107, 7
  %v109 = vsub.s32 1, %v108
  %v110 = vrot.slane %v101, %v109
  %v113 = vmul.f32 %v98, %v106
  %v114 = vmul.f32 %v99, %v110
  %v115 = vadd.f32 %v94, %v113
  %v116 = vadd.f32 %v95, %v114
  %s117 = scalar_lea.vmem %s0, 40
  %v118 = vld [vmem:[%s117] sm:$0xff]
  %v119 = vunpack.c.l.bf16 %v118
  %v120 = vunpack.c.h.bf16 %v118
  %s121 = scalar_lea.vmem %s1, 5
  %v122 = vld [vmem:[%s121] ss:$8 sm:$0x3]
  %v124 = vlaneseq
  %v125 = vshrl.u32 %v124, 7
  %v126 = vsub.s32 0, %v125
  %v127 = vrot.slane %v122, %v126
  %v128 = vlaneseq
  %v129 = vshrl.u32 %v128, 7
  %v130 = vsub.s32 1, %v129
  %v131 = vrot.slane %v122, %v130
  %v134 = vmul.f32 %v119, %v127
  %v135 = vmul.f32 %v120, %v131
  %v136 = vadd.f32 %v115, %v134
  %v137 = vadd.f32 %v116, %v135
  %s138 = scalar_lea.vmem %s0, 48
  %v139 = vld [vmem:[%s138] sm:$0xff]
  %v140 = vunpack.c.l.bf16 %v139
  %v141 = vunpack.c.h.bf16 %v139
  %s142 = scalar_lea.vmem %s1, 6
  %v143 = vld [vmem:[%s142] ss:$8 sm:$0x3]
  %v145 = vlaneseq
  %v146 = vshrl.u32 %v145, 7
  %v147 = vsub.s32 0, %v146
  %v148 = vrot.slane %v143, %v147
  %v149 = vlaneseq
  %v150 = vshrl.u32 %v149, 7
  %v151 = vsub.s32 1, %v150
  %v152 = vrot.slane %v143, %v151
  %v155 = vmul.f32 %v140, %v148
  %v156 = vmul.f32 %v141, %v152
  %v157 = vadd.f32 %v136, %v155
  %v158 = vadd.f32 %v137, %v156
  %s159 = scalar_lea.vmem %s0, 56
  %v160 = vld [vmem:[%s159] sm:$0xff]
  %v161 = vunpack.c.l.bf16 %v160
  %v162 = vunpack.c.h.bf16 %v160
  %s163 = scalar_lea.vmem %s1, 7
  %v164 = vld [vmem:[%s163] ss:$8 sm:$0x3]
  %v166 = vlaneseq
  %v167 = vshrl.u32 %v166, 7
  %v168 = vsub.s32 0, %v167
  %v169 = vrot.slane %v164, %v168
  %v170 = vlaneseq
  %v171 = vshrl.u32 %v170, 7
  %v172 = vsub.s32 1, %v171
  %v173 = vrot.slane %v164, %v172
  %v176 = vmul.f32 %v161, %v169
  %v177 = vmul.f32 %v162, %v173
  %v178 = vadd.f32 %v157, %v176
  %v179 = vadd.f32 %v158, %v177
  %s180 = scalar_lea.vmem %s0, 64
  %v181 = vld [vmem:[%s180] sm:$0xff]
  %v182 = vunpack.c.l.bf16 %v181
  %v183 = vunpack.c.h.bf16 %v181
  %s184 = scalar_lea.vmem %s1, 16
  %v185 = vld [vmem:[%s184] ss:$8 sm:$0x3]
  %v187 = vlaneseq
  %v188 = vshrl.u32 %v187, 7
  %v189 = vsub.s32 0, %v188
  %v190 = vrot.slane %v185, %v189
  %v191 = vlaneseq
  %v192 = vshrl.u32 %v191, 7
  %v193 = vsub.s32 1, %v192
  %v194 = vrot.slane %v185, %v193
  %v197 = vmul.f32 %v182, %v190
  %v198 = vmul.f32 %v183, %v194
  %v199 = vadd.f32 %v178, %v197
  %v200 = vadd.f32 %v179, %v198
  %v201 = vld [vmem:[%s2] sm:$0x3]
  %v203 = vlaneseq
  %v204 = vshrl.u32 %v203, 7
  %v205 = vsub.s32 0, %v204
  %v206 = vrot.slane %v201, %v205
  %v207 = vlaneseq
  %v208 = vshrl.u32 %v207, 7
  %v209 = vsub.s32 1, %v208
  %v210 = vrot.slane %v201, %v209
  %v213 = vadd.f32 %v199, %v206
  %v214 = vadd.f32 %v200, %v210
  %v215 = vadd.f32 %v213, 3.0
  %v216 = vadd.f32 %v214, 3.0
  %v217 = vmax.f32 %v215, 0.0
  %v218 = vmax.f32 %v216, 0.0
  %v219 = vmin.f32 %v217, 6.0
  %v220 = vmin.f32 %v218, 6.0
  %v221 = vmul.f32 %v213, %v219
  %v222 = vmul.f32 %v214, %v220
  %v223 = vmul.f32 %v221, 0.16666667
  %v224 = vmul.f32 %v222, 0.16666667
  %v225 = vpack.c.bf16 %v223, %v223
  %v226 = vpack.c.bf16 %v224, %v224
  %v229 = vunpack.c.l.b16 %v225
  %v230 = vunpack.c.l.b16 %v226
  %v231 = vpack.c.b16 %v230, %v229
  %vm233 = vcmask 1043456
  %vm234 = vcmask 130052
  %vm235 = vmor %vm234, %vm233
  %236 = vst.msk [vmem:[%s3] sm:$0xff] %vm235, %v231
  // Predicated region
  $region14: #{dbnet_forward.33} parent=0 // pred_check
    _
  $region15: #{dbnet_forward.33} parent=0 // pred_check_branch
    %238 = sbr.rel (0) target = $region17
  $region16: #{dbnet_forward.33} parent=0 // pred_region
    _
  $region17: #{dbnet_forward.33} parent=0 // pred_fallthru
    _
  // Predicated region
  $region18: #{dbnet_forward.33} parent=0 // pred_check
    _
  $region19: #{dbnet_forward.33} parent=0 // pred_check_branch
    %240 = sbr.rel (0) target = $region21
  $region20: #{dbnet_forward.33} parent=0 // pred_region
    _
  $region21: #{dbnet_forward.33} parent=0 // pred_fallthru
    _

// kernel: dbnet_forward.34
$region0: #{dbnet_forward.34}
  #allocation0 [shape = 'u32[]', space=smem, size = 0x4, offset = 0x4, fixed_abs, tag = 'smem constant byte address 0x4 - core index']
  #allocation1 [shape = 'u32[144,128]{1,0:T(1,128)}', space=vmem, size = 0x12000, scoped, tag = 'internal scratch']
  %s0 = inlined_call_operand.vmem [shape: bf16[8,144], index: 0, kind: input, shape index: {}]
  %s1 = inlined_call_operand.vmem [shape: bf16[256,128], index: 1, kind: input, shape index: {}]
  %s2 = inlined_call_operand.vmem [shape: f32[1,128], index: 2, kind: input, shape index: {}]
  %s3 = inlined_call_operand.vmem [shape: bf16[8,96], index: 3, kind: output, shape index: {}]
  %s4 = sld [smem:[#allocation0]]
  $region22: #{dbnet_forward.34} parent=0
    _
  %s6 = ssub.s32 1, %s4
  %s7 = scalar_select 0, %s6, %s4
  // Predicated region
  $region2: #{dbnet_forward.34} parent=0 // pred_check
    _
  $region3: #{dbnet_forward.34} parent=0 // pred_check_branch
    %9 = sbr.rel (0) target = $region5
  $region4: #{dbnet_forward.34} parent=0 // pred_region
    _
  $region5: #{dbnet_forward.34} parent=0 // pred_fallthru
    _
  // Predicated region
  $region6: #{dbnet_forward.34} parent=0 // pred_check
    _
  $region7: #{dbnet_forward.34} parent=0 // pred_check_branch
    %11 = sbr.rel (0) target = $region9
  $region8: #{dbnet_forward.34} parent=0 // pred_region
    _
  $region9: #{dbnet_forward.34} parent=0 // pred_fallthru
    _
  // Predicated region
  $region10: #{dbnet_forward.34} parent=0 // pred_check
    _
  $region11: #{dbnet_forward.34} parent=0 // pred_check_branch
    %13 = sbr.rel (0) target = $region13
  $region12: #{dbnet_forward.34} parent=0 // pred_region
    _
  $region13: #{dbnet_forward.34} parent=0 // pred_fallthru
    _
  %v15 = vld [vmem:[%s0] sm:$0xff]
  %v17 = vunpack.c.l.b16 %v15
  %v18 = vunpack.c.h.b16 %v15
  %v19 = vpack.c.b16 %v17, %v17
  %v20 = vpack.c.b16 %v18, %v18
  %vm22 = vcmask 130048
  %v25 = vsel %vm22, %v20, 0
  %v27 = vld [vmem:[%s1] sm:$0xf]
  %v28 = vld [vmem:[%s1 + $0x4] sm:$0xf]
  %v29 = vld [vmem:[%s1 + $0x8] sm:$0xf]
  %v30 = vld [vmem:[%s1 + $0xc] sm:$0xf]
  %v31 = vld [vmem:[%s1 + $0x10] sm:$0xf]
  %v32 = vld [vmem:[%s1 + $0x14] sm:$0xf]
  %v33 = vld [vmem:[%s1 + $0x18] sm:$0xf]
  %v34 = vld [vmem:[%s1 + $0x1c] sm:$0xf]
  %v35 = vld [vmem:[%s1 + $0x20] sm:$0xf]
  %v36 = vld [vmem:[%s1 + $0x24] sm:$0xf]
  %v37 = vld [vmem:[%s1 + $0x28] sm:$0xf]
  %v38 = vld [vmem:[%s1 + $0x2c] sm:$0xf]
  %v39 = vld [vmem:[%s1 + $0x30] sm:$0xf]
  %v40 = vld [vmem:[%s1 + $0x34] sm:$0xf]
  %v41 = vld [vmem:[%s1 + $0x38] sm:$0xf]
  %v42 = vld [vmem:[%s1 + $0x3c] sm:$0xf]
  %v43 = vld [vmem:[%s1 + $0x40] sm:$0xf]
  %v44 = vld [vmem:[%s1 + $0x44] sm:$0xf]
  %v45 = vld [vmem:[%s1 + $0x48] sm:$0xf]
  %v46 = vld [vmem:[%s1 + $0x4c] sm:$0xf]
  %v47 = vld [vmem:[%s1 + $0x50] sm:$0xf]
  %v48 = vld [vmem:[%s1 + $0x54] sm:$0xf]
  %v49 = vld [vmem:[%s1 + $0x58] sm:$0xf]
  %v50 = vld [vmem:[%s1 + $0x5c] sm:$0xf]
  %v51 = vld [vmem:[%s1 + $0x60] sm:$0xf]
  %v52 = vld [vmem:[%s1 + $0x64] sm:$0xf]
  %v53 = vld [vmem:[%s1 + $0x68] sm:$0xf]
  %v54 = vld [vmem:[%s1 + $0x6c] sm:$0xf]
  %v55 = vld [vmem:[%s1 + $0x70] sm:$0xf]
  %v56 = vld [vmem:[%s1 + $0x74] sm:$0xf]
  %v57 = vld [vmem:[%s1 + $0x78] sm:$0xf]
  %v58 = vld [vmem:[%s1 + $0x7c] sm:$0xf]
  %v59 = vld [vmem:[%s2] sm:$0x1]
  %v61 = vlaneseq
  %v62 = vshrl.u32 %v61, 7
  %v63 = vsub.s32 0, %v62
  %v64 = vrot.slane %v59, %v63
  %v98 = vunpack.c.l.b16 %v27
  %v99 = vunpack.c.l.b16 %v28
  %v100 = vunpack.c.l.b16 %v29
  %v101 = vunpack.c.l.b16 %v30
  %v102 = vunpack.c.l.b16 %v31
  %v103 = vunpack.c.l.b16 %v32
  %v104 = vunpack.c.l.b16 %v33
  %v105 = vunpack.c.l.b16 %v34
  %v106 = vunpack.c.l.b16 %v35
  %v107 = vunpack.c.l.b16 %v36
  %v108 = vunpack.c.l.b16 %v37
  %v109 = vunpack.c.l.b16 %v38
  %v110 = vunpack.c.l.b16 %v39
  %v111 = vunpack.c.l.b16 %v40
  %v112 = vunpack.c.l.b16 %v41
  %v113 = vunpack.c.l.b16 %v42
  %v114 = vunpack.c.l.b16 %v43
  %v115 = vunpack.c.l.b16 %v44
  %v116 = vunpack.c.l.b16 %v45
  %v117 = vunpack.c.l.b16 %v46
  %v118 = vunpack.c.l.b16 %v47
  %v119 = vunpack.c.l.b16 %v48
  %v120 = vunpack.c.l.b16 %v49
  %v121 = vunpack.c.l.b16 %v50
  %v122 = vunpack.c.l.b16 %v51
  %v123 = vunpack.c.l.b16 %v52
  %v124 = vunpack.c.l.b16 %v53
  %v125 = vunpack.c.l.b16 %v54
  %v126 = vunpack.c.l.b16 %v55
  %v127 = vunpack.c.l.b16 %v56
  %v128 = vunpack.c.l.b16 %v57
  %v129 = vunpack.c.l.b16 %v58
  %v130 = vpack.c.b16 %v99, %v98
  %v131 = vpack.c.b16 %v101, %v100
  %v132 = vpack.c.b16 %v103, %v102
  %v133 = vpack.c.b16 %v105, %v104
  %v134 = vpack.c.b16 %v107, %v106
  %v135 = vpack.c.b16 %v109, %v108
  %v136 = vpack.c.b16 %v111, %v110
  %v137 = vpack.c.b16 %v113, %v112
  %v138 = vpack.c.b16 %v115, %v114
  %v139 = vpack.c.b16 %v117, %v116
  %v140 = vpack.c.b16 %v119, %v118
  %v141 = vpack.c.b16 %v121, %v120
  %v142 = vpack.c.b16 %v123, %v122
  %v143 = vpack.c.b16 %v125, %v124
  %v144 = vpack.c.b16 %v127, %v126
  %v145 = vpack.c.b16 %v129, %v128
  %162 = vmatprep.subr.bf16.mxu0 0
  %163 = vmatpush1.bf16.msra.mxu0 %v130
  %164 = vmatprep.subr.bf16.mxu0 0
  %165 = vmatpush1.bf16.msra.mxu0 %v131
  %166 = vmatprep.subr.bf16.mxu0 0
  %167 = vmatpush1.bf16.msra.mxu0 %v132
  %168 = vmatprep.subr.bf16.mxu0 0
  %169 = vmatpush1.bf16.msra.mxu0 %v133
  %170 = vmatprep.subr.bf16.mxu0 0
  %171 = vmatpush1.bf16.msra.mxu0 %v134
  %172 = vmatprep.subr.bf16.mxu0 0
  %173 = vmatpush1.bf16.msra.mxu0 %v135
  %174 = vmatprep.subr.bf16.mxu0 0
  %175 = vmatpush1.bf16.msra.mxu0 %v136
  %176 = vmatprep.subr.bf16.mxu0 0
  %177 = vmatpush1.bf16.msra.mxu0 %v137
  %178 = vmatprep.subr.bf16.mxu0 0
  %179 = vmatpush1.bf16.msra.mxu0 %v138
  %180 = vmatprep.subr.bf16.mxu0 0
  %181 = vmatpush1.bf16.msra.mxu0 %v139
  %182 = vmatprep.subr.bf16.mxu0 0
  %183 = vmatpush1.bf16.msra.mxu0 %v140
  %184 = vmatprep.subr.bf16.mxu0 0
  %185 = vmatpush1.bf16.msra.mxu0 %v141
  %186 = vmatprep.subr.bf16.mxu0 0
  %187 = vmatpush1.bf16.msra.mxu0 %v142
  %188 = vmatprep.subr.bf16.mxu0 0
  %189 = vmatpush1.bf16.msra.mxu0 %v143
  %190 = vmatprep.subr.bf16.mxu0 0
  %191 = vmatpush1.bf16.msra.mxu0 %v144
  %192 = vmatprep.subr.bf16.mxu0 0
  %193 = vmatpush1.bf16.msra.mxu0 %v145
  %194 = vmatprep.mubr.bf16.mxu0 %v25
  %195 = vmatmul.mubr.bf16.gmra.mrb[0].mxu0 %v19
  %v196 = vpop.f32.mrb[0].mxu0
  %v197 = vadd.f32 %v64, %v196
  %v198 = vpop.f32.mrb[0].mxu0
  %v199 = vpop.f32.mrb[0].mxu0
  %v200 = vpop.f32.mrb[0].mxu0
  %201 = vdwg.mxu0
  %v202 = vpack.c.bf16 %v197, %v197
  %vm203 = vcmask 781312
  %204 = vst.msk [vmem:[%s3] sm:$0xf] %vm203, %v202
  // Predicated region
  $region14: #{dbnet_forward.34} parent=0 // pred_check
    _
  $region15: #{dbnet_forward.34} parent=0 // pred_check_branch
    %206 = sbr.rel (0) target = $region17
  $region16: #{dbnet_forward.34} parent=0 // pred_region
    _
  $region17: #{dbnet_forward.34} parent=0 // pred_fallthru
    _
  // Predicated region
  $region18: #{dbnet_forward.34} parent=0 // pred_check
    _
  $region19: #{dbnet_forward.34} parent=0 // pred_check_branch
    %208 = sbr.rel (0) target = $region21
  $region20: #{dbnet_forward.34} parent=0 // pred_region
    _
  $region21: #{dbnet_forward.34} parent=0 // pred_fallthru
    _

// kernel: dbnet_forward.42
$region0: #{dbnet_forward.42}
  #allocation0 [shape = 'u32[]', space=smem, size = 0x4, offset = 0x4, fixed_abs, tag = 'smem constant byte address 0x4 - core index']
  #allocation1 [shape = 'u32[144,128]{1,0:T(1,128)}', space=vmem, size = 0x12000, scoped, tag = 'internal scratch']
  %s0 = inlined_call_operand.vmem [shape: bf16[8,288], index: 0, kind: input, shape index: {}]
  %s1 = inlined_call_operand.vmem [shape: bf16[384,128], index: 1, kind: input, shape index: {}]
  %s2 = inlined_call_operand.vmem [shape: f32[1,128], index: 2, kind: input, shape index: {}]
  %s3 = inlined_call_operand.vmem [shape: bf16[8,8], index: 3, kind: output, shape index: {}]
  %s4 = sld [smem:[#allocation0]]
  $region22: #{dbnet_forward.42} parent=0
    _
  %s6 = ssub.s32 1, %s4
  %s7 = scalar_select 0, %s6, %s4
  // Predicated region
  $region2: #{dbnet_forward.42} parent=0 // pred_check
    _
  $region3: #{dbnet_forward.42} parent=0 // pred_check_branch
    %9 = sbr.rel (0) target = $region5
  $region4: #{dbnet_forward.42} parent=0 // pred_region
    _
  $region5: #{dbnet_forward.42} parent=0 // pred_fallthru
    _
  // Predicated region
  $region6: #{dbnet_forward.42} parent=0 // pred_check
    _
  $region7: #{dbnet_forward.42} parent=0 // pred_check_branch
    %11 = sbr.rel (0) target = $region9
  $region8: #{dbnet_forward.42} parent=0 // pred_region
    _
  $region9: #{dbnet_forward.42} parent=0 // pred_fallthru
    _
  // Predicated region
  $region10: #{dbnet_forward.42} parent=0 // pred_check
    _
  $region11: #{dbnet_forward.42} parent=0 // pred_check_branch
    %13 = sbr.rel (0) target = $region13
  $region12: #{dbnet_forward.42} parent=0 // pred_region
    _
  $region13: #{dbnet_forward.42} parent=0 // pred_fallthru
    _
  %v15 = vld [vmem:[%s0] sm:$0xff]
  %v16 = vld [vmem:[%s0 + $0x8] sm:$0xf]
  %v19 = vunpack.c.l.b16 %v15
  %v20 = vunpack.c.h.b16 %v15
  %v21 = vunpack.c.l.b16 %v16
  %v22 = vpack.c.b16 %v19, %v19
  %v23 = vpack.c.b16 %v20, %v20
  %v24 = vpack.c.b16 %v21, %v21
  %vm27 = vcmask 261120
  %v30 = vsel %vm27, %v24, 0
  %v32 = vld [vmem:[%s1] sm:$0xf]
  %v33 = vld [vmem:[%s1 + $0x4] sm:$0xf]
  %v34 = vld [vmem:[%s1 + $0x8] sm:$0xf]
  %v35 = vld [vmem:[%s1 + $0xc] sm:$0xf]
  %v36 = vld [vmem:[%s1 + $0x10] sm:$0xf]
  %v37 = vld [vmem:[%s1 + $0x14] sm:$0xf]
  %v38 = vld [vmem:[%s1 + $0x18] sm:$0xf]
  %v39 = vld [vmem:[%s1 + $0x1c] sm:$0xf]
  %v40 = vld [vmem:[%s1 + $0x20] sm:$0xf]
  %v41 = vld [vmem:[%s1 + $0x24] sm:$0xf]
  %v42 = vld [vmem:[%s1 + $0x28] sm:$0xf]
  %v43 = vld [vmem:[%s1 + $0x2c] sm:$0xf]
  %v44 = vld [vmem:[%s1 + $0x30] sm:$0xf]
  %v45 = vld [vmem:[%s1 + $0x34] sm:$0xf]
  %v46 = vld [vmem:[%s1 + $0x38] sm:$0xf]
  %v47 = vld [vmem:[%s1 + $0x3c] sm:$0xf]
  %v48 = vld [vmem:[%s1 + $0x40] sm:$0xf]
  %v49 = vld [vmem:[%s1 + $0x44] sm:$0xf]
  %v50 = vld [vmem:[%s1 + $0x48] sm:$0xf]
  %v51 = vld [vmem:[%s1 + $0x4c] sm:$0xf]
  %v52 = vld [vmem:[%s1 + $0x50] sm:$0xf]
  %v53 = vld [vmem:[%s1 + $0x54] sm:$0xf]
  %v54 = vld [vmem:[%s1 + $0x58] sm:$0xf]
  %v55 = vld [vmem:[%s1 + $0x5c] sm:$0xf]
  %v56 = vld [vmem:[%s1 + $0x60] sm:$0xf]
  %v57 = vld [vmem:[%s1 + $0x64] sm:$0xf]
  %v58 = vld [vmem:[%s1 + $0x68] sm:$0xf]
  %v59 = vld [vmem:[%s1 + $0x6c] sm:$0xf]
  %v60 = vld [vmem:[%s1 + $0x70] sm:$0xf]
  %v61 = vld [vmem:[%s1 + $0x74] sm:$0xf]
  %v62 = vld [vmem:[%s1 + $0x78] sm:$0xf]
  %v63 = vld [vmem:[%s1 + $0x7c] sm:$0xf]
  %v64 = vld [vmem:[%s1 + $0x80] sm:$0xf]
  %v65 = vld [vmem:[%s1 + $0x84] sm:$0xf]
  %v66 = vld [vmem:[%s1 + $0x88] sm:$0xf]
  %v67 = vld [vmem:[%s1 + $0x8c] sm:$0xf]
  %v68 = vld [vmem:[%s1 + $0x90] sm:$0xf]
  %v69 = vld [vmem:[%s1 + $0x94] sm:$0xf]
  %v70 = vld [vmem:[%s1 + $0x98] sm:$0xf]
  %v71 = vld [vmem:[%s1 + $0x9c] sm:$0xf]
  %v72 = vld [vmem:[%s1 + $0xa0] sm:$0xf]
  %v73 = vld [vmem:[%s1 + $0xa4] sm:$0xf]
  %v74 = vld [vmem:[%s1 + $0xa8] sm:$0xf]
  %v75 = vld [vmem:[%s1 + $0xac] sm:$0xf]
  %v76 = vld [vmem:[%s1 + $0xb0] sm:$0xf]
  %v77 = vld [vmem:[%s1 + $0xb4] sm:$0xf]
  %v78 = vld [vmem:[%s1 + $0xb8] sm:$0xf]
  %v79 = vld [vmem:[%s1 + $0xbc] sm:$0xf]
  %v80 = vld [vmem:[%s2] sm:$0x1]
  %v82 = vlaneseq
  %v83 = vshrl.u32 %v82, 7
  %v84 = vsub.s32 0, %v83
  %v85 = vrot.slane %v80, %v84
  %v135 = vunpack.c.l.b16 %v32
  %v136 = vunpack.c.l.b16 %v33
  %v137 = vunpack.c.l.b16 %v34
  %v138 = vunpack.c.l.b16 %v35
  %v139 = vunpack.c.l.b16 %v36
  %v140 = vunpack.c.l.b16 %v37
  %v141 = vunpack.c.l.b16 %v38
  %v142 = vunpack.c.l.b16 %v39
  %v143 = vunpack.c.l.b16 %v40
  %v144 = vunpack.c.l.b16 %v41
  %v145 = vunpack.c.l.b16 %v42
  %v146 = vunpack.c.l.b16 %v43
  %v147 = vunpack.c.l.b16 %v44
  %v148 = vunpack.c.l.b16 %v45
  %v149 = vunpack.c.l.b16 %v46
  %v150 = vunpack.c.l.b16 %v47
  %v151 = vunpack.c.l.b16 %v48
  %v152 = vunpack.c.l.b16 %v49
  %v153 = vunpack.c.l.b16 %v50
  %v154 = vunpack.c.l.b16 %v51
  %v155 = vunpack.c.l.b16 %v52
  %v156 = vunpack.c.l.b16 %v53
  %v157 = vunpack.c.l.b16 %v54
  %v158 = vunpack.c.l.b16 %v55
  %v159 = vunpack.c.l.b16 %v56
  %v160 = vunpack.c.l.b16 %v57
  %v161 = vunpack.c.l.b16 %v58
  %v162 = vunpack.c.l.b16 %v59
  %v163 = vunpack.c.l.b16 %v60
  %v164 = vunpack.c.l.b16 %v61
  %v165 = vunpack.c.l.b16 %v62
  %v166 = vunpack.c.l.b16 %v63
  %v167 = vunpack.c.l.b16 %v64
  %v168 = vunpack.c.l.b16 %v65
  %v169 = vunpack.c.l.b16 %v66
  %v170 = vunpack.c.l.b16 %v67
  %v171 = vunpack.c.l.b16 %v68
  %v172 = vunpack.c.l.b16 %v69
  %v173 = vunpack.c.l.b16 %v70
  %v174 = vunpack.c.l.b16 %v71
  %v175 = vunpack.c.l.b16 %v72
  %v176 = vunpack.c.l.b16 %v73
  %v177 = vunpack.c.l.b16 %v74
  %v178 = vunpack.c.l.b16 %v75
  %v179 = vunpack.c.l.b16 %v76
  %v180 = vunpack.c.l.b16 %v77
  %v181 = vunpack.c.l.b16 %v78
  %v182 = vunpack.c.l.b16 %v79
  %v183 = vpack.c.b16 %v136, %v135
  %v184 = vpack.c.b16 %v138, %v137
  %v185 = vpack.c.b16 %v140, %v139
  %v186 = vpack.c.b16 %v142, %v141
  %v187 = vpack.c.b16 %v144, %v143
  %v188 = vpack.c.b16 %v146, %v145
  %v189 = vpack.c.b16 %v148, %v147
  %v190 = vpack.c.b16 %v150, %v149
  %v191 = vpack.c.b16 %v152, %v151
  %v192 = vpack.c.b16 %v154, %v153
  %v193 = vpack.c.b16 %v156, %v155
  %v194 = vpack.c.b16 %v158, %v157
  %v195 = vpack.c.b16 %v160, %v159
  %v196 = vpack.c.b16 %v162, %v161
  %v197 = vpack.c.b16 %v164, %v163
  %v198 = vpack.c.b16 %v166, %v165
  %v199 = vpack.c.b16 %v168, %v167
  %v200 = vpack.c.b16 %v170, %v169
  %v201 = vpack.c.b16 %v172, %v171
  %v202 = vpack.c.b16 %v174, %v173
  %v203 = vpack.c.b16 %v176, %v175
  %v204 = vpack.c.b16 %v178, %v177
  %v205 = vpack.c.b16 %v180, %v179
  %v206 = vpack.c.b16 %v182, %v181
  %231 = vmatprep.subr.bf16.mxu0 0
  %232 = vmatpush1.bf16.msra.mxu0 %v183
  %233 = vmatprep.subr.bf16.mxu0 0
  %234 = vmatpush1.bf16.msra.mxu0 %v184
  %235 = vmatprep.subr.bf16.mxu0 0
  %236 = vmatpush1.bf16.msra.mxu0 %v185
  %237 = vmatprep.subr.bf16.mxu0 0
  %238 = vmatpush1.bf16.msra.mxu0 %v186
  %239 = vmatprep.subr.bf16.mxu0 0
  %240 = vmatpush1.bf16.msra.mxu0 %v187
  %241 = vmatprep.subr.bf16.mxu0 0
  %242 = vmatpush1.bf16.msra.mxu0 %v188
  %243 = vmatprep.subr.bf16.mxu0 0
  %244 = vmatpush1.bf16.msra.mxu0 %v189
  %245 = vmatprep.subr.bf16.mxu0 0
  %246 = vmatpush1.bf16.msra.mxu0 %v190
  %247 = vmatprep.subr.bf16.mxu0 0
  %248 = vmatpush1.bf16.msra.mxu0 %v191
  %249 = vmatprep.subr.bf16.mxu0 0
  %250 = vmatpush1.bf16.msra.mxu0 %v192
  %251 = vmatprep.subr.bf16.mxu0 0
  %252 = vmatpush1.bf16.msra.mxu0 %v193
  %253 = vmatprep.subr.bf16.mxu0 0
  %254 = vmatpush1.bf16.msra.mxu0 %v194
  %255 = vmatprep.subr.bf16.mxu0 0
  %256 = vmatpush1.bf16.msra.mxu0 %v195
  %257 = vmatprep.subr.bf16.mxu0 0
  %258 = vmatpush1.bf16.msra.mxu0 %v196
  %259 = vmatprep.subr.bf16.mxu0 0
  %260 = vmatpush1.bf16.msra.mxu0 %v197
  %261 = vmatprep.subr.bf16.mxu0 0
  %262 = vmatpush1.bf16.msra.mxu0 %v198
  %263 = vmatprep.mubr.bf16.mxu0 %v23
  %264 = vmatmul.mubr.bf16.gmra.mrb[0].mxu0 %v22
  %v265 = vpop.f32.mrb[0].mxu0
  %v266 = vadd.f32 %v85, %v265
  %v267 = vpop.f32.mrb[0].mxu0
  %v268 = vpop.f32.mrb[0].mxu0
  %v269 = vpop.f32.mrb[0].mxu0
  %270 = vdwg.mxu0
  %271 = vmatprep.subr.bf16.mxu0 0
  %272 = vmatpush1.bf16.msra.mxu0 %v199
  %273 = vmatprep.subr.bf16.mxu0 0
  %274 = vmatpush1.bf16.msra.mxu0 %v200
  %275 = vmatprep.subr.bf16.mxu0 0
  %276 = vmatpush1.bf16.msra.mxu0 %v201
  %277 = vmatprep.subr.bf16.mxu0 0
  %278 = vmatpush1.bf16.msra.mxu0 %v202
  %279 = vmatprep.subr.bf16.mxu0 0
  %280 = vmatpush1.bf16.msra.mxu0 %v203
  %281 = vmatprep.subr.bf16.mxu0 0
  %282 = vmatpush1.bf16.msra.mxu0 %v204
  %283 = vmatprep.subr.bf16.mxu0 0
  %284 = vmatpush1.bf16.msra.mxu0 %v205
  %285 = vmatprep.subr.bf16.mxu0 0
  %286 = vmatpush1.bf16.msra.mxu0 %v206
  %287 = vmatprep.subr.bf16.mxu0 0
  %288 = vmatpush1.bf16.msra.mxu0 0
  %289 = vmatprep.subr.bf16.mxu0 0
  %290 = vmatpush1.bf16.msra.mxu0 0
  %291 = vmatprep.subr.bf16.mxu0 0
  %292 = vmatpush1.bf16.msra.mxu0 0
  %293 = vmatprep.subr.bf16.mxu0 0
  %294 = vmatpush1.bf16.msra.mxu0 0
  %295 = vmatprep.subr.bf16.mxu0 0
  %296 = vmatpush1.bf16.msra.mxu0 0
  %297 = vmatprep.subr.bf16.mxu0 0
  %298 = vmatpush1.bf16.msra.mxu0 0
  %299 = vmatprep.subr.bf16.mxu0 0
  %300 = vmatpush1.bf16.msra.mxu0 0
  %301 = vmatprep.subr.bf16.mxu0 0
  %302 = vmatpush1.bf16.msra.mxu0 0
  %303 = vmatprep.mubr.bf16.mxu0 0
  %304 = vmatmul.mubr.bf16.gmra.mrb[0].mxu0 %v30
  %v305 = vpop.f32.mrb[0].mxu0
  %v306 = vadd.f32 %v266, %v305
  %v307 = vpop.f32.mrb[0].mxu0
  %v308 = vpop.f32.mrb[0].mxu0
  %v309 = vpop.f32.mrb[0].mxu0
  %310 = vdwg.mxu0
  %v311 = vpack.c.bf16 %v306, %v306
  %vm312 = vcmask 60416
  %313 = vst.msk [vmem:[%s3] sm:$0xf] %vm312, %v311
  // Predicated region
  $region14: #{dbnet_forward.42} parent=0 // pred_check
    _
  $region15: #{dbnet_forward.42} parent=0 // pred_check_branch
    %315 = sbr.rel (0) target = $region17
  $region16: #{dbnet_forward.42} parent=0 // pred_region
    _
  $region17: #{dbnet_forward.42} parent=0 // pred_fallthru
    _
  // Predicated region
  $region18: #{dbnet_forward.42} parent=0 // pred_check
    _
  $region19: #{dbnet_forward.42} parent=0 // pred_check_branch
    %317 = sbr.rel (0) target = $region21
  $region20: #{dbnet_forward.42} parent=0 // pred_region
    _
  $region21: #{dbnet_forward.42} parent=0 // pred_fallthru
    _

// kernel: dbnet_forward.40
$region0: #{dbnet_forward.40}
  #allocation0 [shape = 'u32[]', space=smem, size = 0x4, offset = 0x4, fixed_abs, tag = 'smem constant byte address 0x4 - core index']
  #allocation1 [shape = 'u32[144,128]{1,0:T(1,128)}', space=vmem, size = 0x12000, scoped, tag = 'internal scratch']
  %s0 = inlined_call_operand.vmem [shape: bf16[32,288], index: 0, kind: input, shape index: {}]
  %s1 = inlined_call_operand.vmem [shape: bf16[384,128], index: 1, kind: input, shape index: {}]
  %s2 = inlined_call_operand.vmem [shape: f32[1,128], index: 2, kind: input, shape index: {}]
  %s3 = inlined_call_operand.vmem [shape: bf16[32,8], index: 3, kind: output, shape index: {}]
  %s4 = sld [smem:[#allocation0]]
  $region22: #{dbnet_forward.40} parent=0
    _
  %s6 = ssub.s32 1, %s4
  %s7 = scalar_select 0, %s6, %s4
  // Predicated region
  $region2: #{dbnet_forward.40} parent=0 // pred_check
    _
  $region3: #{dbnet_forward.40} parent=0 // pred_check_branch
    %9 = sbr.rel (0) target = $region5
  $region4: #{dbnet_forward.40} parent=0 // pred_region
    _
  $region5: #{dbnet_forward.40} parent=0 // pred_fallthru
    _
  // Predicated region
  $region6: #{dbnet_forward.40} parent=0 // pred_check
    _
  $region7: #{dbnet_forward.40} parent=0 // pred_check_branch
    %11 = sbr.rel (0) target = $region9
  $region8: #{dbnet_forward.40} parent=0 // pred_region
    _
  $region9: #{dbnet_forward.40} parent=0 // pred_fallthru
    _
  // Predicated region
  $region10: #{dbnet_forward.40} parent=0 // pred_check
    _
  $region11: #{dbnet_forward.40} parent=0 // pred_check_branch
    %13 = sbr.rel (0) target = $region13
  $region12: #{dbnet_forward.40} parent=0 // pred_region
    _
  $region13: #{dbnet_forward.40} parent=0 // pred_fallthru
    _
  %v15 = vld [vmem:[%s0] sm:$0xff]
  %v16 = vld [vmem:[%s0 + $0x8] sm:$0xf]
  %v17 = vld [vmem:[%s0 + $0xc] sm:$0xff]
  %v18 = vld [vmem:[%s0 + $0x14] sm:$0xf]
  %v19 = vld [vmem:[%s0 + $0x18] sm:$0xff]
  %v20 = vld [vmem:[%s0 + $0x20] sm:$0xf]
  %v21 = vld [vmem:[%s0 + $0x24] sm:$0xff]
  %v22 = vld [vmem:[%s0 + $0x2c] sm:$0xf]
  %v31 = vunpack.c.l.b16 %v15
  %v32 = vunpack.c.h.b16 %v15
  %v33 = vunpack.c.l.b16 %v16
  %v34 = vunpack.c.l.b16 %v17
  %v35 = vunpack.c.h.b16 %v17
  %v36 = vunpack.c.l.b16 %v18
  %v37 = vunpack.c.l.b16 %v19
  %v38 = vunpack.c.h.b16 %v19
  %v39 = vunpack.c.l.b16 %v20
  %v40 = vunpack.c.l.b16 %v21
  %v41 = vunpack.c.h.b16 %v21
  %v42 = vunpack.c.l.b16 %v22
  %v43 = vpack.c.b16 %v34, %v31
  %v44 = vpack.c.b16 %v35, %v32
  %v45 = vpack.c.b16 %v36, %v33
  %v46 = vpack.c.b16 %v40, %v37
  %v47 = vpack.c.b16 %v41, %v38
  %v48 = vpack.c.b16 %v42, %v39
  %vm53 = vcmask 261120
  %v56 = vsel %vm53, %v45, 0
  %v59 = vsel %vm53, %v48, 0
  %v61 = vld [vmem:[%s1] sm:$0xf]
  %v62 = vld [vmem:[%s1 + $0x4] sm:$0xf]
  %v63 = vld [vmem:[%s1 + $0x8] sm:$0xf]
  %v64 = vld [vmem:[%s1 + $0xc] sm:$0xf]
  %v65 = vld [vmem:[%s1 + $0x10] sm:$0xf]
  %v66 = vld [vmem:[%s1 + $0x14] sm:$0xf]
  %v67 = vld [vmem:[%s1 + $0x18] sm:$0xf]
  %v68 = vld [vmem:[%s1 + $0x1c] sm:$0xf]
  %v69 = vld [vmem:[%s1 + $0x20] sm:$0xf]
  %v70 = vld [vmem:[%s1 + $0x24] sm:$0xf]
  %v71 = vld [vmem:[%s1 + $0x28] sm:$0xf]
  %v72 = vld [vmem:[%s1 + $0x2c] sm:$0xf]
  %v73 = vld [vmem:[%s1 + $0x30] sm:$0xf]
  %v74 = vld [vmem:[%s1 + $0x34] sm:$0xf]
  %v75 = vld [vmem:[%s1 + $0x38] sm:$0xf]
  %v76 = vld [vmem:[%s1 + $0x3c] sm:$0xf]
  %v77 = vld [vmem:[%s1 + $0x40] sm:$0xf]
  %v78 = vld [vmem:[%s1 + $0x44] sm:$0xf]
  %v79 = vld [vmem:[%s1 + $0x48] sm:$0xf]
  %v80 = vld [vmem:[%s1 + $0x4c] sm:$0xf]
  %v81 = vld [vmem:[%s1 + $0x50] sm:$0xf]
  %v82 = vld [vmem:[%s1 + $0x54] sm:$0xf]
  %v83 = vld [vmem:[%s1 + $0x58] sm:$0xf]
  %v84 = vld [vmem:[%s1 + $0x5c] sm:$0xf]
  %v85 = vld [vmem:[%s1 + $0x60] sm:$0xf]
  %v86 = vld [vmem:[%s1 + $0x64] sm:$0xf]
  %v87 = vld [vmem:[%s1 + $0x68] sm:$0xf]
  %v88 = vld [vmem:[%s1 + $0x6c] sm:$0xf]
  %v89 = vld [vmem:[%s1 + $0x70] sm:$0xf]
  %v90 = vld [vmem:[%s1 + $0x74] sm:$0xf]
  %v91 = vld [vmem:[%s1 + $0x78] sm:$0xf]
  %v92 = vld [vmem:[%s1 + $0x7c] sm:$0xf]
  %v93 = vld [vmem:[%s1 + $0x80] sm:$0xf]
  %v94 = vld [vmem:[%s1 + $0x84] sm:$0xf]
  %v95 = vld [vmem:[%s1 + $0x88] sm:$0xf]
  %v96 = vld [vmem:[%s1 + $0x8c] sm:$0xf]
  %v97 = vld [vmem:[%s1 + $0x90] sm:$0xf]
  %v98 = vld [vmem:[%s1 + $0x94] sm:$0xf]
  %v99 = vld [vmem:[%s1 + $0x98] sm:$0xf]
  %v100 = vld [vmem:[%s1 + $0x9c] sm:$0xf]
  %v101 = vld [vmem:[%s1 + $0xa0] sm:$0xf]
  %v102 = vld [vmem:[%s1 + $0xa4] sm:$0xf]
  %v103 = vld [vmem:[%s1 + $0xa8] sm:$0xf]
  %v104 = vld [vmem:[%s1 + $0xac] sm:$0xf]
  %v105 = vld [vmem:[%s1 + $0xb0] sm:$0xf]
  %v106 = vld [vmem:[%s1 + $0xb4] sm:$0xf]
  %v107 = vld [vmem:[%s1 + $0xb8] sm:$0xf]
  %v108 = vld [vmem:[%s1 + $0xbc] sm:$0xf]
  %v109 = vld [vmem:[%s2] sm:$0x1]
  %v111 = vlaneseq
  %v112 = vshrl.u32 %v111, 7
  %v113 = vsub.s32 0, %v112
  %v114 = vrot.slane %v109, %v113
  %v164 = vunpack.c.l.b16 %v61
  %v165 = vunpack.c.l.b16 %v62
  %v166 = vunpack.c.l.b16 %v63
  %v167 = vunpack.c.l.b16 %v64
  %v168 = vunpack.c.l.b16 %v65
  %v169 = vunpack.c.l.b16 %v66
  %v170 = vunpack.c.l.b16 %v67
  %v171 = vunpack.c.l.b16 %v68
  %v172 = vunpack.c.l.b16 %v69
  %v173 = vunpack.c.l.b16 %v70
  %v174 = vunpack.c.l.b16 %v71
  %v175 = vunpack.c.l.b16 %v72
  %v176 = vunpack.c.l.b16 %v73
  %v177 = vunpack.c.l.b16 %v74
  %v178 = vunpack.c.l.b16 %v75
  %v179 = vunpack.c.l.b16 %v76
  %v180 = vunpack.c.l.b16 %v77
  %v181 = vunpack.c.l.b16 %v78
  %v182 = vunpack.c.l.b16 %v79
  %v183 = vunpack.c.l.b16 %v80
  %v184 = vunpack.c.l.b16 %v81
  %v185 = vunpack.c.l.b16 %v82
  %v186 = vunpack.c.l.b16 %v83
  %v187 = vunpack.c.l.b16 %v84
  %v188 = vunpack.c.l.b16 %v85
  %v189 = vunpack.c.l.b16 %v86
  %v190 = vunpack.c.l.b16 %v87
  %v191 = vunpack.c.l.b16 %v88
  %v192 = vunpack.c.l.b16 %v89
  %v193 = vunpack.c.l.b16 %v90
  %v194 = vunpack.c.l.b16 %v91
  %v195 = vunpack.c.l.b16 %v92
  %v196 = vunpack.c.l.b16 %v93
  %v197 = vunpack.c.l.b16 %v94
  %v198 = vunpack.c.l.b16 %v95
  %v199 = vunpack.c.l.b16 %v96
  %v200 = vunpack.c.l.b16 %v97
  %v201 = vunpack.c.l.b16 %v98
  %v202 = vunpack.c.l.b16 %v99
  %v203 = vunpack.c.l.b16 %v100
  %v204 = vunpack.c.l.b16 %v101
  %v205 = vunpack.c.l.b16 %v102
  %v206 = vunpack.c.l.b16 %v103
  %v207 = vunpack.c.l.b16 %v104
  %v208 = vunpack.c.l.b16 %v105
  %v209 = vunpack.c.l.b16 %v106
  %v210 = vunpack.c.l.b16 %v107
  %v211 = vunpack.c.l.b16 %v108
  %v212 = vpack.c.b16 %v165, %v164
  %v213 = vpack.c.b16 %v167, %v166
  %v214 = vpack.c.b16 %v169, %v168
  %v215 = vpack.c.b16 %v171, %v170
  %v216 = vpack.c.b16 %v173, %v172
  %v217 = vpack.c.b16 %v175, %v174
  %v218 = vpack.c.b16 %v177, %v176
  %v219 = vpack.c.b16 %v179, %v178
  %v220 = vpack.c.b16 %v181, %v180
  %v221 = vpack.c.b16 %v183, %v182
  %v222 = vpack.c.b16 %v185, %v184
  %v223 = vpack.c.b16 %v187, %v186
  %v224 = vpack.c.b16 %v189, %v188
  %v225 = vpack.c.b16 %v191, %v190
  %v226 = vpack.c.b16 %v193, %v192
  %v227 = vpack.c.b16 %v195, %v194
  %v228 = vpack.c.b16 %v197, %v196
  %v229 = vpack.c.b16 %v199, %v198
  %v230 = vpack.c.b16 %v201, %v200
  %v231 = vpack.c.b16 %v203, %v202
  %v232 = vpack.c.b16 %v205, %v204
  %v233 = vpack.c.b16 %v207, %v206
  %v234 = vpack.c.b16 %v209, %v208
  %v235 = vpack.c.b16 %v211, %v210
  %260 = vmatprep.subr.bf16.mxu0 0
  %261 = vmatpush1.bf16.msra.mxu0 %v212
  %262 = vmatprep.subr.bf16.mxu0 0
  %263 = vmatpush1.bf16.msra.mxu0 %v213
  %264 = vmatprep.subr.bf16.mxu0 0
  %265 = vmatpush1.bf16.msra.mxu0 %v214
  %266 = vmatprep.subr.bf16.mxu0 0
  %267 = vmatpush1.bf16.msra.mxu0 %v215
  %268 = vmatprep.subr.bf16.mxu0 0
  %269 = vmatpush1.bf16.msra.mxu0 %v216
  %270 = vmatprep.subr.bf16.mxu0 0
  %271 = vmatpush1.bf16.msra.mxu0 %v217
  %272 = vmatprep.subr.bf16.mxu0 0
  %273 = vmatpush1.bf16.msra.mxu0 %v218
  %274 = vmatprep.subr.bf16.mxu0 0
  %275 = vmatpush1.bf16.msra.mxu0 %v219
  %276 = vmatprep.subr.bf16.mxu0 0
  %277 = vmatpush1.bf16.msra.mxu0 %v220
  %278 = vmatprep.subr.bf16.mxu0 0
  %279 = vmatpush1.bf16.msra.mxu0 %v221
  %280 = vmatprep.subr.bf16.mxu0 0
  %281 = vmatpush1.bf16.msra.mxu0 %v222
  %282 = vmatprep.subr.bf16.mxu0 0
  %283 = vmatpush1.bf16.msra.mxu0 %v223
  %284 = vmatprep.subr.bf16.mxu0 0
  %285 = vmatpush1.bf16.msra.mxu0 %v224
  %286 = vmatprep.subr.bf16.mxu0 0
  %287 = vmatpush1.bf16.msra.mxu0 %v225
  %288 = vmatprep.subr.bf16.mxu0 0
  %289 = vmatpush1.bf16.msra.mxu0 %v226
  %290 = vmatprep.subr.bf16.mxu0 0
  %291 = vmatpush1.bf16.msra.mxu0 %v227
  %292 = vmatprep.mubr.bf16.mxu0 %v44
  %293 = vmatmul.mubr.bf16.gmra.mrb[0].mxu0 %v43
  %v294 = vpop.f32.mrb[0].mxu0
  %v295 = vadd.f32 %v114, %v294
  %v296 = vpop.f32.mrb[0].mxu0
  %v297 = vpop.f32.mrb[0].mxu0
  %v298 = vadd.f32 %v114, %v297
  %v299 = vpop.f32.mrb[0].mxu0
  %300 = vmatprep.mubr.bf16.mxu0 %v47
  %301 = vmatmul.mubr.bf16.gmra.mrb[0].mxu0 %v46
  %v302 = vpop.f32.mrb[0].mxu0
  %v303 = vadd.f32 %v114, %v302
  %v304 = vpop.f32.mrb[0].mxu0
  %v305 = vpop.f32.mrb[0].mxu0
  %v306 = vadd.f32 %v114, %v305
  %v307 = vpop.f32.mrb[0].mxu0
  %308 = vdwg.mxu0
  %309 = vmatprep.subr.bf16.mxu0 0
  %310 = vmatpush1.bf16.msra.mxu0 %v228
  %311 = vmatprep.subr.bf16.mxu0 0
  %312 = vmatpush1.bf16.msra.mxu0 %v229
  %313 = vmatprep.subr.bf16.mxu0 0
  %314 = vmatpush1.bf16.msra.mxu0 %v230
  %315 = vmatprep.subr.bf16.mxu0 0
  %316 = vmatpush1.bf16.msra.mxu0 %v231
  %317 = vmatprep.subr.bf16.mxu0 0
  %318 = vmatpush1.bf16.msra.mxu0 %v232
  %319 = vmatprep.subr.bf16.mxu0 0
  %320 = vmatpush1.bf16.msra.mxu0 %v233
  %321 = vmatprep.subr.bf16.mxu0 0
  %322 = vmatpush1.bf16.msra.mxu0 %v234
  %323 = vmatprep.subr.bf16.mxu0 0
  %324 = vmatpush1.bf16.msra.mxu0 %v235
  %325 = vmatprep.subr.bf16.mxu0 0
  %326 = vmatpush1.bf16.msra.mxu0 0
  %327 = vmatprep.subr.bf16.mxu0 0
  %328 = vmatpush1.bf16.msra.mxu0 0
  %329 = vmatprep.subr.bf16.mxu0 0
  %330 = vmatpush1.bf16.msra.mxu0 0
  %331 = vmatprep.subr.bf16.mxu0 0
  %332 = vmatpush1.bf16.msra.mxu0 0
  %333 = vmatprep.subr.bf16.mxu0 0
  %334 = vmatpush1.bf16.msra.mxu0 0
  %335 = vmatprep.subr.bf16.mxu0 0
  %336 = vmatpush1.bf16.msra.mxu0 0
  %337 = vmatprep.subr.bf16.mxu0 0
  %338 = vmatpush1.bf16.msra.mxu0 0
  %339 = vmatprep.subr.bf16.mxu0 0
  %340 = vmatpush1.bf16.msra.mxu0 0
  %341 = vmatprep.mubr.bf16.mxu0 0
  %342 = vmatmul.mubr.bf16.gmra.mrb[0].mxu0 %v56
  %v343 = vpop.f32.mrb[0].mxu0
  %v344 = vadd.f32 %v295, %v343
  %v345 = vpop.f32.mrb[0].mxu0
  %v346 = vpop.f32.mrb[0].mxu0
  %v347 = vadd.f32 %v298, %v346
  %v348 = vpop.f32.mrb[0].mxu0
  %349 = vmatprep.mubr.bf16.mxu0 0
  %350 = vmatmul.mubr.bf16.gmra.mrb[0].mxu0 %v59
  %v351 = vpop.f32.mrb[0].mxu0
  %v352 = vadd.f32 %v303, %v351
  %v353 = vpop.f32.mrb[0].mxu0
  %v354 = vpop.f32.mrb[0].mxu0
  %v355 = vadd.f32 %v306, %v354
  %v356 = vpop.f32.mrb[0].mxu0
  %357 = vdwg.mxu0
  %v358 = vpack.c.bf16 %v347, %v344
  %v359 = vpack.c.bf16 %v355, %v352
  %v362 = vunpack.c.l.b16 %v358
  %v363 = vunpack.c.h.b16 %v358
  %v364 = vunpack.c.l.b16 %v359
  %v365 = vunpack.c.h.b16 %v359
  %v366 = vpack.c.b16 %v362, %v362
  %v367 = vpack.c.b16 %v363, %v363
  %v368 = vpack.c.b16 %v364, %v364
  %v369 = vpack.c.b16 %v365, %v365
  %vm374 = vcmask 60416
  %375 = vst.msk [vmem:[%s3] sm:$0xf] %vm374, %v366
  %376 = vst.msk [vmem:[%s3 + $0x4] sm:$0xf] %vm374, %v367
  %377 = vst.msk [vmem:[%s3 + $0x8] sm:$0xf] %vm374, %v368
  %378 = vst.msk [vmem:[%s3 + $0xc] sm:$0xf] %vm374, %v369
  // Predicated region
  $region14: #{dbnet_forward.40} parent=0 // pred_check
    _
  $region15: #{dbnet_forward.40} parent=0 // pred_check_branch
    %380 = sbr.rel (0) target = $region17
  $region16: #{dbnet_forward.40} parent=0 // pred_region
    _
  $region17: #{dbnet_forward.40} parent=0 // pred_fallthru
    _
  // Predicated region
  $region18: #{dbnet_forward.40} parent=0 // pred_check
    _
  $region19: #{dbnet_forward.40} parent=0 // pred_check_branch
    %382 = sbr.rel (0) target = $region21
  $region20: #{dbnet_forward.40} parent=0 // pred_region
    _
  $region21: #{dbnet_forward.40} parent=0 // pred_fallthru
    _

// kernel: dbnet_forward.39
$region0: #{dbnet_forward.39}
  #allocation0 [shape = 'u32[]', space=smem, size = 0x4, offset = 0x4, fixed_abs, tag = 'smem constant byte address 0x4 - core index']
  #allocation1 [shape = 'u32[144,128]{1,0:T(1,128)}', space=vmem, size = 0x12000, scoped, tag = 'internal scratch']
  %s0 = inlined_call_operand.vmem [shape: bf16[128,288], index: 0, kind: input, shape index: {}]
  %s1 = inlined_call_operand.vmem [shape: bf16[384,128], index: 1, kind: input, shape index: {}]
  %s2 = inlined_call_operand.vmem [shape: f32[1,128], index: 2, kind: input, shape index: {}]
  %s3 = inlined_call_operand.vmem [shape: bf16[128,8], index: 3, kind: output, shape index: {}]
  %s4 = sld [smem:[#allocation0]]
  $region45: #{dbnet_forward.39} parent=0
    _
  %s6 = ssub.s32 1, %s4
  %s7 = scalar_select 0, %s6, %s4
  loop: start=0, step=1, limit=4
  $region2: #{dbnet_forward.39} parent=0 // loop_pre_header
    _
  $region3: #{dbnet_forward.39} parent=0 // loop_header
    %s9 = sphi 0, %s13
    %p10 = scmp.ge.s32.totalorder %s9, 4
    %s19 = sphi 0, %s21
    %s22 = sphi 0, %s19
    %s23 = sphi 0, %s22
    %s39 = sphi 0, %s23
    %s43 = sphi 0, %s43
    %s45 = sphi 0, %s43
    %s46 = sphi 0, %s45
    %s60 = sphi 0, %s46
    %s64 = sphi 0, %s64
    %s66 = sphi 0, %s64
    %s67 = sphi 0, %s66
    %s81 = sphi 0, %s67
    %s87 = sphi 0, %s89
    %s90 = sphi 0, %s87
    %s91 = sphi 0, %s90
    %s107 = sphi 0, %s91
  $region4: #{dbnet_forward.39} parent=0 // loop_header_branch
    %12 = sbr.rel (%p10) target = $region8
  $region5: #{dbnet_forward.39} parent=0 // loop_body
    %s14 = ssub.s32 %s9, 1
    %s15 = ssub.s32 %s9, 2
    %s16 = sadd.s32 %s9, 1
    %s17 = ssub.s32 %s9, %s16
    %p18 = scmp.eq.s32.totalorder %s17, 0
    %s20 = sadd.s32 %s19, 1
    %s21 = scalar_select %p18, %s19, %s20
    %p24 = pneg %p18
    %p25 = scmp.eq.s32.totalorder %s9, 1
    %p26 = por %p24, %p25
    %p27 = scmp.ne.s32.totalorder %s19, %s22
    %p28 = scmp.eq.s32.totalorder %s9, 0
    %p29 = por %p27, %p28
    %p30 = scmp.ne.s32.totalorder %s19, %s22
    %p31 = scmp.eq.s32.totalorder %s14, 1
    %p32 = por %p30, %p31
    %p33 = scmp.ne.s32.totalorder %s22, %s23
    %p34 = scmp.eq.s32.totalorder %s14, 0
    %p35 = por %p33, %p34
    %p36 = scmp.ne.s32.totalorder %s22, %s23
    %p37 = scmp.eq.s32.totalorder %s15, 1
    %p38 = por %p36, %p37
    %p40 = scmp.ne.s32.totalorder %s23, %s39
    %p41 = scmp.eq.s32.totalorder %s15, 0
    %p42 = por %p40, %p41
    %s44 = sadd.s32 %s43, 1
    %p47 = scmp.eq.s32.totalorder %s9, 1
    %p48 = scmp.ne.s32.totalorder %s43, %s45
    %p49 = scmp.eq.s32.totalorder %s9, 0
    %p50 = por %p48, %p49
    %p51 = scmp.ne.s32.totalorder %s43, %s45
    %p52 = scmp.eq.s32.totalorder %s14, 1
    %p53 = por %p51, %p52
    %p54 = scmp.ne.s32.totalorder %s45, %s46
    %p55 = scmp.eq.s32.totalorder %s14, 0
    %p56 = por %p54, %p55
    %p57 = scmp.ne.s32.totalorder %s45, %s46
    %p58 = scmp.eq.s32.totalorder %s15, 1
    %p59 = por %p57, %p58
    %p61 = scmp.ne.s32.totalorder %s46, %s60
    %p62 = scmp.eq.s32.totalorder %s15, 0
    %p63 = por %p61, %p62
    %s65 = sadd.s32 %s64, 1
    %p68 = scmp.eq.s32.totalorder %s9, 1
    %p69 = scmp.ne.s32.totalorder %s64, %s66
    %p70 = scmp.eq.s32.totalorder %s9, 0
    %p71 = por %p69, %p70
    %p72 = scmp.ne.s32.totalorder %s64, %s66
    %p73 = scmp.eq.s32.totalorder %s14, 1
    %p74 = por %p72, %p73
    %p75 = scmp.ne.s32.totalorder %s66, %s67
    %p76 = scmp.eq.s32.totalorder %s14, 0
    %p77 = por %p75, %p76
    %p78 = scmp.ne.s32.totalorder %s66, %s67
    %p79 = scmp.eq.s32.totalorder %s15, 1
    %p80 = por %p78, %p79
    %p82 = scmp.ne.s32.totalorder %s67, %s81
    %p83 = scmp.eq.s32.totalorder %s15, 0
    %p84 = por %p82, %p83
    %s85 = ssub.s32 %s9, %s16
    %p86 = scmp.eq.s32.totalorder %s85, 0
    %s88 = sadd.s32 %s87, 1
    %s89 = scalar_select %p86, %s87, %s88
    %p92 = pneg %p86
    %p93 = scmp.eq.s32.totalorder %s9, 1
    %p94 = por %p92, %p93
    %p95 = scmp.ne.s32.totalorder %s87, %s90
    %p96 = scmp.eq.s32.totalorder %s9, 0
    %p97 = por %p95, %p96
    %p98 = scmp.ne.s32.totalorder %s87, %s90
    %p99 = scmp.eq.s32.totalorder %s14, 1
    %p100 = por %p98, %p99
    %p101 = scmp.ne.s32.totalorder %s90, %s91
    %p102 = scmp.eq.s32.totalorder %s14, 0
    %p103 = por %p101, %p102
    %p104 = scmp.ne.s32.totalorder %s90, %s91
    %p105 = scmp.eq.s32.totalorder %s15, 1
    %p106 = por %p104, %p105
    %p108 = scmp.ne.s32.totalorder %s91, %s107
    %p109 = scmp.eq.s32.totalorder %s15, 0
    %p110 = por %p108, %p109
    %p111 = scmp.le.s32.totalorder 1, %s9
    %p112 = scmp.lt.s32.totalorder %s9, 3
    %p113 = pnand %p111, %p112
    %p114 = pneg %p113
    // Predicated region
    $region9: #{dbnet_forward.39} parent=5 // pred_check
      _
    $region10: #{dbnet_forward.39} parent=5 // pred_check_branch
      %116 = sbr.rel (%p113) target = $region12
    $region11: #{dbnet_forward.39} parent=5 // pred_region
      %s117 = ssub.s32 %s9, 1
      // Predicated region
      $region13: #{dbnet_forward.39} parent=11 // pred_check
        %p118 = pneg %p56
      $region14: #{dbnet_forward.39} parent=11 // pred_check_branch
        %120 = sbr.rel (%p118) target = $region16
      $region15: #{dbnet_forward.39} parent=11 // pred_region
        _
      $region16: #{dbnet_forward.39} parent=11 // pred_fallthru
        _
      // Predicated region
      $region17: #{dbnet_forward.39} parent=11 // pred_check
        %p121 = pneg %p77
      $region18: #{dbnet_forward.39} parent=11 // pred_check_branch
        %123 = sbr.rel (%p121) target = $region20
      $region19: #{dbnet_forward.39} parent=11 // pred_region
        _
      $region20: #{dbnet_forward.39} parent=11 // pred_fallthru
        _
    $region12: #{dbnet_forward.39} parent=5 // pred_fallthru
      _
    %p124 = scmp.lt.s32.totalorder %s9, 2
    // Predicated region
    $region21: #{dbnet_forward.39} parent=5 // pred_check
      %p125 = pneg %p124
    $region22: #{dbnet_forward.39} parent=5 // pred_check_branch
      %127 = sbr.rel (%p125) target = $region24
    $region23: #{dbnet_forward.39} parent=5 // pred_region
      // Predicated region
      $region25: #{dbnet_forward.39} parent=23 // pred_check
        %p128 = pneg %p29
      $region26: #{dbnet_forward.39} parent=23 // pred_check_branch
        %130 = sbr.rel (%p128) target = $region28
      $region27: #{dbnet_forward.39} parent=23 // pred_region
        %s131 = smul.u32 8, %s9
        %p132 = scmp.lt.s32.totalorder %s131, 15
        %s133 = scalar_select %p132, %s131, 15
        %s134 = smul.addr %s133, 3
        %s135 = smul.addr %s134, 4
        %s136 = scalar_lea.vmem %s0, %s135
        %s137 = smul.u32 8, %s9
      $region28: #{dbnet_forward.39} parent=23 // pred_fallthru
        _
    $region24: #{dbnet_forward.39} parent=5 // pred_fallthru
      _
    %p138 = scmp.le.s32.totalorder 1, %s9
    %p139 = scmp.lt.s32.totalorder %s9, 3
    %p140 = pnand %p138, %p139
    %p141 = pneg %p140
    // Predicated region
    $region29: #{dbnet_forward.39} parent=5 // pred_check
      _
    $region30: #{dbnet_forward.39} parent=5 // pred_check_branch
      %143 = sbr.rel (%p140) target = $region32
    $region31: #{dbnet_forward.39} parent=5 // pred_region
      %s144 = ssub.s32 %s9, 1
      %s145 = smul.u32 8, %s14
      %p146 = scmp.lt.s32.totalorder %s145, 15
      %s147 = scalar_select %p146, %s145, 15
      %s148 = smul.addr %s147, 3
      %s149 = smul.addr %s148, 4
      %s150 = scalar_lea.vmem %s0, %s149
      %p151 = pneg %p35
      %p152 = pneg %p32
      %p153 = pneg %p56
      %p154 = pneg %p53
      %p155 = pneg %p77
      %p156 = pneg %p74
      %p157 = pneg %p103
      %p158 = pneg %p100
      %s159 = smul.u32 8, %s14
      %p160 = scmp.lt.s32.totalorder %s159, 15
      %s161 = scalar_select %p160, %s159, 15
      %s162 = smul.addr %s161, 4
      %s163 = scalar_lea.vmem %s3, %s162
      %s164 = smul.u32 8, %s14
      %p165 = scmp.lt.s32.totalorder %s164, 15
      %s166 = scalar_select %p165, %s164, 15
      %s167 = smul.addr %s166, 3
      %s168 = smul.addr %s167, 4
      %s169 = scalar_lea.vmem %s0, %s168
      %s170 = smul.u32 8, %s14
      %s171 = smul.u32 8, %s14
      %p172 = scmp.lt.s32.totalorder %s171, 15
      %s173 = scalar_select %p172, %s171, 15
      %s174 = smul.addr %s173, 4
      %s175 = scalar_lea.vmem %s3, %s174
      %s176 = smul.u32 8, %s14
      %v178 = vld [vmem:[%s169] sm:$0xff]
      %v179 = vld [vmem:[%s169 + $0x8] sm:$0xf]
      %v180 = vld [vmem:[%s169 + $0xc] sm:$0xff]
      %v181 = vld [vmem:[%s169 + $0x14] sm:$0xf]
      %v182 = vld [vmem:[%s169 + $0x18] sm:$0xff]
      %v183 = vld [vmem:[%s169 + $0x20] sm:$0xf]
      %v184 = vld [vmem:[%s169 + $0x24] sm:$0xff]
      %v185 = vld [vmem:[%s169 + $0x2c] sm:$0xf]
      %v186 = vld [vmem:[%s169 + $0x30] sm:$0xff]
      %v187 = vld [vmem:[%s169 + $0x38] sm:$0xf]
      %v188 = vld [vmem:[%s169 + $0x3c] sm:$0xff]
      %v189 = vld [vmem:[%s169 + $0x44] sm:$0xf]
      %v190 = vld [vmem:[%s169 + $0x48] sm:$0xff]
      %v191 = vld [vmem:[%s169 + $0x50] sm:$0xf]
      %v192 = vld [vmem:[%s169 + $0x54] sm:$0xff]
      %v193 = vld [vmem:[%s169 + $0x5c] sm:$0xf]
      %v210 = vunpack.c.l.b16 %v178
      %v211 = vunpack.c.h.b16 %v178
      %v212 = vunpack.c.l.b16 %v179
      %v213 = vunpack.c.l.b16 %v180
      %v214 = vunpack.c.h.b16 %v180
      %v215 = vunpack.c.l.b16 %v181
      %v216 = vunpack.c.l.b16 %v182
      %v217 = vunpack.c.h.b16 %v182
      %v218 = vunpack.c.l.b16 %v183
      %v219 = vunpack.c.l.b16 %v184
      %v220 = vunpack.c.h.b16 %v184
      %v221 = vunpack.c.l.b16 %v185
      %v222 = vunpack.c.l.b16 %v186
      %v223 = vunpack.c.h.b16 %v186
      %v224 = vunpack.c.l.b16 %v187
      %v225 = vunpack.c.l.b16 %v188
      %v226 = vunpack.c.h.b16 %v188
      %v227 = vunpack.c.l.b16 %v189
      %v228 = vunpack.c.l.b16 %v190
      %v229 = vunpack.c.h.b16 %v190
      %v230 = vunpack.c.l.b16 %v191
      %v231 = vunpack.c.l.b16 %v192
      %v232 = vunpack.c.h.b16 %v192
      %v233 = vunpack.c.l.b16 %v193
      %v234 = vpack.c.b16 %v213, %v210
      %v235 = vpack.c.b16 %v214, %v211
      %v236 = vpack.c.b16 %v215, %v212
      %v237 = vpack.c.b16 %v219, %v216
      %v238 = vpack.c.b16 %v220, %v217
      %v239 = vpack.c.b16 %v221, %v218
      %v240 = vpack.c.b16 %v225, %v222
      %v241 = vpack.c.b16 %v226, %v223
      %v242 = vpack.c.b16 %v227, %v224
      %v243 = vpack.c.b16 %v231, %v228
      %v244 = vpack.c.b16 %v232, %v229
      %v245 = vpack.c.b16 %v233, %v230
      %vm254 = vcmask 261120
      %v257 = vsel %vm254, %v236, 0
      %v260 = vsel %vm254, %v239, 0
      %v263 = vsel %vm254, %v242, 0
      %v266 = vsel %vm254, %v245, 0
      %v268 = vld [vmem:[%s1] sm:$0xf]
      %v269 = vld [vmem:[%s1 + $0x4] sm:$0xf]
      %v270 = vld [vmem:[%s1 + $0x8] sm:$0xf]
      %v271 = vld [vmem:[%s1 + $0xc] sm:$0xf]
      %v272 = vld [vmem:[%s1 + $0x10] sm:$0xf]
      %v273 = vld [vmem:[%s1 + $0x14] sm:$0xf]
      %v274 = vld [vmem:[%s1 + $0x18] sm:$0xf]
      %v275 = vld [vmem:[%s1 + $0x1c] sm:$0xf]
      %v276 = vld [vmem:[%s1 + $0x20] sm:$0xf]
      %v277 = vld [vmem:[%s1 + $0x24] sm:$0xf]
      %v278 = vld [vmem:[%s1 + $0x28] sm:$0xf]
      %v279 = vld [vmem:[%s1 + $0x2c] sm:$0xf]
      %v280 = vld [vmem:[%s1 + $0x30] sm:$0xf]
      %v281 = vld [vmem:[%s1 + $0x34] sm:$0xf]
      %v282 = vld [vmem:[%s1 + $0x38] sm:$0xf]
      %v283 = vld [vmem:[%s1 + $0x3c] sm:$0xf]
      %v284 = vld [vmem:[%s1 + $0x40] sm:$0xf]
      %v285 = vld [vmem:[%s1 + $0x44] sm:$0xf]
      %v286 = vld [vmem:[%s1 + $0x48] sm:$0xf]
      %v287 = vld [vmem:[%s1 + $0x4c] sm:$0xf]
      %v288 = vld [vmem:[%s1 + $0x50] sm:$0xf]
      %v289 = vld [vmem:[%s1 + $0x54] sm:$0xf]
      %v290 = vld [vmem:[%s1 + $0x58] sm:$0xf]
      %v291 = vld [vmem:[%s1 + $0x5c] sm:$0xf]
      %v292 = vld [vmem:[%s1 + $0x60] sm:$0xf]
      %v293 = vld [vmem:[%s1 + $0x64] sm:$0xf]
      %v294 = vld [vmem:[%s1 + $0x68] sm:$0xf]
      %v295 = vld [vmem:[%s1 + $0x6c] sm:$0xf]
      %v296 = vld [vmem:[%s1 + $0x70] sm:$0xf]
      %v297 = vld [vmem:[%s1 + $0x74] sm:$0xf]
      %v298 = vld [vmem:[%s1 + $0x78] sm:$0xf]
      %v299 = vld [vmem:[%s1 + $0x7c] sm:$0xf]
      %v300 = vld [vmem:[%s1 + $0x80] sm:$0xf]
      %v301 = vld [vmem:[%s1 + $0x84] sm:$0xf]
      %v302 = vld [vmem:[%s1 + $0x88] sm:$0xf]
      %v303 = vld [vmem:[%s1 + $0x8c] sm:$0xf]
      %v304 = vld [vmem:[%s1 + $0x90] sm:$0xf]
      %v305 = vld [vmem:[%s1 + $0x94] sm:$0xf]
      %v306 = vld [vmem:[%s1 + $0x98] sm:$0xf]
      %v307 = vld [vmem:[%s1 + $0x9c] sm:$0xf]
      %v308 = vld [vmem:[%s1 + $0xa0] sm:$0xf]
      %v309 = vld [vmem:[%s1 + $0xa4] sm:$0xf]
      %v310 = vld [vmem:[%s1 + $0xa8] sm:$0xf]
      %v311 = vld [vmem:[%s1 + $0xac] sm:$0xf]
      %v312 = vld [vmem:[%s1 + $0xb0] sm:$0xf]
      %v313 = vld [vmem:[%s1 + $0xb4] sm:$0xf]
      %v314 = vld [vmem:[%s1 + $0xb8] sm:$0xf]
      %v315 = vld [vmem:[%s1 + $0xbc] sm:$0xf]
      %v316 = vld [vmem:[%s2] sm:$0x1]
      %v318 = vlaneseq
      %v319 = vshrl.u32 %v318, 7
      %v320 = vsub.s32 0, %v319
      %v321 = vrot.slane %v316, %v320
      %v371 = vunpack.c.l.b16 %v268
      %v372 = vunpack.c.l.b16 %v269
      %v373 = vunpack.c.l.b16 %v270
      %v374 = vunpack.c.l.b16 %v271
      %v375 = vunpack.c.l.b16 %v272
      %v376 = vunpack.c.l.b16 %v273
      %v377 = vunpack.c.l.b16 %v274
      %v378 = vunpack.c.l.b16 %v275
      %v379 = vunpack.c.l.b16 %v276
      %v380 = vunpack.c.l.b16 %v277
      %v381 = vunpack.c.l.b16 %v278
      %v382 = vunpack.c.l.b16 %v279
      %v383 = vunpack.c.l.b16 %v280
      %v384 = vunpack.c.l.b16 %v281
      %v385 = vunpack.c.l.b16 %v282
      %v386 = vunpack.c.l.b16 %v283
      %v387 = vunpack.c.l.b16 %v284
      %v388 = vunpack.c.l.b16 %v285
      %v389 = vunpack.c.l.b16 %v286
      %v390 = vunpack.c.l.b16 %v287
      %v391 = vunpack.c.l.b16 %v288
      %v392 = vunpack.c.l.b16 %v289
      %v393 = vunpack.c.l.b16 %v290
      %v394 = vunpack.c.l.b16 %v291
      %v395 = vunpack.c.l.b16 %v292
      %v396 = vunpack.c.l.b16 %v293
      %v397 = vunpack.c.l.b16 %v294
      %v398 = vunpack.c.l.b16 %v295
      %v399 = vunpack.c.l.b16 %v296
      %v400 = vunpack.c.l.b16 %v297
      %v401 = vunpack.c.l.b16 %v298
      %v402 = vunpack.c.l.b16 %v299
      %v403 = vunpack.c.l.b16 %v300
      %v404 = vunpack.c.l.b16 %v301
      %v405 = vunpack.c.l.b16 %v302
      %v406 = vunpack.c.l.b16 %v303
      %v407 = vunpack.c.l.b16 %v304
      %v408 = vunpack.c.l.b16 %v305
      %v409 = vunpack.c.l.b16 %v306
      %v410 = vunpack.c.l.b16 %v307
      %v411 = vunpack.c.l.b16 %v308
      %v412 = vunpack.c.l.b16 %v309
      %v413 = vunpack.c.l.b16 %v310
      %v414 = vunpack.c.l.b16 %v311
      %v415 = vunpack.c.l.b16 %v312
      %v416 = vunpack.c.l.b16 %v313
      %v417 = vunpack.c.l.b16 %v314
      %v418 = vunpack.c.l.b16 %v315
      %v419 = vpack.c.b16 %v372, %v371
      %v420 = vpack.c.b16 %v374, %v373
      %v421 = vpack.c.b16 %v376, %v375
      %v422 = vpack.c.b16 %v378, %v377
      %v423 = vpack.c.b16 %v380, %v379
      %v424 = vpack.c.b16 %v382, %v381
      %v425 = vpack.c.b16 %v384, %v383
      %v426 = vpack.c.b16 %v386, %v385
      %v427 = vpack.c.b16 %v388, %v387
      %v428 = vpack.c.b16 %v390, %v389
      %v429 = vpack.c.b16 %v392, %v391
      %v430 = vpack.c.b16 %v394, %v393
      %v431 = vpack.c.b16 %v396, %v395
      %v432 = vpack.c.b16 %v398, %v397
      %v433 = vpack.c.b16 %v400, %v399
      %v434 = vpack.c.b16 %v402, %v401
      %v435 = vpack.c.b16 %v404, %v403
      %v436 = vpack.c.b16 %v406, %v405
      %v437 = vpack.c.b16 %v408, %v407
      %v438 = vpack.c.b16 %v410, %v409
      %v439 = vpack.c.b16 %v412, %v411
      %v440 = vpack.c.b16 %v414, %v413
      %v441 = vpack.c.b16 %v416, %v415
      %v442 = vpack.c.b16 %v418, %v417
      %467 = vmatprep.subr.bf16.mxu0 0
      %468 = vmatpush1.bf16.msra.mxu0 %v419
      %469 = vmatprep.subr.bf16.mxu0 0
      %470 = vmatpush1.bf16.msra.mxu0 %v420
      %471 = vmatprep.subr.bf16.mxu0 0
      %472 = vmatpush1.bf16.msra.mxu0 %v421
      %473 = vmatprep.subr.bf16.mxu0 0
      %474 = vmatpush1.bf16.msra.mxu0 %v422
      %475 = vmatprep.subr.bf16.mxu0 0
      %476 = vmatpush1.bf16.msra.mxu0 %v423
      %477 = vmatprep.subr.bf16.mxu0 0
      %478 = vmatpush1.bf16.msra.mxu0 %v424
      %479 = vmatprep.subr.bf16.mxu0 0
      %480 = vmatpush1.bf16.msra.mxu0 %v425
      %481 = vmatprep.subr.bf16.mxu0 0
      %482 = vmatpush1.bf16.msra.mxu0 %v426
      %483 = vmatprep.subr.bf16.mxu0 0
      %484 = vmatpush1.bf16.msra.mxu0 %v427
      %485 = vmatprep.subr.bf16.mxu0 0
      %486 = vmatpush1.bf16.msra.mxu0 %v428
      %487 = vmatprep.subr.bf16.mxu0 0
      %488 = vmatpush1.bf16.msra.mxu0 %v429
      %489 = vmatprep.subr.bf16.mxu0 0
      %490 = vmatpush1.bf16.msra.mxu0 %v430
      %491 = vmatprep.subr.bf16.mxu0 0
      %492 = vmatpush1.bf16.msra.mxu0 %v431
      %493 = vmatprep.subr.bf16.mxu0 0
      %494 = vmatpush1.bf16.msra.mxu0 %v432
      %495 = vmatprep.subr.bf16.mxu0 0
      %496 = vmatpush1.bf16.msra.mxu0 %v433
      %497 = vmatprep.subr.bf16.mxu0 0
      %498 = vmatpush1.bf16.msra.mxu0 %v434
      %499 = vmatprep.mubr.bf16.mxu0 %v235
      %500 = vmatmul.mubr.bf16.gmra.mrb[0].mxu0 %v234
      %v501 = vpop.f32.mrb[0].mxu0
      %v502 = vadd.f32 %v321, %v501
      %v503 = vpop.f32.mrb[0].mxu0
      %v504 = vpop.f32.mrb[0].mxu0
      %v505 = vadd.f32 %v321, %v504
      %v506 = vpop.f32.mrb[0].mxu0
      %507 = vmatprep.mubr.bf16.mxu0 %v238
      %508 = vmatmul.mubr.bf16.gmra.mrb[0].mxu0 %v237
      %v509 = vpop.f32.mrb[0].mxu0
      %v510 = vadd.f32 %v321, %v509
      %v511 = vpop.f32.mrb[0].mxu0
      %v512 = vpop.f32.mrb[0].mxu0
      %v513 = vadd.f32 %v321, %v512
      %v514 = vpop.f32.mrb[0].mxu0
      %515 = vmatprep.mubr.bf16.mxu0 %v241
      %516 = vmatmul.mubr.bf16.gmra.mrb[0].mxu0 %v240
      %v517 = vpop.f32.mrb[0].mxu0
      %v518 = vadd.f32 %v321, %v517
      %v519 = vpop.f32.mrb[0].mxu0
      %v520 = vpop.f32.mrb[0].mxu0
      %v521 = vadd.f32 %v321, %v520
      %v522 = vpop.f32.mrb[0].mxu0
      %523 = vmatprep.mubr.bf16.mxu0 %v244
      %524 = vmatmul.mubr.bf16.gmra.mrb[0].mxu0 %v243
      %v525 = vpop.f32.mrb[0].mxu0
      %v526 = vadd.f32 %v321, %v525
      %v527 = vpop.f32.mrb[0].mxu0
      %v528 = vpop.f32.mrb[0].mxu0
      %v529 = vadd.f32 %v321, %v528
      %v530 = vpop.f32.mrb[0].mxu0
      %531 = vdwg.mxu0
      %532 = vmatprep.subr.bf16.mxu0 0
      %533 = vmatpush1.bf16.msra.mxu0 %v435
      %534 = vmatprep.subr.bf16.mxu0 0
      %535 = vmatpush1.bf16.msra.mxu0 %v436
      %536 = vmatprep.subr.bf16.mxu0 0
      %537 = vmatpush1.bf16.msra.mxu0 %v437
      %538 = vmatprep.subr.bf16.mxu0 0
      %539 = vmatpush1.bf16.msra.mxu0 %v438
      %540 = vmatprep.subr.bf16.mxu0 0
      %541 = vmatpush1.bf16.msra.mxu0 %v439
      %542 = vmatprep.subr.bf16.mxu0 0
      %543 = vmatpush1.bf16.msra.mxu0 %v440
      %544 = vmatprep.subr.bf16.mxu0 0
      %545 = vmatpush1.bf16.msra.mxu0 %v441
      %546 = vmatprep.subr.bf16.mxu0 0
      %547 = vmatpush1.bf16.msra.mxu0 %v442
      %548 = vmatprep.subr.bf16.mxu0 0
      %549 = vmatpush1.bf16.msra.mxu0 0
      %550 = vmatprep.subr.bf16.mxu0 0
      %551 = vmatpush1.bf16.msra.mxu0 0
      %552 = vmatprep.subr.bf16.mxu0 0
      %553 = vmatpush1.bf16.msra.mxu0 0
      %554 = vmatprep.subr.bf16.mxu0 0
      %555 = vmatpush1.bf16.msra.mxu0 0
      %556 = vmatprep.subr.bf16.mxu0 0
      %557 = vmatpush1.bf16.msra.mxu0 0
      %558 = vmatprep.subr.bf16.mxu0 0
      %559 = vmatpush1.bf16.msra.mxu0 0
      %560 = vmatprep.subr.bf16.mxu0 0
      %561 = vmatpush1.bf16.msra.mxu0 0
      %562 = vmatprep.subr.bf16.mxu0 0
      %563 = vmatpush1.bf16.msra.mxu0 0
      %564 = vmatprep.mubr.bf16.mxu0 0
      %565 = vmatmul.mubr.bf16.gmra.mrb[0].mxu0 %v257
      %v566 = vpop.f32.mrb[0].mxu0
      %v567 = vadd.f32 %v502, %v566
      %v568 = vpop.f32.mrb[0].mxu0
      %v569 = vpop.f32.mrb[0].mxu0
      %v570 = vadd.f32 %v505, %v569
      %v571 = vpop.f32.mrb[0].mxu0
      %572 = vmatprep.mubr.bf16.mxu0 0
      %573 = vmatmul.mubr.bf16.gmra.mrb[0].mxu0 %v260
      %v574 = vpop.f32.mrb[0].mxu0
      %v575 = vadd.f32 %v510, %v574
      %v576 = vpop.f32.mrb[0].mxu0
      %v577 = vpop.f32.mrb[0].mxu0
      %v578 = vadd.f32 %v513, %v577
      %v579 = vpop.f32.mrb[0].mxu0
      %580 = vmatprep.mubr.bf16.mxu0 0
      %581 = vmatmul.mubr.bf16.gmra.mrb[0].mxu0 %v263
      %v582 = vpop.f32.mrb[0].mxu0
      %v583 = vadd.f32 %v518, %v582
      %v584 = vpop.f32.mrb[0].mxu0
      %v585 = vpop.f32.mrb[0].mxu0
      %v586 = vadd.f32 %v521, %v585
      %v587 = vpop.f32.mrb[0].mxu0
      %588 = vmatprep.mubr.bf16.mxu0 0
      %589 = vmatmul.mubr.bf16.gmra.mrb[0].mxu0 %v266
      %v590 = vpop.f32.mrb[0].mxu0
      %v591 = vadd.f32 %v526, %v590
      %v592 = vpop.f32.mrb[0].mxu0
      %v593 = vpop.f32.mrb[0].mxu0
      %v594 = vadd.f32 %v529, %v593
      %v595 = vpop.f32.mrb[0].mxu0
      %596 = vdwg.mxu0
      %v597 = vpack.c.bf16 %v570, %v567
      %v598 = vpack.c.bf16 %v578, %v575
      %v599 = vpack.c.bf16 %v586, %v583
      %v600 = vpack.c.bf16 %v594, %v591
      %v605 = vunpack.c.l.b16 %v597
      %v606 = vunpack.c.h.b16 %v597
      %v607 = vunpack.c.l.b16 %v598
      %v608 = vunpack.c.h.b16 %v598
      %v609 = vunpack.c.l.b16 %v599
      %v610 = vunpack.c.h.b16 %v599
      %v611 = vunpack.c.l.b16 %v600
      %v612 = vunpack.c.h.b16 %v600
      %v613 = vpack.c.b16 %v605, %v605
      %v614 = vpack.c.b16 %v606, %v606
      %v615 = vpack.c.b16 %v607, %v607
      %v616 = vpack.c.b16 %v608, %v608
      %v617 = vpack.c.b16 %v609, %v609
      %v618 = vpack.c.b16 %v610, %v610
      %v619 = vpack.c.b16 %v611, %v611
      %v620 = vpack.c.b16 %v612, %v612
      %vm629 = vcmask 60416
      %630 = vst.msk [vmem:[%s175] sm:$0xf] %vm629, %v613
      %631 = vst.msk [vmem:[%s175 + $0x4] sm:$0xf] %vm629, %v614
      %632 = vst.msk [vmem:[%s175 + $0x8] sm:$0xf] %vm629, %v615
      %633 = vst.msk [vmem:[%s175 + $0xc] sm:$0xf] %vm629, %v616
      %634 = vst.msk [vmem:[%s175 + $0x10] sm:$0xf] %vm629, %v617
      %635 = vst.msk [vmem:[%s175 + $0x14] sm:$0xf] %vm629, %v618
      %636 = vst.msk [vmem:[%s175 + $0x18] sm:$0xf] %vm629, %v619
      %637 = vst.msk [vmem:[%s175 + $0x1c] sm:$0xf] %vm629, %v620
      %s638 = smul.u32 8, %s14
      %p639 = scmp.lt.s32.totalorder %s638, 15
      %s640 = scalar_select %p639, %s638, 15
      %s641 = smul.addr %s640, 4
      %s642 = scalar_lea.vmem %s3, %s641
      // Predicated region
      $region33: #{dbnet_forward.39} parent=31 // pred_check
        %p643 = pneg %p100
      $region34: #{dbnet_forward.39} parent=31 // pred_check_branch
        %645 = sbr.rel (%p643) target = $region36
      $region35: #{dbnet_forward.39} parent=31 // pred_region
        %s646 = smul.u32 8, %s14
      $region36: #{dbnet_forward.39} parent=31 // pred_fallthru
        _
    $region32: #{dbnet_forward.39} parent=5 // pred_fallthru
      _
    %p647 = scmp.le.s32.totalorder 2, %s9
    // Predicated region
    $region37: #{dbnet_forward.39} parent=5 // pred_check
      %p648 = pneg %p647
    $region38: #{dbnet_forward.39} parent=5 // pred_check_branch
      %650 = sbr.rel (%p648) target = $region40
    $region39: #{dbnet_forward.39} parent=5 // pred_region
      %s651 = ssub.s32 %s9, 2
      // Predicated region
      $region41: #{dbnet_forward.39} parent=39 // pred_check
        %p652 = pneg %p106
      $region42: #{dbnet_forward.39} parent=39 // pred_check_branch
        %654 = sbr.rel (%p652) target = $region44
      $region43: #{dbnet_forward.39} parent=39 // pred_region
        %s655 = smul.u32 8, %s15
        %p656 = scmp.lt.s32.totalorder %s655, 15
        %s657 = scalar_select %p656, %s655, 15
        %s658 = smul.addr %s657, 4
        %s659 = scalar_lea.vmem %s3, %s658
      $region44: #{dbnet_forward.39} parent=39 // pred_fallthru
        _
    $region40: #{dbnet_forward.39} parent=5 // pred_fallthru
      _
  $region6: #{dbnet_forward.39} parent=0 // loop_footer
    %s13 = sadd.s32 1, %s9
  $region7: #{dbnet_forward.39} parent=0 // loop_footer_branch
    %8 = sbr.rel target = $region3
  $region8: #{dbnet_forward.39} parent=0 // loop_exit
    _

// kernel: dbnet_forward.44
$region0: #{dbnet_forward.44}
  #allocation0 [shape = 'u32[]', space=smem, size = 0x4, offset = 0x4, fixed_abs, tag = 'smem constant byte address 0x4 - core index']
  #allocation1 [shape = 'u32[144,128]{1,0:T(1,128)}', space=vmem, size = 0x12000, scoped, tag = 'internal scratch']
  %s0 = inlined_call_operand.vmem [shape: bf16[128,16], index: 0, kind: input, shape index: {}]
  %s1 = inlined_call_operand.vmem [shape: bf16[128,128], index: 1, kind: input, shape index: {}]
  %s2 = inlined_call_operand.vmem [shape: f32[1,128], index: 2, kind: input, shape index: {}]
  %s3 = inlined_call_operand.vmem [shape: bf16[128,64], index: 3, kind: output, shape index: {}]
  %s4 = sld [smem:[#allocation0]]
  $region45: #{dbnet_forward.44} parent=0
    _
  %s6 = ssub.s32 1, %s4
  %s7 = scalar_select 0, %s6, %s4
  loop: start=0, step=1, limit=4
  $region2: #{dbnet_forward.44} parent=0 // loop_pre_header
    _
  $region3: #{dbnet_forward.44} parent=0 // loop_header
    %s9 = sphi 0, %s13
    %p10 = scmp.ge.s32.totalorder %s9, 4
    %s19 = sphi 0, %s21
    %s22 = sphi 0, %s19
    %s23 = sphi 0, %s22
    %s39 = sphi 0, %s23
    %s43 = sphi 0, %s43
    %s45 = sphi 0, %s43
    %s46 = sphi 0, %s45
    %s60 = sphi 0, %s46
    %s64 = sphi 0, %s64
    %s66 = sphi 0, %s64
    %s67 = sphi 0, %s66
    %s81 = sphi 0, %s67
    %s87 = sphi 0, %s89
    %s90 = sphi 0, %s87
    %s91 = sphi 0, %s90
    %s107 = sphi 0, %s91
  $region4: #{dbnet_forward.44} parent=0 // loop_header_branch
    %12 = sbr.rel (%p10) target = $region8
  $region5: #{dbnet_forward.44} parent=0 // loop_body
    %s14 = ssub.s32 %s9, 1
    %s15 = ssub.s32 %s9, 2
    %s16 = sadd.s32 %s9, 1
    %s17 = ssub.s32 %s9, %s16
    %p18 = scmp.eq.s32.totalorder %s17, 0
    %s20 = sadd.s32 %s19, 1
    %s21 = scalar_select %p18, %s19, %s20
    %p24 = pneg %p18
    %p25 = scmp.eq.s32.totalorder %s9, 1
    %p26 = por %p24, %p25
    %p27 = scmp.ne.s32.totalorder %s19, %s22
    %p28 = scmp.eq.s32.totalorder %s9, 0
    %p29 = por %p27, %p28
    %p30 = scmp.ne.s32.totalorder %s19, %s22
    %p31 = scmp.eq.s32.totalorder %s14, 1
    %p32 = por %p30, %p31
    %p33 = scmp.ne.s32.totalorder %s22, %s23
    %p34 = scmp.eq.s32.totalorder %s14, 0
    %p35 = por %p33, %p34
    %p36 = scmp.ne.s32.totalorder %s22, %s23
    %p37 = scmp.eq.s32.totalorder %s15, 1
    %p38 = por %p36, %p37
    %p40 = scmp.ne.s32.totalorder %s23, %s39
    %p41 = scmp.eq.s32.totalorder %s15, 0
    %p42 = por %p40, %p41
    %s44 = sadd.s32 %s43, 1
    %p47 = scmp.eq.s32.totalorder %s9, 1
    %p48 = scmp.ne.s32.totalorder %s43, %s45
    %p49 = scmp.eq.s32.totalorder %s9, 0
    %p50 = por %p48, %p49
    %p51 = scmp.ne.s32.totalorder %s43, %s45
    %p52 = scmp.eq.s32.totalorder %s14, 1
    %p53 = por %p51, %p52
    %p54 = scmp.ne.s32.totalorder %s45, %s46
    %p55 = scmp.eq.s32.totalorder %s14, 0
    %p56 = por %p54, %p55
    %p57 = scmp.ne.s32.totalorder %s45, %s46
    %p58 = scmp.eq.s32.totalorder %s15, 1
    %p59 = por %p57, %p58
    %p61 = scmp.ne.s32.totalorder %s46, %s60
    %p62 = scmp.eq.s32.totalorder %s15, 0
    %p63 = por %p61, %p62
    %s65 = sadd.s32 %s64, 1
    %p68 = scmp.eq.s32.totalorder %s9, 1
    %p69 = scmp.ne.s32.totalorder %s64, %s66
    %p70 = scmp.eq.s32.totalorder %s9, 0
    %p71 = por %p69, %p70
    %p72 = scmp.ne.s32.totalorder %s64, %s66
    %p73 = scmp.eq.s32.totalorder %s14, 1
    %p74 = por %p72, %p73
    %p75 = scmp.ne.s32.totalorder %s66, %s67
    %p76 = scmp.eq.s32.totalorder %s14, 0
    %p77 = por %p75, %p76
    %p78 = scmp.ne.s32.totalorder %s66, %s67
    %p79 = scmp.eq.s32.totalorder %s15, 1
    %p80 = por %p78, %p79
    %p82 = scmp.ne.s32.totalorder %s67, %s81
    %p83 = scmp.eq.s32.totalorder %s15, 0
    %p84 = por %p82, %p83
    %s85 = ssub.s32 %s9, %s16
    %p86 = scmp.eq.s32.totalorder %s85, 0
    %s88 = sadd.s32 %s87, 1
    %s89 = scalar_select %p86, %s87, %s88
    %p92 = pneg %p86
    %p93 = scmp.eq.s32.totalorder %s9, 1
    %p94 = por %p92, %p93
    %p95 = scmp.ne.s32.totalorder %s87, %s90
    %p96 = scmp.eq.s32.totalorder %s9, 0
    %p97 = por %p95, %p96
    %p98 = scmp.ne.s32.totalorder %s87, %s90
    %p99 = scmp.eq.s32.totalorder %s14, 1
    %p100 = por %p98, %p99
    %p101 = scmp.ne.s32.totalorder %s90, %s91
    %p102 = scmp.eq.s32.totalorder %s14, 0
    %p103 = por %p101, %p102
    %p104 = scmp.ne.s32.totalorder %s90, %s91
    %p105 = scmp.eq.s32.totalorder %s15, 1
    %p106 = por %p104, %p105
    %p108 = scmp.ne.s32.totalorder %s91, %s107
    %p109 = scmp.eq.s32.totalorder %s15, 0
    %p110 = por %p108, %p109
    %p111 = scmp.le.s32.totalorder 1, %s9
    %p112 = scmp.lt.s32.totalorder %s9, 3
    %p113 = pnand %p111, %p112
    %p114 = pneg %p113
    // Predicated region
    $region9: #{dbnet_forward.44} parent=5 // pred_check
      _
    $region10: #{dbnet_forward.44} parent=5 // pred_check_branch
      %116 = sbr.rel (%p113) target = $region12
    $region11: #{dbnet_forward.44} parent=5 // pred_region
      %s117 = ssub.s32 %s9, 1
      // Predicated region
      $region13: #{dbnet_forward.44} parent=11 // pred_check
        %p118 = pneg %p56
      $region14: #{dbnet_forward.44} parent=11 // pred_check_branch
        %120 = sbr.rel (%p118) target = $region16
      $region15: #{dbnet_forward.44} parent=11 // pred_region
        _
      $region16: #{dbnet_forward.44} parent=11 // pred_fallthru
        _
      // Predicated region
      $region17: #{dbnet_forward.44} parent=11 // pred_check
        %p121 = pneg %p77
      $region18: #{dbnet_forward.44} parent=11 // pred_check_branch
        %123 = sbr.rel (%p121) target = $region20
      $region19: #{dbnet_forward.44} parent=11 // pred_region
        _
      $region20: #{dbnet_forward.44} parent=11 // pred_fallthru
        _
    $region12: #{dbnet_forward.44} parent=5 // pred_fallthru
      _
    %p124 = scmp.lt.s32.totalorder %s9, 2
    // Predicated region
    $region21: #{dbnet_forward.44} parent=5 // pred_check
      %p125 = pneg %p124
    $region22: #{dbnet_forward.44} parent=5 // pred_check_branch
      %127 = sbr.rel (%p125) target = $region24
    $region23: #{dbnet_forward.44} parent=5 // pred_region
      // Predicated region
      $region25: #{dbnet_forward.44} parent=23 // pred_check
        %p128 = pneg %p29
      $region26: #{dbnet_forward.44} parent=23 // pred_check_branch
        %130 = sbr.rel (%p128) target = $region28
      $region27: #{dbnet_forward.44} parent=23 // pred_region
        %s131 = smul.u32 8, %s9
        %p132 = scmp.lt.s32.totalorder %s131, 15
        %s133 = scalar_select %p132, %s131, 15
        %s134 = smul.addr %s133, 4
        %s135 = scalar_lea.vmem %s0, %s134
        %s136 = smul.u32 8, %s9
      $region28: #{dbnet_forward.44} parent=23 // pred_fallthru
        _
    $region24: #{dbnet_forward.44} parent=5 // pred_fallthru
      _
    %p137 = scmp.le.s32.totalorder 1, %s9
    %p138 = scmp.lt.s32.totalorder %s9, 3
    %p139 = pnand %p137, %p138
    %p140 = pneg %p139
    // Predicated region
    $region29: #{dbnet_forward.44} parent=5 // pred_check
      _
    $region30: #{dbnet_forward.44} parent=5 // pred_check_branch
      %142 = sbr.rel (%p139) target = $region32
    $region31: #{dbnet_forward.44} parent=5 // pred_region
      %s143 = ssub.s32 %s9, 1
      %s144 = smul.u32 8, %s14
      %p145 = scmp.lt.s32.totalorder %s144, 15
      %s146 = scalar_select %p145, %s144, 15
      %s147 = smul.addr %s146, 4
      %s148 = scalar_lea.vmem %s0, %s147
      %p149 = pneg %p35
      %p150 = pneg %p32
      %p151 = pneg %p56
      %p152 = pneg %p53
      %p153 = pneg %p77
      %p154 = pneg %p74
      %p155 = pneg %p103
      %p156 = pneg %p100
      %s157 = smul.u32 8, %s14
      %p158 = scmp.lt.s32.totalorder %s157, 15
      %s159 = scalar_select %p158, %s157, 15
      %s160 = smul.addr %s159, 4
      %s161 = scalar_lea.vmem %s3, %s160
      %s162 = smul.u32 8, %s14
      %p163 = scmp.lt.s32.totalorder %s162, 15
      %s164 = scalar_select %p163, %s162, 15
      %s165 = smul.addr %s164, 4
      %s166 = scalar_lea.vmem %s0, %s165
      %s167 = smul.u32 8, %s14
      %s168 = smul.u32 8, %s14
      %p169 = scmp.lt.s32.totalorder %s168, 15
      %s170 = scalar_select %p169, %s168, 15
      %s171 = smul.addr %s170, 4
      %s172 = scalar_lea.vmem %s3, %s171
      %s173 = smul.u32 8, %s14
      %v175 = vld [vmem:[%s166] sm:$0xf]
      %v176 = vld [vmem:[%s166 + $0x4] sm:$0xf]
      %v177 = vld [vmem:[%s166 + $0x8] sm:$0xf]
      %v178 = vld [vmem:[%s166 + $0xc] sm:$0xf]
      %v179 = vld [vmem:[%s166 + $0x10] sm:$0xf]
      %v180 = vld [vmem:[%s166 + $0x14] sm:$0xf]
      %v181 = vld [vmem:[%s166 + $0x18] sm:$0xf]
      %v182 = vld [vmem:[%s166 + $0x1c] sm:$0xf]
      %v191 = vunpack.c.l.b16 %v175
      %v192 = vunpack.c.l.b16 %v176
      %v193 = vunpack.c.l.b16 %v177
      %v194 = vunpack.c.l.b16 %v178
      %v195 = vunpack.c.l.b16 %v179
      %v196 = vunpack.c.l.b16 %v180
      %v197 = vunpack.c.l.b16 %v181
      %v198 = vunpack.c.l.b16 %v182
      %v199 = vpack.c.b16 %v192, %v191
      %v200 = vpack.c.b16 %v194, %v193
      %v201 = vpack.c.b16 %v196, %v195
      %v202 = vpack.c.b16 %v198, %v197
      %vm203 = vcmask 130048
      %v206 = vsel %vm203, %v199, 0
      %v209 = vsel %vm203, %v200, 0
      %v212 = vsel %vm203, %v201, 0
      %v215 = vsel %vm203, %v202, 0
      %v217 = vld [vmem:[%s1] sm:$0xf]
      %v218 = vld [vmem:[%s1 + $0x4] sm:$0xf]
      %v219 = vld [vmem:[%s1 + $0x8] sm:$0xf]
      %v220 = vld [vmem:[%s1 + $0xc] sm:$0xf]
      %v221 = vld [vmem:[%s1 + $0x10] sm:$0xf]
      %v222 = vld [vmem:[%s1 + $0x14] sm:$0xf]
      %v223 = vld [vmem:[%s1 + $0x18] sm:$0xf]
      %v224 = vld [vmem:[%s1 + $0x1c] sm:$0xf]
      %v225 = vld [vmem:[%s1 + $0x20] sm:$0xf]
      %v226 = vld [vmem:[%s1 + $0x24] sm:$0xf]
      %v227 = vld [vmem:[%s1 + $0x28] sm:$0xf]
      %v228 = vld [vmem:[%s1 + $0x2c] sm:$0xf]
      %v229 = vld [vmem:[%s1 + $0x30] sm:$0xf]
      %v230 = vld [vmem:[%s1 + $0x34] sm:$0xf]
      %v231 = vld [vmem:[%s1 + $0x38] sm:$0xf]
      %v232 = vld [vmem:[%s1 + $0x3c] sm:$0xf]
      %v233 = vld [vmem:[%s2] sm:$0x1]
      %v235 = vlaneseq
      %v236 = vshrl.u32 %v235, 7
      %v237 = vsub.s32 0, %v236
      %v238 = vrot.slane %v233, %v237
      %v256 = vunpack.c.l.b16 %v217
      %v257 = vunpack.c.l.b16 %v218
      %v258 = vunpack.c.l.b16 %v219
      %v259 = vunpack.c.l.b16 %v220
      %v260 = vunpack.c.l.b16 %v221
      %v261 = vunpack.c.l.b16 %v222
      %v262 = vunpack.c.l.b16 %v223
      %v263 = vunpack.c.l.b16 %v224
      %v264 = vunpack.c.l.b16 %v225
      %v265 = vunpack.c.l.b16 %v226
      %v266 = vunpack.c.l.b16 %v227
      %v267 = vunpack.c.l.b16 %v228
      %v268 = vunpack.c.l.b16 %v229
      %v269 = vunpack.c.l.b16 %v230
      %v270 = vunpack.c.l.b16 %v231
      %v271 = vunpack.c.l.b16 %v232
      %v272 = vpack.c.b16 %v257, %v256
      %v273 = vpack.c.b16 %v259, %v258
      %v274 = vpack.c.b16 %v261, %v260
      %v275 = vpack.c.b16 %v263, %v262
      %v276 = vpack.c.b16 %v265, %v264
      %v277 = vpack.c.b16 %v267, %v266
      %v278 = vpack.c.b16 %v269, %v268
      %v279 = vpack.c.b16 %v271, %v270
      %288 = vmatprep.subr.bf16.mxu0 0
      %289 = vmatpush1.bf16.msra.mxu0 %v272
      %290 = vmatprep.subr.bf16.mxu0 0
      %291 = vmatpush1.bf16.msra.mxu0 %v273
      %292 = vmatprep.subr.bf16.mxu0 0
      %293 = vmatpush1.bf16.msra.mxu0 %v274
      %294 = vmatprep.subr.bf16.mxu0 0
      %295 = vmatpush1.bf16.msra.mxu0 %v275
      %296 = vmatprep.subr.bf16.mxu0 0
      %297 = vmatpush1.bf16.msra.mxu0 %v276
      %298 = vmatprep.subr.bf16.mxu0 0
      %299 = vmatpush1.bf16.msra.mxu0 %v277
      %300 = vmatprep.subr.bf16.mxu0 0
      %301 = vmatpush1.bf16.msra.mxu0 %v278
      %302 = vmatprep.subr.bf16.mxu0 0
      %303 = vmatpush1.bf16.msra.mxu0 %v279
      %304 = vmatprep.subr.bf16.mxu0 0
      %305 = vmatpush1.bf16.msra.mxu0 0
      %306 = vmatprep.subr.bf16.mxu0 0
      %307 = vmatpush1.bf16.msra.mxu0 0
      %308 = vmatprep.subr.bf16.mxu0 0
      %309 = vmatpush1.bf16.msra.mxu0 0
      %310 = vmatprep.subr.bf16.mxu0 0
      %311 = vmatpush1.bf16.msra.mxu0 0
      %312 = vmatprep.subr.bf16.mxu0 0
      %313 = vmatpush1.bf16.msra.mxu0 0
      %314 = vmatprep.subr.bf16.mxu0 0
      %315 = vmatpush1.bf16.msra.mxu0 0
      %316 = vmatprep.subr.bf16.mxu0 0
      %317 = vmatpush1.bf16.msra.mxu0 0
      %318 = vmatprep.subr.bf16.mxu0 0
      %319 = vmatpush1.bf16.msra.mxu0 0
      %320 = vmatprep.mubr.bf16.mxu0 0
      %321 = vmatmul.mubr.bf16.gmra.mrb[0].mxu0 %v206
      %v322 = vpop.f32.mrb[0].mxu0
      %v323 = vadd.f32 %v238, %v322
      %v324 = vpop.f32.mrb[0].mxu0
      %v325 = vpop.f32.mrb[0].mxu0
      %v326 = vadd.f32 %v238, %v325
      %v327 = vpop.f32.mrb[0].mxu0
      %328 = vmatprep.mubr.bf16.mxu0 0
      %329 = vmatmul.mubr.bf16.gmra.mrb[0].mxu0 %v209
      %v330 = vpop.f32.mrb[0].mxu0
      %v331 = vadd.f32 %v238, %v330
      %v332 = vpop.f32.mrb[0].mxu0
      %v333 = vpop.f32.mrb[0].mxu0
      %v334 = vadd.f32 %v238, %v333
      %v335 = vpop.f32.mrb[0].mxu0
      %336 = vmatprep.mubr.bf16.mxu0 0
      %337 = vmatmul.mubr.bf16.gmra.mrb[0].mxu0 %v212
      %v338 = vpop.f32.mrb[0].mxu0
      %v339 = vadd.f32 %v238, %v338
      %v340 = vpop.f32.mrb[0].mxu0
      %v341 = vpop.f32.mrb[0].mxu0
      %v342 = vadd.f32 %v238, %v341
      %v343 = vpop.f32.mrb[0].mxu0
      %344 = vmatprep.mubr.bf16.mxu0 0
      %345 = vmatmul.mubr.bf16.gmra.mrb[0].mxu0 %v215
      %v346 = vpop.f32.mrb[0].mxu0
      %v347 = vadd.f32 %v238, %v346
      %v348 = vpop.f32.mrb[0].mxu0
      %v349 = vpop.f32.mrb[0].mxu0
      %v350 = vadd.f32 %v238, %v349
      %v351 = vpop.f32.mrb[0].mxu0
      %352 = vdwg.mxu0
      %v353 = vmax.f32 %v323, 0.0
      %v354 = vmax.f32 %v326, 0.0
      %v355 = vmax.f32 %v331, 0.0
      %v356 = vmax.f32 %v334, 0.0
      %v357 = vmax.f32 %v339, 0.0
      %v358 = vmax.f32 %v342, 0.0
      %v359 = vmax.f32 %v347, 0.0
      %v360 = vmax.f32 %v350, 0.0
      %v361 = vpack.c.bf16 %v354, %v353
      %v362 = vpack.c.bf16 %v356, %v355
      %v363 = vpack.c.bf16 %v358, %v357
      %v364 = vpack.c.bf16 %v360, %v359
      %v369 = vunpack.c.l.b16 %v361
      %v370 = vunpack.c.h.b16 %v361
      %v371 = vunpack.c.l.b16 %v362
      %v372 = vunpack.c.h.b16 %v362
      %v373 = vunpack.c.l.b16 %v363
      %v374 = vunpack.c.h.b16 %v363
      %v375 = vunpack.c.l.b16 %v364
      %v376 = vunpack.c.h.b16 %v364
      %v377 = vpack.c.b16 %v369, %v369
      %v378 = vpack.c.b16 %v370, %v370
      %v379 = vpack.c.b16 %v371, %v371
      %v380 = vpack.c.b16 %v372, %v372
      %v381 = vpack.c.b16 %v373, %v373
      %v382 = vpack.c.b16 %v374, %v374
      %v383 = vpack.c.b16 %v375, %v375
      %v384 = vpack.c.b16 %v376, %v376
      %vm393 = vcmask 519168
      %394 = vst.msk [vmem:[%s172] sm:$0xf] %vm393, %v377
      %395 = vst.msk [vmem:[%s172 + $0x4] sm:$0xf] %vm393, %v378
      %396 = vst.msk [vmem:[%s172 + $0x8] sm:$0xf] %vm393, %v379
      %397 = vst.msk [vmem:[%s172 + $0xc] sm:$0xf] %vm393, %v380
      %398 = vst.msk [vmem:[%s172 + $0x10] sm:$0xf] %vm393, %v381
      %399 = vst.msk [vmem:[%s172 + $0x14] sm:$0xf] %vm393, %v382
      %400 = vst.msk [vmem:[%s172 + $0x18] sm:$0xf] %vm393, %v383
      %401 = vst.msk [vmem:[%s172 + $0x1c] sm:$0xf] %vm393, %v384
      %s402 = smul.u32 8, %s14
      %p403 = scmp.lt.s32.totalorder %s402, 15
      %s404 = scalar_select %p403, %s402, 15
      %s405 = smul.addr %s404, 4
      %s406 = scalar_lea.vmem %s3, %s405
      // Predicated region
      $region33: #{dbnet_forward.44} parent=31 // pred_check
        %p407 = pneg %p100
      $region34: #{dbnet_forward.44} parent=31 // pred_check_branch
        %409 = sbr.rel (%p407) target = $region36
      $region35: #{dbnet_forward.44} parent=31 // pred_region
        %s410 = smul.u32 8, %s14
      $region36: #{dbnet_forward.44} parent=31 // pred_fallthru
        _
    $region32: #{dbnet_forward.44} parent=5 // pred_fallthru
      _
    %p411 = scmp.le.s32.totalorder 2, %s9
    // Predicated region
    $region37: #{dbnet_forward.44} parent=5 // pred_check
      %p412 = pneg %p411
    $region38: #{dbnet_forward.44} parent=5 // pred_check_branch
      %414 = sbr.rel (%p412) target = $region40
    $region39: #{dbnet_forward.44} parent=5 // pred_region
      %s415 = ssub.s32 %s9, 2
      // Predicated region
      $region41: #{dbnet_forward.44} parent=39 // pred_check
        %p416 = pneg %p106
      $region42: #{dbnet_forward.44} parent=39 // pred_check_branch
        %418 = sbr.rel (%p416) target = $region44
      $region43: #{dbnet_forward.44} parent=39 // pred_region
        %s419 = smul.u32 8, %s15
        %p420 = scmp.lt.s32.totalorder %s419, 15
        %s421 = scalar_select %p420, %s419, 15
        %s422 = smul.addr %s421, 4
        %s423 = scalar_lea.vmem %s3, %s422
      $region44: #{dbnet_forward.44} parent=39 // pred_fallthru
        _
    $region40: #{dbnet_forward.44} parent=5 // pred_fallthru
      _
  $region6: #{dbnet_forward.44} parent=0 // loop_footer
    %s13 = sadd.s32 1, %s9
  $region7: #{dbnet_forward.44} parent=0 // loop_footer_branch
    %8 = sbr.rel target = $region3
  $region8: #{dbnet_forward.44} parent=0 // loop_exit
    _

// kernel: dbnet_forward.43
$region0: #{dbnet_forward.43}
  #allocation0 [shape = 'u32[]', space=smem, size = 0x4, offset = 0x4, fixed_abs, tag = 'smem constant byte address 0x4 - core index']
  #allocation1 [shape = 'u32[144,128]{1,0:T(1,128)}', space=vmem, size = 0x12000, scoped, tag = 'internal scratch']
  %s0 = inlined_call_operand.vmem [shape: bf16[128,288], index: 0, kind: input, shape index: {}]
  %s1 = inlined_call_operand.vmem [shape: bf16[384,128], index: 1, kind: input, shape index: {}]
  %s2 = inlined_call_operand.vmem [shape: f32[1,128], index: 2, kind: input, shape index: {}]
  %s3 = inlined_call_operand.vmem [shape: bf16[128,16], index: 3, kind: output, shape index: {}]
  %s4 = sld [smem:[#allocation0]]
  $region45: #{dbnet_forward.43} parent=0
    _
  %s6 = ssub.s32 1, %s4
  %s7 = scalar_select 0, %s6, %s4
  loop: start=0, step=1, limit=4
  $region2: #{dbnet_forward.43} parent=0 // loop_pre_header
    _
  $region3: #{dbnet_forward.43} parent=0 // loop_header
    %s9 = sphi 0, %s13
    %p10 = scmp.ge.s32.totalorder %s9, 4
    %s19 = sphi 0, %s21
    %s22 = sphi 0, %s19
    %s23 = sphi 0, %s22
    %s39 = sphi 0, %s23
    %s43 = sphi 0, %s43
    %s45 = sphi 0, %s43
    %s46 = sphi 0, %s45
    %s60 = sphi 0, %s46
    %s64 = sphi 0, %s64
    %s66 = sphi 0, %s64
    %s67 = sphi 0, %s66
    %s81 = sphi 0, %s67
    %s87 = sphi 0, %s89
    %s90 = sphi 0, %s87
    %s91 = sphi 0, %s90
    %s107 = sphi 0, %s91
  $region4: #{dbnet_forward.43} parent=0 // loop_header_branch
    %12 = sbr.rel (%p10) target = $region8
  $region5: #{dbnet_forward.43} parent=0 // loop_body
    %s14 = ssub.s32 %s9, 1
    %s15 = ssub.s32 %s9, 2
    %s16 = sadd.s32 %s9, 1
    %s17 = ssub.s32 %s9, %s16
    %p18 = scmp.eq.s32.totalorder %s17, 0
    %s20 = sadd.s32 %s19, 1
    %s21 = scalar_select %p18, %s19, %s20
    %p24 = pneg %p18
    %p25 = scmp.eq.s32.totalorder %s9, 1
    %p26 = por %p24, %p25
    %p27 = scmp.ne.s32.totalorder %s19, %s22
    %p28 = scmp.eq.s32.totalorder %s9, 0
    %p29 = por %p27, %p28
    %p30 = scmp.ne.s32.totalorder %s19, %s22
    %p31 = scmp.eq.s32.totalorder %s14, 1
    %p32 = por %p30, %p31
    %p33 = scmp.ne.s32.totalorder %s22, %s23
    %p34 = scmp.eq.s32.totalorder %s14, 0
    %p35 = por %p33, %p34
    %p36 = scmp.ne.s32.totalorder %s22, %s23
    %p37 = scmp.eq.s32.totalorder %s15, 1
    %p38 = por %p36, %p37
    %p40 = scmp.ne.s32.totalorder %s23, %s39
    %p41 = scmp.eq.s32.totalorder %s15, 0
    %p42 = por %p40, %p41
    %s44 = sadd.s32 %s43, 1
    %p47 = scmp.eq.s32.totalorder %s9, 1
    %p48 = scmp.ne.s32.totalorder %s43, %s45
    %p49 = scmp.eq.s32.totalorder %s9, 0
    %p50 = por %p48, %p49
    %p51 = scmp.ne.s32.totalorder %s43, %s45
    %p52 = scmp.eq.s32.totalorder %s14, 1
    %p53 = por %p51, %p52
    %p54 = scmp.ne.s32.totalorder %s45, %s46
    %p55 = scmp.eq.s32.totalorder %s14, 0
    %p56 = por %p54, %p55
    %p57 = scmp.ne.s32.totalorder %s45, %s46
    %p58 = scmp.eq.s32.totalorder %s15, 1
    %p59 = por %p57, %p58
    %p61 = scmp.ne.s32.totalorder %s46, %s60
    %p62 = scmp.eq.s32.totalorder %s15, 0
    %p63 = por %p61, %p62
    %s65 = sadd.s32 %s64, 1
    %p68 = scmp.eq.s32.totalorder %s9, 1
    %p69 = scmp.ne.s32.totalorder %s64, %s66
    %p70 = scmp.eq.s32.totalorder %s9, 0
    %p71 = por %p69, %p70
    %p72 = scmp.ne.s32.totalorder %s64, %s66
    %p73 = scmp.eq.s32.totalorder %s14, 1
    %p74 = por %p72, %p73
    %p75 = scmp.ne.s32.totalorder %s66, %s67
    %p76 = scmp.eq.s32.totalorder %s14, 0
    %p77 = por %p75, %p76
    %p78 = scmp.ne.s32.totalorder %s66, %s67
    %p79 = scmp.eq.s32.totalorder %s15, 1
    %p80 = por %p78, %p79
    %p82 = scmp.ne.s32.totalorder %s67, %s81
    %p83 = scmp.eq.s32.totalorder %s15, 0
    %p84 = por %p82, %p83
    %s85 = ssub.s32 %s9, %s16
    %p86 = scmp.eq.s32.totalorder %s85, 0
    %s88 = sadd.s32 %s87, 1
    %s89 = scalar_select %p86, %s87, %s88
    %p92 = pneg %p86
    %p93 = scmp.eq.s32.totalorder %s9, 1
    %p94 = por %p92, %p93
    %p95 = scmp.ne.s32.totalorder %s87, %s90
    %p96 = scmp.eq.s32.totalorder %s9, 0
    %p97 = por %p95, %p96
    %p98 = scmp.ne.s32.totalorder %s87, %s90
    %p99 = scmp.eq.s32.totalorder %s14, 1
    %p100 = por %p98, %p99
    %p101 = scmp.ne.s32.totalorder %s90, %s91
    %p102 = scmp.eq.s32.totalorder %s14, 0
    %p103 = por %p101, %p102
    %p104 = scmp.ne.s32.totalorder %s90, %s91
    %p105 = scmp.eq.s32.totalorder %s15, 1
    %p106 = por %p104, %p105
    %p108 = scmp.ne.s32.totalorder %s91, %s107
    %p109 = scmp.eq.s32.totalorder %s15, 0
    %p110 = por %p108, %p109
    %p111 = scmp.le.s32.totalorder 1, %s9
    %p112 = scmp.lt.s32.totalorder %s9, 3
    %p113 = pnand %p111, %p112
    %p114 = pneg %p113
    // Predicated region
    $region9: #{dbnet_forward.43} parent=5 // pred_check
      _
    $region10: #{dbnet_forward.43} parent=5 // pred_check_branch
      %116 = sbr.rel (%p113) target = $region12
    $region11: #{dbnet_forward.43} parent=5 // pred_region
      %s117 = ssub.s32 %s9, 1
      // Predicated region
      $region13: #{dbnet_forward.43} parent=11 // pred_check
        %p118 = pneg %p56
      $region14: #{dbnet_forward.43} parent=11 // pred_check_branch
        %120 = sbr.rel (%p118) target = $region16
      $region15: #{dbnet_forward.43} parent=11 // pred_region
        _
      $region16: #{dbnet_forward.43} parent=11 // pred_fallthru
        _
      // Predicated region
      $region17: #{dbnet_forward.43} parent=11 // pred_check
        %p121 = pneg %p77
      $region18: #{dbnet_forward.43} parent=11 // pred_check_branch
        %123 = sbr.rel (%p121) target = $region20
      $region19: #{dbnet_forward.43} parent=11 // pred_region
        _
      $region20: #{dbnet_forward.43} parent=11 // pred_fallthru
        _
    $region12: #{dbnet_forward.43} parent=5 // pred_fallthru
      _
    %p124 = scmp.lt.s32.totalorder %s9, 2
    // Predicated region
    $region21: #{dbnet_forward.43} parent=5 // pred_check
      %p125 = pneg %p124
    $region22: #{dbnet_forward.43} parent=5 // pred_check_branch
      %127 = sbr.rel (%p125) target = $region24
    $region23: #{dbnet_forward.43} parent=5 // pred_region
      // Predicated region
      $region25: #{dbnet_forward.43} parent=23 // pred_check
        %p128 = pneg %p29
      $region26: #{dbnet_forward.43} parent=23 // pred_check_branch
        %130 = sbr.rel (%p128) target = $region28
      $region27: #{dbnet_forward.43} parent=23 // pred_region
        %s131 = smul.u32 8, %s9
        %p132 = scmp.lt.s32.totalorder %s131, 15
        %s133 = scalar_select %p132, %s131, 15
        %s134 = smul.addr %s133, 3
        %s135 = smul.addr %s134, 4
        %s136 = scalar_lea.vmem %s0, %s135
        %s137 = smul.u32 8, %s9
      $region28: #{dbnet_forward.43} parent=23 // pred_fallthru
        _
    $region24: #{dbnet_forward.43} parent=5 // pred_fallthru
      _
    %p138 = scmp.le.s32.totalorder 1, %s9
    %p139 = scmp.lt.s32.totalorder %s9, 3
    %p140 = pnand %p138, %p139
    %p141 = pneg %p140
    // Predicated region
    $region29: #{dbnet_forward.43} parent=5 // pred_check
      _
    $region30: #{dbnet_forward.43} parent=5 // pred_check_branch
      %143 = sbr.rel (%p140) target = $region32
    $region31: #{dbnet_forward.43} parent=5 // pred_region
      %s144 = ssub.s32 %s9, 1
      %s145 = smul.u32 8, %s14
      %p146 = scmp.lt.s32.totalorder %s145, 15
      %s147 = scalar_select %p146, %s145, 15
      %s148 = smul.addr %s147, 3
      %s149 = smul.addr %s148, 4
      %s150 = scalar_lea.vmem %s0, %s149
      %p151 = pneg %p35
      %p152 = pneg %p32
      %p153 = pneg %p56
      %p154 = pneg %p53
      %p155 = pneg %p77
      %p156 = pneg %p74
      %p157 = pneg %p103
      %p158 = pneg %p100
      %s159 = smul.u32 8, %s14
      %p160 = scmp.lt.s32.totalorder %s159, 15
      %s161 = scalar_select %p160, %s159, 15
      %s162 = smul.addr %s161, 4
      %s163 = scalar_lea.vmem %s3, %s162
      %s164 = smul.u32 8, %s14
      %p165 = scmp.lt.s32.totalorder %s164, 15
      %s166 = scalar_select %p165, %s164, 15
      %s167 = smul.addr %s166, 3
      %s168 = smul.addr %s167, 4
      %s169 = scalar_lea.vmem %s0, %s168
      %s170 = smul.u32 8, %s14
      %s171 = smul.u32 8, %s14
      %p172 = scmp.lt.s32.totalorder %s171, 15
      %s173 = scalar_select %p172, %s171, 15
      %s174 = smul.addr %s173, 4
      %s175 = scalar_lea.vmem %s3, %s174
      %s176 = smul.u32 8, %s14
      %v178 = vld [vmem:[%s169] sm:$0xff]
      %v179 = vld [vmem:[%s169 + $0x8] sm:$0xf]
      %v180 = vld [vmem:[%s169 + $0xc] sm:$0xff]
      %v181 = vld [vmem:[%s169 + $0x14] sm:$0xf]
      %v182 = vld [vmem:[%s169 + $0x18] sm:$0xff]
      %v183 = vld [vmem:[%s169 + $0x20] sm:$0xf]
      %v184 = vld [vmem:[%s169 + $0x24] sm:$0xff]
      %v185 = vld [vmem:[%s169 + $0x2c] sm:$0xf]
      %v186 = vld [vmem:[%s169 + $0x30] sm:$0xff]
      %v187 = vld [vmem:[%s169 + $0x38] sm:$0xf]
      %v188 = vld [vmem:[%s169 + $0x3c] sm:$0xff]
      %v189 = vld [vmem:[%s169 + $0x44] sm:$0xf]
      %v190 = vld [vmem:[%s169 + $0x48] sm:$0xff]
      %v191 = vld [vmem:[%s169 + $0x50] sm:$0xf]
      %v192 = vld [vmem:[%s169 + $0x54] sm:$0xff]
      %v193 = vld [vmem:[%s169 + $0x5c] sm:$0xf]
      %v210 = vunpack.c.l.b16 %v178
      %v211 = vunpack.c.h.b16 %v178
      %v212 = vunpack.c.l.b16 %v179
      %v213 = vunpack.c.l.b16 %v180
      %v214 = vunpack.c.h.b16 %v180
      %v215 = vunpack.c.l.b16 %v181
      %v216 = vunpack.c.l.b16 %v182
      %v217 = vunpack.c.h.b16 %v182
      %v218 = vunpack.c.l.b16 %v183
      %v219 = vunpack.c.l.b16 %v184
      %v220 = vunpack.c.h.b16 %v184
      %v221 = vunpack.c.l.b16 %v185
      %v222 = vunpack.c.l.b16 %v186
      %v223 = vunpack.c.h.b16 %v186
      %v224 = vunpack.c.l.b16 %v187
      %v225 = vunpack.c.l.b16 %v188
      %v226 = vunpack.c.h.b16 %v188
      %v227 = vunpack.c.l.b16 %v189
      %v228 = vunpack.c.l.b16 %v190
      %v229 = vunpack.c.h.b16 %v190
      %v230 = vunpack.c.l.b16 %v191
      %v231 = vunpack.c.l.b16 %v192
      %v232 = vunpack.c.h.b16 %v192
      %v233 = vunpack.c.l.b16 %v193
      %v234 = vpack.c.b16 %v213, %v210
      %v235 = vpack.c.b16 %v214, %v211
      %v236 = vpack.c.b16 %v215, %v212
      %v237 = vpack.c.b16 %v219, %v216
      %v238 = vpack.c.b16 %v220, %v217
      %v239 = vpack.c.b16 %v221, %v218
      %v240 = vpack.c.b16 %v225, %v222
      %v241 = vpack.c.b16 %v226, %v223
      %v242 = vpack.c.b16 %v227, %v224
      %v243 = vpack.c.b16 %v231, %v228
      %v244 = vpack.c.b16 %v232, %v229
      %v245 = vpack.c.b16 %v233, %v230
      %vm254 = vcmask 261120
      %v257 = vsel %vm254, %v236, 0
      %v260 = vsel %vm254, %v239, 0
      %v263 = vsel %vm254, %v242, 0
      %v266 = vsel %vm254, %v245, 0
      %v268 = vld [vmem:[%s1] sm:$0xf]
      %v269 = vld [vmem:[%s1 + $0x4] sm:$0xf]
      %v270 = vld [vmem:[%s1 + $0x8] sm:$0xf]
      %v271 = vld [vmem:[%s1 + $0xc] sm:$0xf]
      %v272 = vld [vmem:[%s1 + $0x10] sm:$0xf]
      %v273 = vld [vmem:[%s1 + $0x14] sm:$0xf]
      %v274 = vld [vmem:[%s1 + $0x18] sm:$0xf]
      %v275 = vld [vmem:[%s1 + $0x1c] sm:$0xf]
      %v276 = vld [vmem:[%s1 + $0x20] sm:$0xf]
      %v277 = vld [vmem:[%s1 + $0x24] sm:$0xf]
      %v278 = vld [vmem:[%s1 + $0x28] sm:$0xf]
      %v279 = vld [vmem:[%s1 + $0x2c] sm:$0xf]
      %v280 = vld [vmem:[%s1 + $0x30] sm:$0xf]
      %v281 = vld [vmem:[%s1 + $0x34] sm:$0xf]
      %v282 = vld [vmem:[%s1 + $0x38] sm:$0xf]
      %v283 = vld [vmem:[%s1 + $0x3c] sm:$0xf]
      %v284 = vld [vmem:[%s1 + $0x40] sm:$0xf]
      %v285 = vld [vmem:[%s1 + $0x44] sm:$0xf]
      %v286 = vld [vmem:[%s1 + $0x48] sm:$0xf]
      %v287 = vld [vmem:[%s1 + $0x4c] sm:$0xf]
      %v288 = vld [vmem:[%s1 + $0x50] sm:$0xf]
      %v289 = vld [vmem:[%s1 + $0x54] sm:$0xf]
      %v290 = vld [vmem:[%s1 + $0x58] sm:$0xf]
      %v291 = vld [vmem:[%s1 + $0x5c] sm:$0xf]
      %v292 = vld [vmem:[%s1 + $0x60] sm:$0xf]
      %v293 = vld [vmem:[%s1 + $0x64] sm:$0xf]
      %v294 = vld [vmem:[%s1 + $0x68] sm:$0xf]
      %v295 = vld [vmem:[%s1 + $0x6c] sm:$0xf]
      %v296 = vld [vmem:[%s1 + $0x70] sm:$0xf]
      %v297 = vld [vmem:[%s1 + $0x74] sm:$0xf]
      %v298 = vld [vmem:[%s1 + $0x78] sm:$0xf]
      %v299 = vld [vmem:[%s1 + $0x7c] sm:$0xf]
      %v300 = vld [vmem:[%s1 + $0x80] sm:$0xf]
      %v301 = vld [vmem:[%s1 + $0x84] sm:$0xf]
      %v302 = vld [vmem:[%s1 + $0x88] sm:$0xf]
      %v303 = vld [vmem:[%s1 + $0x8c] sm:$0xf]
      %v304 = vld [vmem:[%s1 + $0x90] sm:$0xf]
      %v305 = vld [vmem:[%s1 + $0x94] sm:$0xf]
      %v306 = vld [vmem:[%s1 + $0x98] sm:$0xf]
      %v307 = vld [vmem:[%s1 + $0x9c] sm:$0xf]
      %v308 = vld [vmem:[%s1 + $0xa0] sm:$0xf]
      %v309 = vld [vmem:[%s1 + $0xa4] sm:$0xf]
      %v310 = vld [vmem:[%s1 + $0xa8] sm:$0xf]
      %v311 = vld [vmem:[%s1 + $0xac] sm:$0xf]
      %v312 = vld [vmem:[%s1 + $0xb0] sm:$0xf]
      %v313 = vld [vmem:[%s1 + $0xb4] sm:$0xf]
      %v314 = vld [vmem:[%s1 + $0xb8] sm:$0xf]
      %v315 = vld [vmem:[%s1 + $0xbc] sm:$0xf]
      %v316 = vld [vmem:[%s2] sm:$0x1]
      %v318 = vlaneseq
      %v319 = vshrl.u32 %v318, 7
      %v320 = vsub.s32 0, %v319
      %v321 = vrot.slane %v316, %v320
      %v371 = vunpack.c.l.b16 %v268
      %v372 = vunpack.c.l.b16 %v269
      %v373 = vunpack.c.l.b16 %v270
      %v374 = vunpack.c.l.b16 %v271
      %v375 = vunpack.c.l.b16 %v272
      %v376 = vunpack.c.l.b16 %v273
      %v377 = vunpack.c.l.b16 %v274
      %v378 = vunpack.c.l.b16 %v275
      %v379 = vunpack.c.l.b16 %v276
      %v380 = vunpack.c.l.b16 %v277
      %v381 = vunpack.c.l.b16 %v278
      %v382 = vunpack.c.l.b16 %v279
      %v383 = vunpack.c.l.b16 %v280
      %v384 = vunpack.c.l.b16 %v281
      %v385 = vunpack.c.l.b16 %v282
      %v386 = vunpack.c.l.b16 %v283
      %v387 = vunpack.c.l.b16 %v284
      %v388 = vunpack.c.l.b16 %v285
      %v389 = vunpack.c.l.b16 %v286
      %v390 = vunpack.c.l.b16 %v287
      %v391 = vunpack.c.l.b16 %v288
      %v392 = vunpack.c.l.b16 %v289
      %v393 = vunpack.c.l.b16 %v290
      %v394 = vunpack.c.l.b16 %v291
      %v395 = vunpack.c.l.b16 %v292
      %v396 = vunpack.c.l.b16 %v293
      %v397 = vunpack.c.l.b16 %v294
      %v398 = vunpack.c.l.b16 %v295
      %v399 = vunpack.c.l.b16 %v296
      %v400 = vunpack.c.l.b16 %v297
      %v401 = vunpack.c.l.b16 %v298
      %v402 = vunpack.c.l.b16 %v299
      %v403 = vunpack.c.l.b16 %v300
      %v404 = vunpack.c.l.b16 %v301
      %v405 = vunpack.c.l.b16 %v302
      %v406 = vunpack.c.l.b16 %v303
      %v407 = vunpack.c.l.b16 %v304
      %v408 = vunpack.c.l.b16 %v305
      %v409 = vunpack.c.l.b16 %v306
      %v410 = vunpack.c.l.b16 %v307
      %v411 = vunpack.c.l.b16 %v308
      %v412 = vunpack.c.l.b16 %v309
      %v413 = vunpack.c.l.b16 %v310
      %v414 = vunpack.c.l.b16 %v311
      %v415 = vunpack.c.l.b16 %v312
      %v416 = vunpack.c.l.b16 %v313
      %v417 = vunpack.c.l.b16 %v314
      %v418 = vunpack.c.l.b16 %v315
      %v419 = vpack.c.b16 %v372, %v371
      %v420 = vpack.c.b16 %v374, %v373
      %v421 = vpack.c.b16 %v376, %v375
      %v422 = vpack.c.b16 %v378, %v377
      %v423 = vpack.c.b16 %v380, %v379
      %v424 = vpack.c.b16 %v382, %v381
      %v425 = vpack.c.b16 %v384, %v383
      %v426 = vpack.c.b16 %v386, %v385
      %v427 = vpack.c.b16 %v388, %v387
      %v428 = vpack.c.b16 %v390, %v389
      %v429 = vpack.c.b16 %v392, %v391
      %v430 = vpack.c.b16 %v394, %v393
      %v431 = vpack.c.b16 %v396, %v395
      %v432 = vpack.c.b16 %v398, %v397
      %v433 = vpack.c.b16 %v400, %v399
      %v434 = vpack.c.b16 %v402, %v401
      %v435 = vpack.c.b16 %v404, %v403
      %v436 = vpack.c.b16 %v406, %v405
      %v437 = vpack.c.b16 %v408, %v407
      %v438 = vpack.c.b16 %v410, %v409
      %v439 = vpack.c.b16 %v412, %v411
      %v440 = vpack.c.b16 %v414, %v413
      %v441 = vpack.c.b16 %v416, %v415
      %v442 = vpack.c.b16 %v418, %v417
      %467 = vmatprep.subr.bf16.mxu0 0
      %468 = vmatpush1.bf16.msra.mxu0 %v419
      %469 = vmatprep.subr.bf16.mxu0 0
      %470 = vmatpush1.bf16.msra.mxu0 %v420
      %471 = vmatprep.subr.bf16.mxu0 0
      %472 = vmatpush1.bf16.msra.mxu0 %v421
      %473 = vmatprep.subr.bf16.mxu0 0
      %474 = vmatpush1.bf16.msra.mxu0 %v422
      %475 = vmatprep.subr.bf16.mxu0 0
      %476 = vmatpush1.bf16.msra.mxu0 %v423
      %477 = vmatprep.subr.bf16.mxu0 0
      %478 = vmatpush1.bf16.msra.mxu0 %v424
      %479 = vmatprep.subr.bf16.mxu0 0
      %480 = vmatpush1.bf16.msra.mxu0 %v425
      %481 = vmatprep.subr.bf16.mxu0 0
      %482 = vmatpush1.bf16.msra.mxu0 %v426
      %483 = vmatprep.subr.bf16.mxu0 0
      %484 = vmatpush1.bf16.msra.mxu0 %v427
      %485 = vmatprep.subr.bf16.mxu0 0
      %486 = vmatpush1.bf16.msra.mxu0 %v428
      %487 = vmatprep.subr.bf16.mxu0 0
      %488 = vmatpush1.bf16.msra.mxu0 %v429
      %489 = vmatprep.subr.bf16.mxu0 0
      %490 = vmatpush1.bf16.msra.mxu0 %v430
      %491 = vmatprep.subr.bf16.mxu0 0
      %492 = vmatpush1.bf16.msra.mxu0 %v431
      %493 = vmatprep.subr.bf16.mxu0 0
      %494 = vmatpush1.bf16.msra.mxu0 %v432
      %495 = vmatprep.subr.bf16.mxu0 0
      %496 = vmatpush1.bf16.msra.mxu0 %v433
      %497 = vmatprep.subr.bf16.mxu0 0
      %498 = vmatpush1.bf16.msra.mxu0 %v434
      %499 = vmatprep.mubr.bf16.mxu0 %v235
      %500 = vmatmul.mubr.bf16.gmra.mrb[0].mxu0 %v234
      %v501 = vpop.f32.mrb[0].mxu0
      %v502 = vadd.f32 %v321, %v501
      %v503 = vpop.f32.mrb[0].mxu0
      %v504 = vpop.f32.mrb[0].mxu0
      %v505 = vadd.f32 %v321, %v504
      %v506 = vpop.f32.mrb[0].mxu0
      %507 = vmatprep.mubr.bf16.mxu0 %v238
      %508 = vmatmul.mubr.bf16.gmra.mrb[0].mxu0 %v237
      %v509 = vpop.f32.mrb[0].mxu0
      %v510 = vadd.f32 %v321, %v509
      %v511 = vpop.f32.mrb[0].mxu0
      %v512 = vpop.f32.mrb[0].mxu0
      %v513 = vadd.f32 %v321, %v512
      %v514 = vpop.f32.mrb[0].mxu0
      %515 = vmatprep.mubr.bf16.mxu0 %v241
      %516 = vmatmul.mubr.bf16.gmra.mrb[0].mxu0 %v240
      %v517 = vpop.f32.mrb[0].mxu0
      %v518 = vadd.f32 %v321, %v517
      %v519 = vpop.f32.mrb[0].mxu0
      %v520 = vpop.f32.mrb[0].mxu0
      %v521 = vadd.f32 %v321, %v520
      %v522 = vpop.f32.mrb[0].mxu0
      %523 = vmatprep.mubr.bf16.mxu0 %v244
      %524 = vmatmul.mubr.bf16.gmra.mrb[0].mxu0 %v243
      %v525 = vpop.f32.mrb[0].mxu0
      %v526 = vadd.f32 %v321, %v525
      %v527 = vpop.f32.mrb[0].mxu0
      %v528 = vpop.f32.mrb[0].mxu0
      %v529 = vadd.f32 %v321, %v528
      %v530 = vpop.f32.mrb[0].mxu0
      %531 = vdwg.mxu0
      %532 = vmatprep.subr.bf16.mxu0 0
      %533 = vmatpush1.bf16.msra.mxu0 %v435
      %534 = vmatprep.subr.bf16.mxu0 0
      %535 = vmatpush1.bf16.msra.mxu0 %v436
      %536 = vmatprep.subr.bf16.mxu0 0
      %537 = vmatpush1.bf16.msra.mxu0 %v437
      %538 = vmatprep.subr.bf16.mxu0 0
      %539 = vmatpush1.bf16.msra.mxu0 %v438
      %540 = vmatprep.subr.bf16.mxu0 0
      %541 = vmatpush1.bf16.msra.mxu0 %v439
      %542 = vmatprep.subr.bf16.mxu0 0
      %543 = vmatpush1.bf16.msra.mxu0 %v440
      %544 = vmatprep.subr.bf16.mxu0 0
      %545 = vmatpush1.bf16.msra.mxu0 %v441
      %546 = vmatprep.subr.bf16.mxu0 0
      %547 = vmatpush1.bf16.msra.mxu0 %v442
      %548 = vmatprep.subr.bf16.mxu0 0
      %549 = vmatpush1.bf16.msra.mxu0 0
      %550 = vmatprep.subr.bf16.mxu0 0
      %551 = vmatpush1.bf16.msra.mxu0 0
      %552 = vmatprep.subr.bf16.mxu0 0
      %553 = vmatpush1.bf16.msra.mxu0 0
      %554 = vmatprep.subr.bf16.mxu0 0
      %555 = vmatpush1.bf16.msra.mxu0 0
      %556 = vmatprep.subr.bf16.mxu0 0
      %557 = vmatpush1.bf16.msra.mxu0 0
      %558 = vmatprep.subr.bf16.mxu0 0
      %559 = vmatpush1.bf16.msra.mxu0 0
      %560 = vmatprep.subr.bf16.mxu0 0
      %561 = vmatpush1.bf16.msra.mxu0 0
      %562 = vmatprep.subr.bf16.mxu0 0
      %563 = vmatpush1.bf16.msra.mxu0 0
      %564 = vmatprep.mubr.bf16.mxu0 0
      %565 = vmatmul.mubr.bf16.gmra.mrb[0].mxu0 %v257
      %v566 = vpop.f32.mrb[0].mxu0
      %v567 = vadd.f32 %v502, %v566
      %v568 = vpop.f32.mrb[0].mxu0
      %v569 = vpop.f32.mrb[0].mxu0
      %v570 = vadd.f32 %v505, %v569
      %v571 = vpop.f32.mrb[0].mxu0
      %572 = vmatprep.mubr.bf16.mxu0 0
      %573 = vmatmul.mubr.bf16.gmra.mrb[0].mxu0 %v260
      %v574 = vpop.f32.mrb[0].mxu0
      %v575 = vadd.f32 %v510, %v574
      %v576 = vpop.f32.mrb[0].mxu0
      %v577 = vpop.f32.mrb[0].mxu0
      %v578 = vadd.f32 %v513, %v577
      %v579 = vpop.f32.mrb[0].mxu0
      %580 = vmatprep.mubr.bf16.mxu0 0
      %581 = vmatmul.mubr.bf16.gmra.mrb[0].mxu0 %v263
      %v582 = vpop.f32.mrb[0].mxu0
      %v583 = vadd.f32 %v518, %v582
      %v584 = vpop.f32.mrb[0].mxu0
      %v585 = vpop.f32.mrb[0].mxu0
      %v586 = vadd.f32 %v521, %v585
      %v587 = vpop.f32.mrb[0].mxu0
      %588 = vmatprep.mubr.bf16.mxu0 0
      %589 = vmatmul.mubr.bf16.gmra.mrb[0].mxu0 %v266
      %v590 = vpop.f32.mrb[0].mxu0
      %v591 = vadd.f32 %v526, %v590
      %v592 = vpop.f32.mrb[0].mxu0
      %v593 = vpop.f32.mrb[0].mxu0
      %v594 = vadd.f32 %v529, %v593
      %v595 = vpop.f32.mrb[0].mxu0
      %596 = vdwg.mxu0
      %v597 = vmax.f32 %v567, 0.0
      %v598 = vmax.f32 %v570, 0.0
      %v599 = vmax.f32 %v575, 0.0
      %v600 = vmax.f32 %v578, 0.0
      %v601 = vmax.f32 %v583, 0.0
      %v602 = vmax.f32 %v586, 0.0
      %v603 = vmax.f32 %v591, 0.0
      %v604 = vmax.f32 %v594, 0.0
      %v605 = vpack.c.bf16 %v598, %v597
      %v606 = vpack.c.bf16 %v600, %v599
      %v607 = vpack.c.bf16 %v602, %v601
      %v608 = vpack.c.bf16 %v604, %v603
      %v613 = vunpack.c.l.b16 %v605
      %v614 = vunpack.c.h.b16 %v605
      %v615 = vunpack.c.l.b16 %v606
      %v616 = vunpack.c.h.b16 %v606
      %v617 = vunpack.c.l.b16 %v607
      %v618 = vunpack.c.h.b16 %v607
      %v619 = vunpack.c.l.b16 %v608
      %v620 = vunpack.c.h.b16 %v608
      %v621 = vpack.c.b16 %v613, %v613
      %v622 = vpack.c.b16 %v614, %v614
      %v623 = vpack.c.b16 %v615, %v615
      %v624 = vpack.c.b16 %v616, %v616
      %v625 = vpack.c.b16 %v617, %v617
      %v626 = vpack.c.b16 %v618, %v618
      %v627 = vpack.c.b16 %v619, %v619
      %v628 = vpack.c.b16 %v620, %v620
      %vm637 = vcmask 125952
      %638 = vst.msk [vmem:[%s175] sm:$0xf] %vm637, %v621
      %639 = vst.msk [vmem:[%s175 + $0x4] sm:$0xf] %vm637, %v622
      %640 = vst.msk [vmem:[%s175 + $0x8] sm:$0xf] %vm637, %v623
      %641 = vst.msk [vmem:[%s175 + $0xc] sm:$0xf] %vm637, %v624
      %642 = vst.msk [vmem:[%s175 + $0x10] sm:$0xf] %vm637, %v625
      %643 = vst.msk [vmem:[%s175 + $0x14] sm:$0xf] %vm637, %v626
      %644 = vst.msk [vmem:[%s175 + $0x18] sm:$0xf] %vm637, %v627
      %645 = vst.msk [vmem:[%s175 + $0x1c] sm:$0xf] %vm637, %v628
      %s646 = smul.u32 8, %s14
      %p647 = scmp.lt.s32.totalorder %s646, 15
      %s648 = scalar_select %p647, %s646, 15
      %s649 = smul.addr %s648, 4
      %s650 = scalar_lea.vmem %s3, %s649
      // Predicated region
      $region33: #{dbnet_forward.43} parent=31 // pred_check
        %p651 = pneg %p100
      $region34: #{dbnet_forward.43} parent=31 // pred_check_branch
        %653 = sbr.rel (%p651) target = $region36
      $region35: #{dbnet_forward.43} parent=31 // pred_region
        %s654 = smul.u32 8, %s14
      $region36: #{dbnet_forward.43} parent=31 // pred_fallthru
        _
    $region32: #{dbnet_forward.43} parent=5 // pred_fallthru
      _
    %p655 = scmp.le.s32.totalorder 2, %s9
    // Predicated region
    $region37: #{dbnet_forward.43} parent=5 // pred_check
      %p656 = pneg %p655
    $region38: #{dbnet_forward.43} parent=5 // pred_check_branch
      %658 = sbr.rel (%p656) target = $region40
    $region39: #{dbnet_forward.43} parent=5 // pred_region
      %s659 = ssub.s32 %s9, 2
      // Predicated region
      $region41: #{dbnet_forward.43} parent=39 // pred_check
        %p660 = pneg %p106
      $region42: #{dbnet_forward.43} parent=39 // pred_check_branch
        %662 = sbr.rel (%p660) target = $region44
      $region43: #{dbnet_forward.43} parent=39 // pred_region
        %s663 = smul.u32 8, %s15
        %p664 = scmp.lt.s32.totalorder %s663, 15
        %s665 = scalar_select %p664, %s663, 15
        %s666 = smul.addr %s665, 4
        %s667 = scalar_lea.vmem %s3, %s666
      $region44: #{dbnet_forward.43} parent=39 // pred_fallthru
        _
    $region40: #{dbnet_forward.43} parent=5 // pred_fallthru
      _
  $region6: #{dbnet_forward.43} parent=0 // loop_footer
    %s13 = sadd.s32 1, %s9
  $region7: #{dbnet_forward.43} parent=0 // loop_footer_branch
    %8 = sbr.rel target = $region3
  $region8: #{dbnet_forward.43} parent=0 // loop_exit
    _

// kernel: dbnet_forward.45
$region0: #{dbnet_forward.45}
  #allocation0 [shape = 'u32[]', space=smem, size = 0x4, offset = 0x4, fixed_abs, tag = 'smem constant byte address 0x4 - core index']
  #allocation1 [shape = 'u32[144,128]{1,0:T(1,128)}', space=vmem, size = 0x12000, scoped, tag = 'internal scratch']
  %s0 = inlined_call_operand.vmem [shape: bf16[512,16], index: 0, kind: input, shape index: {}]
  %s1 = inlined_call_operand.vmem [shape: bf16[128,128], index: 1, kind: input, shape index: {}]
  %s2 = inlined_call_operand.vmem [shape: f32[1,128], index: 2, kind: input, shape index: {}]
  %s3 = inlined_call_operand.vmem [shape: f32[512,12], index: 3, kind: output, shape index: {}]
  %s4 = sld [smem:[#allocation0]]
  $region45: #{dbnet_forward.45} parent=0
    _
  %s6 = ssub.s32 1, %s4
  %s7 = scalar_select 0, %s6, %s4
  loop: start=0, step=1, limit=4
  $region2: #{dbnet_forward.45} parent=0 // loop_pre_header
    _
  $region3: #{dbnet_forward.45} parent=0 // loop_header
    %s9 = sphi 0, %s13
    %p10 = scmp.ge.s32.totalorder %s9, 4
    %s19 = sphi 0, %s21
    %s22 = sphi 0, %s19
    %s23 = sphi 0, %s22
    %s39 = sphi 0, %s23
    %s43 = sphi 0, %s43
    %s45 = sphi 0, %s43
    %s46 = sphi 0, %s45
    %s60 = sphi 0, %s46
    %s64 = sphi 0, %s64
    %s66 = sphi 0, %s64
    %s67 = sphi 0, %s66
    %s81 = sphi 0, %s67
    %s87 = sphi 0, %s89
    %s90 = sphi 0, %s87
    %s91 = sphi 0, %s90
    %s107 = sphi 0, %s91
  $region4: #{dbnet_forward.45} parent=0 // loop_header_branch
    %12 = sbr.rel (%p10) target = $region8
  $region5: #{dbnet_forward.45} parent=0 // loop_body
    %s14 = ssub.s32 %s9, 1
    %s15 = ssub.s32 %s9, 2
    %s16 = sadd.s32 %s9, 1
    %s17 = ssub.s32 %s9, %s16
    %p18 = scmp.eq.s32.totalorder %s17, 0
    %s20 = sadd.s32 %s19, 1
    %s21 = scalar_select %p18, %s19, %s20
    %p24 = pneg %p18
    %p25 = scmp.eq.s32.totalorder %s9, 1
    %p26 = por %p24, %p25
    %p27 = scmp.ne.s32.totalorder %s19, %s22
    %p28 = scmp.eq.s32.totalorder %s9, 0
    %p29 = por %p27, %p28
    %p30 = scmp.ne.s32.totalorder %s19, %s22
    %p31 = scmp.eq.s32.totalorder %s14, 1
    %p32 = por %p30, %p31
    %p33 = scmp.ne.s32.totalorder %s22, %s23
    %p34 = scmp.eq.s32.totalorder %s14, 0
    %p35 = por %p33, %p34
    %p36 = scmp.ne.s32.totalorder %s22, %s23
    %p37 = scmp.eq.s32.totalorder %s15, 1
    %p38 = por %p36, %p37
    %p40 = scmp.ne.s32.totalorder %s23, %s39
    %p41 = scmp.eq.s32.totalorder %s15, 0
    %p42 = por %p40, %p41
    %s44 = sadd.s32 %s43, 1
    %p47 = scmp.eq.s32.totalorder %s9, 1
    %p48 = scmp.ne.s32.totalorder %s43, %s45
    %p49 = scmp.eq.s32.totalorder %s9, 0
    %p50 = por %p48, %p49
    %p51 = scmp.ne.s32.totalorder %s43, %s45
    %p52 = scmp.eq.s32.totalorder %s14, 1
    %p53 = por %p51, %p52
    %p54 = scmp.ne.s32.totalorder %s45, %s46
    %p55 = scmp.eq.s32.totalorder %s14, 0
    %p56 = por %p54, %p55
    %p57 = scmp.ne.s32.totalorder %s45, %s46
    %p58 = scmp.eq.s32.totalorder %s15, 1
    %p59 = por %p57, %p58
    %p61 = scmp.ne.s32.totalorder %s46, %s60
    %p62 = scmp.eq.s32.totalorder %s15, 0
    %p63 = por %p61, %p62
    %s65 = sadd.s32 %s64, 1
    %p68 = scmp.eq.s32.totalorder %s9, 1
    %p69 = scmp.ne.s32.totalorder %s64, %s66
    %p70 = scmp.eq.s32.totalorder %s9, 0
    %p71 = por %p69, %p70
    %p72 = scmp.ne.s32.totalorder %s64, %s66
    %p73 = scmp.eq.s32.totalorder %s14, 1
    %p74 = por %p72, %p73
    %p75 = scmp.ne.s32.totalorder %s66, %s67
    %p76 = scmp.eq.s32.totalorder %s14, 0
    %p77 = por %p75, %p76
    %p78 = scmp.ne.s32.totalorder %s66, %s67
    %p79 = scmp.eq.s32.totalorder %s15, 1
    %p80 = por %p78, %p79
    %p82 = scmp.ne.s32.totalorder %s67, %s81
    %p83 = scmp.eq.s32.totalorder %s15, 0
    %p84 = por %p82, %p83
    %s85 = ssub.s32 %s9, %s16
    %p86 = scmp.eq.s32.totalorder %s85, 0
    %s88 = sadd.s32 %s87, 1
    %s89 = scalar_select %p86, %s87, %s88
    %p92 = pneg %p86
    %p93 = scmp.eq.s32.totalorder %s9, 1
    %p94 = por %p92, %p93
    %p95 = scmp.ne.s32.totalorder %s87, %s90
    %p96 = scmp.eq.s32.totalorder %s9, 0
    %p97 = por %p95, %p96
    %p98 = scmp.ne.s32.totalorder %s87, %s90
    %p99 = scmp.eq.s32.totalorder %s14, 1
    %p100 = por %p98, %p99
    %p101 = scmp.ne.s32.totalorder %s90, %s91
    %p102 = scmp.eq.s32.totalorder %s14, 0
    %p103 = por %p101, %p102
    %p104 = scmp.ne.s32.totalorder %s90, %s91
    %p105 = scmp.eq.s32.totalorder %s15, 1
    %p106 = por %p104, %p105
    %p108 = scmp.ne.s32.totalorder %s91, %s107
    %p109 = scmp.eq.s32.totalorder %s15, 0
    %p110 = por %p108, %p109
    %p111 = scmp.le.s32.totalorder 1, %s9
    %p112 = scmp.lt.s32.totalorder %s9, 3
    %p113 = pnand %p111, %p112
    %p114 = pneg %p113
    // Predicated region
    $region9: #{dbnet_forward.45} parent=5 // pred_check
      _
    $region10: #{dbnet_forward.45} parent=5 // pred_check_branch
      %116 = sbr.rel (%p113) target = $region12
    $region11: #{dbnet_forward.45} parent=5 // pred_region
      %s117 = ssub.s32 %s9, 1
      // Predicated region
      $region13: #{dbnet_forward.45} parent=11 // pred_check
        %p118 = pneg %p56
      $region14: #{dbnet_forward.45} parent=11 // pred_check_branch
        %120 = sbr.rel (%p118) target = $region16
      $region15: #{dbnet_forward.45} parent=11 // pred_region
        _
      $region16: #{dbnet_forward.45} parent=11 // pred_fallthru
        _
      // Predicated region
      $region17: #{dbnet_forward.45} parent=11 // pred_check
        %p121 = pneg %p77
      $region18: #{dbnet_forward.45} parent=11 // pred_check_branch
        %123 = sbr.rel (%p121) target = $region20
      $region19: #{dbnet_forward.45} parent=11 // pred_region
        _
      $region20: #{dbnet_forward.45} parent=11 // pred_fallthru
        _
    $region12: #{dbnet_forward.45} parent=5 // pred_fallthru
      _
    %p124 = scmp.lt.s32.totalorder %s9, 2
    // Predicated region
    $region21: #{dbnet_forward.45} parent=5 // pred_check
      %p125 = pneg %p124
    $region22: #{dbnet_forward.45} parent=5 // pred_check_branch
      %127 = sbr.rel (%p125) target = $region24
    $region23: #{dbnet_forward.45} parent=5 // pred_region
      // Predicated region
      $region25: #{dbnet_forward.45} parent=23 // pred_check
        %p128 = pneg %p29
      $region26: #{dbnet_forward.45} parent=23 // pred_check_branch
        %130 = sbr.rel (%p128) target = $region28
      $region27: #{dbnet_forward.45} parent=23 // pred_region
        %s131 = smul.u32 32, %s9
        %p132 = scmp.lt.s32.totalorder %s131, 63
        %s133 = scalar_select %p132, %s131, 63
        %s134 = smul.addr %s133, 4
        %s135 = scalar_lea.vmem %s0, %s134
        %s136 = smul.u32 32, %s9
      $region28: #{dbnet_forward.45} parent=23 // pred_fallthru
        _
    $region24: #{dbnet_forward.45} parent=5 // pred_fallthru
      _
    %p137 = scmp.le.s32.totalorder 1, %s9
    %p138 = scmp.lt.s32.totalorder %s9, 3
    %p139 = pnand %p137, %p138
    %p140 = pneg %p139
    // Predicated region
    $region29: #{dbnet_forward.45} parent=5 // pred_check
      _
    $region30: #{dbnet_forward.45} parent=5 // pred_check_branch
      %142 = sbr.rel (%p139) target = $region32
    $region31: #{dbnet_forward.45} parent=5 // pred_region
      %s143 = ssub.s32 %s9, 1
      %s144 = smul.u32 32, %s14
      %p145 = scmp.lt.s32.totalorder %s144, 63
      %s146 = scalar_select %p145, %s144, 63
      %s147 = smul.addr %s146, 4
      %s148 = scalar_lea.vmem %s0, %s147
      %p149 = pneg %p35
      %p150 = pneg %p32
      %p151 = pneg %p56
      %p152 = pneg %p53
      %p153 = pneg %p77
      %p154 = pneg %p74
      %p155 = pneg %p103
      %p156 = pneg %p100
      %s157 = smul.u32 32, %s14
      %p158 = scmp.lt.s32.totalorder %s157, 63
      %s159 = scalar_select %p158, %s157, 63
      %s160 = smul.addr %s159, 8
      %s161 = scalar_lea.vmem %s3, %s160
      %s162 = smul.u32 32, %s14
      %p163 = scmp.lt.s32.totalorder %s162, 63
      %s164 = scalar_select %p163, %s162, 63
      %s165 = smul.addr %s164, 4
      %s166 = scalar_lea.vmem %s0, %s165
      %s167 = smul.u32 32, %s14
      %s168 = smul.u32 32, %s14
      %p169 = scmp.lt.s32.totalorder %s168, 63
      %s170 = scalar_select %p169, %s168, 63
      %s171 = smul.addr %s170, 8
      %s172 = scalar_lea.vmem %s3, %s171
      %s173 = smul.u32 32, %s14
      %v175 = vld [vmem:[%s166] sm:$0xf]
      %v176 = vld [vmem:[%s166 + $0x4] sm:$0xf]
      %v177 = vld [vmem:[%s166 + $0x8] sm:$0xf]
      %v178 = vld [vmem:[%s166 + $0xc] sm:$0xf]
      %v179 = vld [vmem:[%s166 + $0x10] sm:$0xf]
      %v180 = vld [vmem:[%s166 + $0x14] sm:$0xf]
      %v181 = vld [vmem:[%s166 + $0x18] sm:$0xf]
      %v182 = vld [vmem:[%s166 + $0x1c] sm:$0xf]
      %v183 = vld [vmem:[%s166 + $0x20] sm:$0xf]
      %v184 = vld [vmem:[%s166 + $0x24] sm:$0xf]
      %v185 = vld [vmem:[%s166 + $0x28] sm:$0xf]
      %v186 = vld [vmem:[%s166 + $0x2c] sm:$0xf]
      %v187 = vld [vmem:[%s166 + $0x30] sm:$0xf]
      %v188 = vld [vmem:[%s166 + $0x34] sm:$0xf]
      %v189 = vld [vmem:[%s166 + $0x38] sm:$0xf]
      %v190 = vld [vmem:[%s166 + $0x3c] sm:$0xf]
      %v191 = vld [vmem:[%s166 + $0x40] sm:$0xf]
      %v192 = vld [vmem:[%s166 + $0x44] sm:$0xf]
      %v193 = vld [vmem:[%s166 + $0x48] sm:$0xf]
      %v194 = vld [vmem:[%s166 + $0x4c] sm:$0xf]
      %v195 = vld [vmem:[%s166 + $0x50] sm:$0xf]
      %v196 = vld [vmem:[%s166 + $0x54] sm:$0xf]
      %v197 = vld [vmem:[%s166 + $0x58] sm:$0xf]
      %v198 = vld [vmem:[%s166 + $0x5c] sm:$0xf]
      %v199 = vld [vmem:[%s166 + $0x60] sm:$0xf]
      %v200 = vld [vmem:[%s166 + $0x64] sm:$0xf]
      %v201 = vld [vmem:[%s166 + $0x68] sm:$0xf]
      %v202 = vld [vmem:[%s166 + $0x6c] sm:$0xf]
      %v203 = vld [vmem:[%s166 + $0x70] sm:$0xf]
      %v204 = vld [vmem:[%s166 + $0x74] sm:$0xf]
      %v205 = vld [vmem:[%s166 + $0x78] sm:$0xf]
      %v206 = vld [vmem:[%s166 + $0x7c] sm:$0xf]
      %v239 = vunpack.c.l.b16 %v175
      %v240 = vunpack.c.l.b16 %v176
      %v241 = vunpack.c.l.b16 %v177
      %v242 = vunpack.c.l.b16 %v178
      %v243 = vunpack.c.l.b16 %v179
      %v244 = vunpack.c.l.b16 %v180
      %v245 = vunpack.c.l.b16 %v181
      %v246 = vunpack.c.l.b16 %v182
      %v247 = vunpack.c.l.b16 %v183
      %v248 = vunpack.c.l.b16 %v184
      %v249 = vunpack.c.l.b16 %v185
      %v250 = vunpack.c.l.b16 %v186
      %v251 = vunpack.c.l.b16 %v187
      %v252 = vunpack.c.l.b16 %v188
      %v253 = vunpack.c.l.b16 %v189
      %v254 = vunpack.c.l.b16 %v190
      %v255 = vunpack.c.l.b16 %v191
      %v256 = vunpack.c.l.b16 %v192
      %v257 = vunpack.c.l.b16 %v193
      %v258 = vunpack.c.l.b16 %v194
      %v259 = vunpack.c.l.b16 %v195
      %v260 = vunpack.c.l.b16 %v196
      %v261 = vunpack.c.l.b16 %v197
      %v262 = vunpack.c.l.b16 %v198
      %v263 = vunpack.c.l.b16 %v199
      %v264 = vunpack.c.l.b16 %v200
      %v265 = vunpack.c.l.b16 %v201
      %v266 = vunpack.c.l.b16 %v202
      %v267 = vunpack.c.l.b16 %v203
      %v268 = vunpack.c.l.b16 %v204
      %v269 = vunpack.c.l.b16 %v205
      %v270 = vunpack.c.l.b16 %v206
      %v271 = vpack.c.b16 %v240, %v239
      %v272 = vpack.c.b16 %v242, %v241
      %v273 = vpack.c.b16 %v244, %v243
      %v274 = vpack.c.b16 %v246, %v245
      %v275 = vpack.c.b16 %v248, %v247
      %v276 = vpack.c.b16 %v250, %v249
      %v277 = vpack.c.b16 %v252, %v251
      %v278 = vpack.c.b16 %v254, %v253
      %v279 = vpack.c.b16 %v256, %v255
      %v280 = vpack.c.b16 %v258, %v257
      %v281 = vpack.c.b16 %v260, %v259
      %v282 = vpack.c.b16 %v262, %v261
      %v283 = vpack.c.b16 %v264, %v263
      %v284 = vpack.c.b16 %v266, %v265
      %v285 = vpack.c.b16 %v268, %v267
      %v286 = vpack.c.b16 %v270, %v269
      %vm287 = vcmask 130048
      %v290 = vsel %vm287, %v271, 0
      %v293 = vsel %vm287, %v272, 0
      %v296 = vsel %vm287, %v273, 0
      %v299 = vsel %vm287, %v274, 0
      %v302 = vsel %vm287, %v275, 0
      %v305 = vsel %vm287, %v276, 0
      %v308 = vsel %vm287, %v277, 0
      %v311 = vsel %vm287, %v278, 0
      %v314 = vsel %vm287, %v279, 0
      %v317 = vsel %vm287, %v280, 0
      %v320 = vsel %vm287, %v281, 0
      %v323 = vsel %vm287, %v282, 0
      %v326 = vsel %vm287, %v283, 0
      %v329 = vsel %vm287, %v284, 0
      %v332 = vsel %vm287, %v285, 0
      %v335 = vsel %vm287, %v286, 0
      %v337 = vld [vmem:[%s1] sm:$0xf]
      %v338 = vld [vmem:[%s1 + $0x4] sm:$0xf]
      %v339 = vld [vmem:[%s1 + $0x8] sm:$0xf]
      %v340 = vld [vmem:[%s1 + $0xc] sm:$0xf]
      %v341 = vld [vmem:[%s1 + $0x10] sm:$0xf]
      %v342 = vld [vmem:[%s1 + $0x14] sm:$0xf]
      %v343 = vld [vmem:[%s1 + $0x18] sm:$0xf]
      %v344 = vld [vmem:[%s1 + $0x1c] sm:$0xf]
      %v345 = vld [vmem:[%s1 + $0x20] sm:$0xf]
      %v346 = vld [vmem:[%s1 + $0x24] sm:$0xf]
      %v347 = vld [vmem:[%s1 + $0x28] sm:$0xf]
      %v348 = vld [vmem:[%s1 + $0x2c] sm:$0xf]
      %v349 = vld [vmem:[%s1 + $0x30] sm:$0xf]
      %v350 = vld [vmem:[%s1 + $0x34] sm:$0xf]
      %v351 = vld [vmem:[%s1 + $0x38] sm:$0xf]
      %v352 = vld [vmem:[%s1 + $0x3c] sm:$0xf]
      %v353 = vld [vmem:[%s2] sm:$0x1]
      %v355 = vlaneseq
      %v356 = vshrl.u32 %v355, 7
      %v357 = vsub.s32 0, %v356
      %v358 = vrot.slane %v353, %v357
      %v376 = vunpack.c.l.b16 %v337
      %v377 = vunpack.c.l.b16 %v338
      %v378 = vunpack.c.l.b16 %v339
      %v379 = vunpack.c.l.b16 %v340
      %v380 = vunpack.c.l.b16 %v341
      %v381 = vunpack.c.l.b16 %v342
      %v382 = vunpack.c.l.b16 %v343
      %v383 = vunpack.c.l.b16 %v344
      %v384 = vunpack.c.l.b16 %v345
      %v385 = vunpack.c.l.b16 %v346
      %v386 = vunpack.c.l.b16 %v347
      %v387 = vunpack.c.l.b16 %v348
      %v388 = vunpack.c.l.b16 %v349
      %v389 = vunpack.c.l.b16 %v350
      %v390 = vunpack.c.l.b16 %v351
      %v391 = vunpack.c.l.b16 %v352
      %v392 = vpack.c.b16 %v377, %v376
      %v393 = vpack.c.b16 %v379, %v378
      %v394 = vpack.c.b16 %v381, %v380
      %v395 = vpack.c.b16 %v383, %v382
      %v396 = vpack.c.b16 %v385, %v384
      %v397 = vpack.c.b16 %v387, %v386
      %v398 = vpack.c.b16 %v389, %v388
      %v399 = vpack.c.b16 %v391, %v390
      %408 = vmatprep.subr.bf16.mxu0 0
      %409 = vmatpush1.bf16.msra.mxu0 %v392
      %410 = vmatprep.subr.bf16.mxu0 0
      %411 = vmatpush1.bf16.msra.mxu0 %v393
      %412 = vmatprep.subr.bf16.mxu0 0
      %413 = vmatpush1.bf16.msra.mxu0 %v394
      %414 = vmatprep.subr.bf16.mxu0 0
      %415 = vmatpush1.bf16.msra.mxu0 %v395
      %416 = vmatprep.subr.bf16.mxu0 0
      %417 = vmatpush1.bf16.msra.mxu0 %v396
      %418 = vmatprep.subr.bf16.mxu0 0
      %419 = vmatpush1.bf16.msra.mxu0 %v397
      %420 = vmatprep.subr.bf16.mxu0 0
      %421 = vmatpush1.bf16.msra.mxu0 %v398
      %422 = vmatprep.subr.bf16.mxu0 0
      %423 = vmatpush1.bf16.msra.mxu0 %v399
      %424 = vmatprep.subr.bf16.mxu0 0
      %425 = vmatpush1.bf16.msra.mxu0 0
      %426 = vmatprep.subr.bf16.mxu0 0
      %427 = vmatpush1.bf16.msra.mxu0 0
      %428 = vmatprep.subr.bf16.mxu0 0
      %429 = vmatpush1.bf16.msra.mxu0 0
      %430 = vmatprep.subr.bf16.mxu0 0
      %431 = vmatpush1.bf16.msra.mxu0 0
      %432 = vmatprep.subr.bf16.mxu0 0
      %433 = vmatpush1.bf16.msra.mxu0 0
      %434 = vmatprep.subr.bf16.mxu0 0
      %435 = vmatpush1.bf16.msra.mxu0 0
      %436 = vmatprep.subr.bf16.mxu0 0
      %437 = vmatpush1.bf16.msra.mxu0 0
      %438 = vmatprep.subr.bf16.mxu0 0
      %439 = vmatpush1.bf16.msra.mxu0 0
      %440 = vmatprep.mubr.bf16.mxu0 0
      %441 = vmatmul.mubr.bf16.gmra.mrb[0].mxu0 %v290
      %v442 = vpop.f32.mrb[0].mxu0
      %v443 = vadd.f32 %v358, %v442
      %v444 = vpop.f32.mrb[0].mxu0
      %v445 = vpop.f32.mrb[0].mxu0
      %v446 = vadd.f32 %v358, %v445
      %v447 = vpop.f32.mrb[0].mxu0
      %448 = vmatprep.mubr.bf16.mxu0 0
      %449 = vmatmul.mubr.bf16.gmra.mrb[0].mxu0 %v293
      %v450 = vpop.f32.mrb[0].mxu0
      %v451 = vadd.f32 %v358, %v450
      %v452 = vpop.f32.mrb[0].mxu0
      %v453 = vpop.f32.mrb[0].mxu0
      %v454 = vadd.f32 %v358, %v453
      %v455 = vpop.f32.mrb[0].mxu0
      %456 = vmatprep.mubr.bf16.mxu0 0
      %457 = vmatmul.mubr.bf16.gmra.mrb[0].mxu0 %v296
      %v458 = vpop.f32.mrb[0].mxu0
      %v459 = vadd.f32 %v358, %v458
      %v460 = vpop.f32.mrb[0].mxu0
      %v461 = vpop.f32.mrb[0].mxu0
      %v462 = vadd.f32 %v358, %v461
      %v463 = vpop.f32.mrb[0].mxu0
      %464 = vmatprep.mubr.bf16.mxu0 0
      %465 = vmatmul.mubr.bf16.gmra.mrb[0].mxu0 %v299
      %v466 = vpop.f32.mrb[0].mxu0
      %v467 = vadd.f32 %v358, %v466
      %v468 = vpop.f32.mrb[0].mxu0
      %v469 = vpop.f32.mrb[0].mxu0
      %v470 = vadd.f32 %v358, %v469
      %v471 = vpop.f32.mrb[0].mxu0
      %472 = vmatprep.mubr.bf16.mxu0 0
      %473 = vmatmul.mubr.bf16.gmra.mrb[0].mxu0 %v302
      %v474 = vpop.f32.mrb[0].mxu0
      %v475 = vadd.f32 %v358, %v474
      %v476 = vpop.f32.mrb[0].mxu0
      %v477 = vpop.f32.mrb[0].mxu0
      %v478 = vadd.f32 %v358, %v477
      %v479 = vpop.f32.mrb[0].mxu0
      %480 = vmatprep.mubr.bf16.mxu0 0
      %481 = vmatmul.mubr.bf16.gmra.mrb[0].mxu0 %v305
      %v482 = vpop.f32.mrb[0].mxu0
      %v483 = vadd.f32 %v358, %v482
      %v484 = vpop.f32.mrb[0].mxu0
      %v485 = vpop.f32.mrb[0].mxu0
      %v486 = vadd.f32 %v358, %v485
      %v487 = vpop.f32.mrb[0].mxu0
      %488 = vmatprep.mubr.bf16.mxu0 0
      %489 = vmatmul.mubr.bf16.gmra.mrb[0].mxu0 %v308
      %v490 = vpop.f32.mrb[0].mxu0
      %v491 = vadd.f32 %v358, %v490
      %v492 = vpop.f32.mrb[0].mxu0
      %v493 = vpop.f32.mrb[0].mxu0
      %v494 = vadd.f32 %v358, %v493
      %v495 = vpop.f32.mrb[0].mxu0
      %496 = vmatprep.mubr.bf16.mxu0 0
      %497 = vmatmul.mubr.bf16.gmra.mrb[0].mxu0 %v311
      %v498 = vpop.f32.mrb[0].mxu0
      %v499 = vadd.f32 %v358, %v498
      %v500 = vpop.f32.mrb[0].mxu0
      %v501 = vpop.f32.mrb[0].mxu0
      %v502 = vadd.f32 %v358, %v501
      %v503 = vpop.f32.mrb[0].mxu0
      %504 = vmatprep.mubr.bf16.mxu0 0
      %505 = vmatmul.mubr.bf16.gmra.mrb[0].mxu0 %v314
      %v506 = vpop.f32.mrb[0].mxu0
      %v507 = vadd.f32 %v358, %v506
      %v508 = vpop.f32.mrb[0].mxu0
      %v509 = vpop.f32.mrb[0].mxu0
      %v510 = vadd.f32 %v358, %v509
      %v511 = vpop.f32.mrb[0].mxu0
      %512 = vmatprep.mubr.bf16.mxu0 0
      %513 = vmatmul.mubr.bf16.gmra.mrb[0].mxu0 %v317
      %v514 = vpop.f32.mrb[0].mxu0
      %v515 = vadd.f32 %v358, %v514
      %v516 = vpop.f32.mrb[0].mxu0
      %v517 = vpop.f32.mrb[0].mxu0
      %v518 = vadd.f32 %v358, %v517
      %v519 = vpop.f32.mrb[0].mxu0
      %520 = vmatprep.mubr.bf16.mxu0 0
      %521 = vmatmul.mubr.bf16.gmra.mrb[0].mxu0 %v320
      %v522 = vpop.f32.mrb[0].mxu0
      %v523 = vadd.f32 %v358, %v522
      %v524 = vpop.f32.mrb[0].mxu0
      %v525 = vpop.f32.mrb[0].mxu0
      %v526 = vadd.f32 %v358, %v525
      %v527 = vpop.f32.mrb[0].mxu0
      %528 = vmatprep.mubr.bf16.mxu0 0
      %529 = vmatmul.mubr.bf16.gmra.mrb[0].mxu0 %v323
      %v530 = vpop.f32.mrb[0].mxu0
      %v531 = vadd.f32 %v358, %v530
      %v532 = vpop.f32.mrb[0].mxu0
      %v533 = vpop.f32.mrb[0].mxu0
      %v534 = vadd.f32 %v358, %v533
      %v535 = vpop.f32.mrb[0].mxu0
      %536 = vmatprep.mubr.bf16.mxu0 0
      %537 = vmatmul.mubr.bf16.gmra.mrb[0].mxu0 %v326
      %v538 = vpop.f32.mrb[0].mxu0
      %v539 = vadd.f32 %v358, %v538
      %v540 = vpop.f32.mrb[0].mxu0
      %v541 = vpop.f32.mrb[0].mxu0
      %v542 = vadd.f32 %v358, %v541
      %v543 = vpop.f32.mrb[0].mxu0
      %544 = vmatprep.mubr.bf16.mxu0 0
      %545 = vmatmul.mubr.bf16.gmra.mrb[0].mxu0 %v329
      %v546 = vpop.f32.mrb[0].mxu0
      %v547 = vadd.f32 %v358, %v546
      %v548 = vpop.f32.mrb[0].mxu0
      %v549 = vpop.f32.mrb[0].mxu0
      %v550 = vadd.f32 %v358, %v549
      %v551 = vpop.f32.mrb[0].mxu0
      %552 = vmatprep.mubr.bf16.mxu0 0
      %553 = vmatmul.mubr.bf16.gmra.mrb[0].mxu0 %v332
      %v554 = vpop.f32.mrb[0].mxu0
      %v555 = vadd.f32 %v358, %v554
      %v556 = vpop.f32.mrb[0].mxu0
      %v557 = vpop.f32.mrb[0].mxu0
      %v558 = vadd.f32 %v358, %v557
      %v559 = vpop.f32.mrb[0].mxu0
      %560 = vmatprep.mubr.bf16.mxu0 0
      %561 = vmatmul.mubr.bf16.gmra.mrb[0].mxu0 %v335
      %v562 = vpop.f32.mrb[0].mxu0
      %v563 = vadd.f32 %v358, %v562
      %v564 = vpop.f32.mrb[0].mxu0
      %v565 = vpop.f32.mrb[0].mxu0
      %v566 = vadd.f32 %v358, %v565
      %v567 = vpop.f32.mrb[0].mxu0
      %568 = vdwg.mxu0
      %v569 = vxor.u32 %v443, 2147483648
      %v570 = vxor.u32 %v446, 2147483648
      %v571 = vxor.u32 %v451, 2147483648
      %v572 = vxor.u32 %v454, 2147483648
      %v573 = vxor.u32 %v459, 2147483648
      %v574 = vxor.u32 %v462, 2147483648
      %v575 = vxor.u32 %v467, 2147483648
      %v576 = vxor.u32 %v470, 2147483648
      %v577 = vxor.u32 %v475, 2147483648
      %v578 = vxor.u32 %v478, 2147483648
      %v579 = vxor.u32 %v483, 2147483648
      %v580 = vxor.u32 %v486, 2147483648
      %v581 = vxor.u32 %v491, 2147483648
      %v582 = vxor.u32 %v494, 2147483648
      %v583 = vxor.u32 %v499, 2147483648
      %v584 = vxor.u32 %v502, 2147483648
      %v585 = vxor.u32 %v507, 2147483648
      %v586 = vxor.u32 %v510, 2147483648
      %v587 = vxor.u32 %v515, 2147483648
      %v588 = vxor.u32 %v518, 2147483648
      %v589 = vxor.u32 %v523, 2147483648
      %v590 = vxor.u32 %v526, 2147483648
      %v591 = vxor.u32 %v531, 2147483648
      %v592 = vxor.u32 %v534, 2147483648
      %v593 = vxor.u32 %v539, 2147483648
      %v594 = vxor.u32 %v542, 2147483648
      %v595 = vxor.u32 %v547, 2147483648
      %v596 = vxor.u32 %v550, 2147483648
      %v597 = vxor.u32 %v555, 2147483648
      %v598 = vxor.u32 %v558, 2147483648
      %v599 = vxor.u32 %v563, 2147483648
      %v600 = vxor.u32 %v566, 2147483648
      %v601 = vmul.f32 %v569, 1.442695
      %v602 = vpow.pop %v601
      %v603 = vmul.f32 %v570, 1.442695
      %v604 = vpow.pop %v603
      %v605 = vmul.f32 %v571, 1.442695
      %v606 = vpow.pop %v605
      %v607 = vmul.f32 %v572, 1.442695
      %v608 = vpow.pop %v607
      %v609 = vmul.f32 %v573, 1.442695
      %v610 = vpow.pop %v609
      %v611 = vmul.f32 %v574, 1.442695
      %v612 = vpow.pop %v611
      %v613 = vmul.f32 %v575, 1.442695
      %v614 = vpow.pop %v613
      %v615 = vmul.f32 %v576, 1.442695
      %v616 = vpow.pop %v615
      %v617 = vmul.f32 %v577, 1.442695
      %v618 = vpow.pop %v617
      %v619 = vmul.f32 %v578, 1.442695
      %v620 = vpow.pop %v619
      %v621 = vmul.f32 %v579, 1.442695
      %v622 = vpow.pop %v621
      %v623 = vmul.f32 %v580, 1.442695
      %v624 = vpow.pop %v623
      %v625 = vmul.f32 %v581, 1.442695
      %v626 = vpow.pop %v625
      %v627 = vmul.f32 %v582, 1.442695
      %v628 = vpow.pop %v627
      %v629 = vmul.f32 %v583, 1.442695
      %v630 = vpow.pop %v629
      %v631 = vmul.f32 %v584, 1.442695
      %v632 = vpow.pop %v631
      %v633 = vmul.f32 %v585, 1.442695
      %v634 = vpow.pop %v633
      %v635 = vmul.f32 %v586, 1.442695
      %v636 = vpow.pop %v635
      %v637 = vmul.f32 %v587, 1.442695
      %v638 = vpow.pop %v637
      %v639 = vmul.f32 %v588, 1.442695
      %v640 = vpow.pop %v639
      %v641 = vmul.f32 %v589, 1.442695
      %v642 = vpow.pop %v641
      %v643 = vmul.f32 %v590, 1.442695
      %v644 = vpow.pop %v643
      %v645 = vmul.f32 %v591, 1.442695
      %v646 = vpow.pop %v645
      %v647 = vmul.f32 %v592, 1.442695
      %v648 = vpow.pop %v647
      %v649 = vmul.f32 %v593, 1.442695
      %v650 = vpow.pop %v649
      %v651 = vmul.f32 %v594, 1.442695
      %v652 = vpow.pop %v651
      %v653 = vmul.f32 %v595, 1.442695
      %v654 = vpow.pop %v653
      %v655 = vmul.f32 %v596, 1.442695
      %v656 = vpow.pop %v655
      %v657 = vmul.f32 %v597, 1.442695
      %v658 = vpow.pop %v657
      %v659 = vmul.f32 %v598, 1.442695
      %v660 = vpow.pop %v659
      %v661 = vmul.f32 %v599, 1.442695
      %v662 = vpow.pop %v661
      %v663 = vmul.f32 %v600, 1.442695
      %v664 = vpow.pop %v663
      %v665 = vadd.f32 %v602, 1.0
      %v666 = vadd.f32 %v604, 1.0
      %v667 = vadd.f32 %v606, 1.0
      %v668 = vadd.f32 %v608, 1.0
      %v669 = vadd.f32 %v610, 1.0
      %v670 = vadd.f32 %v612, 1.0
      %v671 = vadd.f32 %v614, 1.0
      %v672 = vadd.f32 %v616, 1.0
      %v673 = vadd.f32 %v618, 1.0
      %v674 = vadd.f32 %v620, 1.0
      %v675 = vadd.f32 %v622, 1.0
      %v676 = vadd.f32 %v624, 1.0
      %v677 = vadd.f32 %v626, 1.0
      %v678 = vadd.f32 %v628, 1.0
      %v679 = vadd.f32 %v630, 1.0
      %v680 = vadd.f32 %v632, 1.0
      %v681 = vadd.f32 %v634, 1.0
      %v682 = vadd.f32 %v636, 1.0
      %v683 = vadd.f32 %v638, 1.0
      %v684 = vadd.f32 %v640, 1.0
      %v685 = vadd.f32 %v642, 1.0
      %v686 = vadd.f32 %v644, 1.0
      %v687 = vadd.f32 %v646, 1.0
      %v688 = vadd.f32 %v648, 1.0
      %v689 = vadd.f32 %v650, 1.0
      %v690 = vadd.f32 %v652, 1.0
      %v691 = vadd.f32 %v654, 1.0
      %v692 = vadd.f32 %v656, 1.0
      %v693 = vadd.f32 %v658, 1.0
      %v694 = vadd.f32 %v660, 1.0
      %v695 = vadd.f32 %v662, 1.0
      %v696 = vadd.f32 %v664, 1.0
      %v697 = vrcp.pop %v665
      %v698 = vmul.f32 1.0, %v697
      %v699 = vrcp.pop %v666
      %v700 = vmul.f32 1.0, %v699
      %v701 = vrcp.pop %v667
      %v702 = vmul.f32 1.0, %v701
      %v703 = vrcp.pop %v668
      %v704 = vmul.f32 1.0, %v703
      %v705 = vrcp.pop %v669
      %v706 = vmul.f32 1.0, %v705
      %v707 = vrcp.pop %v670
      %v708 = vmul.f32 1.0, %v707
      %v709 = vrcp.pop %v671
      %v710 = vmul.f32 1.0, %v709
      %v711 = vrcp.pop %v672
      %v712 = vmul.f32 1.0, %v711
      %v713 = vrcp.pop %v673
      %v714 = vmul.f32 1.0, %v713
      %v715 = vrcp.pop %v674
      %v716 = vmul.f32 1.0, %v715
      %v717 = vrcp.pop %v675
      %v718 = vmul.f32 1.0, %v717
      %v719 = vrcp.pop %v676
      %v720 = vmul.f32 1.0, %v719
      %v721 = vrcp.pop %v677
      %v722 = vmul.f32 1.0, %v721
      %v723 = vrcp.pop %v678
      %v724 = vmul.f32 1.0, %v723
      %v725 = vrcp.pop %v679
      %v726 = vmul.f32 1.0, %v725
      %v727 = vrcp.pop %v680
      %v728 = vmul.f32 1.0, %v727
      %v729 = vrcp.pop %v681
      %v730 = vmul.f32 1.0, %v729
      %v731 = vrcp.pop %v682
      %v732 = vmul.f32 1.0, %v731
      %v733 = vrcp.pop %v683
      %v734 = vmul.f32 1.0, %v733
      %v735 = vrcp.pop %v684
      %v736 = vmul.f32 1.0, %v735
      %v737 = vrcp.pop %v685
      %v738 = vmul.f32 1.0, %v737
      %v739 = vrcp.pop %v686
      %v740 = vmul.f32 1.0, %v739
      %v741 = vrcp.pop %v687
      %v742 = vmul.f32 1.0, %v741
      %v743 = vrcp.pop %v688
      %v744 = vmul.f32 1.0, %v743
      %v745 = vrcp.pop %v689
      %v746 = vmul.f32 1.0, %v745
      %v747 = vrcp.pop %v690
      %v748 = vmul.f32 1.0, %v747
      %v749 = vrcp.pop %v691
      %v750 = vmul.f32 1.0, %v749
      %v751 = vrcp.pop %v692
      %v752 = vmul.f32 1.0, %v751
      %v753 = vrcp.pop %v693
      %v754 = vmul.f32 1.0, %v753
      %v755 = vrcp.pop %v694
      %v756 = vmul.f32 1.0, %v755
      %v757 = vrcp.pop %v695
      %v758 = vmul.f32 1.0, %v757
      %v759 = vrcp.pop %v696
      %v760 = vmul.f32 1.0, %v759
      %793 = vrot.lane.b32.xlu0 %v698, 124
      %v794 = vpop.permute.xlu0 %793
      %795 = vrot.lane.b32.xlu0 %v700, 124
      %v796 = vpop.permute.xlu0 %795
      %797 = vrot.lane.b32.xlu0 %v702, 124
      %v798 = vpop.permute.xlu0 %797
      %799 = vrot.lane.b32.xlu0 %v704, 124
      %v800 = vpop.permute.xlu0 %799
      %801 = vrot.lane.b32.xlu0 %v706, 124
      %v802 = vpop.permute.xlu0 %801
      %803 = vrot.lane.b32.xlu0 %v708, 124
      %v804 = vpop.permute.xlu0 %803
      %805 = vrot.lane.b32.xlu0 %v710, 124
      %v806 = vpop.permute.xlu0 %805
      %807 = vrot.lane.b32.xlu0 %v712, 124
      %v808 = vpop.permute.xlu0 %807
      %809 = vrot.lane.b32.xlu0 %v714, 124
      %v810 = vpop.permute.xlu0 %809
      %811 = vrot.lane.b32.xlu0 %v716, 124
      %v812 = vpop.permute.xlu0 %811
      %813 = vrot.lane.b32.xlu0 %v718, 124
      %v814 = vpop.permute.xlu0 %813
      %815 = vrot.lane.b32.xlu0 %v720, 124
      %v816 = vpop.permute.xlu0 %815
      %817 = vrot.lane.b32.xlu0 %v722, 124
      %v818 = vpop.permute.xlu0 %817
      %819 = vrot.lane.b32.xlu0 %v724, 124
      %v820 = vpop.permute.xlu0 %819
      %821 = vrot.lane.b32.xlu0 %v726, 124
      %v822 = vpop.permute.xlu0 %821
      %823 = vrot.lane.b32.xlu0 %v728, 124
      %v824 = vpop.permute.xlu0 %823
      %825 = vrot.lane.b32.xlu0 %v730, 124
      %v826 = vpop.permute.xlu0 %825
      %827 = vrot.lane.b32.xlu0 %v732, 124
      %v828 = vpop.permute.xlu0 %827
      %829 = vrot.lane.b32.xlu0 %v734, 124
      %v830 = vpop.permute.xlu0 %829
      %831 = vrot.lane.b32.xlu0 %v736, 124
      %v832 = vpop.permute.xlu0 %831
      %833 = vrot.lane.b32.xlu0 %v738, 124
      %v834 = vpop.permute.xlu0 %833
      %835 = vrot.lane.b32.xlu0 %v740, 124
      %v836 = vpop.permute.xlu0 %835
      %837 = vrot.lane.b32.xlu0 %v742, 124
      %v838 = vpop.permute.xlu0 %837
      %839 = vrot.lane.b32.xlu0 %v744, 124
      %v840 = vpop.permute.xlu0 %839
      %841 = vrot.lane.b32.xlu0 %v746, 124
      %v842 = vpop.permute.xlu0 %841
      %843 = vrot.lane.b32.xlu0 %v748, 124
      %v844 = vpop.permute.xlu0 %843
      %845 = vrot.lane.b32.xlu0 %v750, 124
      %v846 = vpop.permute.xlu0 %845
      %847 = vrot.lane.b32.xlu0 %v752, 124
      %v848 = vpop.permute.xlu0 %847
      %849 = vrot.lane.b32.xlu0 %v754, 124
      %v850 = vpop.permute.xlu0 %849
      %851 = vrot.lane.b32.xlu0 %v756, 124
      %v852 = vpop.permute.xlu0 %851
      %853 = vrot.lane.b32.xlu0 %v758, 124
      %v854 = vpop.permute.xlu0 %853
      %855 = vrot.lane.b32.xlu0 %v760, 124
      %v856 = vpop.permute.xlu0 %855
      %v889 = vsub.f32 %v698, %v794
      %v890 = vsub.f32 %v700, %v796
      %v891 = vsub.f32 %v702, %v798
      %v892 = vsub.f32 %v704, %v800
      %v893 = vsub.f32 %v706, %v802
      %v894 = vsub.f32 %v708, %v804
      %v895 = vsub.f32 %v710, %v806
      %v896 = vsub.f32 %v712, %v808
      %v897 = vsub.f32 %v714, %v810
      %v898 = vsub.f32 %v716, %v812
      %v899 = vsub.f32 %v718, %v814
      %v900 = vsub.f32 %v720, %v816
      %v901 = vsub.f32 %v722, %v818
      %v902 = vsub.f32 %v724, %v820
      %v903 = vsub.f32 %v726, %v822
      %v904 = vsub.f32 %v728, %v824
      %v905 = vsub.f32 %v730, %v826
      %v906 = vsub.f32 %v732, %v828
      %v907 = vsub.f32 %v734, %v830
      %v908 = vsub.f32 %v736, %v832
      %v909 = vsub.f32 %v738, %v834
      %v910 = vsub.f32 %v740, %v836
      %v911 = vsub.f32 %v742, %v838
      %v912 = vsub.f32 %v744, %v840
      %v913 = vsub.f32 %v746, %v842
      %v914 = vsub.f32 %v748, %v844
      %v915 = vsub.f32 %v750, %v846
      %v916 = vsub.f32 %v752, %v848
      %v917 = vsub.f32 %v754, %v850
      %v918 = vsub.f32 %v756, %v852
      %v919 = vsub.f32 %v758, %v854
      %v920 = vsub.f32 %v760, %v856
      %v921 = vmul.f32 %v889, 50.0
      %v922 = vmul.f32 %v890, 50.0
      %v923 = vmul.f32 %v891, 50.0
      %v924 = vmul.f32 %v892, 50.0
      %v925 = vmul.f32 %v893, 50.0
      %v926 = vmul.f32 %v894, 50.0
      %v927 = vmul.f32 %v895, 50.0
      %v928 = vmul.f32 %v896, 50.0
      %v929 = vmul.f32 %v897, 50.0
      %v930 = vmul.f32 %v898, 50.0
      %v931 = vmul.f32 %v899, 50.0
      %v932 = vmul.f32 %v900, 50.0
      %v933 = vmul.f32 %v901, 50.0
      %v934 = vmul.f32 %v902, 50.0
      %v935 = vmul.f32 %v903, 50.0
      %v936 = vmul.f32 %v904, 50.0
      %v937 = vmul.f32 %v905, 50.0
      %v938 = vmul.f32 %v906, 50.0
      %v939 = vmul.f32 %v907, 50.0
      %v940 = vmul.f32 %v908, 50.0
      %v941 = vmul.f32 %v909, 50.0
      %v942 = vmul.f32 %v910, 50.0
      %v943 = vmul.f32 %v911, 50.0
      %v944 = vmul.f32 %v912, 50.0
      %v945 = vmul.f32 %v913, 50.0
      %v946 = vmul.f32 %v914, 50.0
      %v947 = vmul.f32 %v915, 50.0
      %v948 = vmul.f32 %v916, 50.0
      %v949 = vmul.f32 %v917, 50.0
      %v950 = vmul.f32 %v918, 50.0
      %v951 = vmul.f32 %v919, 50.0
      %v952 = vmul.f32 %v920, 50.0
      %v953 = vxor.u32 %v921, 2147483648
      %v954 = vxor.u32 %v922, 2147483648
      %v955 = vxor.u32 %v923, 2147483648
      %v956 = vxor.u32 %v924, 2147483648
      %v957 = vxor.u32 %v925, 2147483648
      %v958 = vxor.u32 %v926, 2147483648
      %v959 = vxor.u32 %v927, 2147483648
      %v960 = vxor.u32 %v928, 2147483648
      %v961 = vxor.u32 %v929, 2147483648
      %v962 = vxor.u32 %v930, 2147483648
      %v963 = vxor.u32 %v931, 2147483648
      %v964 = vxor.u32 %v932, 2147483648
      %v965 = vxor.u32 %v933, 2147483648
      %v966 = vxor.u32 %v934, 2147483648
      %v967 = vxor.u32 %v935, 2147483648
      %v968 = vxor.u32 %v936, 2147483648
      %v969 = vxor.u32 %v937, 2147483648
      %v970 = vxor.u32 %v938, 2147483648
      %v971 = vxor.u32 %v939, 2147483648
      %v972 = vxor.u32 %v940, 2147483648
      %v973 = vxor.u32 %v941, 2147483648
      %v974 = vxor.u32 %v942, 2147483648
      %v975 = vxor.u32 %v943, 2147483648
      %v976 = vxor.u32 %v944, 2147483648
      %v977 = vxor.u32 %v945, 2147483648
      %v978 = vxor.u32 %v946, 2147483648
      %v979 = vxor.u32 %v947, 2147483648
      %v980 = vxor.u32 %v948, 2147483648
      %v981 = vxor.u32 %v949, 2147483648
      %v982 = vxor.u32 %v950, 2147483648
      %v983 = vxor.u32 %v951, 2147483648
      %v984 = vxor.u32 %v952, 2147483648
      %v985 = vmul.f32 %v953, 1.442695
      %v986 = vpow.pop %v985
      %v987 = vmul.f32 %v954, 1.442695
      %v988 = vpow.pop %v987
      %v989 = vmul.f32 %v955, 1.442695
      %v990 = vpow.pop %v989
      %v991 = vmul.f32 %v956, 1.442695
      %v992 = vpow.pop %v991
      %v993 = vmul.f32 %v957, 1.442695
      %v994 = vpow.pop %v993
      %v995 = vmul.f32 %v958, 1.442695
      %v996 = vpow.pop %v995
      %v997 = vmul.f32 %v959, 1.442695
      %v998 = vpow.pop %v997
      %v999 = vmul.f32 %v960, 1.442695
      %v1000 = vpow.pop %v999
      %v1001 = vmul.f32 %v961, 1.442695
      %v1002 = vpow.pop %v1001
      %v1003 = vmul.f32 %v962, 1.442695
      %v1004 = vpow.pop %v1003
      %v1005 = vmul.f32 %v963, 1.442695
      %v1006 = vpow.pop %v1005
      %v1007 = vmul.f32 %v964, 1.442695
      %v1008 = vpow.pop %v1007
      %v1009 = vmul.f32 %v965, 1.442695
      %v1010 = vpow.pop %v1009
      %v1011 = vmul.f32 %v966, 1.442695
      %v1012 = vpow.pop %v1011
      %v1013 = vmul.f32 %v967, 1.442695
      %v1014 = vpow.pop %v1013
      %v1015 = vmul.f32 %v968, 1.442695
      %v1016 = vpow.pop %v1015
      %v1017 = vmul.f32 %v969, 1.442695
      %v1018 = vpow.pop %v1017
      %v1019 = vmul.f32 %v970, 1.442695
      %v1020 = vpow.pop %v1019
      %v1021 = vmul.f32 %v971, 1.442695
      %v1022 = vpow.pop %v1021
      %v1023 = vmul.f32 %v972, 1.442695
      %v1024 = vpow.pop %v1023
      %v1025 = vmul.f32 %v973, 1.442695
      %v1026 = vpow.pop %v1025
      %v1027 = vmul.f32 %v974, 1.442695
      %v1028 = vpow.pop %v1027
      %v1029 = vmul.f32 %v975, 1.442695
      %v1030 = vpow.pop %v1029
      %v1031 = vmul.f32 %v976, 1.442695
      %v1032 = vpow.pop %v1031
      %v1033 = vmul.f32 %v977, 1.442695
      %v1034 = vpow.pop %v1033
      %v1035 = vmul.f32 %v978, 1.442695
      %v1036 = vpow.pop %v1035
      %v1037 = vmul.f32 %v979, 1.442695
      %v1038 = vpow.pop %v1037
      %v1039 = vmul.f32 %v980, 1.442695
      %v1040 = vpow.pop %v1039
      %v1041 = vmul.f32 %v981, 1.442695
      %v1042 = vpow.pop %v1041
      %v1043 = vmul.f32 %v982, 1.442695
      %v1044 = vpow.pop %v1043
      %v1045 = vmul.f32 %v983, 1.442695
      %v1046 = vpow.pop %v1045
      %v1047 = vmul.f32 %v984, 1.442695
      %v1048 = vpow.pop %v1047
      %v1049 = vadd.f32 %v986, 1.0
      %v1050 = vadd.f32 %v988, 1.0
      %v1051 = vadd.f32 %v990, 1.0
      %v1052 = vadd.f32 %v992, 1.0
      %v1053 = vadd.f32 %v994, 1.0
      %v1054 = vadd.f32 %v996, 1.0
      %v1055 = vadd.f32 %v998, 1.0
      %v1056 = vadd.f32 %v1000, 1.0
      %v1057 = vadd.f32 %v1002, 1.0
      %v1058 = vadd.f32 %v1004, 1.0
      %v1059 = vadd.f32 %v1006, 1.0
      %v1060 = vadd.f32 %v1008, 1.0
      %v1061 = vadd.f32 %v1010, 1.0
      %v1062 = vadd.f32 %v1012, 1.0
      %v1063 = vadd.f32 %v1014, 1.0
      %v1064 = vadd.f32 %v1016, 1.0
      %v1065 = vadd.f32 %v1018, 1.0
      %v1066 = vadd.f32 %v1020, 1.0
      %v1067 = vadd.f32 %v1022, 1.0
      %v1068 = vadd.f32 %v1024, 1.0
      %v1069 = vadd.f32 %v1026, 1.0
      %v1070 = vadd.f32 %v1028, 1.0
      %v1071 = vadd.f32 %v1030, 1.0
      %v1072 = vadd.f32 %v1032, 1.0
      %v1073 = vadd.f32 %v1034, 1.0
      %v1074 = vadd.f32 %v1036, 1.0
      %v1075 = vadd.f32 %v1038, 1.0
      %v1076 = vadd.f32 %v1040, 1.0
      %v1077 = vadd.f32 %v1042, 1.0
      %v1078 = vadd.f32 %v1044, 1.0
      %v1079 = vadd.f32 %v1046, 1.0
      %v1080 = vadd.f32 %v1048, 1.0
      %v1081 = vrcp.pop %v1049
      %v1082 = vmul.f32 1.0, %v1081
      %v1083 = vrcp.pop %v1050
      %v1084 = vmul.f32 1.0, %v1083
      %v1085 = vrcp.pop %v1051
      %v1086 = vmul.f32 1.0, %v1085
      %v1087 = vrcp.pop %v1052
      %v1088 = vmul.f32 1.0, %v1087
      %v1089 = vrcp.pop %v1053
      %v1090 = vmul.f32 1.0, %v1089
      %v1091 = vrcp.pop %v1054
      %v1092 = vmul.f32 1.0, %v1091
      %v1093 = vrcp.pop %v1055
      %v1094 = vmul.f32 1.0, %v1093
      %v1095 = vrcp.pop %v1056
      %v1096 = vmul.f32 1.0, %v1095
      %v1097 = vrcp.pop %v1057
      %v1098 = vmul.f32 1.0, %v1097
      %v1099 = vrcp.pop %v1058
      %v1100 = vmul.f32 1.0, %v1099
      %v1101 = vrcp.pop %v1059
      %v1102 = vmul.f32 1.0, %v1101
      %v1103 = vrcp.pop %v1060
      %v1104 = vmul.f32 1.0, %v1103
      %v1105 = vrcp.pop %v1061
      %v1106 = vmul.f32 1.0, %v1105
      %v1107 = vrcp.pop %v1062
      %v1108 = vmul.f32 1.0, %v1107
      %v1109 = vrcp.pop %v1063
      %v1110 = vmul.f32 1.0, %v1109
      %v1111 = vrcp.pop %v1064
      %v1112 = vmul.f32 1.0, %v1111
      %v1113 = vrcp.pop %v1065
      %v1114 = vmul.f32 1.0, %v1113
      %v1115 = vrcp.pop %v1066
      %v1116 = vmul.f32 1.0, %v1115
      %v1117 = vrcp.pop %v1067
      %v1118 = vmul.f32 1.0, %v1117
      %v1119 = vrcp.pop %v1068
      %v1120 = vmul.f32 1.0, %v1119
      %v1121 = vrcp.pop %v1069
      %v1122 = vmul.f32 1.0, %v1121
      %v1123 = vrcp.pop %v1070
      %v1124 = vmul.f32 1.0, %v1123
      %v1125 = vrcp.pop %v1071
      %v1126 = vmul.f32 1.0, %v1125
      %v1127 = vrcp.pop %v1072
      %v1128 = vmul.f32 1.0, %v1127
      %v1129 = vrcp.pop %v1073
      %v1130 = vmul.f32 1.0, %v1129
      %v1131 = vrcp.pop %v1074
      %v1132 = vmul.f32 1.0, %v1131
      %v1133 = vrcp.pop %v1075
      %v1134 = vmul.f32 1.0, %v1133
      %v1135 = vrcp.pop %v1076
      %v1136 = vmul.f32 1.0, %v1135
      %v1137 = vrcp.pop %v1077
      %v1138 = vmul.f32 1.0, %v1137
      %v1139 = vrcp.pop %v1078
      %v1140 = vmul.f32 1.0, %v1139
      %v1141 = vrcp.pop %v1079
      %v1142 = vmul.f32 1.0, %v1141
      %v1143 = vrcp.pop %v1080
      %v1144 = vmul.f32 1.0, %v1143
      %1177 = vrot.lane.b32.xlu0 %v1082, 8
      %v1178 = vpop.permute.xlu0 %1177
      %1179 = vrot.lane.b32.xlu0 %v1084, 8
      %v1180 = vpop.permute.xlu0 %1179
      %1181 = vrot.lane.b32.xlu0 %v1086, 8
      %v1182 = vpop.permute.xlu0 %1181
      %1183 = vrot.lane.b32.xlu0 %v1088, 8
      %v1184 = vpop.permute.xlu0 %1183
      %1185 = vrot.lane.b32.xlu0 %v1090, 8
      %v1186 = vpop.permute.xlu0 %1185
      %1187 = vrot.lane.b32.xlu0 %v1092, 8
      %v1188 = vpop.permute.xlu0 %1187
      %1189 = vrot.lane.b32.xlu0 %v1094, 8
      %v1190 = vpop.permute.xlu0 %1189
      %1191 = vrot.lane.b32.xlu0 %v1096, 8
      %v1192 = vpop.permute.xlu0 %1191
      %1193 = vrot.lane.b32.xlu0 %v1098, 8
      %v1194 = vpop.permute.xlu0 %1193
      %1195 = vrot.lane.b32.xlu0 %v1100, 8
      %v1196 = vpop.permute.xlu0 %1195
      %1197 = vrot.lane.b32.xlu0 %v1102, 8
      %v1198 = vpop.permute.xlu0 %1197
      %1199 = vrot.lane.b32.xlu0 %v1104, 8
      %v1200 = vpop.permute.xlu0 %1199
      %1201 = vrot.lane.b32.xlu0 %v1106, 8
      %v1202 = vpop.permute.xlu0 %1201
      %1203 = vrot.lane.b32.xlu0 %v1108, 8
      %v1204 = vpop.permute.xlu0 %1203
      %1205 = vrot.lane.b32.xlu0 %v1110, 8
      %v1206 = vpop.permute.xlu0 %1205
      %1207 = vrot.lane.b32.xlu0 %v1112, 8
      %v1208 = vpop.permute.xlu0 %1207
      %1209 = vrot.lane.b32.xlu0 %v1114, 8
      %v1210 = vpop.permute.xlu0 %1209
      %1211 = vrot.lane.b32.xlu0 %v1116, 8
      %v1212 = vpop.permute.xlu0 %1211
      %1213 = vrot.lane.b32.xlu0 %v1118, 8
      %v1214 = vpop.permute.xlu0 %1213
      %1215 = vrot.lane.b32.xlu0 %v1120, 8
      %v1216 = vpop.permute.xlu0 %1215
      %1217 = vrot.lane.b32.xlu0 %v1122, 8
      %v1218 = vpop.permute.xlu0 %1217
      %1219 = vrot.lane.b32.xlu0 %v1124, 8
      %v1220 = vpop.permute.xlu0 %1219
      %1221 = vrot.lane.b32.xlu0 %v1126, 8
      %v1222 = vpop.permute.xlu0 %1221
      %1223 = vrot.lane.b32.xlu0 %v1128, 8
      %v1224 = vpop.permute.xlu0 %1223
      %1225 = vrot.lane.b32.xlu0 %v1130, 8
      %v1226 = vpop.permute.xlu0 %1225
      %1227 = vrot.lane.b32.xlu0 %v1132, 8
      %v1228 = vpop.permute.xlu0 %1227
      %1229 = vrot.lane.b32.xlu0 %v1134, 8
      %v1230 = vpop.permute.xlu0 %1229
      %1231 = vrot.lane.b32.xlu0 %v1136, 8
      %v1232 = vpop.permute.xlu0 %1231
      %1233 = vrot.lane.b32.xlu0 %v1138, 8
      %v1234 = vpop.permute.xlu0 %1233
      %1235 = vrot.lane.b32.xlu0 %v1140, 8
      %v1236 = vpop.permute.xlu0 %1235
      %1237 = vrot.lane.b32.xlu0 %v1142, 8
      %v1238 = vpop.permute.xlu0 %1237
      %1239 = vrot.lane.b32.xlu0 %v1144, 8
      %v1240 = vpop.permute.xlu0 %1239
      %vm1273 = vcmask 64512
      %v1274 = vsel %vm1273, %v698, %v1178
      %v1275 = vsel %vm1273, %v700, %v1180
      %v1276 = vsel %vm1273, %v702, %v1182
      %v1277 = vsel %vm1273, %v704, %v1184
      %v1278 = vsel %vm1273, %v706, %v1186
      %v1279 = vsel %vm1273, %v708, %v1188
      %v1280 = vsel %vm1273, %v710, %v1190
      %v1281 = vsel %vm1273, %v712, %v1192
      %v1282 = vsel %vm1273, %v714, %v1194
      %v1283 = vsel %vm1273, %v716, %v1196
      %v1284 = vsel %vm1273, %v718, %v1198
      %v1285 = vsel %vm1273, %v720, %v1200
      %v1286 = vsel %vm1273, %v722, %v1202
      %v1287 = vsel %vm1273, %v724, %v1204
      %v1288 = vsel %vm1273, %v726, %v1206
      %v1289 = vsel %vm1273, %v728, %v1208
      %v1290 = vsel %vm1273, %v730, %v1210
      %v1291 = vsel %vm1273, %v732, %v1212
      %v1292 = vsel %vm1273, %v734, %v1214
      %v1293 = vsel %vm1273, %v736, %v1216
      %v1294 = vsel %vm1273, %v738, %v1218
      %v1295 = vsel %vm1273, %v740, %v1220
      %v1296 = vsel %vm1273, %v742, %v1222
      %v1297 = vsel %vm1273, %v744, %v1224
      %v1298 = vsel %vm1273, %v746, %v1226
      %v1299 = vsel %vm1273, %v748, %v1228
      %v1300 = vsel %vm1273, %v750, %v1230
      %v1301 = vsel %vm1273, %v752, %v1232
      %v1302 = vsel %vm1273, %v754, %v1234
      %v1303 = vsel %vm1273, %v756, %v1236
      %v1304 = vsel %vm1273, %v758, %v1238
      %v1305 = vsel %vm1273, %v760, %v1240
      %vm1306 = vcmask 97280
      %1307 = vst.msk [vmem:[%s172] sm:$0xff] %vm1306, %v1274
      %1308 = vst.msk [vmem:[%s172 + $0x8] sm:$0xff] %vm1306, %v1275
      %1309 = vst.msk [vmem:[%s172 + $0x10] sm:$0xff] %vm1306, %v1276
      %1310 = vst.msk [vmem:[%s172 + $0x18] sm:$0xff] %vm1306, %v1277
      %1311 = vst.msk [vmem:[%s172 + $0x20] sm:$0xff] %vm1306, %v1278
      %1312 = vst.msk [vmem:[%s172 + $0x28] sm:$0xff] %vm1306, %v1279
      %1313 = vst.msk [vmem:[%s172 + $0x30] sm:$0xff] %vm1306, %v1280
      %1314 = vst.msk [vmem:[%s172 + $0x38] sm:$0xff] %vm1306, %v1281
      %1315 = vst.msk [vmem:[%s172 + $0x40] sm:$0xff] %vm1306, %v1282
      %1316 = vst.msk [vmem:[%s172 + $0x48] sm:$0xff] %vm1306, %v1283
      %1317 = vst.msk [vmem:[%s172 + $0x50] sm:$0xff] %vm1306, %v1284
      %1318 = vst.msk [vmem:[%s172 + $0x58] sm:$0xff] %vm1306, %v1285
      %1319 = vst.msk [vmem:[%s172 + $0x60] sm:$0xff] %vm1306, %v1286
      %1320 = vst.msk [vmem:[%s172 + $0x68] sm:$0xff] %vm1306, %v1287
      %1321 = vst.msk [vmem:[%s172 + $0x70] sm:$0xff] %vm1306, %v1288
      %1322 = vst.msk [vmem:[%s172 + $0x78] sm:$0xff] %vm1306, %v1289
      %1323 = vst.msk [vmem:[%s172 + $0x80] sm:$0xff] %vm1306, %v1290
      %1324 = vst.msk [vmem:[%s172 + $0x88] sm:$0xff] %vm1306, %v1291
      %1325 = vst.msk [vmem:[%s172 + $0x90] sm:$0xff] %vm1306, %v1292
      %1326 = vst.msk [vmem:[%s172 + $0x98] sm:$0xff] %vm1306, %v1293
      %1327 = vst.msk [vmem:[%s172 + $0xa0] sm:$0xff] %vm1306, %v1294
      %1328 = vst.msk [vmem:[%s172 + $0xa8] sm:$0xff] %vm1306, %v1295
      %1329 = vst.msk [vmem:[%s172 + $0xb0] sm:$0xff] %vm1306, %v1296
      %1330 = vst.msk [vmem:[%s172 + $0xb8] sm:$0xff] %vm1306, %v1297
      %1331 = vst.msk [vmem:[%s172 + $0xc0] sm:$0xff] %vm1306, %v1298
      %1332 = vst.msk [vmem:[%s172 + $0xc8] sm:$0xff] %vm1306, %v1299
      %1333 = vst.msk [vmem:[%s172 + $0xd0] sm:$0xff] %vm1306, %v1300
      %1334 = vst.msk [vmem:[%s172 + $0xd8] sm:$0xff] %vm1306, %v1301
      %1335 = vst.msk [vmem:[%s172 + $0xe0] sm:$0xff] %vm1306, %v1302
      %1336 = vst.msk [vmem:[%s172 + $0xe8] sm:$0xff] %vm1306, %v1303
      %1337 = vst.msk [vmem:[%s172 + $0xf0] sm:$0xff] %vm1306, %v1304
      %1338 = vst.msk [vmem:[%s172 + $0xf8] sm:$0xff] %vm1306, %v1305
      %s1339 = smul.u32 32, %s14
      %p1340 = scmp.lt.s32.totalorder %s1339, 63
      %s1341 = scalar_select %p1340, %s1339, 63
      %s1342 = smul.addr %s1341, 8
      %s1343 = scalar_lea.vmem %s3, %s1342
      // Predicated region
      $region33: #{dbnet_forward.45} parent=31 // pred_check
        %p1344 = pneg %p100
      $region34: #{dbnet_forward.45} parent=31 // pred_check_branch
        %1346 = sbr.rel (%p1344) target = $region36
      $region35: #{dbnet_forward.45} parent=31 // pred_region
        %s1347 = smul.u32 32, %s14
      $region36: #{dbnet_forward.45} parent=31 // pred_fallthru
        _
    $region32: #{dbnet_forward.45} parent=5 // pred_fallthru
      _
    %p1348 = scmp.le.s32.totalorder 2, %s9
    // Predicated region
    $region37: #{dbnet_forward.45} parent=5 // pred_check
      %p1349 = pneg %p1348
    $region38: #{dbnet_forward.45} parent=5 // pred_check_branch
      %1351 = sbr.rel (%p1349) target = $region40
    $region39: #{dbnet_forward.45} parent=5 // pred_region
      %s1352 = ssub.s32 %s9, 2
      // Predicated region
      $region41: #{dbnet_forward.45} parent=39 // pred_check
        %p1353 = pneg %p106
      $region42: #{dbnet_forward.45} parent=39 // pred_check_branch
        %1355 = sbr.rel (%p1353) target = $region44
      $region43: #{dbnet_forward.45} parent=39 // pred_region
        %s1356 = smul.u32 32, %s15
        %p1357 = scmp.lt.s32.totalorder %s1356, 63
        %s1358 = scalar_select %p1357, %s1356, 63
        %s1359 = smul.addr %s1358, 8
        %s1360 = scalar_lea.vmem %s3, %s1359
      $region44: #{dbnet_forward.45} parent=39 // pred_fallthru
        _
    $region40: #{dbnet_forward.45} parent=5 // pred_fallthru
      _
  $region6: #{dbnet_forward.45} parent=0 // loop_footer
    %s13 = sadd.s32 1, %s9
  $region7: #{dbnet_forward.45} parent=0 // loop_footer_branch
    %8 = sbr.rel target = $region3
  $region8: #{dbnet_forward.45} parent=0 // loop_exit
    _

</llo_original>
